<compile_context>
chip_gen: v6e
topology: v6e:2x2x1
jax: 0.10.0
libtpu: 0.0.40
codegen_flags: <defaults>
</compile_context>

<pallas_src>
import math
import functools

import jax
import jax.numpy as jnp
from jax.experimental import pallas as pl
from jax.experimental.pallas import tpu as pltpu


# -----------------------------------------------------------------------------
# In-kernel helpers (operate on values / refs already in VMEM)
# -----------------------------------------------------------------------------

def _layernorm(h, g, b, eps=1e-5):
    """LayerNorm over the last dim; h: (N, D) f32, g/b: (1, D) f32."""
    mu = jnp.mean(h, axis=-1, keepdims=True)
    var = jnp.mean(jnp.square(h - mu), axis=-1, keepdims=True)
    return (h - mu) * jax.lax.rsqrt(var + eps) * g + b


def _mm(x_f32, w_ref, b_ref):
    """x @ W + b with bf16 MXU operands and f32 accumulation."""
    y = jnp.dot(x_f32.astype(jnp.bfloat16), w_ref[...],
                preferred_element_type=jnp.float32)
    return y + b_ref[...]


def _attend(q, k, v, *, causal):
    """Single-head scaled-dot-product attention. q:(B,Sq,D) k/v:(B,Sk,D), f32."""
    D = q.shape[-1]
    scale = 1.0 / math.sqrt(D)
    s = jnp.einsum("bqd,bkd->bqk", q.astype(jnp.bfloat16), k.astype(jnp.bfloat16),
                   preferred_element_type=jnp.float32) * scale
    if causal:
        row = jax.lax.broadcasted_iota(jnp.int32, s.shape, 1)
        col = jax.lax.broadcasted_iota(jnp.int32, s.shape, 2)
        s = jnp.where(row >= col, s, -jnp.inf)
    s = s - jnp.max(s, axis=-1, keepdims=True)
    p = jnp.exp(s)
    inv = pl.reciprocal(jnp.sum(p, axis=-1, keepdims=True), approx=True)
    p = p * inv
    return jnp.einsum("bqk,bkd->bqd", p.astype(jnp.bfloat16), v.astype(jnp.bfloat16),
                      preferred_element_type=jnp.float32)


# -----------------------------------------------------------------------------
# Fused encoder-stack kernel (grid axis = encoder layer)
# -----------------------------------------------------------------------------

def _encoder_kernel(src_ref, pos_ref, win_ref, bin_ref,
                    wqkv_ref, bqkv_ref, wo_ref, bo_ref, g1_ref, b1_ref,
                    w1_ref, bf1_ref, w2_ref, bf2_ref, g2_ref, b2_ref,
                    mem_ref, start_scr):
    l = pl.program_id(0)
    n_l = pl.num_programs(0)
    B, S, D = mem_ref.shape
    BS = B * S

    @pl.when(l == 0)
    def _init():
        # input projection (K = n_encoder_inputs is tiny -> keep f32) + pos add
        s_start = jnp.dot(src_ref[...], win_ref[...],
                          preferred_element_type=jnp.float32) + bin_ref[...]
        start_scr[...] = s_start
        mem_ref[...] = s_start.reshape(B, S, D) + pos_ref[...][None, :, :]

    x3 = mem_ref[...]                       # (B, S, D) f32 — resident carry
    x2 = x3.reshape(BS, D)

    # ---- self-attention block (fused QKV projection) ----
    qkv = _mm(x2, wqkv_ref, bqkv_ref)       # (BS, 3D)
    q = qkv[:, :D].reshape(B, S, D)
    k = qkv[:, D:2 * D].reshape(B, S, D)
    v = qkv[:, 2 * D:].reshape(B, S, D)
    a = _attend(q, k, v, causal=False).reshape(BS, D)
    a = _mm(a, wo_ref, bo_ref)
    h = _layernorm(x2 + a, g1_ref[...], b1_ref[...])

    # ---- feed-forward block ----
    f = jnp.maximum(_mm(h, w1_ref, bf1_ref), 0.0)
    f = _mm(f, w2_ref, bf2_ref)
    y2 = _layernorm(h + f, g2_ref[...], b2_ref[...])
    y3 = y2.reshape(B, S, D)

    @pl.when(l == n_l - 1)
    def _finish():                          # memory = encoder(x) + src_start
        mem_ref[...] = y3 + start_scr[...].reshape(B, S, D)

    @pl.when(l < n_l - 1)
    def _carry():
        mem_ref[...] = y3


# -----------------------------------------------------------------------------
# Fused decoder-stack (+ output heads) kernel (grid axis = decoder layer)
# -----------------------------------------------------------------------------

def _decoder_kernel(tgt_ref, pos_ref, wout_ref, bout_ref, mem_ref,
                    sa_wqkv_ref, sa_bqkv_ref, sa_wo_ref, sa_bo_ref, g1_ref, b1_ref,
                    ca_wq_ref, ca_bq_ref, ca_wkv_ref, ca_bkv_ref, ca_wo_ref, ca_bo_ref,
                    g2_ref, b2_ref,
                    w1_ref, bf1_ref, w2_ref, bf2_ref, g3_ref, b3_ref,
                    lin_w_ref, lin_b_ref, ziji_w_ref, ziji_b_ref,
                    pred_ref, y_scr, start_scr):
    l = pl.program_id(0)
    n_l = pl.num_programs(0)
    B, St, D = y_scr.shape
    Ss = mem_ref.shape[1]
    BS = B * St

    @pl.when(l == 0)
    def _init():
        t_start = jnp.dot(tgt_ref[...], wout_ref[...],
                          preferred_element_type=jnp.float32) + bout_ref[...]
        start_scr[...] = t_start
        y_scr[...] = t_start.reshape(B, St, D) + pos_ref[...][None, :, :]

    y3 = y_scr[...]
    y2 = y3.reshape(BS, D)

    # ---- causal self-attention ----
    qkv = _mm(y2, sa_wqkv_ref, sa_bqkv_ref)
    q = qkv[:, :D].reshape(B, St, D)
    k = qkv[:, D:2 * D].reshape(B, St, D)
    v = qkv[:, 2 * D:].reshape(B, St, D)
    a = _attend(q, k, v, causal=True).reshape(BS, D)
    a = _mm(a, sa_wo_ref, sa_bo_ref)
    h = _layernorm(y2 + a, g1_ref[...], b1_ref[...])

    # ---- cross-attention over encoder memory ----
    q = _mm(h, ca_wq_ref, ca_bq_ref).reshape(B, St, D)
    m2 = mem_ref[...].reshape(B * Ss, D)
    kv = _mm(m2, ca_wkv_ref, ca_bkv_ref)
    k = kv[:, :D].reshape(B, Ss, D)
    v = kv[:, D:].reshape(B, Ss, D)
    a = _attend(q, k, v, causal=False).reshape(BS, D)
    a = _mm(a, ca_wo_ref, ca_bo_ref)
    h2 = _layernorm(h + a, g2_ref[...], b2_ref[...])

    # ---- feed-forward ----
    f = jnp.maximum(_mm(h2, w1_ref, bf1_ref), 0.0)
    f = _mm(f, w2_ref, bf2_ref)
    y_new = _layernorm(h2 + f, g3_ref[...], b3_ref[...])
    y_new3 = y_new.reshape(B, St, D)
    y_scr[...] = y_new3

    @pl.when(l == n_l - 1)
    def _head():
        # decode_out residual + linear(D->1).squeeze(2) + ziji_add_linear(S->1)
        out3 = y_new3 + start_scr[...].reshape(B, St, D)
        t = jnp.sum(out3 * lin_w_ref[...].reshape(1, 1, D), axis=-1) + lin_b_ref[...]
        pred_ref[...] = (jnp.sum(t * ziji_w_ref[...], axis=-1, keepdims=True)
                         + ziji_b_ref[...])


# -----------------------------------------------------------------------------
# BlockSpec helpers & pallas_call wrappers
# -----------------------------------------------------------------------------

def _rep2(shape):                 # same 2-D block every layer step (fetched once)
    return pl.BlockSpec(shape, lambda l: (0, 0))


def _rep3(shape):
    return pl.BlockSpec(shape, lambda l: (0, 0, 0))


def _per_layer(shape):            # (L, a, b) stacked -> (a, b) slice of layer l
    return pl.BlockSpec((None,) + shape, lambda l: (l, 0, 0))


def encode(params, src):
    p = params
    D = p["d_model"]
    B, Ss, F = src.shape
    src2d = src.reshape(B * Ss, F)
    pos = p["inp_pos"][:Ss]
    e = p["enc"]
    L = e["wqkv"].shape[0]
    dff = e["w1"].shape[2]

    grid_spec = pltpu.PrefetchScalarGridSpec(
        num_scalar_prefetch=0,
        grid=(L,),
        in_specs=[
            _rep2((B * Ss, F)), _rep2((Ss, D)), _rep2((F, D)), _rep2((1, D)),
            _per_layer((D, 3 * D)), _per_layer((1, 3 * D)),
            _per_layer((D, D)), _per_layer((1, D)),
            _per_layer((1, D)), _per_layer((1, D)),
            _per_layer((D, dff)), _per_layer((1, dff)),
            _per_layer((dff, D)), _per_layer((1, D)),
            _per_layer((1, D)), _per_layer((1, D)),
        ],
        out_specs=pl.BlockSpec((B, Ss, D), lambda l: (0, 0, 0)),
        scratch_shapes=[pltpu.VMEM((B * Ss, D), jnp.float32)],
    )
    return pl.pallas_call(
        _encoder_kernel,
        out_shape=jax.ShapeDtypeStruct((B, Ss, D), jnp.float32),
        grid_spec=grid_spec,
        compiler_params=pltpu.CompilerParams(dimension_semantics=("arbitrary",)),
    )(src2d, pos, p["inp_w"], p["inp_b"],
      e["wqkv"], e["bqkv"], e["wo"], e["bo"], e["g1"], e["b1"],
      e["w1"], e["bf1"], e["w2"], e["bf2"], e["g2"], e["b2"])


def decode(params, tgt, memory):
    p = params
    D = p["d_model"]
    B, St, F = tgt.shape
    Ss = memory.shape[1]
    tgt2d = tgt.reshape(B * St, F)
    pos = p["tgt_pos"][:St]
    d = p["dec"]
    L = d["sa_wqkv"].shape[0]
    dff = d["w1"].shape[2]

    grid_spec = pltpu.PrefetchScalarGridSpec(
        num_scalar_prefetch=0,
        grid=(L,),
        in_specs=[
            _rep2((B * St, F)), _rep2((St, D)), _rep2((F, D)), _rep2((1, D)),
            _rep3((B, Ss, D)),
            _per_layer((D, 3 * D)), _per_layer((1, 3 * D)),
            _per_layer((D, D)), _per_layer((1, D)),
            _per_layer((1, D)), _per_layer((1, D)),
            _per_layer((D, D)), _per_layer((1, D)),
            _per_layer((D, 2 * D)), _per_layer((1, 2 * D)),
            _per_layer((D, D)), _per_layer((1, D)),
            _per_layer((1, D)), _per_layer((1, D)),
            _per_layer((D, dff)), _per_layer((1, dff)),
            _per_layer((dff, D)), _per_layer((1, D)),
            _per_layer((1, D)), _per_layer((1, D)),
            _rep2((1, D)), _rep2((1, 1)), _rep2((1, St)), _rep2((1, 1)),
        ],
        out_specs=pl.BlockSpec((B, 1), lambda l: (0, 0)),
        scratch_shapes=[pltpu.VMEM((B, St, D), jnp.float32),
                        pltpu.VMEM((B * St, D), jnp.float32)],
    )
    return pl.pallas_call(
        _decoder_kernel,
        out_shape=jax.ShapeDtypeStruct((B, 1), jnp.float32),
        grid_spec=grid_spec,
        compiler_params=pltpu.CompilerParams(dimension_semantics=("arbitrary",)),
    )(tgt2d, pos, p["out_w"], p["out_b"], memory,
      d["sa_wqkv"], d["sa_bqkv"], d["sa_wo"], d["sa_bo"], d["g1"], d["b1"],
      d["ca_wq"], d["ca_bq"], d["ca_wkv"], d["ca_bkv"], d["ca_wo"], d["ca_bo"],
      d["g2"], d["b2"],
      d["w1"], d["bf1"], d["w2"], d["bf2"], d["g3"], d["b3"],
      p["lin_w"], p["lin_b"], p["ziji_w"], p["ziji_b"])


def transformer_forward(params, src, target_in):
    memory = encode(params, src)           # (B, S, D)  == encoder(x) + src_start
    return decode(params, target_in, memory)   # (B, 1)


# -----------------------------------------------------------------------------
# Deterministic parameter init (synthetic — shapes follow the module's __init__)
# Matmul weights are stored bf16 (MXU operands); biases / LN params stay f32.
# -----------------------------------------------------------------------------

def _dense(key, din, dout, dtype=jnp.float32):
    w = jax.random.normal(key, (din, dout), jnp.float32) / math.sqrt(din)
    return w.astype(dtype)


def make_params(key, n_enc_in, n_dec_in, seq_len, d_model,
                num_enc_layers=2, num_dec_layers=4):
    dff = 4 * d_model
    ks = iter(jax.random.split(key, 512))
    p = {"d_model": d_model}
    p["inp_w"] = _dense(next(ks), n_enc_in, d_model)          # f32 (K too shallow)
    p["inp_b"] = jnp.zeros((1, d_model), jnp.float32)
    p["out_w"] = _dense(next(ks), n_dec_in, d_model)
    p["out_b"] = jnp.zeros((1, d_model), jnp.float32)
    p["inp_pos"] = 0.02 * jax.random.normal(next(ks), (seq_len, d_model), jnp.float32)
    p["tgt_pos"] = 0.02 * jax.random.normal(next(ks), (seq_len, d_model), jnp.float32)

    def stack(fn, n):
        return jnp.stack([fn() for _ in range(n)], axis=0)

    def enc_layer_params(n):
        e = {}
        e["wqkv"] = stack(lambda: _dense(next(ks), d_model, 3 * d_model, jnp.bfloat16), n)
        e["bqkv"] = jnp.zeros((n, 1, 3 * d_model), jnp.float32)
        e["wo"] = stack(lambda: _dense(next(ks), d_model, d_model, jnp.bfloat16), n)
        e["bo"] = jnp.zeros((n, 1, d_model), jnp.float32)
        e["g1"] = jnp.ones((n, 1, d_model), jnp.float32)
        e["b1"] = jnp.zeros((n, 1, d_model), jnp.float32)
        e["w1"] = stack(lambda: _dense(next(ks), d_model, dff, jnp.bfloat16), n)
        e["bf1"] = jnp.zeros((n, 1, dff), jnp.float32)
        e["w2"] = stack(lambda: _dense(next(ks), dff, d_model, jnp.bfloat16), n)
        e["bf2"] = jnp.zeros((n, 1, d_model), jnp.float32)
        e["g2"] = jnp.ones((n, 1, d_model), jnp.float32)
        e["b2"] = jnp.zeros((n, 1, d_model), jnp.float32)
        return e

    def dec_layer_params(n):
        d = {}
        d["sa_wqkv"] = stack(lambda: _dense(next(ks), d_model, 3 * d_model, jnp.bfloat16), n)
        d["sa_bqkv"] = jnp.zeros((n, 1, 3 * d_model), jnp.float32)
        d["sa_wo"] = stack(lambda: _dense(next(ks), d_model, d_model, jnp.bfloat16), n)
        d["sa_bo"] = jnp.zeros((n, 1, d_model), jnp.float32)
        d["g1"] = jnp.ones((n, 1, d_model), jnp.float32)
        d["b1"] = jnp.zeros((n, 1, d_model), jnp.float32)
        d["ca_wq"] = stack(lambda: _dense(next(ks), d_model, d_model, jnp.bfloat16), n)
        d["ca_bq"] = jnp.zeros((n, 1, d_model), jnp.float32)
        d["ca_wkv"] = stack(lambda: _dense(next(ks), d_model, 2 * d_model, jnp.bfloat16), n)
        d["ca_bkv"] = jnp.zeros((n, 1, 2 * d_model), jnp.float32)
        d["ca_wo"] = stack(lambda: _dense(next(ks), d_model, d_model, jnp.bfloat16), n)
        d["ca_bo"] = jnp.zeros((n, 1, d_model), jnp.float32)
        d["g2"] = jnp.ones((n, 1, d_model), jnp.float32)
        d["b2"] = jnp.zeros((n, 1, d_model), jnp.float32)
        d["w1"] = stack(lambda: _dense(next(ks), d_model, dff, jnp.bfloat16), n)
        d["bf1"] = jnp.zeros((n, 1, dff), jnp.float32)
        d["w2"] = stack(lambda: _dense(next(ks), dff, d_model, jnp.bfloat16), n)
        d["bf2"] = jnp.zeros((n, 1, d_model), jnp.float32)
        d["g3"] = jnp.ones((n, 1, d_model), jnp.float32)
        d["b3"] = jnp.zeros((n, 1, d_model), jnp.float32)
        return d

    p["enc"] = enc_layer_params(num_enc_layers)
    p["dec"] = dec_layer_params(num_dec_layers)

    # heads: linear(d_model->1) and ziji_add_linear(Sequence_length->1),
    # stored lane-dense as (1, D) / (1, S) for the fused in-kernel reductions.
    p["lin_w"] = _dense(next(ks), d_model, 1).reshape(1, d_model)
    p["lin_b"] = jnp.zeros((1, 1), jnp.float32)
    p["ziji_w"] = _dense(next(ks), seq_len, 1).reshape(1, seq_len)
    p["ziji_b"] = jnp.zeros((1, 1), jnp.float32)
    return p


# -----------------------------------------------------------------------------

if __name__ == "__main__":
    # small, module-consistent shapes
    B = 2                 # batch
    SEQ = 8               # Sequence_length (src and target sequence length)
    N_ENC_IN = 4          # n_encoder_inputs
    N_DEC_IN = 4          # n_decoder_inputs
    D_MODEL = 128         # d_model (module default 512; small & lane-aligned here)

    root = jax.random.PRNGKey(0)
    k_param, k_src, k_tgt = jax.random.split(root, 3)

    params = make_params(k_param, N_ENC_IN, N_DEC_IN, SEQ, D_MODEL)
    src = jax.random.normal(k_src, (B, SEQ, N_ENC_IN), jnp.float32)
    target_in = jax.random.normal(k_tgt, (B, SEQ, N_DEC_IN), jnp.float32)

    fwd = jax.jit(functools.partial(transformer_forward, params))
    out = fwd(src, target_in)           # (B, 1), matches torch forward output
    jax.block_until_ready(out)
    assert out.shape == (B, 1)
    print("KERNEL_OK")
</pallas_src>

<mosaic_0001>
module attributes {stable_mosaic.version = 11 : i64} {
  func.func @_encoder_kernel(%arg0: i32, %arg1: memref<16x4xf32, #tpu.memory_space<vmem>>, %arg2: memref<8x128xf32, #tpu.memory_space<vmem>>, %arg3: memref<4x128xf32, #tpu.memory_space<vmem>>, %arg4: memref<1x128xf32, #tpu.memory_space<vmem>>, %arg5: memref<1x128x384xbf16, #tpu.memory_space<vmem>>, %arg6: memref<1x1x384xf32, #tpu.memory_space<vmem>>, %arg7: memref<1x128x128xbf16, #tpu.memory_space<vmem>>, %arg8: memref<1x1x128xf32, #tpu.memory_space<vmem>>, %arg9: memref<1x1x128xf32, #tpu.memory_space<vmem>>, %arg10: memref<1x1x128xf32, #tpu.memory_space<vmem>>, %arg11: memref<1x128x512xbf16, #tpu.memory_space<vmem>>, %arg12: memref<1x1x512xf32, #tpu.memory_space<vmem>>, %arg13: memref<1x512x128xbf16, #tpu.memory_space<vmem>>, %arg14: memref<1x1x128xf32, #tpu.memory_space<vmem>>, %arg15: memref<1x1x128xf32, #tpu.memory_space<vmem>>, %arg16: memref<1x1x128xf32, #tpu.memory_space<vmem>>, %arg17: memref<2x8x128xf32, #tpu.memory_space<vmem>>, %arg18: memref<16x128xf32, #tpu.memory_space<vmem>>) attributes {dimension_semantics = [#tpu.dimension_semantics<arbitrary>], iteration_bounds = array<i64: 2>, scalar_prefetch = 0 : i64, scratch_operands = 1 : i64, tpu.core_type = #tpu.core_type<tc>, window_params = [{pipeline_mode = #tpu.pipeline_mode<synchronous>, transform_indices = @transform_0, window_bounds = array<i64: 16, 4>}, {pipeline_mode = #tpu.pipeline_mode<synchronous>, transform_indices = @transform_1, window_bounds = array<i64: 8, 128>}, {pipeline_mode = #tpu.pipeline_mode<synchronous>, transform_indices = @transform_2, window_bounds = array<i64: 4, 128>}, {pipeline_mode = #tpu.pipeline_mode<synchronous>, transform_indices = @transform_3, window_bounds = array<i64: 1, 128>}, {transform_indices = @transform_4, window_bounds = array<i64: 1, 128, 384>}, {transform_indices = @transform_5, window_bounds = array<i64: 1, 1, 384>}, {transform_indices = @transform_6, window_bounds = array<i64: 1, 128, 128>}, {transform_indices = @transform_7, window_bounds = array<i64: 1, 1, 128>}, {transform_indices = @transform_8, window_bounds = array<i64: 1, 1, 128>}, {transform_indices = @transform_9, window_bounds = array<i64: 1, 1, 128>}, {transform_indices = @transform_10, window_bounds = array<i64: 1, 128, 512>}, {transform_indices = @transform_11, window_bounds = array<i64: 1, 1, 512>}, {transform_indices = @transform_12, window_bounds = array<i64: 1, 512, 128>}, {transform_indices = @transform_13, window_bounds = array<i64: 1, 1, 128>}, {transform_indices = @transform_14, window_bounds = array<i64: 1, 1, 128>}, {transform_indices = @transform_15, window_bounds = array<i64: 1, 1, 128>}, {pipeline_mode = #tpu.pipeline_mode<synchronous>, transform_indices = @transform_16, window_bounds = array<i64: 2, 8, 128>}]} {
    %c0_i32 = arith.constant 0 : i32
    %0 = arith.cmpi eq, %arg0, %c0_i32 : i32
    %1 = arith.extui %0 : i1 to i32
    %c0_i32_0 = arith.constant 0 : i32
    %2 = arith.cmpi ne, %1, %c0_i32_0 : i32
    scf.if %2 {
      %c0_61 = arith.constant 0 : index
      %c0_62 = arith.constant 0 : index
      %125 = vector.load %arg1[%c0_61, %c0_62] : memref<16x4xf32, #tpu.memory_space<vmem>>, vector<16x4xf32>
      %c0_63 = arith.constant 0 : index
      %c0_64 = arith.constant 0 : index
      %126 = vector.load %arg3[%c0_63, %c0_64] : memref<4x128xf32, #tpu.memory_space<vmem>>, vector<4x128xf32>
      %cst_65 = arith.constant dense<0.000000e+00> : vector<16x128xf32>
      %127 = tpu.matmul %125, %126, %cst_65 {dimension_numbers = #tpu.dot_dimension_numbers<[1], [0], [0], [1], [0, 0, 1, 1], [], []>} : vector<16x4xf32>, vector<4x128xf32>, vector<16x128xf32> -> vector<16x128xf32>
      %c0_66 = arith.constant 0 : index
      %c0_67 = arith.constant 0 : index
      %128 = vector.load %arg4[%c0_66, %c0_67] : memref<1x128xf32, #tpu.memory_space<vmem>>, vector<1x128xf32>
      %129 = vector.broadcast %128 : vector<1x128xf32> to vector<16x128xf32>
      %130 = arith.addf %127, %129 : vector<16x128xf32>
      %c0_68 = arith.constant 0 : index
      %c0_69 = arith.constant 0 : index
      %131 = vector.load %arg18[%c0_68, %c0_69] : memref<16x128xf32, #tpu.memory_space<vmem>>, vector<16x128xf32>
      tpu.vector_store %arg18[%c0_68, %c0_69], %130 {strides = array<i32>} : memref<16x128xf32, #tpu.memory_space<vmem>>, vector<16x128xf32>,
      %132 = vector.shape_cast %130 : vector<16x128xf32> to vector<2x8x128xf32>
      %c0_70 = arith.constant 0 : index
      %c0_71 = arith.constant 0 : index
      %133 = vector.load %arg2[%c0_70, %c0_71] : memref<8x128xf32, #tpu.memory_space<vmem>>, vector<8x128xf32>
      %134 = vector.shape_cast %133 : vector<8x128xf32> to vector<1x8x128xf32>
      %135 = vector.broadcast %134 : vector<1x8x128xf32> to vector<2x8x128xf32>
      %136 = arith.addf %132, %135 : vector<2x8x128xf32>
      %c0_72 = arith.constant 0 : index
      %c0_73 = arith.constant 0 : index
      %c0_74 = arith.constant 0 : index
      %137 = vector.load %arg17[%c0_72, %c0_73, %c0_74] : memref<2x8x128xf32, #tpu.memory_space<vmem>>, vector<2x8x128xf32>
      tpu.vector_store %arg17[%c0_72, %c0_73, %c0_74], %136 {strides = array<i32>} : memref<2x8x128xf32, #tpu.memory_space<vmem>>, vector<2x8x128xf32>,
    } else {
    }
    %c0 = arith.constant 0 : index
    %c0_1 = arith.constant 0 : index
    %c0_2 = arith.constant 0 : index
    %3 = vector.load %arg17[%c0, %c0_1, %c0_2] : memref<2x8x128xf32, #tpu.memory_space<vmem>>, vector<2x8x128xf32>
    %4 = vector.shape_cast %3 : vector<2x8x128xf32> to vector<16x128xf32>
    %5 = arith.truncf %4 : vector<16x128xf32> to vector<16x128xbf16>
    %c0_3 = arith.constant 0 : index
    %c0_4 = arith.constant 0 : index
    %c0_5 = arith.constant 0 : index
    %6 = vector.load %arg5[%c0_3, %c0_4, %c0_5] : memref<1x128x384xbf16, #tpu.memory_space<vmem>>, vector<1x128x384xbf16>
    %7 = vector.shape_cast %6 : vector<1x128x384xbf16> to vector<128x384xbf16>
    %cst = arith.constant dense<0.000000e+00> : vector<16x384xf32>
    %8 = tpu.matmul %5, %7, %cst {dimension_numbers = #tpu.dot_dimension_numbers<[1], [0], [0], [1], [0, 0, 1, 1], [], []>} : vector<16x128xbf16>, vector<128x384xbf16>, vector<16x384xf32> -> vector<16x384xf32>
    %c0_6 = arith.constant 0 : index
    %c0_7 = arith.constant 0 : index
    %c0_8 = arith.constant 0 : index
    %9 = vector.load %arg6[%c0_6, %c0_7, %c0_8] : memref<1x1x384xf32, #tpu.memory_space<vmem>>, vector<1x1x384xf32>
    %10 = vector.shape_cast %9 : vector<1x1x384xf32> to vector<1x384xf32>
    %11 = vector.broadcast %10 : vector<1x384xf32> to vector<16x384xf32>
    %12 = arith.addf %8, %11 : vector<16x384xf32>
    %13 = vector.extract_strided_slice %12 {offsets = [0, 0], sizes = [16, 128], strides = [1, 1]} : vector<16x384xf32> to vector<16x128xf32>
    %14 = vector.shape_cast %13 : vector<16x128xf32> to vector<2x8x128xf32>
    %15 = vector.extract_strided_slice %12 {offsets = [0, 128], sizes = [16, 128], strides = [1, 1]} : vector<16x384xf32> to vector<16x128xf32>
    %16 = vector.shape_cast %15 : vector<16x128xf32> to vector<2x8x128xf32>
    %17 = vector.extract_strided_slice %12 {offsets = [0, 256], sizes = [16, 128], strides = [1, 1]} : vector<16x384xf32> to vector<16x128xf32>
    %18 = vector.shape_cast %17 : vector<16x128xf32> to vector<2x8x128xf32>
    %19 = arith.truncf %14 : vector<2x8x128xf32> to vector<2x8x128xbf16>
    %20 = arith.truncf %16 : vector<2x8x128xf32> to vector<2x8x128xbf16>
    "tpu.trace_start"() <{level = 10 : i32, message = "bqd,bkd->bqk"}> : () -> ()
    %cst_9 = arith.constant dense<0.000000e+00> : vector<2x8x8xf32>
    %21 = tpu.matmul %19, %20, %cst_9 {dimension_numbers = #tpu.dot_dimension_numbers<[2], [2], [1], [1], [0, 0, 0, 1, 1, 1], [0], [0]>} : vector<2x8x128xbf16>, vector<2x8x128xbf16>, vector<2x8x8xf32> -> vector<2x8x8xf32>
    "tpu.trace_stop"() : () -> ()
    %cst_10 = arith.constant 0.0883883461 : f32
    %22 = vector.broadcast %cst_10 : f32 to vector<2x8x8xf32>
    %23 = arith.mulf %21, %22 : vector<2x8x8xf32>
    %cst_11 = arith.constant dense<0xFF800000> : vector<2x8xf32>
    %24 = vector.multi_reduction <maximumf>, %23, %cst_11 [2] : vector<2x8x8xf32> to vector<2x8xf32>
    %25 = vector.shape_cast %24 : vector<2x8xf32> to vector<2x8x1xf32>
    %26 = vector.broadcast %25 : vector<2x8x1xf32> to vector<2x8x8xf32>
    %27 = arith.subf %23, %26 : vector<2x8x8xf32>
    %28 = math.exp %27 : vector<2x8x8xf32>
    %cst_12 = arith.constant dense<0.000000e+00> : vector<2x8xf32>
    %29 = vector.multi_reduction <add>, %28, %cst_12 [2] : vector<2x8x8xf32> to vector<2x8xf32>
    %30 = vector.shape_cast %29 : vector<2x8xf32> to vector<2x8x1xf32>
    %31 = tpu.reciprocal %30 {approx = true} : vector<2x8x1xf32> -> vector<2x8x1xf32>
    %32 = vector.broadcast %31 : vector<2x8x1xf32> to vector<2x8x8xf32>
    %33 = arith.mulf %28, %32 : vector<2x8x8xf32>
    %34 = arith.truncf %33 : vector<2x8x8xf32> to vector<2x8x8xbf16>
    %35 = arith.truncf %18 : vector<2x8x128xf32> to vector<2x8x128xbf16>
    "tpu.trace_start"() <{level = 10 : i32, message = "bqk,bkd->bqd"}> : () -> ()
    %cst_13 = arith.constant dense<0.000000e+00> : vector<2x8x128xf32>
    %36 = tpu.matmul %34, %35, %cst_13 {dimension_numbers = #tpu.dot_dimension_numbers<[2], [1], [1], [2], [0, 0, 0, 1, 1, 2], [0], [0]>} : vector<2x8x8xbf16>, vector<2x8x128xbf16>, vector<2x8x128xf32> -> vector<2x8x128xf32>
    "tpu.trace_stop"() : () -> ()
    %37 = vector.shape_cast %36 : vector<2x8x128xf32> to vector<16x128xf32>
    %38 = arith.truncf %37 : vector<16x128xf32> to vector<16x128xbf16>
    %c0_14 = arith.constant 0 : index
    %c0_15 = arith.constant 0 : index
    %c0_16 = arith.constant 0 : index
    %39 = vector.load %arg7[%c0_14, %c0_15, %c0_16] : memref<1x128x128xbf16, #tpu.memory_space<vmem>>, vector<1x128x128xbf16>
    %40 = vector.shape_cast %39 : vector<1x128x128xbf16> to vector<128x128xbf16>
    %cst_17 = arith.constant dense<0.000000e+00> : vector<16x128xf32>
    %41 = tpu.matmul %38, %40, %cst_17 {dimension_numbers = #tpu.dot_dimension_numbers<[1], [0], [0], [1], [0, 0, 1, 1], [], []>} : vector<16x128xbf16>, vector<128x128xbf16>, vector<16x128xf32> -> vector<16x128xf32>
    %c0_18 = arith.constant 0 : index
    %c0_19 = arith.constant 0 : index
    %c0_20 = arith.constant 0 : index
    %42 = vector.load %arg8[%c0_18, %c0_19, %c0_20] : memref<1x1x128xf32, #tpu.memory_space<vmem>>, vector<1x1x128xf32>
    %43 = vector.shape_cast %42 : vector<1x1x128xf32> to vector<1x128xf32>
    %44 = vector.broadcast %43 : vector<1x128xf32> to vector<16x128xf32>
    %45 = arith.addf %41, %44 : vector<16x128xf32>
    %46 = arith.addf %4, %45 : vector<16x128xf32>
    %c0_21 = arith.constant 0 : index
    %c0_22 = arith.constant 0 : index
    %c0_23 = arith.constant 0 : index
    %47 = vector.load %arg9[%c0_21, %c0_22, %c0_23] : memref<1x1x128xf32, #tpu.memory_space<vmem>>, vector<1x1x128xf32>
    %48 = vector.shape_cast %47 : vector<1x1x128xf32> to vector<1x128xf32>
    %c0_24 = arith.constant 0 : index
    %c0_25 = arith.constant 0 : index
    %c0_26 = arith.constant 0 : index
    %49 = vector.load %arg10[%c0_24, %c0_25, %c0_26] : memref<1x1x128xf32, #tpu.memory_space<vmem>>, vector<1x1x128xf32>
    %50 = vector.shape_cast %49 : vector<1x1x128xf32> to vector<1x128xf32>
    %cst_27 = arith.constant dense<0.000000e+00> : vector<16xf32>
    %51 = vector.multi_reduction <add>, %46, %cst_27 [1] : vector<16x128xf32> to vector<16xf32>
    %52 = vector.shape_cast %51 : vector<16xf32> to vector<16x1xf32>
    %cst_28 = arith.constant 1.280000e+02 : f32
    %53 = vector.broadcast %cst_28 : f32 to vector<16x1xf32>
    %54 = arith.divf %52, %53 : vector<16x1xf32>
    %55 = vector.broadcast %54 : vector<16x1xf32> to vector<16x128xf32>
    %56 = arith.subf %46, %55 : vector<16x128xf32>
    %57 = arith.mulf %56, %56 : vector<16x128xf32>
    %cst_29 = arith.constant dense<0.000000e+00> : vector<16xf32>
    %58 = vector.multi_reduction <add>, %57, %cst_29 [1] : vector<16x128xf32> to vector<16xf32>
    %59 = vector.shape_cast %58 : vector<16xf32> to vector<16x1xf32>
    %cst_30 = arith.constant 1.280000e+02 : f32
    %60 = vector.broadcast %cst_30 : f32 to vector<16x1xf32>
    %61 = arith.divf %59, %60 : vector<16x1xf32>
    %62 = vector.broadcast %54 : vector<16x1xf32> to vector<16x128xf32>
    %63 = arith.subf %46, %62 : vector<16x128xf32>
    %cst_31 = arith.constant 9.99999974E-6 : f32
    %64 = vector.broadcast %cst_31 : f32 to vector<16x1xf32>
    %65 = arith.addf %61, %64 : vector<16x1xf32>
    %66 = math.rsqrt %65 : vector<16x1xf32>
    %67 = vector.broadcast %66 : vector<16x1xf32> to vector<16x128xf32>
    %68 = arith.mulf %63, %67 : vector<16x128xf32>
    %69 = vector.broadcast %48 : vector<1x128xf32> to vector<16x128xf32>
    %70 = arith.mulf %68, %69 : vector<16x128xf32>
    %71 = vector.broadcast %50 : vector<1x128xf32> to vector<16x128xf32>
    %72 = arith.addf %70, %71 : vector<16x128xf32>
    %73 = arith.truncf %72 : vector<16x128xf32> to vector<16x128xbf16>
    %c0_32 = arith.constant 0 : index
    %c0_33 = arith.constant 0 : index
    %c0_34 = arith.constant 0 : index
    %74 = vector.load %arg11[%c0_32, %c0_33, %c0_34] : memref<1x128x512xbf16, #tpu.memory_space<vmem>>, vector<1x128x512xbf16>
    %75 = vector.shape_cast %74 : vector<1x128x512xbf16> to vector<128x512xbf16>
    %cst_35 = arith.constant dense<0.000000e+00> : vector<16x512xf32>
    %76 = tpu.matmul %73, %75, %cst_35 {dimension_numbers = #tpu.dot_dimension_numbers<[1], [0], [0], [1], [0, 0, 1, 1], [], []>} : vector<16x128xbf16>, vector<128x512xbf16>, vector<16x512xf32> -> vector<16x512xf32>
    %c0_36 = arith.constant 0 : index
    %c0_37 = arith.constant 0 : index
    %c0_38 = arith.constant 0 : index
    %77 = vector.load %arg12[%c0_36, %c0_37, %c0_38] : memref<1x1x512xf32, #tpu.memory_space<vmem>>, vector<1x1x512xf32>
    %78 = vector.shape_cast %77 : vector<1x1x512xf32> to vector<1x512xf32>
    %79 = vector.broadcast %78 : vector<1x512xf32> to vector<16x512xf32>
    %80 = arith.addf %76, %79 : vector<16x512xf32>
    %cst_39 = arith.constant 0.000000e+00 : f32
    %81 = vector.broadcast %cst_39 : f32 to vector<16x512xf32>
    %82 = arith.maximumf %80, %81 : vector<16x512xf32>
    %83 = arith.truncf %82 : vector<16x512xf32> to vector<16x512xbf16>
    %c0_40 = arith.constant 0 : index
    %c0_41 = arith.constant 0 : index
    %c0_42 = arith.constant 0 : index
    %84 = vector.load %arg13[%c0_40, %c0_41, %c0_42] : memref<1x512x128xbf16, #tpu.memory_space<vmem>>, vector<1x512x128xbf16>
    %85 = vector.shape_cast %84 : vector<1x512x128xbf16> to vector<512x128xbf16>
    %cst_43 = arith.constant dense<0.000000e+00> : vector<16x128xf32>
    %86 = tpu.matmul %83, %85, %cst_43 {dimension_numbers = #tpu.dot_dimension_numbers<[1], [0], [0], [1], [0, 0, 1, 1], [], []>} : vector<16x512xbf16>, vector<512x128xbf16>, vector<16x128xf32> -> vector<16x128xf32>
    %c0_44 = arith.constant 0 : index
    %c0_45 = arith.constant 0 : index
    %c0_46 = arith.constant 0 : index
    %87 = vector.load %arg14[%c0_44, %c0_45, %c0_46] : memref<1x1x128xf32, #tpu.memory_space<vmem>>, vector<1x1x128xf32>
    %88 = vector.shape_cast %87 : vector<1x1x128xf32> to vector<1x128xf32>
    %89 = vector.broadcast %88 : vector<1x128xf32> to vector<16x128xf32>
    %90 = arith.addf %86, %89 : vector<16x128xf32>
    %91 = arith.addf %72, %90 : vector<16x128xf32>
    %c0_47 = arith.constant 0 : index
    %c0_48 = arith.constant 0 : index
    %c0_49 = arith.constant 0 : index
    %92 = vector.load %arg15[%c0_47, %c0_48, %c0_49] : memref<1x1x128xf32, #tpu.memory_space<vmem>>, vector<1x1x128xf32>
    %93 = vector.shape_cast %92 : vector<1x1x128xf32> to vector<1x128xf32>
    %c0_50 = arith.constant 0 : index
    %c0_51 = arith.constant 0 : index
    %c0_52 = arith.constant 0 : index
    %94 = vector.load %arg16[%c0_50, %c0_51, %c0_52] : memref<1x1x128xf32, #tpu.memory_space<vmem>>, vector<1x1x128xf32>
    %95 = vector.shape_cast %94 : vector<1x1x128xf32> to vector<1x128xf32>
    %cst_53 = arith.constant dense<0.000000e+00> : vector<16xf32>
    %96 = vector.multi_reduction <add>, %91, %cst_53 [1] : vector<16x128xf32> to vector<16xf32>
    %97 = vector.shape_cast %96 : vector<16xf32> to vector<16x1xf32>
    %cst_54 = arith.constant 1.280000e+02 : f32
    %98 = vector.broadcast %cst_54 : f32 to vector<16x1xf32>
    %99 = arith.divf %97, %98 : vector<16x1xf32>
    %100 = vector.broadcast %99 : vector<16x1xf32> to vector<16x128xf32>
    %101 = arith.subf %91, %100 : vector<16x128xf32>
    %102 = arith.mulf %101, %101 : vector<16x128xf32>
    %cst_55 = arith.constant dense<0.000000e+00> : vector<16xf32>
    %103 = vector.multi_reduction <add>, %102, %cst_55 [1] : vector<16x128xf32> to vector<16xf32>
    %104 = vector.shape_cast %103 : vector<16xf32> to vector<16x1xf32>
    %cst_56 = arith.constant 1.280000e+02 : f32
    %105 = vector.broadcast %cst_56 : f32 to vector<16x1xf32>
    %106 = arith.divf %104, %105 : vector<16x1xf32>
    %107 = vector.broadcast %99 : vector<16x1xf32> to vector<16x128xf32>
    %108 = arith.subf %91, %107 : vector<16x128xf32>
    %cst_57 = arith.constant 9.99999974E-6 : f32
    %109 = vector.broadcast %cst_57 : f32 to vector<16x1xf32>
    %110 = arith.addf %106, %109 : vector<16x1xf32>
    %111 = math.rsqrt %110 : vector<16x1xf32>
    %112 = vector.broadcast %111 : vector<16x1xf32> to vector<16x128xf32>
    %113 = arith.mulf %108, %112 : vector<16x128xf32>
    %114 = vector.broadcast %93 : vector<1x128xf32> to vector<16x128xf32>
    %115 = arith.mulf %113, %114 : vector<16x128xf32>
    %116 = vector.broadcast %95 : vector<1x128xf32> to vector<16x128xf32>
    %117 = arith.addf %115, %116 : vector<16x128xf32>
    %118 = vector.shape_cast %117 : vector<16x128xf32> to vector<2x8x128xf32>
    %c1_i32 = arith.constant 1 : i32
    %119 = arith.cmpi eq, %arg0, %c1_i32 : i32
    %120 = arith.extui %119 : i1 to i32
    %c0_i32_58 = arith.constant 0 : i32
    %121 = arith.cmpi ne, %120, %c0_i32_58 : i32
    scf.if %121 {
      %c0_61 = arith.constant 0 : index
      %c0_62 = arith.constant 0 : index
      %125 = vector.load %arg18[%c0_61, %c0_62] : memref<16x128xf32, #tpu.memory_space<vmem>>, vector<16x128xf32>
      %126 = vector.shape_cast %125 : vector<16x128xf32> to vector<2x8x128xf32>
      %127 = arith.addf %118, %126 : vector<2x8x128xf32>
      %c0_63 = arith.constant 0 : index
      %c0_64 = arith.constant 0 : index
      %c0_65 = arith.constant 0 : index
      %128 = vector.load %arg17[%c0_63, %c0_64, %c0_65] : memref<2x8x128xf32, #tpu.memory_space<vmem>>, vector<2x8x128xf32>
      tpu.vector_store %arg17[%c0_63, %c0_64, %c0_65], %127 {strides = array<i32>} : memref<2x8x128xf32, #tpu.memory_space<vmem>>, vector<2x8x128xf32>,
    } else {
    }
    %c1_i32_59 = arith.constant 1 : i32
    %122 = arith.cmpi slt, %arg0, %c1_i32_59 : i32
    %123 = arith.extui %122 : i1 to i32
    %c0_i32_60 = arith.constant 0 : i32
    %124 = arith.cmpi ne, %123, %c0_i32_60 : i32
    scf.if %124 {
      %c0_61 = arith.constant 0 : index
      %c0_62 = arith.constant 0 : index
      %c0_63 = arith.constant 0 : index
      %125 = vector.load %arg17[%c0_61, %c0_62, %c0_63] : memref<2x8x128xf32, #tpu.memory_space<vmem>>, vector<2x8x128xf32>
      tpu.vector_store %arg17[%c0_61, %c0_62, %c0_63], %118 {strides = array<i32>} : memref<2x8x128xf32, #tpu.memory_space<vmem>>, vector<2x8x128xf32>,
    } else {
    }
    return
  }
  func.func @transform_0(%arg0: i32) -> (i32, i32) {
    %c0_i32 = arith.constant 0 : i32
    %c0_i32_0 = arith.constant 0 : i32
    %c0_i32_1 = arith.constant 0 : i32
    return %c0_i32, %c0_i32_0 : i32, i32
  }
  func.func @transform_1(%arg0: i32) -> (i32, i32) {
    %c0_i32 = arith.constant 0 : i32
    %c0_i32_0 = arith.constant 0 : i32
    %c0_i32_1 = arith.constant 0 : i32
    return %c0_i32, %c0_i32_0 : i32, i32
  }
  func.func @transform_2(%arg0: i32) -> (i32, i32) {
    %c0_i32 = arith.constant 0 : i32
    %c0_i32_0 = arith.constant 0 : i32
    %c0_i32_1 = arith.constant 0 : i32
    return %c0_i32, %c0_i32_0 : i32, i32
  }
  func.func @transform_3(%arg0: i32) -> (i32, i32) {
    %c0_i32 = arith.constant 0 : i32
    %c0_i32_0 = arith.constant 0 : i32
    %c0_i32_1 = arith.constant 0 : i32
    return %c0_i32, %c0_i32_0 : i32, i32
  }
  func.func @transform_4(%arg0: i32) -> (i32, i32, i32) {
    %c0_i32 = arith.constant 0 : i32
    %c0_i32_0 = arith.constant 0 : i32
    %c0_i32_1 = arith.constant 0 : i32
    return %arg0, %c0_i32, %c0_i32_0 : i32, i32, i32
  }
  func.func @transform_5(%arg0: i32) -> (i32, i32, i32) {
    %c0_i32 = arith.constant 0 : i32
    %c0_i32_0 = arith.constant 0 : i32
    %c0_i32_1 = arith.constant 0 : i32
    return %arg0, %c0_i32, %c0_i32_0 : i32, i32, i32
  }
  func.func @transform_6(%arg0: i32) -> (i32, i32, i32) {
    %c0_i32 = arith.constant 0 : i32
    %c0_i32_0 = arith.constant 0 : i32
    %c0_i32_1 = arith.constant 0 : i32
    return %arg0, %c0_i32, %c0_i32_0 : i32, i32, i32
  }
  func.func @transform_7(%arg0: i32) -> (i32, i32, i32) {
    %c0_i32 = arith.constant 0 : i32
    %c0_i32_0 = arith.constant 0 : i32
    %c0_i32_1 = arith.constant 0 : i32
    return %arg0, %c0_i32, %c0_i32_0 : i32, i32, i32
  }
  func.func @transform_8(%arg0: i32) -> (i32, i32, i32) {
    %c0_i32 = arith.constant 0 : i32
    %c0_i32_0 = arith.constant 0 : i32
    %c0_i32_1 = arith.constant 0 : i32
    return %arg0, %c0_i32, %c0_i32_0 : i32, i32, i32
  }
  func.func @transform_9(%arg0: i32) -> (i32, i32, i32) {
    %c0_i32 = arith.constant 0 : i32
    %c0_i32_0 = arith.constant 0 : i32
    %c0_i32_1 = arith.constant 0 : i32
    return %arg0, %c0_i32, %c0_i32_0 : i32, i32, i32
  }
  func.func @transform_10(%arg0: i32) -> (i32, i32, i32) {
    %c0_i32 = arith.constant 0 : i32
    %c0_i32_0 = arith.constant 0 : i32
    %c0_i32_1 = arith.constant 0 : i32
    return %arg0, %c0_i32, %c0_i32_0 : i32, i32, i32
  }
  func.func @transform_11(%arg0: i32) -> (i32, i32, i32) {
    %c0_i32 = arith.constant 0 : i32
    %c0_i32_0 = arith.constant 0 : i32
    %c0_i32_1 = arith.constant 0 : i32
    return %arg0, %c0_i32, %c0_i32_0 : i32, i32, i32
  }
  func.func @transform_12(%arg0: i32) -> (i32, i32, i32) {
    %c0_i32 = arith.constant 0 : i32
    %c0_i32_0 = arith.constant 0 : i32
    %c0_i32_1 = arith.constant 0 : i32
    return %arg0, %c0_i32, %c0_i32_0 : i32, i32, i32
  }
  func.func @transform_13(%arg0: i32) -> (i32, i32, i32) {
    %c0_i32 = arith.constant 0 : i32
    %c0_i32_0 = arith.constant 0 : i32
    %c0_i32_1 = arith.constant 0 : i32
    return %arg0, %c0_i32, %c0_i32_0 : i32, i32, i32
  }
  func.func @transform_14(%arg0: i32) -> (i32, i32, i32) {
    %c0_i32 = arith.constant 0 : i32
    %c0_i32_0 = arith.constant 0 : i32
    %c0_i32_1 = arith.constant 0 : i32
    return %arg0, %c0_i32, %c0_i32_0 : i32, i32, i32
  }
  func.func @transform_15(%arg0: i32) -> (i32, i32, i32) {
    %c0_i32 = arith.constant 0 : i32
    %c0_i32_0 = arith.constant 0 : i32
    %c0_i32_1 = arith.constant 0 : i32
    return %arg0, %c0_i32, %c0_i32_0 : i32, i32, i32
  }
  func.func @transform_16(%arg0: i32) -> (i32, i32, i32) {
    %c0_i32 = arith.constant 0 : i32
    %c0_i32_0 = arith.constant 0 : i32
    %c0_i32_1 = arith.constant 0 : i32
    %c0_i32_2 = arith.constant 0 : i32
    return %c0_i32, %c0_i32_0, %c0_i32_1 : i32, i32, i32
  }
}

module attributes {stable_mosaic.version = 11 : i64} {
  func.func @_decoder_kernel(%arg0: i32, %arg1: memref<16x4xf32, #tpu.memory_space<vmem>>, %arg2: memref<8x128xf32, #tpu.memory_space<vmem>>, %arg3: memref<4x128xf32, #tpu.memory_space<vmem>>, %arg4: memref<1x128xf32, #tpu.memory_space<vmem>>, %arg5: memref<2x8x128xf32, #tpu.memory_space<vmem>>, %arg6: memref<1x128x384xbf16, #tpu.memory_space<vmem>>, %arg7: memref<1x1x384xf32, #tpu.memory_space<vmem>>, %arg8: memref<1x128x128xbf16, #tpu.memory_space<vmem>>, %arg9: memref<1x1x128xf32, #tpu.memory_space<vmem>>, %arg10: memref<1x1x128xf32, #tpu.memory_space<vmem>>, %arg11: memref<1x1x128xf32, #tpu.memory_space<vmem>>, %arg12: memref<1x128x128xbf16, #tpu.memory_space<vmem>>, %arg13: memref<1x1x128xf32, #tpu.memory_space<vmem>>, %arg14: memref<1x128x256xbf16, #tpu.memory_space<vmem>>, %arg15: memref<1x1x256xf32, #tpu.memory_space<vmem>>, %arg16: memref<1x128x128xbf16, #tpu.memory_space<vmem>>, %arg17: memref<1x1x128xf32, #tpu.memory_space<vmem>>, %arg18: memref<1x1x128xf32, #tpu.memory_space<vmem>>, %arg19: memref<1x1x128xf32, #tpu.memory_space<vmem>>, %arg20: memref<1x128x512xbf16, #tpu.memory_space<vmem>>, %arg21: memref<1x1x512xf32, #tpu.memory_space<vmem>>, %arg22: memref<1x512x128xbf16, #tpu.memory_space<vmem>>, %arg23: memref<1x1x128xf32, #tpu.memory_space<vmem>>, %arg24: memref<1x1x128xf32, #tpu.memory_space<vmem>>, %arg25: memref<1x1x128xf32, #tpu.memory_space<vmem>>, %arg26: memref<1x128xf32, #tpu.memory_space<vmem>>, %arg27: memref<1x1xf32, #tpu.memory_space<vmem>>, %arg28: memref<1x8xf32, #tpu.memory_space<vmem>>, %arg29: memref<1x1xf32, #tpu.memory_space<vmem>>, %arg30: memref<2x1xf32, #tpu.memory_space<vmem>>, %arg31: memref<2x8x128xf32, #tpu.memory_space<vmem>>, %arg32: memref<16x128xf32, #tpu.memory_space<vmem>>) attributes {dimension_semantics = [#tpu.dimension_semantics<arbitrary>], iteration_bounds = array<i64: 4>, scalar_prefetch = 0 : i64, scratch_operands = 2 : i64, tpu.core_type = #tpu.core_type<tc>, window_params = [{pipeline_mode = #tpu.pipeline_mode<synchronous>, transform_indices = @transform_0, window_bounds = array<i64: 16, 4>}, {pipeline_mode = #tpu.pipeline_mode<synchronous>, transform_indices = @transform_1, window_bounds = array<i64: 8, 128>}, {pipeline_mode = #tpu.pipeline_mode<synchronous>, transform_indices = @transform_2, window_bounds = array<i64: 4, 128>}, {pipeline_mode = #tpu.pipeline_mode<synchronous>, transform_indices = @transform_3, window_bounds = array<i64: 1, 128>}, {pipeline_mode = #tpu.pipeline_mode<synchronous>, transform_indices = @transform_4, window_bounds = array<i64: 2, 8, 128>}, {transform_indices = @transform_5, window_bounds = array<i64: 1, 128, 384>}, {transform_indices = @transform_6, window_bounds = array<i64: 1, 1, 384>}, {transform_indices = @transform_7, window_bounds = array<i64: 1, 128, 128>}, {transform_indices = @transform_8, window_bounds = array<i64: 1, 1, 128>}, {transform_indices = @transform_9, window_bounds = array<i64: 1, 1, 128>}, {transform_indices = @transform_10, window_bounds = array<i64: 1, 1, 128>}, {transform_indices = @transform_11, window_bounds = array<i64: 1, 128, 128>}, {transform_indices = @transform_12, window_bounds = array<i64: 1, 1, 128>}, {transform_indices = @transform_13, window_bounds = array<i64: 1, 128, 256>}, {transform_indices = @transform_14, window_bounds = array<i64: 1, 1, 256>}, {transform_indices = @transform_15, window_bounds = array<i64: 1, 128, 128>}, {transform_indices = @transform_16, window_bounds = array<i64: 1, 1, 128>}, {transform_indices = @transform_17, window_bounds = array<i64: 1, 1, 128>}, {transform_indices = @transform_18, window_bounds = array<i64: 1, 1, 128>}, {transform_indices = @transform_19, window_bounds = array<i64: 1, 128, 512>}, {transform_indices = @transform_20, window_bounds = array<i64: 1, 1, 512>}, {transform_indices = @transform_21, window_bounds = array<i64: 1, 512, 128>}, {transform_indices = @transform_22, window_bounds = array<i64: 1, 1, 128>}, {transform_indices = @transform_23, window_bounds = array<i64: 1, 1, 128>}, {transform_indices = @transform_24, window_bounds = array<i64: 1, 1, 128>}, {pipeline_mode = #tpu.pipeline_mode<synchronous>, transform_indices = @transform_25, window_bounds = array<i64: 1, 128>}, {pipeline_mode = #tpu.pipeline_mode<synchronous>, transform_indices = @transform_26, window_bounds = array<i64: 1, 1>}, {pipeline_mode = #tpu.pipeline_mode<synchronous>, transform_indices = @transform_27, window_bounds = array<i64: 1, 8>}, {pipeline_mode = #tpu.pipeline_mode<synchronous>, transform_indices = @transform_28, window_bounds = array<i64: 1, 1>}, {pipeline_mode = #tpu.pipeline_mode<synchronous>, transform_indices = @transform_29, window_bounds = array<i64: 2, 1>}]} {
    %c0_i32 = arith.constant 0 : i32
    %0 = arith.cmpi eq, %arg0, %c0_i32 : i32
    %1 = arith.extui %0 : i1 to i32
    %c0_i32_0 = arith.constant 0 : i32
    %2 = arith.cmpi ne, %1, %c0_i32_0 : i32
    scf.if %2 {
      %c0_103 = arith.constant 0 : index
      %c0_104 = arith.constant 0 : index
      %205 = vector.load %arg1[%c0_103, %c0_104] : memref<16x4xf32, #tpu.memory_space<vmem>>, vector<16x4xf32>
      %c0_105 = arith.constant 0 : index
      %c0_106 = arith.constant 0 : index
      %206 = vector.load %arg3[%c0_105, %c0_106] : memref<4x128xf32, #tpu.memory_space<vmem>>, vector<4x128xf32>
      %cst_107 = arith.constant dense<0.000000e+00> : vector<16x128xf32>
      %207 = tpu.matmul %205, %206, %cst_107 {dimension_numbers = #tpu.dot_dimension_numbers<[1], [0], [0], [1], [0, 0, 1, 1], [], []>} : vector<16x4xf32>, vector<4x128xf32>, vector<16x128xf32> -> vector<16x128xf32>
      %c0_108 = arith.constant 0 : index
      %c0_109 = arith.constant 0 : index
      %208 = vector.load %arg4[%c0_108, %c0_109] : memref<1x128xf32, #tpu.memory_space<vmem>>, vector<1x128xf32>
      %209 = vector.broadcast %208 : vector<1x128xf32> to vector<16x128xf32>
      %210 = arith.addf %207, %209 : vector<16x128xf32>
      %c0_110 = arith.constant 0 : index
      %c0_111 = arith.constant 0 : index
      %211 = vector.load %arg32[%c0_110, %c0_111] : memref<16x128xf32, #tpu.memory_space<vmem>>, vector<16x128xf32>
      tpu.vector_store %arg32[%c0_110, %c0_111], %210 {strides = array<i32>} : memref<16x128xf32, #tpu.memory_space<vmem>>, vector<16x128xf32>,
      %212 = vector.shape_cast %210 : vector<16x128xf32> to vector<2x8x128xf32>
      %c0_112 = arith.constant 0 : index
      %c0_113 = arith.constant 0 : index
      %213 = vector.load %arg2[%c0_112, %c0_113] : memref<8x128xf32, #tpu.memory_space<vmem>>, vector<8x128xf32>
      %214 = vector.shape_cast %213 : vector<8x128xf32> to vector<1x8x128xf32>
      %215 = vector.broadcast %214 : vector<1x8x128xf32> to vector<2x8x128xf32>
      %216 = arith.addf %212, %215 : vector<2x8x128xf32>
      %c0_114 = arith.constant 0 : index
      %c0_115 = arith.constant 0 : index
      %c0_116 = arith.constant 0 : index
      %217 = vector.load %arg31[%c0_114, %c0_115, %c0_116] : memref<2x8x128xf32, #tpu.memory_space<vmem>>, vector<2x8x128xf32>
      tpu.vector_store %arg31[%c0_114, %c0_115, %c0_116], %216 {strides = array<i32>} : memref<2x8x128xf32, #tpu.memory_space<vmem>>, vector<2x8x128xf32>,
    } else {
    }
    %c0 = arith.constant 0 : index
    %c0_1 = arith.constant 0 : index
    %c0_2 = arith.constant 0 : index
    %3 = vector.load %arg31[%c0, %c0_1, %c0_2] : memref<2x8x128xf32, #tpu.memory_space<vmem>>, vector<2x8x128xf32>
    %4 = vector.shape_cast %3 : vector<2x8x128xf32> to vector<16x128xf32>
    %5 = arith.truncf %4 : vector<16x128xf32> to vector<16x128xbf16>
    %c0_3 = arith.constant 0 : index
    %c0_4 = arith.constant 0 : index
    %c0_5 = arith.constant 0 : index
    %6 = vector.load %arg6[%c0_3, %c0_4, %c0_5] : memref<1x128x384xbf16, #tpu.memory_space<vmem>>, vector<1x128x384xbf16>
    %7 = vector.shape_cast %6 : vector<1x128x384xbf16> to vector<128x384xbf16>
    %cst = arith.constant dense<0.000000e+00> : vector<16x384xf32>
    %8 = tpu.matmul %5, %7, %cst {dimension_numbers = #tpu.dot_dimension_numbers<[1], [0], [0], [1], [0, 0, 1, 1], [], []>} : vector<16x128xbf16>, vector<128x384xbf16>, vector<16x384xf32> -> vector<16x384xf32>
    %c0_6 = arith.constant 0 : index
    %c0_7 = arith.constant 0 : index
    %c0_8 = arith.constant 0 : index
    %9 = vector.load %arg7[%c0_6, %c0_7, %c0_8] : memref<1x1x384xf32, #tpu.memory_space<vmem>>, vector<1x1x384xf32>
    %10 = vector.shape_cast %9 : vector<1x1x384xf32> to vector<1x384xf32>
    %11 = vector.broadcast %10 : vector<1x384xf32> to vector<16x384xf32>
    %12 = arith.addf %8, %11 : vector<16x384xf32>
    %13 = vector.extract_strided_slice %12 {offsets = [0, 0], sizes = [16, 128], strides = [1, 1]} : vector<16x384xf32> to vector<16x128xf32>
    %14 = vector.shape_cast %13 : vector<16x128xf32> to vector<2x8x128xf32>
    %15 = vector.extract_strided_slice %12 {offsets = [0, 128], sizes = [16, 128], strides = [1, 1]} : vector<16x384xf32> to vector<16x128xf32>
    %16 = vector.shape_cast %15 : vector<16x128xf32> to vector<2x8x128xf32>
    %17 = vector.extract_strided_slice %12 {offsets = [0, 256], sizes = [16, 128], strides = [1, 1]} : vector<16x384xf32> to vector<16x128xf32>
    %18 = vector.shape_cast %17 : vector<16x128xf32> to vector<2x8x128xf32>
    %19 = arith.truncf %14 : vector<2x8x128xf32> to vector<2x8x128xbf16>
    %20 = arith.truncf %16 : vector<2x8x128xf32> to vector<2x8x128xbf16>
    "tpu.trace_start"() <{level = 10 : i32, message = "bqd,bkd->bqk"}> : () -> ()
    %cst_9 = arith.constant dense<0.000000e+00> : vector<2x8x8xf32>
    %21 = tpu.matmul %19, %20, %cst_9 {dimension_numbers = #tpu.dot_dimension_numbers<[2], [2], [1], [1], [0, 0, 0, 1, 1, 1], [0], [0]>} : vector<2x8x128xbf16>, vector<2x8x128xbf16>, vector<2x8x8xf32> -> vector<2x8x8xf32>
    "tpu.trace_stop"() : () -> ()
    %cst_10 = arith.constant 0.0883883461 : f32
    %22 = vector.broadcast %cst_10 : f32 to vector<2x8x8xf32>
    %23 = arith.mulf %21, %22 : vector<2x8x8xf32>
    %24 = tpu.iota {dimensions = array<i32: 1>} : vector<2x8x8xi32>
    %25 = tpu.iota {dimensions = array<i32: 2>} : vector<2x8x8xi32>
    %26 = arith.cmpi sge, %24, %25 : vector<2x8x8xi32>
    %cst_11 = arith.constant 0xFF800000 : f32
    %27 = vector.broadcast %cst_11 : f32 to vector<2x8x8xf32>
    %28 = arith.select %26, %23, %27 : vector<2x8x8xi1>, vector<2x8x8xf32>
    %cst_12 = arith.constant dense<0xFF800000> : vector<2x8xf32>
    %29 = vector.multi_reduction <maximumf>, %28, %cst_12 [2] : vector<2x8x8xf32> to vector<2x8xf32>
    %30 = vector.shape_cast %29 : vector<2x8xf32> to vector<2x8x1xf32>
    %31 = vector.broadcast %30 : vector<2x8x1xf32> to vector<2x8x8xf32>
    %32 = arith.subf %28, %31 : vector<2x8x8xf32>
    %33 = math.exp %32 : vector<2x8x8xf32>
    %cst_13 = arith.constant dense<0.000000e+00> : vector<2x8xf32>
    %34 = vector.multi_reduction <add>, %33, %cst_13 [2] : vector<2x8x8xf32> to vector<2x8xf32>
    %35 = vector.shape_cast %34 : vector<2x8xf32> to vector<2x8x1xf32>
    %36 = tpu.reciprocal %35 {approx = true} : vector<2x8x1xf32> -> vector<2x8x1xf32>
    %37 = vector.broadcast %36 : vector<2x8x1xf32> to vector<2x8x8xf32>
    %38 = arith.mulf %33, %37 : vector<2x8x8xf32>
    %39 = arith.truncf %38 : vector<2x8x8xf32> to vector<2x8x8xbf16>
    %40 = arith.truncf %18 : vector<2x8x128xf32> to vector<2x8x128xbf16>
    "tpu.trace_start"() <{level = 10 : i32, message = "bqk,bkd->bqd"}> : () -> ()
    %cst_14 = arith.constant dense<0.000000e+00> : vector<2x8x128xf32>
    %41 = tpu.matmul %39, %40, %cst_14 {dimension_numbers = #tpu.dot_dimension_numbers<[2], [1], [1], [2], [0, 0, 0, 1, 1, 2], [0], [0]>} : vector<2x8x8xbf16>, vector<2x8x128xbf16>, vector<2x8x128xf32> -> vector<2x8x128xf32>
    "tpu.trace_stop"() : () -> ()
    %42 = vector.shape_cast %41 : vector<2x8x128xf32> to vector<16x128xf32>
    %43 = arith.truncf %42 : vector<16x128xf32> to vector<16x128xbf16>
    %c0_15 = arith.constant 0 : index
    %c0_16 = arith.constant 0 : index
    %c0_17 = arith.constant 0 : index
    %44 = vector.load %arg8[%c0_15, %c0_16, %c0_17] : memref<1x128x128xbf16, #tpu.memory_space<vmem>>, vector<1x128x128xbf16>
    %45 = vector.shape_cast %44 : vector<1x128x128xbf16> to vector<128x128xbf16>
    %cst_18 = arith.constant dense<0.000000e+00> : vector<16x128xf32>
    %46 = tpu.matmul %43, %45, %cst_18 {dimension_numbers = #tpu.dot_dimension_numbers<[1], [0], [0], [1], [0, 0, 1, 1], [], []>} : vector<16x128xbf16>, vector<128x128xbf16>, vector<16x128xf32> -> vector<16x128xf32>
    %c0_19 = arith.constant 0 : index
    %c0_20 = arith.constant 0 : index
    %c0_21 = arith.constant 0 : index
    %47 = vector.load %arg9[%c0_19, %c0_20, %c0_21] : memref<1x1x128xf32, #tpu.memory_space<vmem>>, vector<1x1x128xf32>
    %48 = vector.shape_cast %47 : vector<1x1x128xf32> to vector<1x128xf32>
    %49 = vector.broadcast %48 : vector<1x128xf32> to vector<16x128xf32>
    %50 = arith.addf %46, %49 : vector<16x128xf32>
    %51 = arith.addf %4, %50 : vector<16x128xf32>
    %c0_22 = arith.constant 0 : index
    %c0_23 = arith.constant 0 : index
    %c0_24 = arith.constant 0 : index
    %52 = vector.load %arg10[%c0_22, %c0_23, %c0_24] : memref<1x1x128xf32, #tpu.memory_space<vmem>>, vector<1x1x128xf32>
    %53 = vector.shape_cast %52 : vector<1x1x128xf32> to vector<1x128xf32>
    %c0_25 = arith.constant 0 : index
    %c0_26 = arith.constant 0 : index
    %c0_27 = arith.constant 0 : index
    %54 = vector.load %arg11[%c0_25, %c0_26, %c0_27] : memref<1x1x128xf32, #tpu.memory_space<vmem>>, vector<1x1x128xf32>
    %55 = vector.shape_cast %54 : vector<1x1x128xf32> to vector<1x128xf32>
    %cst_28 = arith.constant dense<0.000000e+00> : vector<16xf32>
    %56 = vector.multi_reduction <add>, %51, %cst_28 [1] : vector<16x128xf32> to vector<16xf32>
    %57 = vector.shape_cast %56 : vector<16xf32> to vector<16x1xf32>
    %cst_29 = arith.constant 1.280000e+02 : f32
    %58 = vector.broadcast %cst_29 : f32 to vector<16x1xf32>
    %59 = arith.divf %57, %58 : vector<16x1xf32>
    %60 = vector.broadcast %59 : vector<16x1xf32> to vector<16x128xf32>
    %61 = arith.subf %51, %60 : vector<16x128xf32>
    %62 = arith.mulf %61, %61 : vector<16x128xf32>
    %cst_30 = arith.constant dense<0.000000e+00> : vector<16xf32>
    %63 = vector.multi_reduction <add>, %62, %cst_30 [1] : vector<16x128xf32> to vector<16xf32>
    %64 = vector.shape_cast %63 : vector<16xf32> to vector<16x1xf32>
    %cst_31 = arith.constant 1.280000e+02 : f32
    %65 = vector.broadcast %cst_31 : f32 to vector<16x1xf32>
    %66 = arith.divf %64, %65 : vector<16x1xf32>
    %67 = vector.broadcast %59 : vector<16x1xf32> to vector<16x128xf32>
    %68 = arith.subf %51, %67 : vector<16x128xf32>
    %cst_32 = arith.constant 9.99999974E-6 : f32
    %69 = vector.broadcast %cst_32 : f32 to vector<16x1xf32>
    %70 = arith.addf %66, %69 : vector<16x1xf32>
    %71 = math.rsqrt %70 : vector<16x1xf32>
    %72 = vector.broadcast %71 : vector<16x1xf32> to vector<16x128xf32>
    %73 = arith.mulf %68, %72 : vector<16x128xf32>
    %74 = vector.broadcast %53 : vector<1x128xf32> to vector<16x128xf32>
    %75 = arith.mulf %73, %74 : vector<16x128xf32>
    %76 = vector.broadcast %55 : vector<1x128xf32> to vector<16x128xf32>
    %77 = arith.addf %75, %76 : vector<16x128xf32>
    %78 = arith.truncf %77 : vector<16x128xf32> to vector<16x128xbf16>
    %c0_33 = arith.constant 0 : index
    %c0_34 = arith.constant 0 : index
    %c0_35 = arith.constant 0 : index
    %79 = vector.load %arg12[%c0_33, %c0_34, %c0_35] : memref<1x128x128xbf16, #tpu.memory_space<vmem>>, vector<1x128x128xbf16>
    %80 = vector.shape_cast %79 : vector<1x128x128xbf16> to vector<128x128xbf16>
    %cst_36 = arith.constant dense<0.000000e+00> : vector<16x128xf32>
    %81 = tpu.matmul %78, %80, %cst_36 {dimension_numbers = #tpu.dot_dimension_numbers<[1], [0], [0], [1], [0, 0, 1, 1], [], []>} : vector<16x128xbf16>, vector<128x128xbf16>, vector<16x128xf32> -> vector<16x128xf32>
    %c0_37 = arith.constant 0 : index
    %c0_38 = arith.constant 0 : index
    %c0_39 = arith.constant 0 : index
    %82 = vector.load %arg13[%c0_37, %c0_38, %c0_39] : memref<1x1x128xf32, #tpu.memory_space<vmem>>, vector<1x1x128xf32>
    %83 = vector.shape_cast %82 : vector<1x1x128xf32> to vector<1x128xf32>
    %84 = vector.broadcast %83 : vector<1x128xf32> to vector<16x128xf32>
    %85 = arith.addf %81, %84 : vector<16x128xf32>
    %86 = vector.shape_cast %85 : vector<16x128xf32> to vector<2x8x128xf32>
    %c0_40 = arith.constant 0 : index
    %c0_41 = arith.constant 0 : index
    %c0_42 = arith.constant 0 : index
    %87 = vector.load %arg5[%c0_40, %c0_41, %c0_42] : memref<2x8x128xf32, #tpu.memory_space<vmem>>, vector<2x8x128xf32>
    %88 = vector.shape_cast %87 : vector<2x8x128xf32> to vector<16x128xf32>
    %89 = arith.truncf %88 : vector<16x128xf32> to vector<16x128xbf16>
    %c0_43 = arith.constant 0 : index
    %c0_44 = arith.constant 0 : index
    %c0_45 = arith.constant 0 : index
    %90 = vector.load %arg14[%c0_43, %c0_44, %c0_45] : memref<1x128x256xbf16, #tpu.memory_space<vmem>>, vector<1x128x256xbf16>
    %91 = vector.shape_cast %90 : vector<1x128x256xbf16> to vector<128x256xbf16>
    %cst_46 = arith.constant dense<0.000000e+00> : vector<16x256xf32>
    %92 = tpu.matmul %89, %91, %cst_46 {dimension_numbers = #tpu.dot_dimension_numbers<[1], [0], [0], [1], [0, 0, 1, 1], [], []>} : vector<16x128xbf16>, vector<128x256xbf16>, vector<16x256xf32> -> vector<16x256xf32>
    %c0_47 = arith.constant 0 : index
    %c0_48 = arith.constant 0 : index
    %c0_49 = arith.constant 0 : index
    %93 = vector.load %arg15[%c0_47, %c0_48, %c0_49] : memref<1x1x256xf32, #tpu.memory_space<vmem>>, vector<1x1x256xf32>
    %94 = vector.shape_cast %93 : vector<1x1x256xf32> to vector<1x256xf32>
    %95 = vector.broadcast %94 : vector<1x256xf32> to vector<16x256xf32>
    %96 = arith.addf %92, %95 : vector<16x256xf32>
    %97 = vector.extract_strided_slice %96 {offsets = [0, 0], sizes = [16, 128], strides = [1, 1]} : vector<16x256xf32> to vector<16x128xf32>
    %98 = vector.shape_cast %97 : vector<16x128xf32> to vector<2x8x128xf32>
    %99 = vector.extract_strided_slice %96 {offsets = [0, 128], sizes = [16, 128], strides = [1, 1]} : vector<16x256xf32> to vector<16x128xf32>
    %100 = vector.shape_cast %99 : vector<16x128xf32> to vector<2x8x128xf32>
    %101 = arith.truncf %86 : vector<2x8x128xf32> to vector<2x8x128xbf16>
    %102 = arith.truncf %98 : vector<2x8x128xf32> to vector<2x8x128xbf16>
    "tpu.trace_start"() <{level = 10 : i32, message = "bqd,bkd->bqk"}> : () -> ()
    %cst_50 = arith.constant dense<0.000000e+00> : vector<2x8x8xf32>
    %103 = tpu.matmul %101, %102, %cst_50 {dimension_numbers = #tpu.dot_dimension_numbers<[2], [2], [1], [1], [0, 0, 0, 1, 1, 1], [0], [0]>} : vector<2x8x128xbf16>, vector<2x8x128xbf16>, vector<2x8x8xf32> -> vector<2x8x8xf32>
    "tpu.trace_stop"() : () -> ()
    %cst_51 = arith.constant 0.0883883461 : f32
    %104 = vector.broadcast %cst_51 : f32 to vector<2x8x8xf32>
    %105 = arith.mulf %103, %104 : vector<2x8x8xf32>
    %cst_52 = arith.constant dense<0xFF800000> : vector<2x8xf32>
    %106 = vector.multi_reduction <maximumf>, %105, %cst_52 [2] : vector<2x8x8xf32> to vector<2x8xf32>
    %107 = vector.shape_cast %106 : vector<2x8xf32> to vector<2x8x1xf32>
    %108 = vector.broadcast %107 : vector<2x8x1xf32> to vector<2x8x8xf32>
    %109 = arith.subf %105, %108 : vector<2x8x8xf32>
    %110 = math.exp %109 : vector<2x8x8xf32>
    %cst_53 = arith.constant dense<0.000000e+00> : vector<2x8xf32>
    %111 = vector.multi_reduction <add>, %110, %cst_53 [2] : vector<2x8x8xf32> to vector<2x8xf32>
    %112 = vector.shape_cast %111 : vector<2x8xf32> to vector<2x8x1xf32>
    %113 = tpu.reciprocal %112 {approx = true} : vector<2x8x1xf32> -> vector<2x8x1xf32>
    %114 = vector.broadcast %113 : vector<2x8x1xf32> to vector<2x8x8xf32>
    %115 = arith.mulf %110, %114 : vector<2x8x8xf32>
    %116 = arith.truncf %115 : vector<2x8x8xf32> to vector<2x8x8xbf16>
    %117 = arith.truncf %100 : vector<2x8x128xf32> to vector<2x8x128xbf16>
    "tpu.trace_start"() <{level = 10 : i32, message = "bqk,bkd->bqd"}> : () -> ()
    %cst_54 = arith.constant dense<0.000000e+00> : vector<2x8x128xf32>
    %118 = tpu.matmul %116, %117, %cst_54 {dimension_numbers = #tpu.dot_dimension_numbers<[2], [1], [1], [2], [0, 0, 0, 1, 1, 2], [0], [0]>} : vector<2x8x8xbf16>, vector<2x8x128xbf16>, vector<2x8x128xf32> -> vector<2x8x128xf32>
    "tpu.trace_stop"() : () -> ()
    %119 = vector.shape_cast %118 : vector<2x8x128xf32> to vector<16x128xf32>
    %120 = arith.truncf %119 : vector<16x128xf32> to vector<16x128xbf16>
    %c0_55 = arith.constant 0 : index
    %c0_56 = arith.constant 0 : index
    %c0_57 = arith.constant 0 : index
    %121 = vector.load %arg16[%c0_55, %c0_56, %c0_57] : memref<1x128x128xbf16, #tpu.memory_space<vmem>>, vector<1x128x128xbf16>
    %122 = vector.shape_cast %121 : vector<1x128x128xbf16> to vector<128x128xbf16>
    %cst_58 = arith.constant dense<0.000000e+00> : vector<16x128xf32>
    %123 = tpu.matmul %120, %122, %cst_58 {dimension_numbers = #tpu.dot_dimension_numbers<[1], [0], [0], [1], [0, 0, 1, 1], [], []>} : vector<16x128xbf16>, vector<128x128xbf16>, vector<16x128xf32> -> vector<16x128xf32>
    %c0_59 = arith.constant 0 : index
    %c0_60 = arith.constant 0 : index
    %c0_61 = arith.constant 0 : index
    %124 = vector.load %arg17[%c0_59, %c0_60, %c0_61] : memref<1x1x128xf32, #tpu.memory_space<vmem>>, vector<1x1x128xf32>
    %125 = vector.shape_cast %124 : vector<1x1x128xf32> to vector<1x128xf32>
    %126 = vector.broadcast %125 : vector<1x128xf32> to vector<16x128xf32>
    %127 = arith.addf %123, %126 : vector<16x128xf32>
    %128 = arith.addf %77, %127 : vector<16x128xf32>
    %c0_62 = arith.constant 0 : index
    %c0_63 = arith.constant 0 : index
    %c0_64 = arith.constant 0 : index
    %129 = vector.load %arg18[%c0_62, %c0_63, %c0_64] : memref<1x1x128xf32, #tpu.memory_space<vmem>>, vector<1x1x128xf32>
    %130 = vector.shape_cast %129 : vector<1x1x128xf32> to vector<1x128xf32>
    %c0_65 = arith.constant 0 : index
    %c0_66 = arith.constant 0 : index
    %c0_67 = arith.constant 0 : index
    %131 = vector.load %arg19[%c0_65, %c0_66, %c0_67] : memref<1x1x128xf32, #tpu.memory_space<vmem>>, vector<1x1x128xf32>
    %132 = vector.shape_cast %131 : vector<1x1x128xf32> to vector<1x128xf32>
    %cst_68 = arith.constant dense<0.000000e+00> : vector<16xf32>
    %133 = vector.multi_reduction <add>, %128, %cst_68 [1] : vector<16x128xf32> to vector<16xf32>
    %134 = vector.shape_cast %133 : vector<16xf32> to vector<16x1xf32>
    %cst_69 = arith.constant 1.280000e+02 : f32
    %135 = vector.broadcast %cst_69 : f32 to vector<16x1xf32>
    %136 = arith.divf %134, %135 : vector<16x1xf32>
    %137 = vector.broadcast %136 : vector<16x1xf32> to vector<16x128xf32>
    %138 = arith.subf %128, %137 : vector<16x128xf32>
    %139 = arith.mulf %138, %138 : vector<16x128xf32>
    %cst_70 = arith.constant dense<0.000000e+00> : vector<16xf32>
    %140 = vector.multi_reduction <add>, %139, %cst_70 [1] : vector<16x128xf32> to vector<16xf32>
    %141 = vector.shape_cast %140 : vector<16xf32> to vector<16x1xf32>
    %cst_71 = arith.constant 1.280000e+02 : f32
    %142 = vector.broadcast %cst_71 : f32 to vector<16x1xf32>
    %143 = arith.divf %141, %142 : vector<16x1xf32>
    %144 = vector.broadcast %136 : vector<16x1xf32> to vector<16x128xf32>
    %145 = arith.subf %128, %144 : vector<16x128xf32>
    %cst_72 = arith.constant 9.99999974E-6 : f32
    %146 = vector.broadcast %cst_72 : f32 to vector<16x1xf32>
    %147 = arith.addf %143, %146 : vector<16x1xf32>
    %148 = math.rsqrt %147 : vector<16x1xf32>
    %149 = vector.broadcast %148 : vector<16x1xf32> to vector<16x128xf32>
    %150 = arith.mulf %145, %149 : vector<16x128xf32>
    %151 = vector.broadcast %130 : vector<1x128xf32> to vector<16x128xf32>
    %152 = arith.mulf %150, %151 : vector<16x128xf32>
    %153 = vector.broadcast %132 : vector<1x128xf32> to vector<16x128xf32>
    %154 = arith.addf %152, %153 : vector<16x128xf32>
    %155 = arith.truncf %154 : vector<16x128xf32> to vector<16x128xbf16>
    %c0_73 = arith.constant 0 : index
    %c0_74 = arith.constant 0 : index
    %c0_75 = arith.constant 0 : index
    %156 = vector.load %arg20[%c0_73, %c0_74, %c0_75] : memref<1x128x512xbf16, #tpu.memory_space<vmem>>, vector<1x128x512xbf16>
    %157 = vector.shape_cast %156 : vector<1x128x512xbf16> to vector<128x512xbf16>
    %cst_76 = arith.constant dense<0.000000e+00> : vector<16x512xf32>
    %158 = tpu.matmul %155, %157, %cst_76 {dimension_numbers = #tpu.dot_dimension_numbers<[1], [0], [0], [1], [0, 0, 1, 1], [], []>} : vector<16x128xbf16>, vector<128x512xbf16>, vector<16x512xf32> -> vector<16x512xf32>
    %c0_77 = arith.constant 0 : index
    %c0_78 = arith.constant 0 : index
    %c0_79 = arith.constant 0 : index
    %159 = vector.load %arg21[%c0_77, %c0_78, %c0_79] : memref<1x1x512xf32, #tpu.memory_space<vmem>>, vector<1x1x512xf32>
    %160 = vector.shape_cast %159 : vector<1x1x512xf32> to vector<1x512xf32>
    %161 = vector.broadcast %160 : vector<1x512xf32> to vector<16x512xf32>
    %162 = arith.addf %158, %161 : vector<16x512xf32>
    %cst_80 = arith.constant 0.000000e+00 : f32
    %163 = vector.broadcast %cst_80 : f32 to vector<16x512xf32>
    %164 = arith.maximumf %162, %163 : vector<16x512xf32>
    %165 = arith.truncf %164 : vector<16x512xf32> to vector<16x512xbf16>
    %c0_81 = arith.constant 0 : index
    %c0_82 = arith.constant 0 : index
    %c0_83 = arith.constant 0 : index
    %166 = vector.load %arg22[%c0_81, %c0_82, %c0_83] : memref<1x512x128xbf16, #tpu.memory_space<vmem>>, vector<1x512x128xbf16>
    %167 = vector.shape_cast %166 : vector<1x512x128xbf16> to vector<512x128xbf16>
    %cst_84 = arith.constant dense<0.000000e+00> : vector<16x128xf32>
    %168 = tpu.matmul %165, %167, %cst_84 {dimension_numbers = #tpu.dot_dimension_numbers<[1], [0], [0], [1], [0, 0, 1, 1], [], []>} : vector<16x512xbf16>, vector<512x128xbf16>, vector<16x128xf32> -> vector<16x128xf32>
    %c0_85 = arith.constant 0 : index
    %c0_86 = arith.constant 0 : index
    %c0_87 = arith.constant 0 : index
    %169 = vector.load %arg23[%c0_85, %c0_86, %c0_87] : memref<1x1x128xf32, #tpu.memory_space<vmem>>, vector<1x1x128xf32>
    %170 = vector.shape_cast %169 : vector<1x1x128xf32> to vector<1x128xf32>
    %171 = vector.broadcast %170 : vector<1x128xf32> to vector<16x128xf32>
    %172 = arith.addf %168, %171 : vector<16x128xf32>
    %173 = arith.addf %154, %172 : vector<16x128xf32>
    %c0_88 = arith.constant 0 : index
    %c0_89 = arith.constant 0 : index
    %c0_90 = arith.constant 0 : index
    %174 = vector.load %arg24[%c0_88, %c0_89, %c0_90] : memref<1x1x128xf32, #tpu.memory_space<vmem>>, vector<1x1x128xf32>
    %175 = vector.shape_cast %174 : vector<1x1x128xf32> to vector<1x128xf32>
    %c0_91 = arith.constant 0 : index
    %c0_92 = arith.constant 0 : index
    %c0_93 = arith.constant 0 : index
    %176 = vector.load %arg25[%c0_91, %c0_92, %c0_93] : memref<1x1x128xf32, #tpu.memory_space<vmem>>, vector<1x1x128xf32>
    %177 = vector.shape_cast %176 : vector<1x1x128xf32> to vector<1x128xf32>
    %cst_94 = arith.constant dense<0.000000e+00> : vector<16xf32>
    %178 = vector.multi_reduction <add>, %173, %cst_94 [1] : vector<16x128xf32> to vector<16xf32>
    %179 = vector.shape_cast %178 : vector<16xf32> to vector<16x1xf32>
    %cst_95 = arith.constant 1.280000e+02 : f32
    %180 = vector.broadcast %cst_95 : f32 to vector<16x1xf32>
    %181 = arith.divf %179, %180 : vector<16x1xf32>
    %182 = vector.broadcast %181 : vector<16x1xf32> to vector<16x128xf32>
    %183 = arith.subf %173, %182 : vector<16x128xf32>
    %184 = arith.mulf %183, %183 : vector<16x128xf32>
    %cst_96 = arith.constant dense<0.000000e+00> : vector<16xf32>
    %185 = vector.multi_reduction <add>, %184, %cst_96 [1] : vector<16x128xf32> to vector<16xf32>
    %186 = vector.shape_cast %185 : vector<16xf32> to vector<16x1xf32>
    %cst_97 = arith.constant 1.280000e+02 : f32
    %187 = vector.broadcast %cst_97 : f32 to vector<16x1xf32>
    %188 = arith.divf %186, %187 : vector<16x1xf32>
    %189 = vector.broadcast %181 : vector<16x1xf32> to vector<16x128xf32>
    %190 = arith.subf %173, %189 : vector<16x128xf32>
    %cst_98 = arith.constant 9.99999974E-6 : f32
    %191 = vector.broadcast %cst_98 : f32 to vector<16x1xf32>
    %192 = arith.addf %188, %191 : vector<16x1xf32>
    %193 = math.rsqrt %192 : vector<16x1xf32>
    %194 = vector.broadcast %193 : vector<16x1xf32> to vector<16x128xf32>
    %195 = arith.mulf %190, %194 : vector<16x128xf32>
    %196 = vector.broadcast %175 : vector<1x128xf32> to vector<16x128xf32>
    %197 = arith.mulf %195, %196 : vector<16x128xf32>
    %198 = vector.broadcast %177 : vector<1x128xf32> to vector<16x128xf32>
    %199 = arith.addf %197, %198 : vector<16x128xf32>
    %200 = vector.shape_cast %199 : vector<16x128xf32> to vector<2x8x128xf32>
    %c0_99 = arith.constant 0 : index
    %c0_100 = arith.constant 0 : index
    %c0_101 = arith.constant 0 : index
    %201 = vector.load %arg31[%c0_99, %c0_100, %c0_101] : memref<2x8x128xf32, #tpu.memory_space<vmem>>, vector<2x8x128xf32>
    tpu.vector_store %arg31[%c0_99, %c0_100, %c0_101], %200 {strides = array<i32>} : memref<2x8x128xf32, #tpu.memory_space<vmem>>, vector<2x8x128xf32>,
    %c3_i32 = arith.constant 3 : i32
    %202 = arith.cmpi eq, %arg0, %c3_i32 : i32
    %203 = arith.extui %202 : i1 to i32
    %c0_i32_102 = arith.constant 0 : i32
    %204 = arith.cmpi ne, %203, %c0_i32_102 : i32
    scf.if %204 {
      %c0_103 = arith.constant 0 : index
      %c0_104 = arith.constant 0 : index
      %205 = vector.load %arg32[%c0_103, %c0_104] : memref<16x128xf32, #tpu.memory_space<vmem>>, vector<16x128xf32>
      %206 = vector.shape_cast %205 : vector<16x128xf32> to vector<2x8x128xf32>
      %207 = arith.addf %200, %206 : vector<2x8x128xf32>
      %c0_105 = arith.constant 0 : index
      %c0_106 = arith.constant 0 : index
      %208 = vector.load %arg26[%c0_105, %c0_106] : memref<1x128xf32, #tpu.memory_space<vmem>>, vector<1x128xf32>
      %209 = vector.shape_cast %208 : vector<1x128xf32> to vector<1x1x128xf32>
      %210 = vector.broadcast %209 : vector<1x1x128xf32> to vector<2x8x128xf32>
      %211 = arith.mulf %207, %210 : vector<2x8x128xf32>
      %cst_107 = arith.constant dense<0.000000e+00> : vector<2x8xf32>
      %212 = vector.multi_reduction <add>, %211, %cst_107 [2] : vector<2x8x128xf32> to vector<2x8xf32>
      %c0_108 = arith.constant 0 : index
      %c0_109 = arith.constant 0 : index
      %213 = vector.load %arg27[%c0_108, %c0_109] : memref<1x1xf32, #tpu.memory_space<vmem>>, vector<1x1xf32>
      %214 = vector.broadcast %213 : vector<1x1xf32> to vector<2x8xf32>
      %215 = arith.addf %212, %214 : vector<2x8xf32>
      %c0_110 = arith.constant 0 : index
      %c0_111 = arith.constant 0 : index
      %216 = vector.load %arg28[%c0_110, %c0_111] : memref<1x8xf32, #tpu.memory_space<vmem>>, vector<1x8xf32>
      %217 = vector.broadcast %216 : vector<1x8xf32> to vector<2x8xf32>
      %218 = arith.mulf %215, %217 : vector<2x8xf32>
      %cst_112 = arith.constant dense<0.000000e+00> : vector<2xf32>
      %219 = vector.multi_reduction <add>, %218, %cst_112 [1] : vector<2x8xf32> to vector<2xf32>
      %220 = vector.shape_cast %219 : vector<2xf32> to vector<2x1xf32>
      %c0_113 = arith.constant 0 : index
      %c0_114 = arith.constant 0 : index
      %221 = vector.load %arg29[%c0_113, %c0_114] : memref<1x1xf32, #tpu.memory_space<vmem>>, vector<1x1xf32>
      %222 = vector.broadcast %221 : vector<1x1xf32> to vector<2x1xf32>
      %223 = arith.addf %220, %222 : vector<2x1xf32>
      %c0_115 = arith.constant 0 : index
      %c0_116 = arith.constant 0 : index
      %224 = vector.load %arg30[%c0_115, %c0_116] : memref<2x1xf32, #tpu.memory_space<vmem>>, vector<2x1xf32>
      tpu.vector_store %arg30[%c0_115, %c0_116], %223 {strides = array<i32>} : memref<2x1xf32, #tpu.memory_space<vmem>>, vector<2x1xf32>,
    } else {
    }
    return
  }
  func.func @transform_0(%arg0: i32) -> (i32, i32) {
    %c0_i32 = arith.constant 0 : i32
    %c0_i32_0 = arith.constant 0 : i32
    %c0_i32_1 = arith.constant 0 : i32
    return %c0_i32, %c0_i32_0 : i32, i32
  }
  func.func @transform_1(%arg0: i32) -> (i32, i32) {
    %c0_i32 = arith.constant 0 : i32
    %c0_i32_0 = arith.constant 0 : i32
    %c0_i32_1 = arith.constant 0 : i32
    return %c0_i32, %c0_i32_0 : i32, i32
  }
  func.func @transform_2(%arg0: i32) -> (i32, i32) {
    %c0_i32 = arith.constant 0 : i32
    %c0_i32_0 = arith.constant 0 : i32
    %c0_i32_1 = arith.constant 0 : i32
    return %c0_i32, %c0_i32_0 : i32, i32
  }
  func.func @transform_3(%arg0: i32) -> (i32, i32) {
    %c0_i32 = arith.constant 0 : i32
    %c0_i32_0 = arith.constant 0 : i32
    %c0_i32_1 = arith.constant 0 : i32
    return %c0_i32, %c0_i32_0 : i32, i32
  }
  func.func @transform_4(%arg0: i32) -> (i32, i32, i32) {
    %c0_i32 = arith.constant 0 : i32
    %c0_i32_0 = arith.constant 0 : i32
    %c0_i32_1 = arith.constant 0 : i32
    %c0_i32_2 = arith.constant 0 : i32
    return %c0_i32, %c0_i32_0, %c0_i32_1 : i32, i32, i32
  }
  func.func @transform_5(%arg0: i32) -> (i32, i32, i32) {
    %c0_i32 = arith.constant 0 : i32
    %c0_i32_0 = arith.constant 0 : i32
    %c0_i32_1 = arith.constant 0 : i32
    return %arg0, %c0_i32, %c0_i32_0 : i32, i32, i32
  }
  func.func @transform_6(%arg0: i32) -> (i32, i32, i32) {
    %c0_i32 = arith.constant 0 : i32
    %c0_i32_0 = arith.constant 0 : i32
    %c0_i32_1 = arith.constant 0 : i32
    return %arg0, %c0_i32, %c0_i32_0 : i32, i32, i32
  }
  func.func @transform_7(%arg0: i32) -> (i32, i32, i32) {
    %c0_i32 = arith.constant 0 : i32
    %c0_i32_0 = arith.constant 0 : i32
    %c0_i32_1 = arith.constant 0 : i32
    return %arg0, %c0_i32, %c0_i32_0 : i32, i32, i32
  }
  func.func @transform_8(%arg0: i32) -> (i32, i32, i32) {
    %c0_i32 = arith.constant 0 : i32
    %c0_i32_0 = arith.constant 0 : i32
    %c0_i32_1 = arith.constant 0 : i32
    return %arg0, %c0_i32, %c0_i32_0 : i32, i32, i32
  }
  func.func @transform_9(%arg0: i32) -> (i32, i32, i32) {
    %c0_i32 = arith.constant 0 : i32
    %c0_i32_0 = arith.constant 0 : i32
    %c0_i32_1 = arith.constant 0 : i32
    return %arg0, %c0_i32, %c0_i32_0 : i32, i32, i32
  }
  func.func @transform_10(%arg0: i32) -> (i32, i32, i32) {
    %c0_i32 = arith.constant 0 : i32
    %c0_i32_0 = arith.constant 0 : i32
    %c0_i32_1 = arith.constant 0 : i32
    return %arg0, %c0_i32, %c0_i32_0 : i32, i32, i32
  }
  func.func @transform_11(%arg0: i32) -> (i32, i32, i32) {
    %c0_i32 = arith.constant 0 : i32
    %c0_i32_0 = arith.constant 0 : i32
    %c0_i32_1 = arith.constant 0 : i32
    return %arg0, %c0_i32, %c0_i32_0 : i32, i32, i32
  }
  func.func @transform_12(%arg0: i32) -> (i32, i32, i32) {
    %c0_i32 = arith.constant 0 : i32
    %c0_i32_0 = arith.constant 0 : i32
    %c0_i32_1 = arith.constant 0 : i32
    return %arg0, %c0_i32, %c0_i32_0 : i32, i32, i32
  }
  func.func @transform_13(%arg0: i32) -> (i32, i32, i32) {
    %c0_i32 = arith.constant 0 : i32
    %c0_i32_0 = arith.constant 0 : i32
    %c0_i32_1 = arith.constant 0 : i32
    return %arg0, %c0_i32, %c0_i32_0 : i32, i32, i32
  }
  func.func @transform_14(%arg0: i32) -> (i32, i32, i32) {
    %c0_i32 = arith.constant 0 : i32
    %c0_i32_0 = arith.constant 0 : i32
    %c0_i32_1 = arith.constant 0 : i32
    return %arg0, %c0_i32, %c0_i32_0 : i32, i32, i32
  }
  func.func @transform_15(%arg0: i32) -> (i32, i32, i32) {
    %c0_i32 = arith.constant 0 : i32
    %c0_i32_0 = arith.constant 0 : i32
    %c0_i32_1 = arith.constant 0 : i32
    return %arg0, %c0_i32, %c0_i32_0 : i32, i32, i32
  }
  func.func @transform_16(%arg0: i32) -> (i32, i32, i32) {
    %c0_i32 = arith.constant 0 : i32
    %c0_i32_0 = arith.constant 0 : i32
    %c0_i32_1 = arith.constant 0 : i32
    return %arg0, %c0_i32, %c0_i32_0 : i32, i32, i32
  }
  func.func @transform_17(%arg0: i32) -> (i32, i32, i32) {
    %c0_i32 = arith.constant 0 : i32
    %c0_i32_0 = arith.constant 0 : i32
    %c0_i32_1 = arith.constant 0 : i32
    return %arg0, %c0_i32, %c0_i32_0 : i32, i32, i32
  }
  func.func @transform_18(%arg0: i32) -> (i32, i32, i32) {
    %c0_i32 = arith.constant 0 : i32
    %c0_i32_0 = arith.constant 0 : i32
    %c0_i32_1 = arith.constant 0 : i32
    return %arg0, %c0_i32, %c0_i32_0 : i32, i32, i32
  }
  func.func @transform_19(%arg0: i32) -> (i32, i32, i32) {
    %c0_i32 = arith.constant 0 : i32
    %c0_i32_0 = arith.constant 0 : i32
    %c0_i32_1 = arith.constant 0 : i32
    return %arg0, %c0_i32, %c0_i32_0 : i32, i32, i32
  }
  func.func @transform_20(%arg0: i32) -> (i32, i32, i32) {
    %c0_i32 = arith.constant 0 : i32
    %c0_i32_0 = arith.constant 0 : i32
    %c0_i32_1 = arith.constant 0 : i32
    return %arg0, %c0_i32, %c0_i32_0 : i32, i32, i32
  }
  func.func @transform_21(%arg0: i32) -> (i32, i32, i32) {
    %c0_i32 = arith.constant 0 : i32
    %c0_i32_0 = arith.constant 0 : i32
    %c0_i32_1 = arith.constant 0 : i32
    return %arg0, %c0_i32, %c0_i32_0 : i32, i32, i32
  }
  func.func @transform_22(%arg0: i32) -> (i32, i32, i32) {
    %c0_i32 = arith.constant 0 : i32
    %c0_i32_0 = arith.constant 0 : i32
    %c0_i32_1 = arith.constant 0 : i32
    return %arg0, %c0_i32, %c0_i32_0 : i32, i32, i32
  }
  func.func @transform_23(%arg0: i32) -> (i32, i32, i32) {
    %c0_i32 = arith.constant 0 : i32
    %c0_i32_0 = arith.constant 0 : i32
    %c0_i32_1 = arith.constant 0 : i32
    return %arg0, %c0_i32, %c0_i32_0 : i32, i32, i32
  }
  func.func @transform_24(%arg0: i32) -> (i32, i32, i32) {
    %c0_i32 = arith.constant 0 : i32
    %c0_i32_0 = arith.constant 0 : i32
    %c0_i32_1 = arith.constant 0 : i32
    return %arg0, %c0_i32, %c0_i32_0 : i32, i32, i32
  }
  func.func @transform_25(%arg0: i32) -> (i32, i32) {
    %c0_i32 = arith.constant 0 : i32
    %c0_i32_0 = arith.constant 0 : i32
    %c0_i32_1 = arith.constant 0 : i32
    return %c0_i32, %c0_i32_0 : i32, i32
  }
  func.func @transform_26(%arg0: i32) -> (i32, i32) {
    %c0_i32 = arith.constant 0 : i32
    %c0_i32_0 = arith.constant 0 : i32
    %c0_i32_1 = arith.constant 0 : i32
    return %c0_i32, %c0_i32_0 : i32, i32
  }
  func.func @transform_27(%arg0: i32) -> (i32, i32) {
    %c0_i32 = arith.constant 0 : i32
    %c0_i32_0 = arith.constant 0 : i32
    %c0_i32_1 = arith.constant 0 : i32
    return %c0_i32, %c0_i32_0 : i32, i32
  }
  func.func @transform_28(%arg0: i32) -> (i32, i32) {
    %c0_i32 = arith.constant 0 : i32
    %c0_i32_0 = arith.constant 0 : i32
    %c0_i32_1 = arith.constant 0 : i32
    return %c0_i32, %c0_i32_0 : i32, i32
  }
  func.func @transform_29(%arg0: i32) -> (i32, i32) {
    %c0_i32 = arith.constant 0 : i32
    %c0_i32_0 = arith.constant 0 : i32
    %c0_i32_1 = arith.constant 0 : i32
    return %c0_i32, %c0_i32_0 : i32, i32
  }
}

</mosaic_0001>

<llo_original>
// kernel: transformer_forward.2
$region0: #{transformer_forward.2}
  #allocation0 [shape = 'u32[]', space=smem, size = 0x4, offset = 0x4, fixed_abs, tag = 'smem constant byte address 0x4 - core index']
  #allocation1 [shape = 'u32[144,128]{1,0:T(1,128)}', space=vmem, size = 0x12000, scoped, tag = 'internal scratch']
  #allocation2 [shape = 'f32[16,128]{1,0:T(8,128)}', space=vmem, size = 0x2000, scoped, tag = 'scratch operand']
  %s0 = inlined_call_operand.vmem [shape: f32[16,4], index: 0, kind: input, shape index: {}]
  %s1 = inlined_call_operand.vmem [shape: f32[8,128], index: 1, kind: input, shape index: {}]
  %s2 = inlined_call_operand.vmem [shape: f32[4,128], index: 2, kind: input, shape index: {}]
  %s3 = inlined_call_operand.vmem [shape: f32[1,128], index: 3, kind: input, shape index: {}]
  %s4 = inlined_call_operand.hbm [shape: bf16[2,128,384], index: 4, kind: input, shape index: {}]
  %s5 = inlined_call_operand.vmem [shape: f32[2,1,384], index: 5, kind: input, shape index: {}]
  %s6 = inlined_call_operand.hbm [shape: bf16[2,128,128], index: 6, kind: input, shape index: {}]
  %s7 = inlined_call_operand.vmem [shape: f32[2,1,128], index: 7, kind: input, shape index: {}, may-alias: {7,9,13,15}]
  %s8 = inlined_call_operand.vmem [shape: f32[2,1,128], index: 8, kind: input, shape index: {}, may-alias: {8,14}]
  %s9 = inlined_call_operand.vmem [shape: f32[2,1,128], index: 9, kind: input, shape index: {}, may-alias: {7,9,13,15}]
  %s10 = inlined_call_operand.hbm [shape: bf16[2,128,512], index: 10, kind: input, shape index: {}]
  %s11 = inlined_call_operand.vmem [shape: f32[2,1,512], index: 11, kind: input, shape index: {}]
  %s12 = inlined_call_operand.hbm [shape: bf16[2,512,128], index: 12, kind: input, shape index: {}]
  %s13 = inlined_call_operand.vmem [shape: f32[2,1,128], index: 13, kind: input, shape index: {}, may-alias: {7,9,13,15}]
  %s14 = inlined_call_operand.vmem [shape: f32[2,1,128], index: 14, kind: input, shape index: {}, may-alias: {8,14}]
  %s15 = inlined_call_operand.vmem [shape: f32[2,1,128], index: 15, kind: input, shape index: {}, may-alias: {7,9,13,15}]
  %s16 = inlined_call_operand.vmem [shape: f32[2,8,128], index: 16, kind: output, shape index: {}]
  %s17 = sld [smem:[#allocation0]]
  $region125: #{transformer_forward.2} parent=0
    _
  %s19 = ssub.s32 1, %s17
  %s20 = scalar_select 0, %s19, %s17
  $region1: #{transformer_forward.2} parent=0
    #allocation3 [shape = 'u8[196608]{0}', space=vmem, size = 0x30000, scoped, tag = 'input window, operand 4']
    #allocation4 [shape = 's32[2]{0}', space=sflag, size = 0x8, scoped, tag = 'scoped memory for transformer_forward.2']
    #allocation5 [shape = 'u8[65536]{0}', space=vmem, size = 0x10000, scoped, tag = 'input window, operand 6']
    #allocation6 [shape = 's32[2]{0}', space=sflag, size = 0x8, scoped, tag = 'scoped memory for transformer_forward.2']
    #allocation7 [shape = 'u8[262144]{0}', space=vmem, size = 0x40000, scoped, tag = 'input window, operand 10']
    #allocation8 [shape = 'u8[262144]{0}', space=vmem, size = 0x40000, scoped, tag = 'input window, operand 12']
    #allocation9 [shape = 's32[2]{0}', space=sflag, size = 0x8, scoped, tag = 'scoped memory for transformer_forward.2']
    %21 = vsyncpa [#allocation4], 0
    %s22 = scalar_lea.sflag [#allocation4], 1
    %23 = vsyncpa %s22, 0
    %24 = vsyncpa [#allocation6], 0
    %s25 = scalar_lea.sflag [#allocation6], 1
    %26 = vsyncpa %s25, 0
    %27 = vsyncpa [#allocation9], 0
    %s28 = scalar_lea.sflag [#allocation9], 1
    %29 = vsyncpa %s28, 0
    loop: start=0, step=1, limit=4
    $region2: #{transformer_forward.2} parent=1 // loop_pre_header
      _
    $region3: #{transformer_forward.2} parent=1 // loop_header
      %s31 = sphi 0, %s35
      %p32 = scmp.ge.s32.totalorder %s31, 4
      %s39 = sphi 0, %s39
      %s41 = sphi 0, %s39
      %s42 = sphi 0, %s41
      %s56 = sphi 0, %s42
      %s60 = sphi 0, %s60
      %s62 = sphi 0, %s60
      %s63 = sphi 0, %s62
      %s77 = sphi 0, %s63
      %s81 = sphi 0, %s81
      %s83 = sphi 0, %s81
      %s84 = sphi 0, %s83
      %s98 = sphi 0, %s84
      %s102 = sphi 0, %s102
      %s104 = sphi 0, %s102
      %s105 = sphi 0, %s104
      %s119 = sphi 0, %s105
      %s125 = sphi 0, %s127
      %s128 = sphi 0, %s125
      %s129 = sphi 0, %s128
      %s145 = sphi 0, %s129
      %s151 = sphi 0, %s153
      %s154 = sphi 0, %s151
      %s155 = sphi 0, %s154
      %s171 = sphi 0, %s155
      %s177 = sphi 0, %s179
      %s180 = sphi 0, %s177
      %s181 = sphi 0, %s180
      %s197 = sphi 0, %s181
      %s203 = sphi 0, %s205
      %s206 = sphi 0, %s203
      %s207 = sphi 0, %s206
      %s223 = sphi 0, %s207
      %s229 = sphi 0, %s231
      %s232 = sphi 0, %s229
      %s233 = sphi 0, %s232
      %s249 = sphi 0, %s233
      %s255 = sphi 0, %s257
      %s258 = sphi 0, %s255
      %s259 = sphi 0, %s258
      %s275 = sphi 0, %s259
      %s281 = sphi 0, %s283
      %s284 = sphi 0, %s281
      %s285 = sphi 0, %s284
      %s301 = sphi 0, %s285
      %s307 = sphi 0, %s309
      %s310 = sphi 0, %s307
      %s311 = sphi 0, %s310
      %s327 = sphi 0, %s311
      %s333 = sphi 0, %s335
      %s336 = sphi 0, %s333
      %s337 = sphi 0, %s336
      %s353 = sphi 0, %s337
      %s359 = sphi 0, %s361
      %s362 = sphi 0, %s359
      %s363 = sphi 0, %s362
      %s379 = sphi 0, %s363
      %s385 = sphi 0, %s387
      %s388 = sphi 0, %s385
      %s389 = sphi 0, %s388
      %s405 = sphi 0, %s389
      %s411 = sphi 0, %s413
      %s414 = sphi 0, %s411
      %s415 = sphi 0, %s414
      %s431 = sphi 0, %s415
      %s435 = sphi 0, %s435
      %s437 = sphi 0, %s435
      %s438 = sphi 0, %s437
      %s452 = sphi 0, %s438
    $region4: #{transformer_forward.2} parent=1 // loop_header_branch
      %34 = sbr.rel (%p32) target = $region8
    $region5: #{transformer_forward.2} parent=1 // loop_body
      %s36 = ssub.s32 %s31, 1
      %s37 = ssub.s32 %s31, 2
      %s38 = sadd.s32 %s31, 1
      %s40 = sadd.s32 %s39, 1
      %p43 = scmp.eq.s32.totalorder %s31, 1
      %p44 = scmp.ne.s32.totalorder %s39, %s41
      %p45 = scmp.eq.s32.totalorder %s31, 0
      %p46 = por %p44, %p45
      %p47 = scmp.ne.s32.totalorder %s39, %s41
      %p48 = scmp.eq.s32.totalorder %s36, 1
      %p49 = por %p47, %p48
      %p50 = scmp.ne.s32.totalorder %s41, %s42
      %p51 = scmp.eq.s32.totalorder %s36, 0
      %p52 = por %p50, %p51
      %p53 = scmp.ne.s32.totalorder %s41, %s42
      %p54 = scmp.eq.s32.totalorder %s37, 1
      %p55 = por %p53, %p54
      %p57 = scmp.ne.s32.totalorder %s42, %s56
      %p58 = scmp.eq.s32.totalorder %s37, 0
      %p59 = por %p57, %p58
      %s61 = sadd.s32 %s60, 1
      %p64 = scmp.eq.s32.totalorder %s31, 1
      %p65 = scmp.ne.s32.totalorder %s60, %s62
      %p66 = scmp.eq.s32.totalorder %s31, 0
      %p67 = por %p65, %p66
      %p68 = scmp.ne.s32.totalorder %s60, %s62
      %p69 = scmp.eq.s32.totalorder %s36, 1
      %p70 = por %p68, %p69
      %p71 = scmp.ne.s32.totalorder %s62, %s63
      %p72 = scmp.eq.s32.totalorder %s36, 0
      %p73 = por %p71, %p72
      %p74 = scmp.ne.s32.totalorder %s62, %s63
      %p75 = scmp.eq.s32.totalorder %s37, 1
      %p76 = por %p74, %p75
      %p78 = scmp.ne.s32.totalorder %s63, %s77
      %p79 = scmp.eq.s32.totalorder %s37, 0
      %p80 = por %p78, %p79
      %s82 = sadd.s32 %s81, 1
      %p85 = scmp.eq.s32.totalorder %s31, 1
      %p86 = scmp.ne.s32.totalorder %s81, %s83
      %p87 = scmp.eq.s32.totalorder %s31, 0
      %p88 = por %p86, %p87
      %p89 = scmp.ne.s32.totalorder %s81, %s83
      %p90 = scmp.eq.s32.totalorder %s36, 1
      %p91 = por %p89, %p90
      %p92 = scmp.ne.s32.totalorder %s83, %s84
      %p93 = scmp.eq.s32.totalorder %s36, 0
      %p94 = por %p92, %p93
      %p95 = scmp.ne.s32.totalorder %s83, %s84
      %p96 = scmp.eq.s32.totalorder %s37, 1
      %p97 = por %p95, %p96
      %p99 = scmp.ne.s32.totalorder %s84, %s98
      %p100 = scmp.eq.s32.totalorder %s37, 0
      %p101 = por %p99, %p100
      %s103 = sadd.s32 %s102, 1
      %p106 = scmp.eq.s32.totalorder %s31, 1
      %p107 = scmp.ne.s32.totalorder %s102, %s104
      %p108 = scmp.eq.s32.totalorder %s31, 0
      %p109 = por %p107, %p108
      %p110 = scmp.ne.s32.totalorder %s102, %s104
      %p111 = scmp.eq.s32.totalorder %s36, 1
      %p112 = por %p110, %p111
      %p113 = scmp.ne.s32.totalorder %s104, %s105
      %p114 = scmp.eq.s32.totalorder %s36, 0
      %p115 = por %p113, %p114
      %p116 = scmp.ne.s32.totalorder %s104, %s105
      %p117 = scmp.eq.s32.totalorder %s37, 1
      %p118 = por %p116, %p117
      %p120 = scmp.ne.s32.totalorder %s105, %s119
      %p121 = scmp.eq.s32.totalorder %s37, 0
      %p122 = por %p120, %p121
      %s123 = ssub.s32 %s31, %s38
      %p124 = scmp.eq.s32.totalorder %s123, 0
      %s126 = sadd.s32 %s125, 1
      %s127 = scalar_select %p124, %s125, %s126
      %p130 = pneg %p124
      %p131 = scmp.eq.s32.totalorder %s31, 1
      %p132 = por %p130, %p131
      %p133 = scmp.ne.s32.totalorder %s125, %s128
      %p134 = scmp.eq.s32.totalorder %s31, 0
      %p135 = por %p133, %p134
      %p136 = scmp.ne.s32.totalorder %s125, %s128
      %p137 = scmp.eq.s32.totalorder %s36, 1
      %p138 = por %p136, %p137
      %p139 = scmp.ne.s32.totalorder %s128, %s129
      %p140 = scmp.eq.s32.totalorder %s36, 0
      %p141 = por %p139, %p140
      %p142 = scmp.ne.s32.totalorder %s128, %s129
      %p143 = scmp.eq.s32.totalorder %s37, 1
      %p144 = por %p142, %p143
      %p146 = scmp.ne.s32.totalorder %s129, %s145
      %p147 = scmp.eq.s32.totalorder %s37, 0
      %p148 = por %p146, %p147
      %s149 = ssub.s32 %s31, %s38
      %p150 = scmp.eq.s32.totalorder %s149, 0
      %s152 = sadd.s32 %s151, 1
      %s153 = scalar_select %p150, %s151, %s152
      %p156 = pneg %p150
      %p157 = scmp.eq.s32.totalorder %s31, 1
      %p158 = por %p156, %p157
      %p159 = scmp.ne.s32.totalorder %s151, %s154
      %p160 = scmp.eq.s32.totalorder %s31, 0
      %p161 = por %p159, %p160
      %p162 = scmp.ne.s32.totalorder %s151, %s154
      %p163 = scmp.eq.s32.totalorder %s36, 1
      %p164 = por %p162, %p163
      %p165 = scmp.ne.s32.totalorder %s154, %s155
      %p166 = scmp.eq.s32.totalorder %s36, 0
      %p167 = por %p165, %p166
      %p168 = scmp.ne.s32.totalorder %s154, %s155
      %p169 = scmp.eq.s32.totalorder %s37, 1
      %p170 = por %p168, %p169
      %p172 = scmp.ne.s32.totalorder %s155, %s171
      %p173 = scmp.eq.s32.totalorder %s37, 0
      %p174 = por %p172, %p173
      %s175 = ssub.s32 %s31, %s38
      %p176 = scmp.eq.s32.totalorder %s175, 0
      %s178 = sadd.s32 %s177, 1
      %s179 = scalar_select %p176, %s177, %s178
      %p182 = pneg %p176
      %p183 = scmp.eq.s32.totalorder %s31, 1
      %p184 = por %p182, %p183
      %p185 = scmp.ne.s32.totalorder %s177, %s180
      %p186 = scmp.eq.s32.totalorder %s31, 0
      %p187 = por %p185, %p186
      %p188 = scmp.ne.s32.totalorder %s177, %s180
      %p189 = scmp.eq.s32.totalorder %s36, 1
      %p190 = por %p188, %p189
      %p191 = scmp.ne.s32.totalorder %s180, %s181
      %p192 = scmp.eq.s32.totalorder %s36, 0
      %p193 = por %p191, %p192
      %p194 = scmp.ne.s32.totalorder %s180, %s181
      %p195 = scmp.eq.s32.totalorder %s37, 1
      %p196 = por %p194, %p195
      %p198 = scmp.ne.s32.totalorder %s181, %s197
      %p199 = scmp.eq.s32.totalorder %s37, 0
      %p200 = por %p198, %p199
      %s201 = ssub.s32 %s31, %s38
      %p202 = scmp.eq.s32.totalorder %s201, 0
      %s204 = sadd.s32 %s203, 1
      %s205 = scalar_select %p202, %s203, %s204
      %p208 = pneg %p202
      %p209 = scmp.eq.s32.totalorder %s31, 1
      %p210 = por %p208, %p209
      %p211 = scmp.ne.s32.totalorder %s203, %s206
      %p212 = scmp.eq.s32.totalorder %s31, 0
      %p213 = por %p211, %p212
      %p214 = scmp.ne.s32.totalorder %s203, %s206
      %p215 = scmp.eq.s32.totalorder %s36, 1
      %p216 = por %p214, %p215
      %p217 = scmp.ne.s32.totalorder %s206, %s207
      %p218 = scmp.eq.s32.totalorder %s36, 0
      %p219 = por %p217, %p218
      %p220 = scmp.ne.s32.totalorder %s206, %s207
      %p221 = scmp.eq.s32.totalorder %s37, 1
      %p222 = por %p220, %p221
      %p224 = scmp.ne.s32.totalorder %s207, %s223
      %p225 = scmp.eq.s32.totalorder %s37, 0
      %p226 = por %p224, %p225
      %s227 = ssub.s32 %s31, %s38
      %p228 = scmp.eq.s32.totalorder %s227, 0
      %s230 = sadd.s32 %s229, 1
      %s231 = scalar_select %p228, %s229, %s230
      %p234 = pneg %p228
      %p235 = scmp.eq.s32.totalorder %s31, 1
      %p236 = por %p234, %p235
      %p237 = scmp.ne.s32.totalorder %s229, %s232
      %p238 = scmp.eq.s32.totalorder %s31, 0
      %p239 = por %p237, %p238
      %p240 = scmp.ne.s32.totalorder %s229, %s232
      %p241 = scmp.eq.s32.totalorder %s36, 1
      %p242 = por %p240, %p241
      %p243 = scmp.ne.s32.totalorder %s232, %s233
      %p244 = scmp.eq.s32.totalorder %s36, 0
      %p245 = por %p243, %p244
      %p246 = scmp.ne.s32.totalorder %s232, %s233
      %p247 = scmp.eq.s32.totalorder %s37, 1
      %p248 = por %p246, %p247
      %p250 = scmp.ne.s32.totalorder %s233, %s249
      %p251 = scmp.eq.s32.totalorder %s37, 0
      %p252 = por %p250, %p251
      %s253 = ssub.s32 %s31, %s38
      %p254 = scmp.eq.s32.totalorder %s253, 0
      %s256 = sadd.s32 %s255, 1
      %s257 = scalar_select %p254, %s255, %s256
      %p260 = pneg %p254
      %p261 = scmp.eq.s32.totalorder %s31, 1
      %p262 = por %p260, %p261
      %p263 = scmp.ne.s32.totalorder %s255, %s258
      %p264 = scmp.eq.s32.totalorder %s31, 0
      %p265 = por %p263, %p264
      %p266 = scmp.ne.s32.totalorder %s255, %s258
      %p267 = scmp.eq.s32.totalorder %s36, 1
      %p268 = por %p266, %p267
      %p269 = scmp.ne.s32.totalorder %s258, %s259
      %p270 = scmp.eq.s32.totalorder %s36, 0
      %p271 = por %p269, %p270
      %p272 = scmp.ne.s32.totalorder %s258, %s259
      %p273 = scmp.eq.s32.totalorder %s37, 1
      %p274 = por %p272, %p273
      %p276 = scmp.ne.s32.totalorder %s259, %s275
      %p277 = scmp.eq.s32.totalorder %s37, 0
      %p278 = por %p276, %p277
      %s279 = ssub.s32 %s31, %s38
      %p280 = scmp.eq.s32.totalorder %s279, 0
      %s282 = sadd.s32 %s281, 1
      %s283 = scalar_select %p280, %s281, %s282
      %p286 = pneg %p280
      %p287 = scmp.eq.s32.totalorder %s31, 1
      %p288 = por %p286, %p287
      %p289 = scmp.ne.s32.totalorder %s281, %s284
      %p290 = scmp.eq.s32.totalorder %s31, 0
      %p291 = por %p289, %p290
      %p292 = scmp.ne.s32.totalorder %s281, %s284
      %p293 = scmp.eq.s32.totalorder %s36, 1
      %p294 = por %p292, %p293
      %p295 = scmp.ne.s32.totalorder %s284, %s285
      %p296 = scmp.eq.s32.totalorder %s36, 0
      %p297 = por %p295, %p296
      %p298 = scmp.ne.s32.totalorder %s284, %s285
      %p299 = scmp.eq.s32.totalorder %s37, 1
      %p300 = por %p298, %p299
      %p302 = scmp.ne.s32.totalorder %s285, %s301
      %p303 = scmp.eq.s32.totalorder %s37, 0
      %p304 = por %p302, %p303
      %s305 = ssub.s32 %s31, %s38
      %p306 = scmp.eq.s32.totalorder %s305, 0
      %s308 = sadd.s32 %s307, 1
      %s309 = scalar_select %p306, %s307, %s308
      %p312 = pneg %p306
      %p313 = scmp.eq.s32.totalorder %s31, 1
      %p314 = por %p312, %p313
      %p315 = scmp.ne.s32.totalorder %s307, %s310
      %p316 = scmp.eq.s32.totalorder %s31, 0
      %p317 = por %p315, %p316
      %p318 = scmp.ne.s32.totalorder %s307, %s310
      %p319 = scmp.eq.s32.totalorder %s36, 1
      %p320 = por %p318, %p319
      %p321 = scmp.ne.s32.totalorder %s310, %s311
      %p322 = scmp.eq.s32.totalorder %s36, 0
      %p323 = por %p321, %p322
      %p324 = scmp.ne.s32.totalorder %s310, %s311
      %p325 = scmp.eq.s32.totalorder %s37, 1
      %p326 = por %p324, %p325
      %p328 = scmp.ne.s32.totalorder %s311, %s327
      %p329 = scmp.eq.s32.totalorder %s37, 0
      %p330 = por %p328, %p329
      %s331 = ssub.s32 %s31, %s38
      %p332 = scmp.eq.s32.totalorder %s331, 0
      %s334 = sadd.s32 %s333, 1
      %s335 = scalar_select %p332, %s333, %s334
      %p338 = pneg %p332
      %p339 = scmp.eq.s32.totalorder %s31, 1
      %p340 = por %p338, %p339
      %p341 = scmp.ne.s32.totalorder %s333, %s336
      %p342 = scmp.eq.s32.totalorder %s31, 0
      %p343 = por %p341, %p342
      %p344 = scmp.ne.s32.totalorder %s333, %s336
      %p345 = scmp.eq.s32.totalorder %s36, 1
      %p346 = por %p344, %p345
      %p347 = scmp.ne.s32.totalorder %s336, %s337
      %p348 = scmp.eq.s32.totalorder %s36, 0
      %p349 = por %p347, %p348
      %p350 = scmp.ne.s32.totalorder %s336, %s337
      %p351 = scmp.eq.s32.totalorder %s37, 1
      %p352 = por %p350, %p351
      %p354 = scmp.ne.s32.totalorder %s337, %s353
      %p355 = scmp.eq.s32.totalorder %s37, 0
      %p356 = por %p354, %p355
      %s357 = ssub.s32 %s31, %s38
      %p358 = scmp.eq.s32.totalorder %s357, 0
      %s360 = sadd.s32 %s359, 1
      %s361 = scalar_select %p358, %s359, %s360
      %p364 = pneg %p358
      %p365 = scmp.eq.s32.totalorder %s31, 1
      %p366 = por %p364, %p365
      %p367 = scmp.ne.s32.totalorder %s359, %s362
      %p368 = scmp.eq.s32.totalorder %s31, 0
      %p369 = por %p367, %p368
      %p370 = scmp.ne.s32.totalorder %s359, %s362
      %p371 = scmp.eq.s32.totalorder %s36, 1
      %p372 = por %p370, %p371
      %p373 = scmp.ne.s32.totalorder %s362, %s363
      %p374 = scmp.eq.s32.totalorder %s36, 0
      %p375 = por %p373, %p374
      %p376 = scmp.ne.s32.totalorder %s362, %s363
      %p377 = scmp.eq.s32.totalorder %s37, 1
      %p378 = por %p376, %p377
      %p380 = scmp.ne.s32.totalorder %s363, %s379
      %p381 = scmp.eq.s32.totalorder %s37, 0
      %p382 = por %p380, %p381
      %s383 = ssub.s32 %s31, %s38
      %p384 = scmp.eq.s32.totalorder %s383, 0
      %s386 = sadd.s32 %s385, 1
      %s387 = scalar_select %p384, %s385, %s386
      %p390 = pneg %p384
      %p391 = scmp.eq.s32.totalorder %s31, 1
      %p392 = por %p390, %p391
      %p393 = scmp.ne.s32.totalorder %s385, %s388
      %p394 = scmp.eq.s32.totalorder %s31, 0
      %p395 = por %p393, %p394
      %p396 = scmp.ne.s32.totalorder %s385, %s388
      %p397 = scmp.eq.s32.totalorder %s36, 1
      %p398 = por %p396, %p397
      %p399 = scmp.ne.s32.totalorder %s388, %s389
      %p400 = scmp.eq.s32.totalorder %s36, 0
      %p401 = por %p399, %p400
      %p402 = scmp.ne.s32.totalorder %s388, %s389
      %p403 = scmp.eq.s32.totalorder %s37, 1
      %p404 = por %p402, %p403
      %p406 = scmp.ne.s32.totalorder %s389, %s405
      %p407 = scmp.eq.s32.totalorder %s37, 0
      %p408 = por %p406, %p407
      %s409 = ssub.s32 %s31, %s38
      %p410 = scmp.eq.s32.totalorder %s409, 0
      %s412 = sadd.s32 %s411, 1
      %s413 = scalar_select %p410, %s411, %s412
      %p416 = pneg %p410
      %p417 = scmp.eq.s32.totalorder %s31, 1
      %p418 = por %p416, %p417
      %p419 = scmp.ne.s32.totalorder %s411, %s414
      %p420 = scmp.eq.s32.totalorder %s31, 0
      %p421 = por %p419, %p420
      %p422 = scmp.ne.s32.totalorder %s411, %s414
      %p423 = scmp.eq.s32.totalorder %s36, 1
      %p424 = por %p422, %p423
      %p425 = scmp.ne.s32.totalorder %s414, %s415
      %p426 = scmp.eq.s32.totalorder %s36, 0
      %p427 = por %p425, %p426
      %p428 = scmp.ne.s32.totalorder %s414, %s415
      %p429 = scmp.eq.s32.totalorder %s37, 1
      %p430 = por %p428, %p429
      %p432 = scmp.ne.s32.totalorder %s415, %s431
      %p433 = scmp.eq.s32.totalorder %s37, 0
      %p434 = por %p432, %p433
      %s436 = sadd.s32 %s435, 1
      %p439 = scmp.eq.s32.totalorder %s31, 1
      %p440 = scmp.ne.s32.totalorder %s435, %s437
      %p441 = scmp.eq.s32.totalorder %s31, 0
      %p442 = por %p440, %p441
      %p443 = scmp.ne.s32.totalorder %s435, %s437
      %p444 = scmp.eq.s32.totalorder %s36, 1
      %p445 = por %p443, %p444
      %p446 = scmp.ne.s32.totalorder %s437, %s438
      %p447 = scmp.eq.s32.totalorder %s36, 0
      %p448 = por %p446, %p447
      %p449 = scmp.ne.s32.totalorder %s437, %s438
      %p450 = scmp.eq.s32.totalorder %s37, 1
      %p451 = por %p449, %p450
      %p453 = scmp.ne.s32.totalorder %s438, %s452
      %p454 = scmp.eq.s32.totalorder %s37, 0
      %p455 = por %p453, %p454
      %p456 = scmp.le.s32.totalorder 1, %s31
      %p457 = scmp.lt.s32.totalorder %s31, 3
      %p458 = pnand %p456, %p457
      %p459 = pneg %p458
      // Predicated region
      $region9: #{transformer_forward.2} parent=5 // pred_check
        _
      $region10: #{transformer_forward.2} parent=5 // pred_check_branch
        %461 = sbr.rel (%p458) target = $region12
      $region11: #{transformer_forward.2} parent=5 // pred_region
        %s462 = ssub.s32 %s31, 1
        // Predicated region
        $region13: #{transformer_forward.2} parent=11 // pred_check
          %p463 = pneg %p52
        $region14: #{transformer_forward.2} parent=11 // pred_check_branch
          %465 = sbr.rel (%p463) target = $region16
        $region15: #{transformer_forward.2} parent=11 // pred_region
          _
        $region16: #{transformer_forward.2} parent=11 // pred_fallthru
          _
        // Predicated region
        $region17: #{transformer_forward.2} parent=11 // pred_check
          %p466 = pneg %p73
        $region18: #{transformer_forward.2} parent=11 // pred_check_branch
          %468 = sbr.rel (%p466) target = $region20
        $region19: #{transformer_forward.2} parent=11 // pred_region
          _
        $region20: #{transformer_forward.2} parent=11 // pred_fallthru
          _
        // Predicated region
        $region21: #{transformer_forward.2} parent=11 // pred_check
          %p469 = pneg %p94
        $region22: #{transformer_forward.2} parent=11 // pred_check_branch
          %471 = sbr.rel (%p469) target = $region24
        $region23: #{transformer_forward.2} parent=11 // pred_region
          _
        $region24: #{transformer_forward.2} parent=11 // pred_fallthru
          _
        // Predicated region
        $region25: #{transformer_forward.2} parent=11 // pred_check
          %p472 = pneg %p115
        $region26: #{transformer_forward.2} parent=11 // pred_check_branch
          %474 = sbr.rel (%p472) target = $region28
        $region27: #{transformer_forward.2} parent=11 // pred_region
          _
        $region28: #{transformer_forward.2} parent=11 // pred_fallthru
          _
      $region12: #{transformer_forward.2} parent=5 // pred_fallthru
        _
      %p475 = scmp.lt.s32.totalorder %s31, 2
      // Predicated region
      $region29: #{transformer_forward.2} parent=5 // pred_check
        %p476 = pneg %p475
      $region30: #{transformer_forward.2} parent=5 // pred_check_branch
        %478 = sbr.rel (%p476) target = $region32
      $region31: #{transformer_forward.2} parent=5 // pred_region
        // Predicated region
        $region33: #{transformer_forward.2} parent=31 // pred_check
          %p479 = pneg %p135
        $region34: #{transformer_forward.2} parent=31 // pred_check_branch
          %481 = sbr.rel (%p479) target = $region36
        $region35: #{transformer_forward.2} parent=31 // pred_region
          %s482 = sand.u32 %s125, 1
          %s483 = scalar_lea.sflag [#allocation4], %s482
          %s484 = sand.u32 %s125, 1
          %s485 = smul.addr %s484, 192
          %s486 = scalar_lea.vmem [#allocation3], %s485
          %s488 = ssub.s32 3072, 3072
          %489 = vsyncadd %s483, %s488
          %s490 = smul.addr %s31, 48
          %s491 = smul.addr %s490, 64
          %s492 = scalar_lea.hbm %s4, %s491
          %s493 = sshll.u32 %s486, 4
          %s494 = int_to_ptr.vmem [resolvable:$true] %s493
          %499 = dma.hbm_to_vmem [thread:$0]  %s492, 3072, %s494, %s483, 192, 192, 12
        $region36: #{transformer_forward.2} parent=31 // pred_fallthru
          _
        // Predicated region
        $region37: #{transformer_forward.2} parent=31 // pred_check
          %p500 = pneg %p161
        $region38: #{transformer_forward.2} parent=31 // pred_check_branch
          %502 = sbr.rel (%p500) target = $region40
        $region39: #{transformer_forward.2} parent=31 // pred_region
          %p503 = scmp.lt.s32.totalorder %s31, 1
          %s504 = scalar_select %p503, %s31, 1
          %s505 = smul.addr %s504, 3
          %s506 = scalar_lea.vmem %s5, %s505
        $region40: #{transformer_forward.2} parent=31 // pred_fallthru
          _
        // Predicated region
        $region41: #{transformer_forward.2} parent=31 // pred_check
          %p507 = pneg %p187
        $region42: #{transformer_forward.2} parent=31 // pred_check_branch
          %509 = sbr.rel (%p507) target = $region44
        $region43: #{transformer_forward.2} parent=31 // pred_region
          %s510 = sand.u32 %s31, 1
          %s511 = scalar_lea.sflag [#allocation6], %s510
          %s512 = sand.u32 %s177, 1
          %s513 = smul.addr %s512, 64
          %s514 = scalar_lea.vmem [#allocation5], %s513
          %s516 = ssub.s32 1024, 1024
          %517 = vsyncadd %s511, %s516
          %s518 = smul.addr %s31, 16
          %s519 = smul.addr %s518, 64
          %s520 = scalar_lea.hbm %s6, %s519
          %s521 = sshll.u32 %s514, 4
          %s522 = int_to_ptr.vmem [resolvable:$true] %s521
          %527 = dma.hbm_to_vmem [thread:$0]  %s520, 1024, %s522, %s511, 64, 64, 4
        $region44: #{transformer_forward.2} parent=31 // pred_fallthru
          _
        // Predicated region
        $region45: #{transformer_forward.2} parent=31 // pred_check
          %p528 = pneg %p213
        $region46: #{transformer_forward.2} parent=31 // pred_check_branch
          %530 = sbr.rel (%p528) target = $region48
        $region47: #{transformer_forward.2} parent=31 // pred_region
          %p531 = scmp.lt.s32.totalorder %s31, 1
          %s532 = scalar_select %p531, %s31, 1
          %s533 = scalar_lea.vmem %s7, %s532
        $region48: #{transformer_forward.2} parent=31 // pred_fallthru
          _
        // Predicated region
        $region49: #{transformer_forward.2} parent=31 // pred_check
          %p534 = pneg %p239
        $region50: #{transformer_forward.2} parent=31 // pred_check_branch
          %536 = sbr.rel (%p534) target = $region52
        $region51: #{transformer_forward.2} parent=31 // pred_region
          %p537 = scmp.lt.s32.totalorder %s31, 1
          %s538 = scalar_select %p537, %s31, 1
          %s539 = scalar_lea.vmem %s8, %s538
        $region52: #{transformer_forward.2} parent=31 // pred_fallthru
          _
        // Predicated region
        $region53: #{transformer_forward.2} parent=31 // pred_check
          %p540 = pneg %p265
        $region54: #{transformer_forward.2} parent=31 // pred_check_branch
          %542 = sbr.rel (%p540) target = $region56
        $region55: #{transformer_forward.2} parent=31 // pred_region
          %p543 = scmp.lt.s32.totalorder %s31, 1
          %s544 = scalar_select %p543, %s31, 1
          %s545 = scalar_lea.vmem %s9, %s544
        $region56: #{transformer_forward.2} parent=31 // pred_fallthru
          _
        // Predicated region
        $region57: #{transformer_forward.2} parent=31 // pred_check
          %p546 = pneg %p291
        $region58: #{transformer_forward.2} parent=31 // pred_check_branch
          %548 = sbr.rel (%p546) target = $region60
        $region59: #{transformer_forward.2} parent=31 // pred_region
          %s549 = sand.u32 %s31, 1
          %s550 = scalar_lea.sflag [#allocation6], %s549
          %s551 = sand.u32 %s281, 1
          %s552 = smul.addr %s551, 256
          %s553 = scalar_lea.vmem [#allocation7], %s552
          %s555 = ssub.s32 4096, 4096
          %556 = vsyncadd %s550, %s555
          %s557 = smul.addr %s31, 64
          %s558 = smul.addr %s557, 64
          %s559 = scalar_lea.hbm %s10, %s558
          %s560 = sshll.u32 %s553, 4
          %s561 = int_to_ptr.vmem [resolvable:$true] %s560
          %566 = dma.hbm_to_vmem [thread:$0]  %s559, 4096, %s561, %s550, 256, 256, 16
        $region60: #{transformer_forward.2} parent=31 // pred_fallthru
          _
        // Predicated region
        $region61: #{transformer_forward.2} parent=31 // pred_check
          %p567 = pneg %p317
        $region62: #{transformer_forward.2} parent=31 // pred_check_branch
          %569 = sbr.rel (%p567) target = $region64
        $region63: #{transformer_forward.2} parent=31 // pred_region
          %p570 = scmp.lt.s32.totalorder %s31, 1
          %s571 = scalar_select %p570, %s31, 1
          %s572 = smul.addr %s571, 4
          %s573 = scalar_lea.vmem %s11, %s572
        $region64: #{transformer_forward.2} parent=31 // pred_fallthru
          _
        // Predicated region
        $region65: #{transformer_forward.2} parent=31 // pred_check
          %p574 = pneg %p343
        $region66: #{transformer_forward.2} parent=31 // pred_check_branch
          %576 = sbr.rel (%p574) target = $region68
        $region67: #{transformer_forward.2} parent=31 // pred_region
          %s577 = sand.u32 %s333, 1
          %s578 = scalar_lea.sflag [#allocation9], %s577
          %s579 = sand.u32 %s333, 1
          %s580 = smul.addr %s579, 256
          %s581 = scalar_lea.vmem [#allocation8], %s580
          %s583 = ssub.s32 4096, 4096
          %584 = vsyncadd %s578, %s583
          %s585 = smul.addr %s31, 64
          %s586 = smul.addr %s585, 64
          %s587 = scalar_lea.hbm %s12, %s586
          %s588 = sshll.u32 %s581, 4
          %s589 = int_to_ptr.vmem [resolvable:$true] %s588
          %594 = dma.hbm_to_vmem [thread:$0]  %s587, 4096, %s589, %s578, 64, 64, 4
        $region68: #{transformer_forward.2} parent=31 // pred_fallthru
          _
        // Predicated region
        $region69: #{transformer_forward.2} parent=31 // pred_check
          %p595 = pneg %p369
        $region70: #{transformer_forward.2} parent=31 // pred_check_branch
          %597 = sbr.rel (%p595) target = $region72
        $region71: #{transformer_forward.2} parent=31 // pred_region
          %p598 = scmp.lt.s32.totalorder %s31, 1
          %s599 = scalar_select %p598, %s31, 1
          %s600 = scalar_lea.vmem %s13, %s599
        $region72: #{transformer_forward.2} parent=31 // pred_fallthru
          _
        // Predicated region
        $region73: #{transformer_forward.2} parent=31 // pred_check
          %p601 = pneg %p395
        $region74: #{transformer_forward.2} parent=31 // pred_check_branch
          %603 = sbr.rel (%p601) target = $region76
        $region75: #{transformer_forward.2} parent=31 // pred_region
          %p604 = scmp.lt.s32.totalorder %s31, 1
          %s605 = scalar_select %p604, %s31, 1
          %s606 = scalar_lea.vmem %s14, %s605
        $region76: #{transformer_forward.2} parent=31 // pred_fallthru
          _
        // Predicated region
        $region77: #{transformer_forward.2} parent=31 // pred_check
          %p607 = pneg %p421
        $region78: #{transformer_forward.2} parent=31 // pred_check_branch
          %609 = sbr.rel (%p607) target = $region80
        $region79: #{transformer_forward.2} parent=31 // pred_region
          %p610 = scmp.lt.s32.totalorder %s31, 1
          %s611 = scalar_select %p610, %s31, 1
          %s612 = scalar_lea.vmem %s15, %s611
        $region80: #{transformer_forward.2} parent=31 // pred_fallthru
          _
      $region32: #{transformer_forward.2} parent=5 // pred_fallthru
        _
      %p613 = scmp.le.s32.totalorder 1, %s31
      %p614 = scmp.lt.s32.totalorder %s31, 3
      %p615 = pnand %p613, %p614
      %p616 = pneg %p615
      // Predicated region
      $region81: #{transformer_forward.2} parent=5 // pred_check
        _
      $region82: #{transformer_forward.2} parent=5 // pred_check_branch
        %618 = sbr.rel (%p615) target = $region84
      $region83: #{transformer_forward.2} parent=5 // pred_region
        %s619 = ssub.s32 %s31, 1
        %s620 = sand.u32 %s128, 1
        %s621 = scalar_lea.sflag [#allocation4], %s620
        %s622 = sand.u32 %s128, 1
        %s623 = smul.addr %s622, 192
        %s624 = scalar_lea.vmem [#allocation3], %s623
        // Predicated region
        $region85: #{transformer_forward.2} parent=83 // pred_check
          %p625 = pneg %p141
        $region86: #{transformer_forward.2} parent=83 // pred_check_branch
          %627 = sbr.rel (%p625) target = $region88
        $region87: #{transformer_forward.2} parent=83 // pred_region
          %628 = dma.done %s621, 3072
        $region88: #{transformer_forward.2} parent=83 // pred_fallthru
          _
        %s629 = sand.u32 %s36, 1
        %s630 = scalar_lea.sflag [#allocation6], %s629
        %s631 = sand.u32 %s180, 1
        %s632 = smul.addr %s631, 64
        %s633 = scalar_lea.vmem [#allocation5], %s632
        // Predicated region
        $region89: #{transformer_forward.2} parent=83 // pred_check
          %p634 = pneg %p193
        $region90: #{transformer_forward.2} parent=83 // pred_check_branch
          %636 = sbr.rel (%p634) target = $region92
        $region91: #{transformer_forward.2} parent=83 // pred_region
          %637 = dma.done %s630, 1024
        $region92: #{transformer_forward.2} parent=83 // pred_fallthru
          _
        %s638 = sand.u32 %s36, 1
        %s639 = scalar_lea.sflag [#allocation6], %s638
        %s640 = sand.u32 %s284, 1
        %s641 = smul.addr %s640, 256
        %s642 = scalar_lea.vmem [#allocation7], %s641
        // Predicated region
        $region93: #{transformer_forward.2} parent=83 // pred_check
          %p643 = pneg %p297
        $region94: #{transformer_forward.2} parent=83 // pred_check_branch
          %645 = sbr.rel (%p643) target = $region96
        $region95: #{transformer_forward.2} parent=83 // pred_region
          %646 = dma.done %s639, 4096
        $region96: #{transformer_forward.2} parent=83 // pred_fallthru
          _
        %s647 = sand.u32 %s336, 1
        %s648 = scalar_lea.sflag [#allocation9], %s647
        %s649 = sand.u32 %s336, 1
        %s650 = smul.addr %s649, 256
        %s651 = scalar_lea.vmem [#allocation8], %s650
        // Predicated region
        $region97: #{transformer_forward.2} parent=83 // pred_check
          %p652 = pneg %p349
        $region98: #{transformer_forward.2} parent=83 // pred_check_branch
          %654 = sbr.rel (%p652) target = $region100
        $region99: #{transformer_forward.2} parent=83 // pred_region
          %655 = dma.done %s648, 4096
        $region100: #{transformer_forward.2} parent=83 // pred_fallthru
          _
        %p656 = pneg %p52
        %p657 = pneg %p49
        %p658 = pneg %p73
        %p659 = pneg %p70
        %p660 = pneg %p94
        %p661 = pneg %p91
        %p662 = pneg %p115
        %p663 = pneg %p112
        %s664 = sand.u32 %s128, 1
        %s665 = scalar_lea.sflag [#allocation4], %s664
        %s666 = sand.u32 %s128, 1
        %s667 = smul.addr %s666, 192
        %s668 = scalar_lea.vmem [#allocation3], %s667
        %p669 = pneg %p141
        %p670 = pneg %p138
        %p671 = scmp.lt.s32.totalorder %s36, 1
        %s672 = scalar_select %p671, %s36, 1
        %s673 = smul.addr %s672, 3
        %s674 = scalar_lea.vmem %s5, %s673
        %p675 = pneg %p167
        %p676 = pneg %p164
        %s677 = sand.u32 %s36, 1
        %s678 = scalar_lea.sflag [#allocation6], %s677
        %s679 = sand.u32 %s180, 1
        %s680 = smul.addr %s679, 64
        %s681 = scalar_lea.vmem [#allocation5], %s680
        %p682 = pneg %p193
        %p683 = pneg %p190
        %p684 = scmp.lt.s32.totalorder %s36, 1
        %s685 = scalar_select %p684, %s36, 1
        %s686 = scalar_lea.vmem %s7, %s685
        %p687 = pneg %p219
        %p688 = pneg %p216
        %p689 = scmp.lt.s32.totalorder %s36, 1
        %s690 = scalar_select %p689, %s36, 1
        %s691 = scalar_lea.vmem %s8, %s690
        %p692 = pneg %p245
        %p693 = pneg %p242
        %p694 = scmp.lt.s32.totalorder %s36, 1
        %s695 = scalar_select %p694, %s36, 1
        %s696 = scalar_lea.vmem %s9, %s695
        %p697 = pneg %p271
        %p698 = pneg %p268
        %s699 = sand.u32 %s36, 1
        %s700 = scalar_lea.sflag [#allocation6], %s699
        %s701 = sand.u32 %s284, 1
        %s702 = smul.addr %s701, 256
        %s703 = scalar_lea.vmem [#allocation7], %s702
        %p704 = pneg %p297
        %p705 = pneg %p294
        %p706 = scmp.lt.s32.totalorder %s36, 1
        %s707 = scalar_select %p706, %s36, 1
        %s708 = smul.addr %s707, 4
        %s709 = scalar_lea.vmem %s11, %s708
        %p710 = pneg %p323
        %p711 = pneg %p320
        %s712 = sand.u32 %s336, 1
        %s713 = scalar_lea.sflag [#allocation9], %s712
        %s714 = sand.u32 %s336, 1
        %s715 = smul.addr %s714, 256
        %s716 = scalar_lea.vmem [#allocation8], %s715
        %p717 = pneg %p349
        %p718 = pneg %p346
        %p719 = scmp.lt.s32.totalorder %s36, 1
        %s720 = scalar_select %p719, %s36, 1
        %s721 = scalar_lea.vmem %s13, %s720
        %p722 = pneg %p375
        %p723 = pneg %p372
        %p724 = scmp.lt.s32.totalorder %s36, 1
        %s725 = scalar_select %p724, %s36, 1
        %s726 = scalar_lea.vmem %s14, %s725
        %p727 = pneg %p401
        %p728 = pneg %p398
        %p729 = scmp.lt.s32.totalorder %s36, 1
        %s730 = scalar_select %p729, %s36, 1
        %s731 = scalar_lea.vmem %s15, %s730
        %p732 = pneg %p427
        %p733 = pneg %p424
        %p734 = pneg %p448
        %p735 = pneg %p445
        %p736 = scmp.lt.s32.totalorder %s36, 1
        %s737 = scalar_select %p736, %s36, 1
        %s738 = smul.addr %s737, 3
        %s739 = scalar_lea.vmem %s5, %s738
        %p740 = scmp.lt.s32.totalorder %s36, 1
        %s741 = scalar_select %p740, %s36, 1
        %s742 = scalar_lea.vmem %s7, %s741
        %p743 = scmp.lt.s32.totalorder %s36, 1
        %s744 = scalar_select %p743, %s36, 1
        %s745 = scalar_lea.vmem %s8, %s744
        %p746 = scmp.lt.s32.totalorder %s36, 1
        %s747 = scalar_select %p746, %s36, 1
        %s748 = scalar_lea.vmem %s9, %s747
        %p749 = scmp.lt.s32.totalorder %s36, 1
        %s750 = scalar_select %p749, %s36, 1
        %s751 = smul.addr %s750, 4
        %s752 = scalar_lea.vmem %s11, %s751
        %p753 = scmp.lt.s32.totalorder %s36, 1
        %s754 = scalar_select %p753, %s36, 1
        %s755 = scalar_lea.vmem %s13, %s754
        %p756 = scmp.lt.s32.totalorder %s36, 1
        %s757 = scalar_select %p756, %s36, 1
        %s758 = scalar_lea.vmem %s14, %s757
        %p759 = scmp.lt.s32.totalorder %s36, 1
        %s760 = scalar_select %p759, %s36, 1
        %s761 = scalar_lea.vmem %s15, %s760
        %p763 = scmp.eq.s32.totalorder %s36, 0
        // Predicated region
        $region101: #{transformer_forward.2} parent=83 // pred_check
          %p764 = pneg %p763
        $region102: #{transformer_forward.2} parent=83 // pred_check_branch
          %766 = sbr.rel (%p764) target = $region104
        $region103: #{transformer_forward.2} parent=83 // pred_region
          %v767 = vld [vmem:[%s0] sm:$0xff]
          %v768 = vld [vmem:[%s0 + $0x8] sm:$0xff]
          %v769 = vld [vmem:[%s2] sm:$0xf]
          %v770 = vld [vmem:[%s3] sm:$0x1]
          %v772 = vlaneseq
          %v773 = vshrl.u32 %v772, 7
          %v774 = vsub.s32 0, %v773
          %v775 = vrot.slane %v770, %v774
          %vm777 = vcmask 31744
          %v779 = vsel %vm777, %v767, 0
          %v782 = vsel %vm777, %v768, 0
          %vm784 = vcmask 1043456
          %v786 = vsel %vm784, %v769, 0
          %788 = vmatprep.subr.mxu0 0.0
          %789 = vmatpush1.msra.mxu0 0.0
          %790 = vmatprep.subr.mxu0 0.0
          %791 = vmatpush1.msra.mxu0 0.0
          %792 = vmatprep.subr.mxu0 0.0
          %793 = vmatpush1.msra.mxu0 0.0
          %794 = vmatprep.subr.mxu0 0.0
          %795 = vmatpush1.msra.mxu0 0.0
          %796 = vmatprep.subr.mxu0 0.0
          %797 = vmatpush1.msra.mxu0 0.0
          %798 = vmatprep.subr.mxu0 0.0
          %799 = vmatpush1.msra.mxu0 0.0
          %800 = vmatprep.subr.mxu0 0.0
          %801 = vmatpush1.msra.mxu0 0.0
          %802 = vmatprep.subr.mxu0 0.0
          %803 = vmatpush1.msra.mxu0 0.0
          %804 = vmatprep.subr.mxu0 0.0
          %805 = vmatpush1.msra.mxu0 0.0
          %806 = vmatprep.subr.mxu0 0.0
          %807 = vmatpush1.msra.mxu0 0.0
          %808 = vmatprep.subr.mxu0 0.0
          %809 = vmatpush1.msra.mxu0 0.0
          %810 = vmatprep.subr.mxu0 0.0
          %811 = vmatpush1.msra.mxu0 0.0
          %812 = vmatprep.subr.mxu0 0.0
          %813 = vmatpush1.msra.mxu0 0.0
          %814 = vmatprep.subr.mxu0 0.0
          %815 = vmatpush1.msra.mxu0 0.0
          %816 = vmatprep.subr.mxu0 0.0
          %817 = vmatpush1.msra.mxu0 0.0
          %818 = vmatprep.subr.mxu0 0.0
          %819 = vmatpush1.msra.mxu0 %v786
          %820 = vmatprep.subr.mxu0 0.0
          %821 = vmatpush2.msra.mxu0 0.0
          %822 = vmatprep.subr.mxu0 0.0
          %823 = vmatpush2.msra.mxu0 0.0
          %824 = vmatprep.subr.mxu0 0.0
          %825 = vmatpush2.msra.mxu0 0.0
          %826 = vmatprep.subr.mxu0 0.0
          %827 = vmatpush2.msra.mxu0 0.0
          %828 = vmatprep.subr.mxu0 0.0
          %829 = vmatpush2.msra.mxu0 0.0
          %830 = vmatprep.subr.mxu0 0.0
          %831 = vmatpush2.msra.mxu0 0.0
          %832 = vmatprep.subr.mxu0 0.0
          %833 = vmatpush2.msra.mxu0 0.0
          %834 = vmatprep.subr.mxu0 0.0
          %835 = vmatpush2.msra.mxu0 0.0
          %836 = vmatprep.subr.mxu0 0.0
          %837 = vmatpush2.msra.mxu0 0.0
          %838 = vmatprep.subr.mxu0 0.0
          %839 = vmatpush2.msra.mxu0 0.0
          %840 = vmatprep.subr.mxu0 0.0
          %841 = vmatpush2.msra.mxu0 0.0
          %842 = vmatprep.subr.mxu0 0.0
          %843 = vmatpush2.msra.mxu0 0.0
          %844 = vmatprep.subr.mxu0 0.0
          %845 = vmatpush2.msra.mxu0 0.0
          %846 = vmatprep.subr.mxu0 0.0
          %847 = vmatpush2.msra.mxu0 0.0
          %848 = vmatprep.subr.mxu0 0.0
          %849 = vmatpush2.msra.mxu0 0.0
          %850 = vmatprep.subr.mxu0 0.0
          %851 = vmatpush2.msra.mxu0 0.0
          %852 = vmatprep.mubr.f32.mxu0 0.0
          %853 = vmatmul.mubr.f32.gmra.mxu0 %v779
          %v854 = vpop.f32.mrf.mxu0
          %v855 = vadd.f32 %v775, %v854
          %v856 = vpop.f32.mrf.mxu0
          %857 = vmatprep.mubr.f32.mxu0 0.0
          %858 = vmatmul.mubr.f32.gmra.mxu0 %v782
          %v859 = vpop.f32.mrf.mxu0
          %v860 = vadd.f32 %v775, %v859
          %v861 = vpop.f32.mrf.mxu0
          %862 = vdwg.mxu0
          %863 = vst [vmem:[#allocation2] sm:$0xff] %v855
          %864 = vst [vmem:[#allocation2 + $0x8] sm:$0xff] %v860
          %v865 = vld [vmem:[%s1] sm:$0xff]
          %v866 = vadd.f32 %v855, %v865
          %v867 = vadd.f32 %v860, %v865
          %868 = vst [vmem:[%s16] sm:$0xff] %v866
          %869 = vst [vmem:[%s16 + $0x8] sm:$0xff] %v867
        $region104: #{transformer_forward.2} parent=83 // pred_fallthru
          _
        %v870 = vld [vmem:[%s16] sm:$0xff]
        %v871 = vld [vmem:[%s16 + $0x8] sm:$0xff]
        %v872 = vpack.c.bf16 %v871, %v870
        %v873 = vld [vmem:[%s624] sm:$0xff]
        %v874 = vld [vmem:[%s624 + $0x8] sm:$0xf]
        %v875 = vld [vmem:[%s624 + $0xc] sm:$0xff]
        %v876 = vld [vmem:[%s624 + $0x14] sm:$0xf]
        %v877 = vld [vmem:[%s624 + $0x18] sm:$0xff]
        %v878 = vld [vmem:[%s624 + $0x20] sm:$0xf]
        %v879 = vld [vmem:[%s624 + $0x24] sm:$0xff]
        %v880 = vld [vmem:[%s624 + $0x2c] sm:$0xf]
        %v881 = vld [vmem:[%s624 + $0x30] sm:$0xff]
        %v882 = vld [vmem:[%s624 + $0x38] sm:$0xf]
        %v883 = vld [vmem:[%s624 + $0x3c] sm:$0xff]
        %v884 = vld [vmem:[%s624 + $0x44] sm:$0xf]
        %v885 = vld [vmem:[%s624 + $0x48] sm:$0xff]
        %v886 = vld [vmem:[%s624 + $0x50] sm:$0xf]
        %v887 = vld [vmem:[%s624 + $0x54] sm:$0xff]
        %v888 = vld [vmem:[%s624 + $0x5c] sm:$0xf]
        %v889 = vld [vmem:[%s624 + $0x60] sm:$0xff]
        %v890 = vld [vmem:[%s624 + $0x68] sm:$0xf]
        %v891 = vld [vmem:[%s624 + $0x6c] sm:$0xff]
        %v892 = vld [vmem:[%s624 + $0x74] sm:$0xf]
        %v893 = vld [vmem:[%s624 + $0x78] sm:$0xff]
        %v894 = vld [vmem:[%s624 + $0x80] sm:$0xf]
        %v895 = vld [vmem:[%s624 + $0x84] sm:$0xff]
        %v896 = vld [vmem:[%s624 + $0x8c] sm:$0xf]
        %v897 = vld [vmem:[%s624 + $0x90] sm:$0xff]
        %v898 = vld [vmem:[%s624 + $0x98] sm:$0xf]
        %v899 = vld [vmem:[%s624 + $0x9c] sm:$0xff]
        %v900 = vld [vmem:[%s624 + $0xa4] sm:$0xf]
        %v901 = vld [vmem:[%s624 + $0xa8] sm:$0xff]
        %v902 = vld [vmem:[%s624 + $0xb0] sm:$0xf]
        %v903 = vld [vmem:[%s624 + $0xb4] sm:$0xff]
        %v904 = vld [vmem:[%s624 + $0xbc] sm:$0xf]
        %v905 = vld [vmem:[%s739] sm:$0x7]
        %v907 = vlaneseq
        %v908 = vshrl.u32 %v907, 7
        %v909 = vsub.s32 0, %v908
        %v910 = vrot.slane %v905, %v909
        %v911 = vlaneseq
        %v912 = vshrl.u32 %v911, 7
        %v913 = vsub.s32 1, %v912
        %v914 = vrot.slane %v905, %v913
        %v915 = vlaneseq
        %v916 = vshrl.u32 %v915, 7
        %v917 = vsub.s32 2, %v916
        %v918 = vrot.slane %v905, %v917
        %v954 = vunpack.c.l.b16 %v873
        %v955 = vunpack.c.h.b16 %v873
        %v956 = vunpack.c.l.b16 %v874
        %v957 = vunpack.c.l.b16 %v875
        %v958 = vunpack.c.h.b16 %v875
        %v959 = vunpack.c.l.b16 %v876
        %v960 = vunpack.c.l.b16 %v877
        %v961 = vunpack.c.h.b16 %v877
        %v962 = vunpack.c.l.b16 %v878
        %v963 = vunpack.c.l.b16 %v879
        %v964 = vunpack.c.h.b16 %v879
        %v965 = vunpack.c.l.b16 %v880
        %v966 = vunpack.c.l.b16 %v881
        %v967 = vunpack.c.h.b16 %v881
        %v968 = vunpack.c.l.b16 %v882
        %v969 = vunpack.c.l.b16 %v883
        %v970 = vunpack.c.h.b16 %v883
        %v971 = vunpack.c.l.b16 %v884
        %v972 = vunpack.c.l.b16 %v885
        %v973 = vunpack.c.h.b16 %v885
        %v974 = vunpack.c.l.b16 %v886
        %v975 = vunpack.c.l.b16 %v887
        %v976 = vunpack.c.h.b16 %v887
        %v977 = vunpack.c.l.b16 %v888
        %v978 = vunpack.c.l.b16 %v889
        %v979 = vunpack.c.h.b16 %v889
        %v980 = vunpack.c.l.b16 %v890
        %v981 = vunpack.c.l.b16 %v891
        %v982 = vunpack.c.h.b16 %v891
        %v983 = vunpack.c.l.b16 %v892
        %v984 = vunpack.c.l.b16 %v893
        %v985 = vunpack.c.h.b16 %v893
        %v986 = vunpack.c.l.b16 %v894
        %v987 = vunpack.c.l.b16 %v895
        %v988 = vunpack.c.h.b16 %v895
        %v989 = vunpack.c.l.b16 %v896
        %v990 = vunpack.c.l.b16 %v897
        %v991 = vunpack.c.h.b16 %v897
        %v992 = vunpack.c.l.b16 %v898
        %v993 = vunpack.c.l.b16 %v899
        %v994 = vunpack.c.h.b16 %v899
        %v995 = vunpack.c.l.b16 %v900
        %v996 = vunpack.c.l.b16 %v901
        %v997 = vunpack.c.h.b16 %v901
        %v998 = vunpack.c.l.b16 %v902
        %v999 = vunpack.c.l.b16 %v903
        %v1000 = vunpack.c.h.b16 %v903
        %v1001 = vunpack.c.l.b16 %v904
        %v1002 = vpack.c.b16 %v957, %v954
        %v1003 = vpack.c.b16 %v958, %v955
        %v1004 = vpack.c.b16 %v959, %v956
        %v1005 = vpack.c.b16 %v963, %v960
        %v1006 = vpack.c.b16 %v964, %v961
        %v1007 = vpack.c.b16 %v965, %v962
        %v1008 = vpack.c.b16 %v969, %v966
        %v1009 = vpack.c.b16 %v970, %v967
        %v1010 = vpack.c.b16 %v971, %v968
        %v1011 = vpack.c.b16 %v975, %v972
        %v1012 = vpack.c.b16 %v976, %v973
        %v1013 = vpack.c.b16 %v977, %v974
        %v1014 = vpack.c.b16 %v981, %v978
        %v1015 = vpack.c.b16 %v982, %v979
        %v1016 = vpack.c.b16 %v983, %v980
        %v1017 = vpack.c.b16 %v987, %v984
        %v1018 = vpack.c.b16 %v988, %v985
        %v1019 = vpack.c.b16 %v989, %v986
        %v1020 = vpack.c.b16 %v993, %v990
        %v1021 = vpack.c.b16 %v994, %v991
        %v1022 = vpack.c.b16 %v995, %v992
        %v1023 = vpack.c.b16 %v999, %v996
        %v1024 = vpack.c.b16 %v1000, %v997
        %v1025 = vpack.c.b16 %v1001, %v998
        %1050 = vmatprep.subr.bf16.mxu0 %v1024
        %1051 = vmatpush1.bf16.msra.mxu0 %v1023
        %1052 = vmatprep.subr.bf16.mxu0 %v1021
        %1053 = vmatpush1.bf16.msra.mxu0 %v1020
        %1054 = vmatprep.subr.bf16.mxu0 %v1018
        %1055 = vmatpush1.bf16.msra.mxu0 %v1017
        %1056 = vmatprep.subr.bf16.mxu0 %v1015
        %1057 = vmatpush1.bf16.msra.mxu0 %v1014
        %1058 = vmatprep.subr.bf16.mxu0 %v1012
        %1059 = vmatpush1.bf16.msra.mxu0 %v1011
        %1060 = vmatprep.subr.bf16.mxu0 %v1009
        %1061 = vmatpush1.bf16.msra.mxu0 %v1008
        %1062 = vmatprep.subr.bf16.mxu0 %v1006
        %1063 = vmatpush1.bf16.msra.mxu0 %v1005
        %1064 = vmatprep.subr.bf16.mxu0 %v1003
        %1065 = vmatpush1.bf16.msra.mxu0 %v1002
        %1066 = vmatprep.subr.bf16.mxu0 0
        %1067 = vmatpush2.bf16.msra.mxu0 0
        %1068 = vmatprep.subr.bf16.mxu0 0
        %1069 = vmatpush2.bf16.msra.mxu0 0
        %1070 = vmatprep.subr.bf16.mxu0 0
        %1071 = vmatpush2.bf16.msra.mxu0 0
        %1072 = vmatprep.subr.bf16.mxu0 0
        %1073 = vmatpush2.bf16.msra.mxu0 0
        %1074 = vmatprep.subr.bf16.mxu0 0
        %1075 = vmatpush2.bf16.msra.mxu0 0
        %1076 = vmatprep.subr.bf16.mxu0 0
        %1077 = vmatpush2.bf16.msra.mxu0 0
        %1078 = vmatprep.subr.bf16.mxu0 0
        %1079 = vmatpush2.bf16.msra.mxu0 0
        %1080 = vmatprep.subr.bf16.mxu0 0
        %1081 = vmatpush2.bf16.msra.mxu0 0
        %1082 = vmatprep.mubr.bf16.mxu0 0
        %1083 = vmatmul.mubr.bf16.gmra.mxu0 %v872
        %v1084 = vpop.f32.mrf.mxu0
        %v1085 = vadd.f32 %v910, %v1084
        %v1086 = vpop.f32.mrf.mxu0
        %v1087 = vadd.f32 %v914, %v1086
        %v1088 = vpop.f32.mrf.mxu0
        %v1089 = vadd.f32 %v910, %v1088
        %v1090 = vpop.f32.mrf.mxu0
        %v1091 = vadd.f32 %v914, %v1090
        %1092 = vdwg.mxu0
        %1093 = vmatprep.subr.bf16.mxu0 0
        %1094 = vmatpush1.bf16.msra.mxu0 %v1025
        %1095 = vmatprep.subr.bf16.mxu0 0
        %1096 = vmatpush1.bf16.msra.mxu0 %v1022
        %1097 = vmatprep.subr.bf16.mxu0 0
        %1098 = vmatpush1.bf16.msra.mxu0 %v1019
        %1099 = vmatprep.subr.bf16.mxu0 0
        %1100 = vmatpush1.bf16.msra.mxu0 %v1016
        %1101 = vmatprep.subr.bf16.mxu0 0
        %1102 = vmatpush1.bf16.msra.mxu0 %v1013
        %1103 = vmatprep.subr.bf16.mxu0 0
        %1104 = vmatpush1.bf16.msra.mxu0 %v1010
        %1105 = vmatprep.subr.bf16.mxu0 0
        %1106 = vmatpush1.bf16.msra.mxu0 %v1007
        %1107 = vmatprep.subr.bf16.mxu0 0
        %1108 = vmatpush1.bf16.msra.mxu0 %v1004
        %1109 = vmatprep.subr.bf16.mxu0 0
        %1110 = vmatpush2.bf16.msra.mxu0 0
        %1111 = vmatprep.subr.bf16.mxu0 0
        %1112 = vmatpush2.bf16.msra.mxu0 0
        %1113 = vmatprep.subr.bf16.mxu0 0
        %1114 = vmatpush2.bf16.msra.mxu0 0
        %1115 = vmatprep.subr.bf16.mxu0 0
        %1116 = vmatpush2.bf16.msra.mxu0 0
        %1117 = vmatprep.subr.bf16.mxu0 0
        %1118 = vmatpush2.bf16.msra.mxu0 0
        %1119 = vmatprep.subr.bf16.mxu0 0
        %1120 = vmatpush2.bf16.msra.mxu0 0
        %1121 = vmatprep.subr.bf16.mxu0 0
        %1122 = vmatpush2.bf16.msra.mxu0 0
        %1123 = vmatprep.subr.bf16.mxu0 0
        %1124 = vmatpush2.bf16.msra.mxu0 0
        %1125 = vmatprep.mubr.bf16.mxu0 0
        %1126 = vmatmul.mubr.bf16.gmra.mxu0 %v872
        %v1127 = vpop.f32.mrf.mxu0
        %v1128 = vadd.f32 %v918, %v1127
        %v1129 = vpop.f32.mrf.mxu0
        %v1130 = vpop.f32.mrf.mxu0
        %v1131 = vadd.f32 %v918, %v1130
        %v1132 = vpop.f32.mrf.mxu0
        %1133 = vdwg.mxu0
        %v1134 = vpack.c.bf16 %v1085, %v1085
        %v1135 = vpack.c.bf16 %v1089, %v1089
        %v1136 = vpack.c.bf16 %v1087, %v1087
        %v1137 = vpack.c.bf16 %v1091, %v1091
        %1138 = vmatprep.subr.bf16.mxu0 0
        %1139 = vmatpush1.bf16.xpose.msra.mxu0 0
        %1140 = vmatprep.subr.bf16.mxu0 0
        %1141 = vmatpush1.bf16.xpose.msra.mxu0 0
        %1142 = vmatprep.subr.bf16.mxu0 0
        %1143 = vmatpush1.bf16.xpose.msra.mxu0 0
        %1144 = vmatprep.subr.bf16.mxu0 0
        %1145 = vmatpush1.bf16.xpose.msra.mxu0 0
        %1146 = vmatprep.subr.bf16.mxu0 0
        %1147 = vmatpush1.bf16.xpose.msra.mxu0 0
        %1148 = vmatprep.subr.bf16.mxu0 0
        %1149 = vmatpush1.bf16.xpose.msra.mxu0 0
        %1150 = vmatprep.subr.bf16.mxu0 0
        %1151 = vmatpush1.bf16.xpose.msra.mxu0 0
        %1152 = vmatprep.subr.bf16.mxu0 0
        %1153 = vmatpush1.bf16.xpose.msra.mxu0 %v1136
        %1154 = vmatprep.subr.bf16.mxu0 0
        %1155 = vmatpush2.bf16.xpose.msra.mxu0 0
        %1156 = vmatprep.subr.bf16.mxu0 0
        %1157 = vmatpush2.bf16.xpose.msra.mxu0 0
        %1158 = vmatprep.subr.bf16.mxu0 0
        %1159 = vmatpush2.bf16.xpose.msra.mxu0 0
        %1160 = vmatprep.subr.bf16.mxu0 0
        %1161 = vmatpush2.bf16.xpose.msra.mxu0 0
        %1162 = vmatprep.subr.bf16.mxu0 0
        %1163 = vmatpush2.bf16.xpose.msra.mxu0 0
        %1164 = vmatprep.subr.bf16.mxu0 0
        %1165 = vmatpush2.bf16.xpose.msra.mxu0 0
        %1166 = vmatprep.subr.bf16.mxu0 0
        %1167 = vmatpush2.bf16.xpose.msra.mxu0 0
        %1168 = vmatprep.subr.bf16.mxu0 0
        %1169 = vmatpush2.bf16.xpose.msra.mxu0 0
        %1170 = vmatprep.mubr.bf16.mxu0 0
        %1171 = vmatmul.mubr.bf16.gmra.mxu0 %v1134
        %v1172 = vpop.f32.mrf.mxu0
        %v1173 = vadd.f32 0.0, %v1172
        %v1174 = vpop.f32.mrf.mxu0
        %v1175 = vpop.f32.mrf.mxu0
        %v1176 = vpop.f32.mrf.mxu0
        %1177 = vdwg.mxu0
        %1178 = vmatprep.subr.bf16.mxu0 0
        %1179 = vmatpush1.bf16.xpose.msra.mxu0 0
        %1180 = vmatprep.subr.bf16.mxu0 0
        %1181 = vmatpush1.bf16.xpose.msra.mxu0 0
        %1182 = vmatprep.subr.bf16.mxu0 0
        %1183 = vmatpush1.bf16.xpose.msra.mxu0 0
        %1184 = vmatprep.subr.bf16.mxu0 0
        %1185 = vmatpush1.bf16.xpose.msra.mxu0 0
        %1186 = vmatprep.subr.bf16.mxu0 0
        %1187 = vmatpush1.bf16.xpose.msra.mxu0 0
        %1188 = vmatprep.subr.bf16.mxu0 0
        %1189 = vmatpush1.bf16.xpose.msra.mxu0 0
        %1190 = vmatprep.subr.bf16.mxu0 0
        %1191 = vmatpush1.bf16.xpose.msra.mxu0 0
        %1192 = vmatprep.subr.bf16.mxu0 0
        %1193 = vmatpush1.bf16.xpose.msra.mxu0 %v1137
        %1194 = vmatprep.subr.bf16.mxu0 0
        %1195 = vmatpush2.bf16.xpose.msra.mxu0 0
        %1196 = vmatprep.subr.bf16.mxu0 0
        %1197 = vmatpush2.bf16.xpose.msra.mxu0 0
        %1198 = vmatprep.subr.bf16.mxu0 0
        %1199 = vmatpush2.bf16.xpose.msra.mxu0 0
        %1200 = vmatprep.subr.bf16.mxu0 0
        %1201 = vmatpush2.bf16.xpose.msra.mxu0 0
        %1202 = vmatprep.subr.bf16.mxu0 0
        %1203 = vmatpush2.bf16.xpose.msra.mxu0 0
        %1204 = vmatprep.subr.bf16.mxu0 0
        %1205 = vmatpush2.bf16.xpose.msra.mxu0 0
        %1206 = vmatprep.subr.bf16.mxu0 0
        %1207 = vmatpush2.bf16.xpose.msra.mxu0 0
        %1208 = vmatprep.subr.bf16.mxu0 0
        %1209 = vmatpush2.bf16.xpose.msra.mxu0 0
        %1210 = vmatprep.mubr.bf16.mxu0 0
        %1211 = vmatmul.mubr.bf16.gmra.mxu0 %v1135
        %v1212 = vpop.f32.mrf.mxu0
        %v1213 = vadd.f32 0.0, %v1212
        %v1214 = vpop.f32.mrf.mxu0
        %v1215 = vpop.f32.mrf.mxu0
        %v1216 = vpop.f32.mrf.mxu0
        %1217 = vdwg.mxu0
        %v1218 = vmul.f32 %v1173, 0.088388346
        %v1219 = vmul.f32 %v1213, 0.088388346
        %vm1220 = vcmask 64512
        %v1221 = vsel %vm1220, %v1218, -inf
        %1222 = vmax.xlane.f32.xlu0 %v1221
        %v1223 = vpop.xlane.xlu0 %1222
        %v1224 = vsel %vm1220, %v1219, -inf
        %1225 = vmax.xlane.f32.xlu0 %v1224
        %v1226 = vpop.xlane.xlu0 %1225
        %v1227 = vsub.f32 %v1218, %v1223
        %v1228 = vsub.f32 %v1219, %v1226
        %v1229 = vmul.f32 %v1227, 1.442695
        %v1230 = vpow.pop %v1229
        %v1231 = vmul.f32 %v1228, 1.442695
        %v1232 = vpow.pop %v1231
        %v1233 = vsel %vm1220, %v1230, 0.0
        %1234 = vadd.xlane.f32.xlu0 %v1233
        %v1235 = vpop.xlane.xlu0 %1234
        %v1236 = vsel %vm1220, %v1232, 0.0
        %1237 = vadd.xlane.f32.xlu0 %v1236
        %v1238 = vpop.xlane.xlu0 %1237
        %v1239 = vrcp.pop %v1235
        %v1240 = vrcp.pop %v1238
        %v1241 = vmul.f32 %v1230, %v1239
        %v1242 = vmul.f32 %v1232, %v1240
        %v1243 = vpack.c.bf16 %v1241, %v1241
        %v1244 = vpack.c.bf16 %v1242, %v1242
        %v1245 = vpack.c.bf16 %v1128, %v1128
        %v1246 = vpack.c.bf16 %v1131, %v1131
        %v1248 = vsel %vm1220, %v1243, 0
        %vm1250 = vcmask 1043456
        %v1252 = vsel %vm1250, %v1245, 0
        %1254 = vmatprep.subr.bf16.mxu0 0
        %1255 = vmatpush1.bf16.msra.mxu0 0
        %1256 = vmatprep.subr.bf16.mxu0 0
        %1257 = vmatpush1.bf16.msra.mxu0 0
        %1258 = vmatprep.subr.bf16.mxu0 0
        %1259 = vmatpush1.bf16.msra.mxu0 0
        %1260 = vmatprep.subr.bf16.mxu0 0
        %1261 = vmatpush1.bf16.msra.mxu0 0
        %1262 = vmatprep.subr.bf16.mxu0 0
        %1263 = vmatpush1.bf16.msra.mxu0 0
        %1264 = vmatprep.subr.bf16.mxu0 0
        %1265 = vmatpush1.bf16.msra.mxu0 0
        %1266 = vmatprep.subr.bf16.mxu0 0
        %1267 = vmatpush1.bf16.msra.mxu0 0
        %1268 = vmatprep.subr.bf16.mxu0 0
        %1269 = vmatpush1.bf16.msra.mxu0 %v1252
        %1270 = vmatprep.subr.bf16.mxu0 0
        %1271 = vmatpush2.bf16.msra.mxu0 0
        %1272 = vmatprep.subr.bf16.mxu0 0
        %1273 = vmatpush2.bf16.msra.mxu0 0
        %1274 = vmatprep.subr.bf16.mxu0 0
        %1275 = vmatpush2.bf16.msra.mxu0 0
        %1276 = vmatprep.subr.bf16.mxu0 0
        %1277 = vmatpush2.bf16.msra.mxu0 0
        %1278 = vmatprep.subr.bf16.mxu0 0
        %1279 = vmatpush2.bf16.msra.mxu0 0
        %1280 = vmatprep.subr.bf16.mxu0 0
        %1281 = vmatpush2.bf16.msra.mxu0 0
        %1282 = vmatprep.subr.bf16.mxu0 0
        %1283 = vmatpush2.bf16.msra.mxu0 0
        %1284 = vmatprep.subr.bf16.mxu0 0
        %1285 = vmatpush2.bf16.msra.mxu0 0
        %1286 = vmatprep.mubr.bf16.mxu0 0
        %1287 = vmatmul.mubr.bf16.gmra.mxu0 %v1248
        %v1288 = vpop.f32.mrf.mxu0
        %v1289 = vadd.f32 0.0, %v1288
        %v1290 = vpop.f32.mrf.mxu0
        %v1291 = vpop.f32.mrf.mxu0
        %v1292 = vpop.f32.mrf.mxu0
        %1293 = vdwg.mxu0
        %v1295 = vsel %vm1220, %v1244, 0
        %v1298 = vsel %vm1250, %v1246, 0
        %1300 = vmatprep.subr.bf16.mxu0 0
        %1301 = vmatpush1.bf16.msra.mxu0 0
        %1302 = vmatprep.subr.bf16.mxu0 0
        %1303 = vmatpush1.bf16.msra.mxu0 0
        %1304 = vmatprep.subr.bf16.mxu0 0
        %1305 = vmatpush1.bf16.msra.mxu0 0
        %1306 = vmatprep.subr.bf16.mxu0 0
        %1307 = vmatpush1.bf16.msra.mxu0 0
        %1308 = vmatprep.subr.bf16.mxu0 0
        %1309 = vmatpush1.bf16.msra.mxu0 0
        %1310 = vmatprep.subr.bf16.mxu0 0
        %1311 = vmatpush1.bf16.msra.mxu0 0
        %1312 = vmatprep.subr.bf16.mxu0 0
        %1313 = vmatpush1.bf16.msra.mxu0 0
        %1314 = vmatprep.subr.bf16.mxu0 0
        %1315 = vmatpush1.bf16.msra.mxu0 %v1298
        %1316 = vmatprep.subr.bf16.mxu0 0
        %1317 = vmatpush2.bf16.msra.mxu0 0
        %1318 = vmatprep.subr.bf16.mxu0 0
        %1319 = vmatpush2.bf16.msra.mxu0 0
        %1320 = vmatprep.subr.bf16.mxu0 0
        %1321 = vmatpush2.bf16.msra.mxu0 0
        %1322 = vmatprep.subr.bf16.mxu0 0
        %1323 = vmatpush2.bf16.msra.mxu0 0
        %1324 = vmatprep.subr.bf16.mxu0 0
        %1325 = vmatpush2.bf16.msra.mxu0 0
        %1326 = vmatprep.subr.bf16.mxu0 0
        %1327 = vmatpush2.bf16.msra.mxu0 0
        %1328 = vmatprep.subr.bf16.mxu0 0
        %1329 = vmatpush2.bf16.msra.mxu0 0
        %1330 = vmatprep.subr.bf16.mxu0 0
        %1331 = vmatpush2.bf16.msra.mxu0 0
        %1332 = vmatprep.mubr.bf16.mxu0 0
        %1333 = vmatmul.mubr.bf16.gmra.mxu0 %v1295
        %v1334 = vpop.f32.mrf.mxu0
        %v1335 = vadd.f32 0.0, %v1334
        %v1336 = vpop.f32.mrf.mxu0
        %v1337 = vpop.f32.mrf.mxu0
        %v1338 = vpop.f32.mrf.mxu0
        %1339 = vdwg.mxu0
        %v1340 = vpack.c.bf16 %v1335, %v1289
        %v1341 = vld [vmem:[%s633] sm:$0xf]
        %v1342 = vld [vmem:[%s633 + $0x4] sm:$0xf]
        %v1343 = vld [vmem:[%s633 + $0x8] sm:$0xf]
        %v1344 = vld [vmem:[%s633 + $0xc] sm:$0xf]
        %v1345 = vld [vmem:[%s633 + $0x10] sm:$0xf]
        %v1346 = vld [vmem:[%s633 + $0x14] sm:$0xf]
        %v1347 = vld [vmem:[%s633 + $0x18] sm:$0xf]
        %v1348 = vld [vmem:[%s633 + $0x1c] sm:$0xf]
        %v1349 = vld [vmem:[%s633 + $0x20] sm:$0xf]
        %v1350 = vld [vmem:[%s633 + $0x24] sm:$0xf]
        %v1351 = vld [vmem:[%s633 + $0x28] sm:$0xf]
        %v1352 = vld [vmem:[%s633 + $0x2c] sm:$0xf]
        %v1353 = vld [vmem:[%s633 + $0x30] sm:$0xf]
        %v1354 = vld [vmem:[%s633 + $0x34] sm:$0xf]
        %v1355 = vld [vmem:[%s633 + $0x38] sm:$0xf]
        %v1356 = vld [vmem:[%s633 + $0x3c] sm:$0xf]
        %v1357 = vld [vmem:[%s742] sm:$0x1]
        %v1359 = vlaneseq
        %v1360 = vshrl.u32 %v1359, 7
        %v1361 = vsub.s32 0, %v1360
        %v1362 = vrot.slane %v1357, %v1361
        %v1380 = vunpack.c.l.b16 %v1341
        %v1381 = vunpack.c.l.b16 %v1342
        %v1382 = vunpack.c.l.b16 %v1343
        %v1383 = vunpack.c.l.b16 %v1344
        %v1384 = vunpack.c.l.b16 %v1345
        %v1385 = vunpack.c.l.b16 %v1346
        %v1386 = vunpack.c.l.b16 %v1347
        %v1387 = vunpack.c.l.b16 %v1348
        %v1388 = vunpack.c.l.b16 %v1349
        %v1389 = vunpack.c.l.b16 %v1350
        %v1390 = vunpack.c.l.b16 %v1351
        %v1391 = vunpack.c.l.b16 %v1352
        %v1392 = vunpack.c.l.b16 %v1353
        %v1393 = vunpack.c.l.b16 %v1354
        %v1394 = vunpack.c.l.b16 %v1355
        %v1395 = vunpack.c.l.b16 %v1356
        %v1396 = vpack.c.b16 %v1381, %v1380
        %v1397 = vpack.c.b16 %v1383, %v1382
        %v1398 = vpack.c.b16 %v1385, %v1384
        %v1399 = vpack.c.b16 %v1387, %v1386
        %v1400 = vpack.c.b16 %v1389, %v1388
        %v1401 = vpack.c.b16 %v1391, %v1390
        %v1402 = vpack.c.b16 %v1393, %v1392
        %v1403 = vpack.c.b16 %v1395, %v1394
        %1412 = vmatprep.subr.bf16.mxu0 0
        %1413 = vmatpush1.bf16.msra.mxu0 %v1403
        %1414 = vmatprep.subr.bf16.mxu0 0
        %1415 = vmatpush1.bf16.msra.mxu0 %v1402
        %1416 = vmatprep.subr.bf16.mxu0 0
        %1417 = vmatpush1.bf16.msra.mxu0 %v1401
        %1418 = vmatprep.subr.bf16.mxu0 0
        %1419 = vmatpush1.bf16.msra.mxu0 %v1400
        %1420 = vmatprep.subr.bf16.mxu0 0
        %1421 = vmatpush1.bf16.msra.mxu0 %v1399
        %1422 = vmatprep.subr.bf16.mxu0 0
        %1423 = vmatpush1.bf16.msra.mxu0 %v1398
        %1424 = vmatprep.subr.bf16.mxu0 0
        %1425 = vmatpush1.bf16.msra.mxu0 %v1397
        %1426 = vmatprep.subr.bf16.mxu0 0
        %1427 = vmatpush1.bf16.msra.mxu0 %v1396
        %1428 = vmatprep.subr.bf16.mxu0 0
        %1429 = vmatpush2.bf16.msra.mxu0 0
        %1430 = vmatprep.subr.bf16.mxu0 0
        %1431 = vmatpush2.bf16.msra.mxu0 0
        %1432 = vmatprep.subr.bf16.mxu0 0
        %1433 = vmatpush2.bf16.msra.mxu0 0
        %1434 = vmatprep.subr.bf16.mxu0 0
        %1435 = vmatpush2.bf16.msra.mxu0 0
        %1436 = vmatprep.subr.bf16.mxu0 0
        %1437 = vmatpush2.bf16.msra.mxu0 0
        %1438 = vmatprep.subr.bf16.mxu0 0
        %1439 = vmatpush2.bf16.msra.mxu0 0
        %1440 = vmatprep.subr.bf16.mxu0 0
        %1441 = vmatpush2.bf16.msra.mxu0 0
        %1442 = vmatprep.subr.bf16.mxu0 0
        %1443 = vmatpush2.bf16.msra.mxu0 0
        %1444 = vmatprep.mubr.bf16.mxu0 0
        %1445 = vmatmul.mubr.bf16.gmra.mxu0 %v1340
        %v1446 = vpop.f32.mrf.mxu0
        %v1447 = vadd.f32 %v1362, %v1446
        %v1448 = vpop.f32.mrf.mxu0
        %v1449 = vpop.f32.mrf.mxu0
        %v1450 = vadd.f32 %v1362, %v1449
        %v1451 = vpop.f32.mrf.mxu0
        %1452 = vdwg.mxu0
        %v1453 = vadd.f32 %v870, %v1447
        %v1454 = vadd.f32 %v871, %v1450
        %v1455 = vld [vmem:[%s745] sm:$0x1]
        %v1456 = vld [vmem:[%s748] sm:$0x1]
        %1457 = vadd.xlane.f32.xlu0 %v1453
        %v1458 = vpop.xlane.xlu0 %1457
        %1459 = vadd.xlane.f32.xlu0 %v1454
        %v1460 = vpop.xlane.xlu0 %1459
        %v1461 = vrcp.pop 128.0
        %v1462 = vmul.f32 %v1458, %v1461
        %v1463 = vmul.f32 %v1460, %v1461
        %v1464 = vsub.f32 %v1453, %v1462
        %v1465 = vsub.f32 %v1454, %v1463
        %v1466 = vmul.f32 %v1464, %v1464
        %v1467 = vmul.f32 %v1465, %v1465
        %1468 = vadd.xlane.f32.xlu0 %v1466
        %v1469 = vpop.xlane.xlu0 %1468
        %1470 = vadd.xlane.f32.xlu0 %v1467
        %v1471 = vpop.xlane.xlu0 %1470
        %v1472 = vmul.f32 %v1469, %v1461
        %v1473 = vmul.f32 %v1471, %v1461
        %v1474 = vadd.f32 %v1472, 1e-05
        %v1475 = vadd.f32 %v1473, 1e-05
        %v1476 = vrsqrt.pop %v1474
        %v1477 = vrsqrt.pop %v1475
        %v1478 = vmul.f32 %v1464, %v1476
        %v1479 = vmul.f32 %v1465, %v1477
        %v1481 = vlaneseq
        %v1482 = vshrl.u32 %v1481, 7
        %v1483 = vsub.s32 0, %v1482
        %v1484 = vrot.slane %v1455, %v1483
        %v1486 = vmul.f32 %v1478, %v1484
        %v1487 = vmul.f32 %v1479, %v1484
        %v1489 = vlaneseq
        %v1490 = vshrl.u32 %v1489, 7
        %v1491 = vsub.s32 0, %v1490
        %v1492 = vrot.slane %v1456, %v1491
        %v1494 = vadd.f32 %v1486, %v1492
        %v1495 = vadd.f32 %v1487, %v1492
        %v1496 = vpack.c.bf16 %v1495, %v1494
        %v1497 = vld [vmem:[%s642] sm:$0xff]
        %v1498 = vld [vmem:[%s642 + $0x8] sm:$0xff]
        %v1499 = vld [vmem:[%s642 + $0x10] sm:$0xff]
        %v1500 = vld [vmem:[%s642 + $0x18] sm:$0xff]
        %v1501 = vld [vmem:[%s642 + $0x20] sm:$0xff]
        %v1502 = vld [vmem:[%s642 + $0x28] sm:$0xff]
        %v1503 = vld [vmem:[%s642 + $0x30] sm:$0xff]
        %v1504 = vld [vmem:[%s642 + $0x38] sm:$0xff]
        %v1505 = vld [vmem:[%s642 + $0x40] sm:$0xff]
        %v1506 = vld [vmem:[%s642 + $0x48] sm:$0xff]
        %v1507 = vld [vmem:[%s642 + $0x50] sm:$0xff]
        %v1508 = vld [vmem:[%s642 + $0x58] sm:$0xff]
        %v1509 = vld [vmem:[%s642 + $0x60] sm:$0xff]
        %v1510 = vld [vmem:[%s642 + $0x68] sm:$0xff]
        %v1511 = vld [vmem:[%s642 + $0x70] sm:$0xff]
        %v1512 = vld [vmem:[%s642 + $0x78] sm:$0xff]
        %v1513 = vld [vmem:[%s642 + $0x80] sm:$0xff]
        %v1514 = vld [vmem:[%s642 + $0x88] sm:$0xff]
        %v1515 = vld [vmem:[%s642 + $0x90] sm:$0xff]
        %v1516 = vld [vmem:[%s642 + $0x98] sm:$0xff]
        %v1517 = vld [vmem:[%s642 + $0xa0] sm:$0xff]
        %v1518 = vld [vmem:[%s642 + $0xa8] sm:$0xff]
        %v1519 = vld [vmem:[%s642 + $0xb0] sm:$0xff]
        %v1520 = vld [vmem:[%s642 + $0xb8] sm:$0xff]
        %v1521 = vld [vmem:[%s642 + $0xc0] sm:$0xff]
        %v1522 = vld [vmem:[%s642 + $0xc8] sm:$0xff]
        %v1523 = vld [vmem:[%s642 + $0xd0] sm:$0xff]
        %v1524 = vld [vmem:[%s642 + $0xd8] sm:$0xff]
        %v1525 = vld [vmem:[%s642 + $0xe0] sm:$0xff]
        %v1526 = vld [vmem:[%s642 + $0xe8] sm:$0xff]
        %v1527 = vld [vmem:[%s642 + $0xf0] sm:$0xff]
        %v1528 = vld [vmem:[%s642 + $0xf8] sm:$0xff]
        %v1529 = vld [vmem:[%s752] sm:$0xf]
        %v1531 = vlaneseq
        %v1532 = vshrl.u32 %v1531, 7
        %v1533 = vsub.s32 0, %v1532
        %v1534 = vrot.slane %v1529, %v1533
        %v1535 = vlaneseq
        %v1536 = vshrl.u32 %v1535, 7
        %v1537 = vsub.s32 1, %v1536
        %v1538 = vrot.slane %v1529, %v1537
        %v1539 = vlaneseq
        %v1540 = vshrl.u32 %v1539, 7
        %v1541 = vsub.s32 2, %v1540
        %v1542 = vrot.slane %v1529, %v1541
        %v1543 = vlaneseq
        %v1544 = vshrl.u32 %v1543, 7
        %v1545 = vsub.s32 3, %v1544
        %v1546 = vrot.slane %v1529, %v1545
        %v1583 = vunpack.c.l.b16 %v1497
        %v1584 = vunpack.c.h.b16 %v1497
        %v1585 = vunpack.c.l.b16 %v1498
        %v1586 = vunpack.c.h.b16 %v1498
        %v1587 = vunpack.c.l.b16 %v1499
        %v1588 = vunpack.c.h.b16 %v1499
        %v1589 = vunpack.c.l.b16 %v1500
        %v1590 = vunpack.c.h.b16 %v1500
        %v1591 = vunpack.c.l.b16 %v1501
        %v1592 = vunpack.c.h.b16 %v1501
        %v1593 = vunpack.c.l.b16 %v1502
        %v1594 = vunpack.c.h.b16 %v1502
        %v1595 = vunpack.c.l.b16 %v1503
        %v1596 = vunpack.c.h.b16 %v1503
        %v1597 = vunpack.c.l.b16 %v1504
        %v1598 = vunpack.c.h.b16 %v1504
        %v1599 = vunpack.c.l.b16 %v1505
        %v1600 = vunpack.c.h.b16 %v1505
        %v1601 = vunpack.c.l.b16 %v1506
        %v1602 = vunpack.c.h.b16 %v1506
        %v1603 = vunpack.c.l.b16 %v1507
        %v1604 = vunpack.c.h.b16 %v1507
        %v1605 = vunpack.c.l.b16 %v1508
        %v1606 = vunpack.c.h.b16 %v1508
        %v1607 = vunpack.c.l.b16 %v1509
        %v1608 = vunpack.c.h.b16 %v1509
        %v1609 = vunpack.c.l.b16 %v1510
        %v1610 = vunpack.c.h.b16 %v1510
        %v1611 = vunpack.c.l.b16 %v1511
        %v1612 = vunpack.c.h.b16 %v1511
        %v1613 = vunpack.c.l.b16 %v1512
        %v1614 = vunpack.c.h.b16 %v1512
        %v1615 = vunpack.c.l.b16 %v1513
        %v1616 = vunpack.c.h.b16 %v1513
        %v1617 = vunpack.c.l.b16 %v1514
        %v1618 = vunpack.c.h.b16 %v1514
        %v1619 = vunpack.c.l.b16 %v1515
        %v1620 = vunpack.c.h.b16 %v1515
        %v1621 = vunpack.c.l.b16 %v1516
        %v1622 = vunpack.c.h.b16 %v1516
        %v1623 = vunpack.c.l.b16 %v1517
        %v1624 = vunpack.c.h.b16 %v1517
        %v1625 = vunpack.c.l.b16 %v1518
        %v1626 = vunpack.c.h.b16 %v1518
        %v1627 = vunpack.c.l.b16 %v1519
        %v1628 = vunpack.c.h.b16 %v1519
        %v1629 = vunpack.c.l.b16 %v1520
        %v1630 = vunpack.c.h.b16 %v1520
        %v1631 = vunpack.c.l.b16 %v1521
        %v1632 = vunpack.c.h.b16 %v1521
        %v1633 = vunpack.c.l.b16 %v1522
        %v1634 = vunpack.c.h.b16 %v1522
        %v1635 = vunpack.c.l.b16 %v1523
        %v1636 = vunpack.c.h.b16 %v1523
        %v1637 = vunpack.c.l.b16 %v1524
        %v1638 = vunpack.c.h.b16 %v1524
        %v1639 = vunpack.c.l.b16 %v1525
        %v1640 = vunpack.c.h.b16 %v1525
        %v1641 = vunpack.c.l.b16 %v1526
        %v1642 = vunpack.c.h.b16 %v1526
        %v1643 = vunpack.c.l.b16 %v1527
        %v1644 = vunpack.c.h.b16 %v1527
        %v1645 = vunpack.c.l.b16 %v1528
        %v1646 = vunpack.c.h.b16 %v1528
        %v1647 = vpack.c.b16 %v1587, %v1583
        %v1648 = vpack.c.b16 %v1588, %v1584
        %v1649 = vpack.c.b16 %v1589, %v1585
        %v1650 = vpack.c.b16 %v1590, %v1586
        %v1651 = vpack.c.b16 %v1595, %v1591
        %v1652 = vpack.c.b16 %v1596, %v1592
        %v1653 = vpack.c.b16 %v1597, %v1593
        %v1654 = vpack.c.b16 %v1598, %v1594
        %v1655 = vpack.c.b16 %v1603, %v1599
        %v1656 = vpack.c.b16 %v1604, %v1600
        %v1657 = vpack.c.b16 %v1605, %v1601
        %v1658 = vpack.c.b16 %v1606, %v1602
        %v1659 = vpack.c.b16 %v1611, %v1607
        %v1660 = vpack.c.b16 %v1612, %v1608
        %v1661 = vpack.c.b16 %v1613, %v1609
        %v1662 = vpack.c.b16 %v1614, %v1610
        %v1663 = vpack.c.b16 %v1619, %v1615
        %v1664 = vpack.c.b16 %v1620, %v1616
        %v1665 = vpack.c.b16 %v1621, %v1617
        %v1666 = vpack.c.b16 %v1622, %v1618
        %v1667 = vpack.c.b16 %v1627, %v1623
        %v1668 = vpack.c.b16 %v1628, %v1624
        %v1669 = vpack.c.b16 %v1629, %v1625
        %v1670 = vpack.c.b16 %v1630, %v1626
        %v1671 = vpack.c.b16 %v1635, %v1631
        %v1672 = vpack.c.b16 %v1636, %v1632
        %v1673 = vpack.c.b16 %v1637, %v1633
        %v1674 = vpack.c.b16 %v1638, %v1634
        %v1675 = vpack.c.b16 %v1643, %v1639
        %v1676 = vpack.c.b16 %v1644, %v1640
        %v1677 = vpack.c.b16 %v1645, %v1641
        %v1678 = vpack.c.b16 %v1646, %v1642
        %1711 = vmatprep.subr.bf16.mxu0 %v1676
        %1712 = vmatpush1.bf16.msra.mxu0 %v1675
        %1713 = vmatprep.subr.bf16.mxu0 %v1672
        %1714 = vmatpush1.bf16.msra.mxu0 %v1671
        %1715 = vmatprep.subr.bf16.mxu0 %v1668
        %1716 = vmatpush1.bf16.msra.mxu0 %v1667
        %1717 = vmatprep.subr.bf16.mxu0 %v1664
        %1718 = vmatpush1.bf16.msra.mxu0 %v1663
        %1719 = vmatprep.subr.bf16.mxu0 %v1660
        %1720 = vmatpush1.bf16.msra.mxu0 %v1659
        %1721 = vmatprep.subr.bf16.mxu0 %v1656
        %1722 = vmatpush1.bf16.msra.mxu0 %v1655
        %1723 = vmatprep.subr.bf16.mxu0 %v1652
        %1724 = vmatpush1.bf16.msra.mxu0 %v1651
        %1725 = vmatprep.subr.bf16.mxu0 %v1648
        %1726 = vmatpush1.bf16.msra.mxu0 %v1647
        %1727 = vmatprep.subr.bf16.mxu0 0
        %1728 = vmatpush2.bf16.msra.mxu0 0
        %1729 = vmatprep.subr.bf16.mxu0 0
        %1730 = vmatpush2.bf16.msra.mxu0 0
        %1731 = vmatprep.subr.bf16.mxu0 0
        %1732 = vmatpush2.bf16.msra.mxu0 0
        %1733 = vmatprep.subr.bf16.mxu0 0
        %1734 = vmatpush2.bf16.msra.mxu0 0
        %1735 = vmatprep.subr.bf16.mxu0 0
        %1736 = vmatpush2.bf16.msra.mxu0 0
        %1737 = vmatprep.subr.bf16.mxu0 0
        %1738 = vmatpush2.bf16.msra.mxu0 0
        %1739 = vmatprep.subr.bf16.mxu0 0
        %1740 = vmatpush2.bf16.msra.mxu0 0
        %1741 = vmatprep.subr.bf16.mxu0 0
        %1742 = vmatpush2.bf16.msra.mxu0 0
        %1743 = vmatprep.mubr.bf16.mxu0 0
        %1744 = vmatmul.mubr.bf16.gmra.mxu0 %v1496
        %v1745 = vpop.f32.mrf.mxu0
        %v1746 = vadd.f32 %v1534, %v1745
        %v1747 = vpop.f32.mrf.mxu0
        %v1748 = vadd.f32 %v1538, %v1747
        %v1749 = vpop.f32.mrf.mxu0
        %v1750 = vadd.f32 %v1534, %v1749
        %v1751 = vpop.f32.mrf.mxu0
        %v1752 = vadd.f32 %v1538, %v1751
        %1753 = vdwg.mxu0
        %1754 = vmatprep.subr.bf16.mxu0 %v1678
        %1755 = vmatpush1.bf16.msra.mxu0 %v1677
        %1756 = vmatprep.subr.bf16.mxu0 %v1674
        %1757 = vmatpush1.bf16.msra.mxu0 %v1673
        %1758 = vmatprep.subr.bf16.mxu0 %v1670
        %1759 = vmatpush1.bf16.msra.mxu0 %v1669
        %1760 = vmatprep.subr.bf16.mxu0 %v1666
        %1761 = vmatpush1.bf16.msra.mxu0 %v1665
        %1762 = vmatprep.subr.bf16.mxu0 %v1662
        %1763 = vmatpush1.bf16.msra.mxu0 %v1661
        %1764 = vmatprep.subr.bf16.mxu0 %v1658
        %1765 = vmatpush1.bf16.msra.mxu0 %v1657
        %1766 = vmatprep.subr.bf16.mxu0 %v1654
        %1767 = vmatpush1.bf16.msra.mxu0 %v1653
        %1768 = vmatprep.subr.bf16.mxu0 %v1650
        %1769 = vmatpush1.bf16.msra.mxu0 %v1649
        %1770 = vmatprep.subr.bf16.mxu0 0
        %1771 = vmatpush2.bf16.msra.mxu0 0
        %1772 = vmatprep.subr.bf16.mxu0 0
        %1773 = vmatpush2.bf16.msra.mxu0 0
        %1774 = vmatprep.subr.bf16.mxu0 0
        %1775 = vmatpush2.bf16.msra.mxu0 0
        %1776 = vmatprep.subr.bf16.mxu0 0
        %1777 = vmatpush2.bf16.msra.mxu0 0
        %1778 = vmatprep.subr.bf16.mxu0 0
        %1779 = vmatpush2.bf16.msra.mxu0 0
        %1780 = vmatprep.subr.bf16.mxu0 0
        %1781 = vmatpush2.bf16.msra.mxu0 0
        %1782 = vmatprep.subr.bf16.mxu0 0
        %1783 = vmatpush2.bf16.msra.mxu0 0
        %1784 = vmatprep.subr.bf16.mxu0 0
        %1785 = vmatpush2.bf16.msra.mxu0 0
        %1786 = vmatprep.mubr.bf16.mxu0 0
        %1787 = vmatmul.mubr.bf16.gmra.mxu0 %v1496
        %v1788 = vpop.f32.mrf.mxu0
        %v1789 = vadd.f32 %v1542, %v1788
        %v1790 = vpop.f32.mrf.mxu0
        %v1791 = vadd.f32 %v1546, %v1790
        %v1792 = vpop.f32.mrf.mxu0
        %v1793 = vadd.f32 %v1542, %v1792
        %v1794 = vpop.f32.mrf.mxu0
        %v1795 = vadd.f32 %v1546, %v1794
        %1796 = vdwg.mxu0
        %v1797 = vmax.f32 %v1746, 0.0
        %v1798 = vmax.f32 %v1748, 0.0
        %v1799 = vmax.f32 %v1789, 0.0
        %v1800 = vmax.f32 %v1791, 0.0
        %v1801 = vmax.f32 %v1750, 0.0
        %v1802 = vmax.f32 %v1752, 0.0
        %v1803 = vmax.f32 %v1793, 0.0
        %v1804 = vmax.f32 %v1795, 0.0
        %v1805 = vpack.c.bf16 %v1801, %v1797
        %v1806 = vpack.c.bf16 %v1802, %v1798
        %v1807 = vpack.c.bf16 %v1803, %v1799
        %v1808 = vpack.c.bf16 %v1804, %v1800
        %v1809 = vld [vmem:[%s651] sm:$0xf]
        %v1810 = vld [vmem:[%s651 + $0x4] sm:$0xf]
        %v1811 = vld [vmem:[%s651 + $0x8] sm:$0xf]
        %v1812 = vld [vmem:[%s651 + $0xc] sm:$0xf]
        %v1813 = vld [vmem:[%s651 + $0x10] sm:$0xf]
        %v1814 = vld [vmem:[%s651 + $0x14] sm:$0xf]
        %v1815 = vld [vmem:[%s651 + $0x18] sm:$0xf]
        %v1816 = vld [vmem:[%s651 + $0x1c] sm:$0xf]
        %v1817 = vld [vmem:[%s651 + $0x20] sm:$0xf]
        %v1818 = vld [vmem:[%s651 + $0x24] sm:$0xf]
        %v1819 = vld [vmem:[%s651 + $0x28] sm:$0xf]
        %v1820 = vld [vmem:[%s651 + $0x2c] sm:$0xf]
        %v1821 = vld [vmem:[%s651 + $0x30] sm:$0xf]
        %v1822 = vld [vmem:[%s651 + $0x34] sm:$0xf]
        %v1823 = vld [vmem:[%s651 + $0x38] sm:$0xf]
        %v1824 = vld [vmem:[%s651 + $0x3c] sm:$0xf]
        %v1825 = vld [vmem:[%s651 + $0x40] sm:$0xf]
        %v1826 = vld [vmem:[%s651 + $0x44] sm:$0xf]
        %v1827 = vld [vmem:[%s651 + $0x48] sm:$0xf]
        %v1828 = vld [vmem:[%s651 + $0x4c] sm:$0xf]
        %v1829 = vld [vmem:[%s651 + $0x50] sm:$0xf]
        %v1830 = vld [vmem:[%s651 + $0x54] sm:$0xf]
        %v1831 = vld [vmem:[%s651 + $0x58] sm:$0xf]
        %v1832 = vld [vmem:[%s651 + $0x5c] sm:$0xf]
        %v1833 = vld [vmem:[%s651 + $0x60] sm:$0xf]
        %v1834 = vld [vmem:[%s651 + $0x64] sm:$0xf]
        %v1835 = vld [vmem:[%s651 + $0x68] sm:$0xf]
        %v1836 = vld [vmem:[%s651 + $0x6c] sm:$0xf]
        %v1837 = vld [vmem:[%s651 + $0x70] sm:$0xf]
        %v1838 = vld [vmem:[%s651 + $0x74] sm:$0xf]
        %v1839 = vld [vmem:[%s651 + $0x78] sm:$0xf]
        %v1840 = vld [vmem:[%s651 + $0x7c] sm:$0xf]
        %v1841 = vld [vmem:[%s651 + $0x80] sm:$0xf]
        %v1842 = vld [vmem:[%s651 + $0x84] sm:$0xf]
        %v1843 = vld [vmem:[%s651 + $0x88] sm:$0xf]
        %v1844 = vld [vmem:[%s651 + $0x8c] sm:$0xf]
        %v1845 = vld [vmem:[%s651 + $0x90] sm:$0xf]
        %v1846 = vld [vmem:[%s651 + $0x94] sm:$0xf]
        %v1847 = vld [vmem:[%s651 + $0x98] sm:$0xf]
        %v1848 = vld [vmem:[%s651 + $0x9c] sm:$0xf]
        %v1849 = vld [vmem:[%s651 + $0xa0] sm:$0xf]
        %v1850 = vld [vmem:[%s651 + $0xa4] sm:$0xf]
        %v1851 = vld [vmem:[%s651 + $0xa8] sm:$0xf]
        %v1852 = vld [vmem:[%s651 + $0xac] sm:$0xf]
        %v1853 = vld [vmem:[%s651 + $0xb0] sm:$0xf]
        %v1854 = vld [vmem:[%s651 + $0xb4] sm:$0xf]
        %v1855 = vld [vmem:[%s651 + $0xb8] sm:$0xf]
        %v1856 = vld [vmem:[%s651 + $0xbc] sm:$0xf]
        %v1857 = vld [vmem:[%s651 + $0xc0] sm:$0xf]
        %v1858 = vld [vmem:[%s651 + $0xc4] sm:$0xf]
        %v1859 = vld [vmem:[%s651 + $0xc8] sm:$0xf]
        %v1860 = vld [vmem:[%s651 + $0xcc] sm:$0xf]
        %v1861 = vld [vmem:[%s651 + $0xd0] sm:$0xf]
        %v1862 = vld [vmem:[%s651 + $0xd4] sm:$0xf]
        %v1863 = vld [vmem:[%s651 + $0xd8] sm:$0xf]
        %v1864 = vld [vmem:[%s651 + $0xdc] sm:$0xf]
        %v1865 = vld [vmem:[%s651 + $0xe0] sm:$0xf]
        %v1866 = vld [vmem:[%s651 + $0xe4] sm:$0xf]
        %v1867 = vld [vmem:[%s651 + $0xe8] sm:$0xf]
        %v1868 = vld [vmem:[%s651 + $0xec] sm:$0xf]
        %v1869 = vld [vmem:[%s651 + $0xf0] sm:$0xf]
        %v1870 = vld [vmem:[%s651 + $0xf4] sm:$0xf]
        %v1871 = vld [vmem:[%s651 + $0xf8] sm:$0xf]
        %v1872 = vld [vmem:[%s651 + $0xfc] sm:$0xf]
        %v1873 = vld [vmem:[%s755] sm:$0x1]
        %v1875 = vlaneseq
        %v1876 = vshrl.u32 %v1875, 7
        %v1877 = vsub.s32 0, %v1876
        %v1878 = vrot.slane %v1873, %v1877
        %v1944 = vunpack.c.l.b16 %v1809
        %v1945 = vunpack.c.l.b16 %v1810
        %v1946 = vunpack.c.l.b16 %v1811
        %v1947 = vunpack.c.l.b16 %v1812
        %v1948 = vunpack.c.l.b16 %v1813
        %v1949 = vunpack.c.l.b16 %v1814
        %v1950 = vunpack.c.l.b16 %v1815
        %v1951 = vunpack.c.l.b16 %v1816
        %v1952 = vunpack.c.l.b16 %v1817
        %v1953 = vunpack.c.l.b16 %v1818
        %v1954 = vunpack.c.l.b16 %v1819
        %v1955 = vunpack.c.l.b16 %v1820
        %v1956 = vunpack.c.l.b16 %v1821
        %v1957 = vunpack.c.l.b16 %v1822
        %v1958 = vunpack.c.l.b16 %v1823
        %v1959 = vunpack.c.l.b16 %v1824
        %v1960 = vunpack.c.l.b16 %v1825
        %v1961 = vunpack.c.l.b16 %v1826
        %v1962 = vunpack.c.l.b16 %v1827
        %v1963 = vunpack.c.l.b16 %v1828
        %v1964 = vunpack.c.l.b16 %v1829
        %v1965 = vunpack.c.l.b16 %v1830
        %v1966 = vunpack.c.l.b16 %v1831
        %v1967 = vunpack.c.l.b16 %v1832
        %v1968 = vunpack.c.l.b16 %v1833
        %v1969 = vunpack.c.l.b16 %v1834
        %v1970 = vunpack.c.l.b16 %v1835
        %v1971 = vunpack.c.l.b16 %v1836
        %v1972 = vunpack.c.l.b16 %v1837
        %v1973 = vunpack.c.l.b16 %v1838
        %v1974 = vunpack.c.l.b16 %v1839
        %v1975 = vunpack.c.l.b16 %v1840
        %v1976 = vunpack.c.l.b16 %v1841
        %v1977 = vunpack.c.l.b16 %v1842
        %v1978 = vunpack.c.l.b16 %v1843
        %v1979 = vunpack.c.l.b16 %v1844
        %v1980 = vunpack.c.l.b16 %v1845
        %v1981 = vunpack.c.l.b16 %v1846
        %v1982 = vunpack.c.l.b16 %v1847
        %v1983 = vunpack.c.l.b16 %v1848
        %v1984 = vunpack.c.l.b16 %v1849
        %v1985 = vunpack.c.l.b16 %v1850
        %v1986 = vunpack.c.l.b16 %v1851
        %v1987 = vunpack.c.l.b16 %v1852
        %v1988 = vunpack.c.l.b16 %v1853
        %v1989 = vunpack.c.l.b16 %v1854
        %v1990 = vunpack.c.l.b16 %v1855
        %v1991 = vunpack.c.l.b16 %v1856
        %v1992 = vunpack.c.l.b16 %v1857
        %v1993 = vunpack.c.l.b16 %v1858
        %v1994 = vunpack.c.l.b16 %v1859
        %v1995 = vunpack.c.l.b16 %v1860
        %v1996 = vunpack.c.l.b16 %v1861
        %v1997 = vunpack.c.l.b16 %v1862
        %v1998 = vunpack.c.l.b16 %v1863
        %v1999 = vunpack.c.l.b16 %v1864
        %v2000 = vunpack.c.l.b16 %v1865
        %v2001 = vunpack.c.l.b16 %v1866
        %v2002 = vunpack.c.l.b16 %v1867
        %v2003 = vunpack.c.l.b16 %v1868
        %v2004 = vunpack.c.l.b16 %v1869
        %v2005 = vunpack.c.l.b16 %v1870
        %v2006 = vunpack.c.l.b16 %v1871
        %v2007 = vunpack.c.l.b16 %v1872
        %v2008 = vpack.c.b16 %v1945, %v1944
        %v2009 = vpack.c.b16 %v1947, %v1946
        %v2010 = vpack.c.b16 %v1949, %v1948
        %v2011 = vpack.c.b16 %v1951, %v1950
        %v2012 = vpack.c.b16 %v1953, %v1952
        %v2013 = vpack.c.b16 %v1955, %v1954
        %v2014 = vpack.c.b16 %v1957, %v1956
        %v2015 = vpack.c.b16 %v1959, %v1958
        %v2016 = vpack.c.b16 %v1961, %v1960
        %v2017 = vpack.c.b16 %v1963, %v1962
        %v2018 = vpack.c.b16 %v1965, %v1964
        %v2019 = vpack.c.b16 %v1967, %v1966
        %v2020 = vpack.c.b16 %v1969, %v1968
        %v2021 = vpack.c.b16 %v1971, %v1970
        %v2022 = vpack.c.b16 %v1973, %v1972
        %v2023 = vpack.c.b16 %v1975, %v1974
        %v2024 = vpack.c.b16 %v1977, %v1976
        %v2025 = vpack.c.b16 %v1979, %v1978
        %v2026 = vpack.c.b16 %v1981, %v1980
        %v2027 = vpack.c.b16 %v1983, %v1982
        %v2028 = vpack.c.b16 %v1985, %v1984
        %v2029 = vpack.c.b16 %v1987, %v1986
        %v2030 = vpack.c.b16 %v1989, %v1988
        %v2031 = vpack.c.b16 %v1991, %v1990
        %v2032 = vpack.c.b16 %v1993, %v1992
        %v2033 = vpack.c.b16 %v1995, %v1994
        %v2034 = vpack.c.b16 %v1997, %v1996
        %v2035 = vpack.c.b16 %v1999, %v1998
        %v2036 = vpack.c.b16 %v2001, %v2000
        %v2037 = vpack.c.b16 %v2003, %v2002
        %v2038 = vpack.c.b16 %v2005, %v2004
        %v2039 = vpack.c.b16 %v2007, %v2006
        %2072 = vmatprep.subr.bf16.mxu0 0
        %2073 = vmatpush1.bf16.msra.mxu0 %v2015
        %2074 = vmatprep.subr.bf16.mxu0 0
        %2075 = vmatpush1.bf16.msra.mxu0 %v2014
        %2076 = vmatprep.subr.bf16.mxu0 0
        %2077 = vmatpush1.bf16.msra.mxu0 %v2013
        %2078 = vmatprep.subr.bf16.mxu0 0
        %2079 = vmatpush1.bf16.msra.mxu0 %v2012
        %2080 = vmatprep.subr.bf16.mxu0 0
        %2081 = vmatpush1.bf16.msra.mxu0 %v2011
        %2082 = vmatprep.subr.bf16.mxu0 0
        %2083 = vmatpush1.bf16.msra.mxu0 %v2010
        %2084 = vmatprep.subr.bf16.mxu0 0
        %2085 = vmatpush1.bf16.msra.mxu0 %v2009
        %2086 = vmatprep.subr.bf16.mxu0 0
        %2087 = vmatpush1.bf16.msra.mxu0 %v2008
        %2088 = vmatprep.subr.bf16.mxu0 0
        %2089 = vmatpush2.bf16.msra.mxu0 %v2023
        %2090 = vmatprep.subr.bf16.mxu0 0
        %2091 = vmatpush2.bf16.msra.mxu0 %v2022
        %2092 = vmatprep.subr.bf16.mxu0 0
        %2093 = vmatpush2.bf16.msra.mxu0 %v2021
        %2094 = vmatprep.subr.bf16.mxu0 0
        %2095 = vmatpush2.bf16.msra.mxu0 %v2020
        %2096 = vmatprep.subr.bf16.mxu0 0
        %2097 = vmatpush2.bf16.msra.mxu0 %v2019
        %2098 = vmatprep.subr.bf16.mxu0 0
        %2099 = vmatpush2.bf16.msra.mxu0 %v2018
        %2100 = vmatprep.subr.bf16.mxu0 0
        %2101 = vmatpush2.bf16.msra.mxu0 %v2017
        %2102 = vmatprep.subr.bf16.mxu0 0
        %2103 = vmatpush2.bf16.msra.mxu0 %v2016
        %2104 = vmatprep.mubr.bf16.mxu0 %v1806
        %2105 = vmatmul.mubr.bf16.gmra.mxu0 %v1805
        %v2106 = vpop.f32.mrf.mxu0
        %v2107 = vadd.f32 %v1878, %v2106
        %v2108 = vpop.f32.mrf.mxu0
        %v2109 = vpop.f32.mrf.mxu0
        %v2110 = vadd.f32 %v1878, %v2109
        %v2111 = vpop.f32.mrf.mxu0
        %2112 = vdwg.mxu0
        %2113 = vmatprep.subr.bf16.mxu0 0
        %2114 = vmatpush1.bf16.msra.mxu0 %v2031
        %2115 = vmatprep.subr.bf16.mxu0 0
        %2116 = vmatpush1.bf16.msra.mxu0 %v2030
        %2117 = vmatprep.subr.bf16.mxu0 0
        %2118 = vmatpush1.bf16.msra.mxu0 %v2029
        %2119 = vmatprep.subr.bf16.mxu0 0
        %2120 = vmatpush1.bf16.msra.mxu0 %v2028
        %2121 = vmatprep.subr.bf16.mxu0 0
        %2122 = vmatpush1.bf16.msra.mxu0 %v2027
        %2123 = vmatprep.subr.bf16.mxu0 0
        %2124 = vmatpush1.bf16.msra.mxu0 %v2026
        %2125 = vmatprep.subr.bf16.mxu0 0
        %2126 = vmatpush1.bf16.msra.mxu0 %v2025
        %2127 = vmatprep.subr.bf16.mxu0 0
        %2128 = vmatpush1.bf16.msra.mxu0 %v2024
        %2129 = vmatprep.subr.bf16.mxu0 0
        %2130 = vmatpush2.bf16.msra.mxu0 %v2039
        %2131 = vmatprep.subr.bf16.mxu0 0
        %2132 = vmatpush2.bf16.msra.mxu0 %v2038
        %2133 = vmatprep.subr.bf16.mxu0 0
        %2134 = vmatpush2.bf16.msra.mxu0 %v2037
        %2135 = vmatprep.subr.bf16.mxu0 0
        %2136 = vmatpush2.bf16.msra.mxu0 %v2036
        %2137 = vmatprep.subr.bf16.mxu0 0
        %2138 = vmatpush2.bf16.msra.mxu0 %v2035
        %2139 = vmatprep.subr.bf16.mxu0 0
        %2140 = vmatpush2.bf16.msra.mxu0 %v2034
        %2141 = vmatprep.subr.bf16.mxu0 0
        %2142 = vmatpush2.bf16.msra.mxu0 %v2033
        %2143 = vmatprep.subr.bf16.mxu0 0
        %2144 = vmatpush2.bf16.msra.mxu0 %v2032
        %2145 = vmatprep.mubr.bf16.mxu0 %v1808
        %2146 = vmatmul.mubr.bf16.gmra.mxu0 %v1807
        %v2147 = vpop.f32.mrf.mxu0
        %v2148 = vadd.f32 %v2107, %v2147
        %v2149 = vpop.f32.mrf.mxu0
        %v2150 = vpop.f32.mrf.mxu0
        %v2151 = vadd.f32 %v2110, %v2150
        %v2152 = vpop.f32.mrf.mxu0
        %2153 = vdwg.mxu0
        %v2154 = vadd.f32 %v1494, %v2148
        %v2155 = vadd.f32 %v1495, %v2151
        %v2156 = vld [vmem:[%s758] sm:$0x1]
        %v2157 = vld [vmem:[%s761] sm:$0x1]
        %2158 = vadd.xlane.f32.xlu0 %v2154
        %v2159 = vpop.xlane.xlu0 %2158
        %2160 = vadd.xlane.f32.xlu0 %v2155
        %v2161 = vpop.xlane.xlu0 %2160
        %v2162 = vmul.f32 %v2159, %v1461
        %v2163 = vmul.f32 %v2161, %v1461
        %v2164 = vsub.f32 %v2154, %v2162
        %v2165 = vsub.f32 %v2155, %v2163
        %v2166 = vmul.f32 %v2164, %v2164
        %v2167 = vmul.f32 %v2165, %v2165
        %2168 = vadd.xlane.f32.xlu0 %v2166
        %v2169 = vpop.xlane.xlu0 %2168
        %2170 = vadd.xlane.f32.xlu0 %v2167
        %v2171 = vpop.xlane.xlu0 %2170
        %v2172 = vmul.f32 %v2169, %v1461
        %v2173 = vmul.f32 %v2171, %v1461
        %v2174 = vadd.f32 %v2172, 1e-05
        %v2175 = vadd.f32 %v2173, 1e-05
        %v2176 = vrsqrt.pop %v2174
        %v2177 = vrsqrt.pop %v2175
        %v2178 = vmul.f32 %v2164, %v2176
        %v2179 = vmul.f32 %v2165, %v2177
        %v2181 = vlaneseq
        %v2182 = vshrl.u32 %v2181, 7
        %v2183 = vsub.s32 0, %v2182
        %v2184 = vrot.slane %v2156, %v2183
        %v2186 = vmul.f32 %v2178, %v2184
        %v2187 = vmul.f32 %v2179, %v2184
        %v2189 = vlaneseq
        %v2190 = vshrl.u32 %v2189, 7
        %v2191 = vsub.s32 0, %v2190
        %v2192 = vrot.slane %v2157, %v2191
        %v2194 = vadd.f32 %v2186, %v2192
        %v2195 = vadd.f32 %v2187, %v2192
        %p2196 = scmp.eq.s32.totalorder %s36, 1
        // Predicated region
        $region105: #{transformer_forward.2} parent=83 // pred_check
          %p2197 = pneg %p2196
        $region106: #{transformer_forward.2} parent=83 // pred_check_branch
          %2199 = sbr.rel (%p2197) target = $region108
        $region107: #{transformer_forward.2} parent=83 // pred_region
          %v2200 = vld [vmem:[#allocation2] sm:$0xff]
          %v2201 = vld [vmem:[#allocation2 + $0x8] sm:$0xff]
          %v2202 = vadd.f32 %v2194, %v2200
          %v2203 = vadd.f32 %v2195, %v2201
          %2204 = vst [vmem:[%s16] sm:$0xff] %v2202
          %2205 = vst [vmem:[%s16 + $0x8] sm:$0xff] %v2203
        $region108: #{transformer_forward.2} parent=83 // pred_fallthru
          _
        %p2206 = scmp.lt.s32.totalorder %s36, 1
        // Predicated region
        $region109: #{transformer_forward.2} parent=83 // pred_check
          %p2207 = pneg %p2206
        $region110: #{transformer_forward.2} parent=83 // pred_check_branch
          %2209 = sbr.rel (%p2207) target = $region112
        $region111: #{transformer_forward.2} parent=83 // pred_region
          %2210 = vst [vmem:[%s16] sm:$0xff] %v2194
          %2211 = vst [vmem:[%s16 + $0x8] sm:$0xff] %v2195
        $region112: #{transformer_forward.2} parent=83 // pred_fallthru
          _
        // Predicated region
        $region113: #{transformer_forward.2} parent=83 // pred_check
          %p2212 = pneg %p445
        $region114: #{transformer_forward.2} parent=83 // pred_check_branch
          %2214 = sbr.rel (%p2212) target = $region116
        $region115: #{transformer_forward.2} parent=83 // pred_region
          _
        $region116: #{transformer_forward.2} parent=83 // pred_fallthru
          _
        // Predicated region
        $region117: #{transformer_forward.2} parent=83 // pred_check
          %p2215 = pneg %p445
        $region118: #{transformer_forward.2} parent=83 // pred_check_branch
          %2217 = sbr.rel (%p2215) target = $region120
        $region119: #{transformer_forward.2} parent=83 // pred_region
          _
        $region120: #{transformer_forward.2} parent=83 // pred_fallthru
          _
      $region84: #{transformer_forward.2} parent=5 // pred_fallthru
        _
      %p2218 = scmp.le.s32.totalorder 2, %s31
      // Predicated region
      $region121: #{transformer_forward.2} parent=5 // pred_check
        %p2219 = pneg %p2218
      $region122: #{transformer_forward.2} parent=5 // pred_check_branch
        %2221 = sbr.rel (%p2219) target = $region124
      $region123: #{transformer_forward.2} parent=5 // pred_region
        %s2222 = ssub.s32 %s31, 2
      $region124: #{transformer_forward.2} parent=5 // pred_fallthru
        _
    $region6: #{transformer_forward.2} parent=1 // loop_footer
      %s35 = sadd.s32 1, %s31
    $region7: #{transformer_forward.2} parent=1 // loop_footer_branch
      %30 = sbr.rel target = $region3
    $region8: #{transformer_forward.2} parent=1 // loop_exit
      _
    %2223 = vsyncpa [#allocation4], 1
    %s2224 = scalar_lea.sflag [#allocation4], 1
    %2225 = vsyncpa %s2224, 1
    %2226 = vsyncpa [#allocation6], 1
    %s2227 = scalar_lea.sflag [#allocation6], 1
    %2228 = vsyncpa %s2227, 1
    %2229 = vsyncpa [#allocation9], 1
    %s2230 = scalar_lea.sflag [#allocation9], 1
    %2231 = vsyncpa %s2230, 1

// kernel: transformer_forward.3
$region0: #{transformer_forward.3}
  #allocation0 [shape = 'u32[]', space=smem, size = 0x4, offset = 0x4, fixed_abs, tag = 'smem constant byte address 0x4 - core index']
  #allocation1 [shape = 'u32[144,128]{1,0:T(1,128)}', space=vmem, size = 0x12000, scoped, tag = 'internal scratch']
  #allocation2 [shape = 'f32[2,8,128]{2,1,0:T(8,128)}', space=vmem, size = 0x2000, scoped, tag = 'scratch operand']
  #allocation3 [shape = 'f32[16,128]{1,0:T(8,128)}', space=vmem, size = 0x2000, scoped, tag = 'scratch operand']
  #allocation4 [shape = 'f32[1,1]{1,0:T(1,128)S(1)}', space=vmem, size = 0x200, scoped, tag = 'scoped memory for transformer_forward.3']
  #allocation5 [shape = 'f32[1,1]{1,0:T(1,128)S(1)}', space=vmem, size = 0x200, scoped, tag = 'scoped memory for transformer_forward.3']
  %s0 = inlined_call_operand.smem [shape: u32[30], index: -1, kind: input, shape index: {}]
  %s1 = sld [smem:[%s0]]
  %s2 = scalar_lea.smem %s0, 1
  %s3 = sld [smem:[%s2]]
  %s4 = scalar_lea.smem %s0, 2
  %s5 = sld [smem:[%s4]]
  %s6 = scalar_lea.smem %s0, 3
  %s7 = sld [smem:[%s6]]
  %s8 = scalar_lea.smem %s0, 4
  %s9 = sld [smem:[%s8]]
  %s10 = scalar_lea.smem %s0, 5
  %s11 = sld [smem:[%s10]]
  %s12 = scalar_lea.smem %s0, 6
  %s13 = sld [smem:[%s12]]
  %s14 = scalar_lea.smem %s0, 7
  %s15 = sld [smem:[%s14]]
  %s16 = scalar_lea.smem %s0, 8
  %s17 = sld [smem:[%s16]]
  %s18 = scalar_lea.smem %s0, 9
  %s19 = sld [smem:[%s18]]
  %s20 = scalar_lea.smem %s0, 10
  %s21 = sld [smem:[%s20]]
  %s22 = scalar_lea.smem %s0, 11
  %s23 = sld [smem:[%s22]]
  %s24 = scalar_lea.smem %s0, 12
  %s25 = sld [smem:[%s24]]
  %s26 = scalar_lea.smem %s0, 13
  %s27 = sld [smem:[%s26]]
  %s28 = scalar_lea.smem %s0, 14
  %s29 = sld [smem:[%s28]]
  %s30 = scalar_lea.smem %s0, 15
  %s31 = sld [smem:[%s30]]
  %s32 = scalar_lea.smem %s0, 16
  %s33 = sld [smem:[%s32]]
  %s34 = scalar_lea.smem %s0, 17
  %s35 = sld [smem:[%s34]]
  %s36 = scalar_lea.smem %s0, 18
  %s37 = sld [smem:[%s36]]
  %s38 = scalar_lea.smem %s0, 19
  %s39 = sld [smem:[%s38]]
  %s40 = scalar_lea.smem %s0, 20
  %s41 = sld [smem:[%s40]]
  %s42 = scalar_lea.smem %s0, 21
  %s43 = sld [smem:[%s42]]
  %s44 = scalar_lea.smem %s0, 22
  %s45 = sld [smem:[%s44]]
  %s46 = scalar_lea.smem %s0, 23
  %s47 = sld [smem:[%s46]]
  %s48 = scalar_lea.smem %s0, 24
  %s49 = sld [smem:[%s48]]
  %s50 = scalar_lea.smem %s0, 25
  %s51 = sld [smem:[%s50]]
  %s52 = scalar_lea.smem %s0, 26
  %s53 = sld [smem:[%s52]]
  %s54 = scalar_lea.smem %s0, 27
  %s55 = sld [smem:[%s54]]
  %s56 = scalar_lea.smem %s0, 28
  %s57 = sld [smem:[%s56]]
  %s58 = scalar_lea.smem %s0, 29
  %s59 = sld [smem:[%s58]]
  %s60 = sld [smem:[#allocation0]]
  $region177: #{transformer_forward.3} parent=0
    _
  %s62 = ssub.s32 1, %s60
  %s63 = scalar_select 0, %s62, %s60
  %v64 = vstv %s53
  %65 = vst [vmem:[#allocation4] sm:$0x1] %v64
  %v66 = vstv %s57
  %67 = vst [vmem:[#allocation5] sm:$0x1] %v66
  $region1: #{transformer_forward.3} parent=0
    #allocation6 [shape = 'u8[196608]{0}', space=vmem, size = 0x30000, scoped, tag = 'input window, operand 5']
    #allocation7 [shape = 's32[2]{0}', space=sflag, size = 0x8, scoped, tag = 'scoped memory for transformer_forward.3']
    #allocation8 [shape = 'u8[65536]{0}', space=vmem, size = 0x10000, scoped, tag = 'input window, operand 7']
    #allocation9 [shape = 's32[2]{0}', space=sflag, size = 0x8, scoped, tag = 'scoped memory for transformer_forward.3']
    #allocation10 [shape = 'u8[65536]{0}', space=vmem, size = 0x10000, scoped, tag = 'input window, operand 11']
    #allocation11 [shape = 'u8[65536]{0}', space=vmem, size = 0x10000, scoped, tag = 'input window, operand 15']
    #allocation12 [shape = 's32[2]{0}', space=sflag, size = 0x8, scoped, tag = 'scoped memory for transformer_forward.3']
    #allocation13 [shape = 'u8[262144]{0}', space=vmem, size = 0x40000, scoped, tag = 'input window, operand 19']
    %68 = vsyncpa [#allocation7], 0
    %s69 = scalar_lea.sflag [#allocation7], 1
    %70 = vsyncpa %s69, 0
    %71 = vsyncpa [#allocation9], 0
    %s72 = scalar_lea.sflag [#allocation9], 1
    %73 = vsyncpa %s72, 0
    %74 = vsyncpa [#allocation12], 0
    %s75 = scalar_lea.sflag [#allocation12], 1
    %76 = vsyncpa %s75, 0
    loop: start=0, step=1, limit=6
    $region2: #{transformer_forward.3} parent=1 // loop_pre_header
      _
    $region3: #{transformer_forward.3} parent=1 // loop_header
      %s78 = sphi 0, %s82
      %p79 = scmp.ge.s32.totalorder %s78, 6
      %s86 = sphi 0, %s86
      %s88 = sphi 0, %s86
      %s89 = sphi 0, %s88
      %s103 = sphi 0, %s89
      %s107 = sphi 0, %s107
      %s109 = sphi 0, %s107
      %s110 = sphi 0, %s109
      %s124 = sphi 0, %s110
      %s128 = sphi 0, %s128
      %s130 = sphi 0, %s128
      %s131 = sphi 0, %s130
      %s145 = sphi 0, %s131
      %s149 = sphi 0, %s149
      %s151 = sphi 0, %s149
      %s152 = sphi 0, %s151
      %s166 = sphi 0, %s152
      %s170 = sphi 0, %s170
      %s172 = sphi 0, %s170
      %s173 = sphi 0, %s172
      %s187 = sphi 0, %s173
      %s193 = sphi 0, %s195
      %s196 = sphi 0, %s193
      %s197 = sphi 0, %s196
      %s213 = sphi 0, %s197
      %s219 = sphi 0, %s221
      %s222 = sphi 0, %s219
      %s223 = sphi 0, %s222
      %s239 = sphi 0, %s223
      %s245 = sphi 0, %s247
      %s248 = sphi 0, %s245
      %s249 = sphi 0, %s248
      %s265 = sphi 0, %s249
      %s271 = sphi 0, %s273
      %s274 = sphi 0, %s271
      %s275 = sphi 0, %s274
      %s291 = sphi 0, %s275
      %s297 = sphi 0, %s299
      %s300 = sphi 0, %s297
      %s301 = sphi 0, %s300
      %s317 = sphi 0, %s301
      %s323 = sphi 0, %s325
      %s326 = sphi 0, %s323
      %s327 = sphi 0, %s326
      %s343 = sphi 0, %s327
      %s349 = sphi 0, %s351
      %s352 = sphi 0, %s349
      %s353 = sphi 0, %s352
      %s369 = sphi 0, %s353
      %s375 = sphi 0, %s377
      %s378 = sphi 0, %s375
      %s379 = sphi 0, %s378
      %s395 = sphi 0, %s379
      %s401 = sphi 0, %s403
      %s404 = sphi 0, %s401
      %s405 = sphi 0, %s404
      %s421 = sphi 0, %s405
      %s427 = sphi 0, %s429
      %s430 = sphi 0, %s427
      %s431 = sphi 0, %s430
      %s447 = sphi 0, %s431
      %s453 = sphi 0, %s455
      %s456 = sphi 0, %s453
      %s457 = sphi 0, %s456
      %s473 = sphi 0, %s457
      %s479 = sphi 0, %s481
      %s482 = sphi 0, %s479
      %s483 = sphi 0, %s482
      %s499 = sphi 0, %s483
      %s505 = sphi 0, %s507
      %s508 = sphi 0, %s505
      %s509 = sphi 0, %s508
      %s525 = sphi 0, %s509
      %s531 = sphi 0, %s533
      %s534 = sphi 0, %s531
      %s535 = sphi 0, %s534
      %s551 = sphi 0, %s535
      %s557 = sphi 0, %s559
      %s560 = sphi 0, %s557
      %s561 = sphi 0, %s560
      %s577 = sphi 0, %s561
      %s583 = sphi 0, %s585
      %s586 = sphi 0, %s583
      %s587 = sphi 0, %s586
      %s603 = sphi 0, %s587
      %s609 = sphi 0, %s611
      %s612 = sphi 0, %s609
      %s613 = sphi 0, %s612
      %s629 = sphi 0, %s613
      %s635 = sphi 0, %s637
      %s638 = sphi 0, %s635
      %s639 = sphi 0, %s638
      %s655 = sphi 0, %s639
      %s661 = sphi 0, %s663
      %s664 = sphi 0, %s661
      %s665 = sphi 0, %s664
      %s681 = sphi 0, %s665
      %s687 = sphi 0, %s689
      %s690 = sphi 0, %s687
      %s691 = sphi 0, %s690
      %s707 = sphi 0, %s691
      %s711 = sphi 0, %s711
      %s713 = sphi 0, %s711
      %s714 = sphi 0, %s713
      %s728 = sphi 0, %s714
      %s732 = sphi 0, %s732
      %s734 = sphi 0, %s732
      %s735 = sphi 0, %s734
      %s749 = sphi 0, %s735
      %s753 = sphi 0, %s753
      %s755 = sphi 0, %s753
      %s756 = sphi 0, %s755
      %s770 = sphi 0, %s756
      %s774 = sphi 0, %s774
      %s776 = sphi 0, %s774
      %s777 = sphi 0, %s776
      %s791 = sphi 0, %s777
      %s795 = sphi 0, %s795
      %s797 = sphi 0, %s795
      %s798 = sphi 0, %s797
      %s812 = sphi 0, %s798
    $region4: #{transformer_forward.3} parent=1 // loop_header_branch
      %81 = sbr.rel (%p79) target = $region8
    $region5: #{transformer_forward.3} parent=1 // loop_body
      %s83 = ssub.s32 %s78, 1
      %s84 = ssub.s32 %s78, 2
      %s85 = sadd.s32 %s78, 1
      %s87 = sadd.s32 %s86, 1
      %p90 = scmp.eq.s32.totalorder %s78, 3
      %p91 = scmp.ne.s32.totalorder %s86, %s88
      %p92 = scmp.eq.s32.totalorder %s78, 0
      %p93 = por %p91, %p92
      %p94 = scmp.ne.s32.totalorder %s86, %s88
      %p95 = scmp.eq.s32.totalorder %s83, 3
      %p96 = por %p94, %p95
      %p97 = scmp.ne.s32.totalorder %s88, %s89
      %p98 = scmp.eq.s32.totalorder %s83, 0
      %p99 = por %p97, %p98
      %p100 = scmp.ne.s32.totalorder %s88, %s89
      %p101 = scmp.eq.s32.totalorder %s84, 3
      %p102 = por %p100, %p101
      %p104 = scmp.ne.s32.totalorder %s89, %s103
      %p105 = scmp.eq.s32.totalorder %s84, 0
      %p106 = por %p104, %p105
      %s108 = sadd.s32 %s107, 1
      %p111 = scmp.eq.s32.totalorder %s78, 3
      %p112 = scmp.ne.s32.totalorder %s107, %s109
      %p113 = scmp.eq.s32.totalorder %s78, 0
      %p114 = por %p112, %p113
      %p115 = scmp.ne.s32.totalorder %s107, %s109
      %p116 = scmp.eq.s32.totalorder %s83, 3
      %p117 = por %p115, %p116
      %p118 = scmp.ne.s32.totalorder %s109, %s110
      %p119 = scmp.eq.s32.totalorder %s83, 0
      %p120 = por %p118, %p119
      %p121 = scmp.ne.s32.totalorder %s109, %s110
      %p122 = scmp.eq.s32.totalorder %s84, 3
      %p123 = por %p121, %p122
      %p125 = scmp.ne.s32.totalorder %s110, %s124
      %p126 = scmp.eq.s32.totalorder %s84, 0
      %p127 = por %p125, %p126
      %s129 = sadd.s32 %s128, 1
      %p132 = scmp.eq.s32.totalorder %s78, 3
      %p133 = scmp.ne.s32.totalorder %s128, %s130
      %p134 = scmp.eq.s32.totalorder %s78, 0
      %p135 = por %p133, %p134
      %p136 = scmp.ne.s32.totalorder %s128, %s130
      %p137 = scmp.eq.s32.totalorder %s83, 3
      %p138 = por %p136, %p137
      %p139 = scmp.ne.s32.totalorder %s130, %s131
      %p140 = scmp.eq.s32.totalorder %s83, 0
      %p141 = por %p139, %p140
      %p142 = scmp.ne.s32.totalorder %s130, %s131
      %p143 = scmp.eq.s32.totalorder %s84, 3
      %p144 = por %p142, %p143
      %p146 = scmp.ne.s32.totalorder %s131, %s145
      %p147 = scmp.eq.s32.totalorder %s84, 0
      %p148 = por %p146, %p147
      %s150 = sadd.s32 %s149, 1
      %p153 = scmp.eq.s32.totalorder %s78, 3
      %p154 = scmp.ne.s32.totalorder %s149, %s151
      %p155 = scmp.eq.s32.totalorder %s78, 0
      %p156 = por %p154, %p155
      %p157 = scmp.ne.s32.totalorder %s149, %s151
      %p158 = scmp.eq.s32.totalorder %s83, 3
      %p159 = por %p157, %p158
      %p160 = scmp.ne.s32.totalorder %s151, %s152
      %p161 = scmp.eq.s32.totalorder %s83, 0
      %p162 = por %p160, %p161
      %p163 = scmp.ne.s32.totalorder %s151, %s152
      %p164 = scmp.eq.s32.totalorder %s84, 3
      %p165 = por %p163, %p164
      %p167 = scmp.ne.s32.totalorder %s152, %s166
      %p168 = scmp.eq.s32.totalorder %s84, 0
      %p169 = por %p167, %p168
      %s171 = sadd.s32 %s170, 1
      %p174 = scmp.eq.s32.totalorder %s78, 3
      %p175 = scmp.ne.s32.totalorder %s170, %s172
      %p176 = scmp.eq.s32.totalorder %s78, 0
      %p177 = por %p175, %p176
      %p178 = scmp.ne.s32.totalorder %s170, %s172
      %p179 = scmp.eq.s32.totalorder %s83, 3
      %p180 = por %p178, %p179
      %p181 = scmp.ne.s32.totalorder %s172, %s173
      %p182 = scmp.eq.s32.totalorder %s83, 0
      %p183 = por %p181, %p182
      %p184 = scmp.ne.s32.totalorder %s172, %s173
      %p185 = scmp.eq.s32.totalorder %s84, 3
      %p186 = por %p184, %p185
      %p188 = scmp.ne.s32.totalorder %s173, %s187
      %p189 = scmp.eq.s32.totalorder %s84, 0
      %p190 = por %p188, %p189
      %s191 = ssub.s32 %s78, %s85
      %p192 = scmp.eq.s32.totalorder %s191, 0
      %s194 = sadd.s32 %s193, 1
      %s195 = scalar_select %p192, %s193, %s194
      %p198 = pneg %p192
      %p199 = scmp.eq.s32.totalorder %s78, 3
      %p200 = por %p198, %p199
      %p201 = scmp.ne.s32.totalorder %s193, %s196
      %p202 = scmp.eq.s32.totalorder %s78, 0
      %p203 = por %p201, %p202
      %p204 = scmp.ne.s32.totalorder %s193, %s196
      %p205 = scmp.eq.s32.totalorder %s83, 3
      %p206 = por %p204, %p205
      %p207 = scmp.ne.s32.totalorder %s196, %s197
      %p208 = scmp.eq.s32.totalorder %s83, 0
      %p209 = por %p207, %p208
      %p210 = scmp.ne.s32.totalorder %s196, %s197
      %p211 = scmp.eq.s32.totalorder %s84, 3
      %p212 = por %p210, %p211
      %p214 = scmp.ne.s32.totalorder %s197, %s213
      %p215 = scmp.eq.s32.totalorder %s84, 0
      %p216 = por %p214, %p215
      %s217 = ssub.s32 %s78, %s85
      %p218 = scmp.eq.s32.totalorder %s217, 0
      %s220 = sadd.s32 %s219, 1
      %s221 = scalar_select %p218, %s219, %s220
      %p224 = pneg %p218
      %p225 = scmp.eq.s32.totalorder %s78, 3
      %p226 = por %p224, %p225
      %p227 = scmp.ne.s32.totalorder %s219, %s222
      %p228 = scmp.eq.s32.totalorder %s78, 0
      %p229 = por %p227, %p228
      %p230 = scmp.ne.s32.totalorder %s219, %s222
      %p231 = scmp.eq.s32.totalorder %s83, 3
      %p232 = por %p230, %p231
      %p233 = scmp.ne.s32.totalorder %s222, %s223
      %p234 = scmp.eq.s32.totalorder %s83, 0
      %p235 = por %p233, %p234
      %p236 = scmp.ne.s32.totalorder %s222, %s223
      %p237 = scmp.eq.s32.totalorder %s84, 3
      %p238 = por %p236, %p237
      %p240 = scmp.ne.s32.totalorder %s223, %s239
      %p241 = scmp.eq.s32.totalorder %s84, 0
      %p242 = por %p240, %p241
      %s243 = ssub.s32 %s78, %s85
      %p244 = scmp.eq.s32.totalorder %s243, 0
      %s246 = sadd.s32 %s245, 1
      %s247 = scalar_select %p244, %s245, %s246
      %p250 = pneg %p244
      %p251 = scmp.eq.s32.totalorder %s78, 3
      %p252 = por %p250, %p251
      %p253 = scmp.ne.s32.totalorder %s245, %s248
      %p254 = scmp.eq.s32.totalorder %s78, 0
      %p255 = por %p253, %p254
      %p256 = scmp.ne.s32.totalorder %s245, %s248
      %p257 = scmp.eq.s32.totalorder %s83, 3
      %p258 = por %p256, %p257
      %p259 = scmp.ne.s32.totalorder %s248, %s249
      %p260 = scmp.eq.s32.totalorder %s83, 0
      %p261 = por %p259, %p260
      %p262 = scmp.ne.s32.totalorder %s248, %s249
      %p263 = scmp.eq.s32.totalorder %s84, 3
      %p264 = por %p262, %p263
      %p266 = scmp.ne.s32.totalorder %s249, %s265
      %p267 = scmp.eq.s32.totalorder %s84, 0
      %p268 = por %p266, %p267
      %s269 = ssub.s32 %s78, %s85
      %p270 = scmp.eq.s32.totalorder %s269, 0
      %s272 = sadd.s32 %s271, 1
      %s273 = scalar_select %p270, %s271, %s272
      %p276 = pneg %p270
      %p277 = scmp.eq.s32.totalorder %s78, 3
      %p278 = por %p276, %p277
      %p279 = scmp.ne.s32.totalorder %s271, %s274
      %p280 = scmp.eq.s32.totalorder %s78, 0
      %p281 = por %p279, %p280
      %p282 = scmp.ne.s32.totalorder %s271, %s274
      %p283 = scmp.eq.s32.totalorder %s83, 3
      %p284 = por %p282, %p283
      %p285 = scmp.ne.s32.totalorder %s274, %s275
      %p286 = scmp.eq.s32.totalorder %s83, 0
      %p287 = por %p285, %p286
      %p288 = scmp.ne.s32.totalorder %s274, %s275
      %p289 = scmp.eq.s32.totalorder %s84, 3
      %p290 = por %p288, %p289
      %p292 = scmp.ne.s32.totalorder %s275, %s291
      %p293 = scmp.eq.s32.totalorder %s84, 0
      %p294 = por %p292, %p293
      %s295 = ssub.s32 %s78, %s85
      %p296 = scmp.eq.s32.totalorder %s295, 0
      %s298 = sadd.s32 %s297, 1
      %s299 = scalar_select %p296, %s297, %s298
      %p302 = pneg %p296
      %p303 = scmp.eq.s32.totalorder %s78, 3
      %p304 = por %p302, %p303
      %p305 = scmp.ne.s32.totalorder %s297, %s300
      %p306 = scmp.eq.s32.totalorder %s78, 0
      %p307 = por %p305, %p306
      %p308 = scmp.ne.s32.totalorder %s297, %s300
      %p309 = scmp.eq.s32.totalorder %s83, 3
      %p310 = por %p308, %p309
      %p311 = scmp.ne.s32.totalorder %s300, %s301
      %p312 = scmp.eq.s32.totalorder %s83, 0
      %p313 = por %p311, %p312
      %p314 = scmp.ne.s32.totalorder %s300, %s301
      %p315 = scmp.eq.s32.totalorder %s84, 3
      %p316 = por %p314, %p315
      %p318 = scmp.ne.s32.totalorder %s301, %s317
      %p319 = scmp.eq.s32.totalorder %s84, 0
      %p320 = por %p318, %p319
      %s321 = ssub.s32 %s78, %s85
      %p322 = scmp.eq.s32.totalorder %s321, 0
      %s324 = sadd.s32 %s323, 1
      %s325 = scalar_select %p322, %s323, %s324
      %p328 = pneg %p322
      %p329 = scmp.eq.s32.totalorder %s78, 3
      %p330 = por %p328, %p329
      %p331 = scmp.ne.s32.totalorder %s323, %s326
      %p332 = scmp.eq.s32.totalorder %s78, 0
      %p333 = por %p331, %p332
      %p334 = scmp.ne.s32.totalorder %s323, %s326
      %p335 = scmp.eq.s32.totalorder %s83, 3
      %p336 = por %p334, %p335
      %p337 = scmp.ne.s32.totalorder %s326, %s327
      %p338 = scmp.eq.s32.totalorder %s83, 0
      %p339 = por %p337, %p338
      %p340 = scmp.ne.s32.totalorder %s326, %s327
      %p341 = scmp.eq.s32.totalorder %s84, 3
      %p342 = por %p340, %p341
      %p344 = scmp.ne.s32.totalorder %s327, %s343
      %p345 = scmp.eq.s32.totalorder %s84, 0
      %p346 = por %p344, %p345
      %s347 = ssub.s32 %s78, %s85
      %p348 = scmp.eq.s32.totalorder %s347, 0
      %s350 = sadd.s32 %s349, 1
      %s351 = scalar_select %p348, %s349, %s350
      %p354 = pneg %p348
      %p355 = scmp.eq.s32.totalorder %s78, 3
      %p356 = por %p354, %p355
      %p357 = scmp.ne.s32.totalorder %s349, %s352
      %p358 = scmp.eq.s32.totalorder %s78, 0
      %p359 = por %p357, %p358
      %p360 = scmp.ne.s32.totalorder %s349, %s352
      %p361 = scmp.eq.s32.totalorder %s83, 3
      %p362 = por %p360, %p361
      %p363 = scmp.ne.s32.totalorder %s352, %s353
      %p364 = scmp.eq.s32.totalorder %s83, 0
      %p365 = por %p363, %p364
      %p366 = scmp.ne.s32.totalorder %s352, %s353
      %p367 = scmp.eq.s32.totalorder %s84, 3
      %p368 = por %p366, %p367
      %p370 = scmp.ne.s32.totalorder %s353, %s369
      %p371 = scmp.eq.s32.totalorder %s84, 0
      %p372 = por %p370, %p371
      %s373 = ssub.s32 %s78, %s85
      %p374 = scmp.eq.s32.totalorder %s373, 0
      %s376 = sadd.s32 %s375, 1
      %s377 = scalar_select %p374, %s375, %s376
      %p380 = pneg %p374
      %p381 = scmp.eq.s32.totalorder %s78, 3
      %p382 = por %p380, %p381
      %p383 = scmp.ne.s32.totalorder %s375, %s378
      %p384 = scmp.eq.s32.totalorder %s78, 0
      %p385 = por %p383, %p384
      %p386 = scmp.ne.s32.totalorder %s375, %s378
      %p387 = scmp.eq.s32.totalorder %s83, 3
      %p388 = por %p386, %p387
      %p389 = scmp.ne.s32.totalorder %s378, %s379
      %p390 = scmp.eq.s32.totalorder %s83, 0
      %p391 = por %p389, %p390
      %p392 = scmp.ne.s32.totalorder %s378, %s379
      %p393 = scmp.eq.s32.totalorder %s84, 3
      %p394 = por %p392, %p393
      %p396 = scmp.ne.s32.totalorder %s379, %s395
      %p397 = scmp.eq.s32.totalorder %s84, 0
      %p398 = por %p396, %p397
      %s399 = ssub.s32 %s78, %s85
      %p400 = scmp.eq.s32.totalorder %s399, 0
      %s402 = sadd.s32 %s401, 1
      %s403 = scalar_select %p400, %s401, %s402
      %p406 = pneg %p400
      %p407 = scmp.eq.s32.totalorder %s78, 3
      %p408 = por %p406, %p407
      %p409 = scmp.ne.s32.totalorder %s401, %s404
      %p410 = scmp.eq.s32.totalorder %s78, 0
      %p411 = por %p409, %p410
      %p412 = scmp.ne.s32.totalorder %s401, %s404
      %p413 = scmp.eq.s32.totalorder %s83, 3
      %p414 = por %p412, %p413
      %p415 = scmp.ne.s32.totalorder %s404, %s405
      %p416 = scmp.eq.s32.totalorder %s83, 0
      %p417 = por %p415, %p416
      %p418 = scmp.ne.s32.totalorder %s404, %s405
      %p419 = scmp.eq.s32.totalorder %s84, 3
      %p420 = por %p418, %p419
      %p422 = scmp.ne.s32.totalorder %s405, %s421
      %p423 = scmp.eq.s32.totalorder %s84, 0
      %p424 = por %p422, %p423
      %s425 = ssub.s32 %s78, %s85
      %p426 = scmp.eq.s32.totalorder %s425, 0
      %s428 = sadd.s32 %s427, 1
      %s429 = scalar_select %p426, %s427, %s428
      %p432 = pneg %p426
      %p433 = scmp.eq.s32.totalorder %s78, 3
      %p434 = por %p432, %p433
      %p435 = scmp.ne.s32.totalorder %s427, %s430
      %p436 = scmp.eq.s32.totalorder %s78, 0
      %p437 = por %p435, %p436
      %p438 = scmp.ne.s32.totalorder %s427, %s430
      %p439 = scmp.eq.s32.totalorder %s83, 3
      %p440 = por %p438, %p439
      %p441 = scmp.ne.s32.totalorder %s430, %s431
      %p442 = scmp.eq.s32.totalorder %s83, 0
      %p443 = por %p441, %p442
      %p444 = scmp.ne.s32.totalorder %s430, %s431
      %p445 = scmp.eq.s32.totalorder %s84, 3
      %p446 = por %p444, %p445
      %p448 = scmp.ne.s32.totalorder %s431, %s447
      %p449 = scmp.eq.s32.totalorder %s84, 0
      %p450 = por %p448, %p449
      %s451 = ssub.s32 %s78, %s85
      %p452 = scmp.eq.s32.totalorder %s451, 0
      %s454 = sadd.s32 %s453, 1
      %s455 = scalar_select %p452, %s453, %s454
      %p458 = pneg %p452
      %p459 = scmp.eq.s32.totalorder %s78, 3
      %p460 = por %p458, %p459
      %p461 = scmp.ne.s32.totalorder %s453, %s456
      %p462 = scmp.eq.s32.totalorder %s78, 0
      %p463 = por %p461, %p462
      %p464 = scmp.ne.s32.totalorder %s453, %s456
      %p465 = scmp.eq.s32.totalorder %s83, 3
      %p466 = por %p464, %p465
      %p467 = scmp.ne.s32.totalorder %s456, %s457
      %p468 = scmp.eq.s32.totalorder %s83, 0
      %p469 = por %p467, %p468
      %p470 = scmp.ne.s32.totalorder %s456, %s457
      %p471 = scmp.eq.s32.totalorder %s84, 3
      %p472 = por %p470, %p471
      %p474 = scmp.ne.s32.totalorder %s457, %s473
      %p475 = scmp.eq.s32.totalorder %s84, 0
      %p476 = por %p474, %p475
      %s477 = ssub.s32 %s78, %s85
      %p478 = scmp.eq.s32.totalorder %s477, 0
      %s480 = sadd.s32 %s479, 1
      %s481 = scalar_select %p478, %s479, %s480
      %p484 = pneg %p478
      %p485 = scmp.eq.s32.totalorder %s78, 3
      %p486 = por %p484, %p485
      %p487 = scmp.ne.s32.totalorder %s479, %s482
      %p488 = scmp.eq.s32.totalorder %s78, 0
      %p489 = por %p487, %p488
      %p490 = scmp.ne.s32.totalorder %s479, %s482
      %p491 = scmp.eq.s32.totalorder %s83, 3
      %p492 = por %p490, %p491
      %p493 = scmp.ne.s32.totalorder %s482, %s483
      %p494 = scmp.eq.s32.totalorder %s83, 0
      %p495 = por %p493, %p494
      %p496 = scmp.ne.s32.totalorder %s482, %s483
      %p497 = scmp.eq.s32.totalorder %s84, 3
      %p498 = por %p496, %p497
      %p500 = scmp.ne.s32.totalorder %s483, %s499
      %p501 = scmp.eq.s32.totalorder %s84, 0
      %p502 = por %p500, %p501
      %s503 = ssub.s32 %s78, %s85
      %p504 = scmp.eq.s32.totalorder %s503, 0
      %s506 = sadd.s32 %s505, 1
      %s507 = scalar_select %p504, %s505, %s506
      %p510 = pneg %p504
      %p511 = scmp.eq.s32.totalorder %s78, 3
      %p512 = por %p510, %p511
      %p513 = scmp.ne.s32.totalorder %s505, %s508
      %p514 = scmp.eq.s32.totalorder %s78, 0
      %p515 = por %p513, %p514
      %p516 = scmp.ne.s32.totalorder %s505, %s508
      %p517 = scmp.eq.s32.totalorder %s83, 3
      %p518 = por %p516, %p517
      %p519 = scmp.ne.s32.totalorder %s508, %s509
      %p520 = scmp.eq.s32.totalorder %s83, 0
      %p521 = por %p519, %p520
      %p522 = scmp.ne.s32.totalorder %s508, %s509
      %p523 = scmp.eq.s32.totalorder %s84, 3
      %p524 = por %p522, %p523
      %p526 = scmp.ne.s32.totalorder %s509, %s525
      %p527 = scmp.eq.s32.totalorder %s84, 0
      %p528 = por %p526, %p527
      %s529 = ssub.s32 %s78, %s85
      %p530 = scmp.eq.s32.totalorder %s529, 0
      %s532 = sadd.s32 %s531, 1
      %s533 = scalar_select %p530, %s531, %s532
      %p536 = pneg %p530
      %p537 = scmp.eq.s32.totalorder %s78, 3
      %p538 = por %p536, %p537
      %p539 = scmp.ne.s32.totalorder %s531, %s534
      %p540 = scmp.eq.s32.totalorder %s78, 0
      %p541 = por %p539, %p540
      %p542 = scmp.ne.s32.totalorder %s531, %s534
      %p543 = scmp.eq.s32.totalorder %s83, 3
      %p544 = por %p542, %p543
      %p545 = scmp.ne.s32.totalorder %s534, %s535
      %p546 = scmp.eq.s32.totalorder %s83, 0
      %p547 = por %p545, %p546
      %p548 = scmp.ne.s32.totalorder %s534, %s535
      %p549 = scmp.eq.s32.totalorder %s84, 3
      %p550 = por %p548, %p549
      %p552 = scmp.ne.s32.totalorder %s535, %s551
      %p553 = scmp.eq.s32.totalorder %s84, 0
      %p554 = por %p552, %p553
      %s555 = ssub.s32 %s78, %s85
      %p556 = scmp.eq.s32.totalorder %s555, 0
      %s558 = sadd.s32 %s557, 1
      %s559 = scalar_select %p556, %s557, %s558
      %p562 = pneg %p556
      %p563 = scmp.eq.s32.totalorder %s78, 3
      %p564 = por %p562, %p563
      %p565 = scmp.ne.s32.totalorder %s557, %s560
      %p566 = scmp.eq.s32.totalorder %s78, 0
      %p567 = por %p565, %p566
      %p568 = scmp.ne.s32.totalorder %s557, %s560
      %p569 = scmp.eq.s32.totalorder %s83, 3
      %p570 = por %p568, %p569
      %p571 = scmp.ne.s32.totalorder %s560, %s561
      %p572 = scmp.eq.s32.totalorder %s83, 0
      %p573 = por %p571, %p572
      %p574 = scmp.ne.s32.totalorder %s560, %s561
      %p575 = scmp.eq.s32.totalorder %s84, 3
      %p576 = por %p574, %p575
      %p578 = scmp.ne.s32.totalorder %s561, %s577
      %p579 = scmp.eq.s32.totalorder %s84, 0
      %p580 = por %p578, %p579
      %s581 = ssub.s32 %s78, %s85
      %p582 = scmp.eq.s32.totalorder %s581, 0
      %s584 = sadd.s32 %s583, 1
      %s585 = scalar_select %p582, %s583, %s584
      %p588 = pneg %p582
      %p589 = scmp.eq.s32.totalorder %s78, 3
      %p590 = por %p588, %p589
      %p591 = scmp.ne.s32.totalorder %s583, %s586
      %p592 = scmp.eq.s32.totalorder %s78, 0
      %p593 = por %p591, %p592
      %p594 = scmp.ne.s32.totalorder %s583, %s586
      %p595 = scmp.eq.s32.totalorder %s83, 3
      %p596 = por %p594, %p595
      %p597 = scmp.ne.s32.totalorder %s586, %s587
      %p598 = scmp.eq.s32.totalorder %s83, 0
      %p599 = por %p597, %p598
      %p600 = scmp.ne.s32.totalorder %s586, %s587
      %p601 = scmp.eq.s32.totalorder %s84, 3
      %p602 = por %p600, %p601
      %p604 = scmp.ne.s32.totalorder %s587, %s603
      %p605 = scmp.eq.s32.totalorder %s84, 0
      %p606 = por %p604, %p605
      %s607 = ssub.s32 %s78, %s85
      %p608 = scmp.eq.s32.totalorder %s607, 0
      %s610 = sadd.s32 %s609, 1
      %s611 = scalar_select %p608, %s609, %s610
      %p614 = pneg %p608
      %p615 = scmp.eq.s32.totalorder %s78, 3
      %p616 = por %p614, %p615
      %p617 = scmp.ne.s32.totalorder %s609, %s612
      %p618 = scmp.eq.s32.totalorder %s78, 0
      %p619 = por %p617, %p618
      %p620 = scmp.ne.s32.totalorder %s609, %s612
      %p621 = scmp.eq.s32.totalorder %s83, 3
      %p622 = por %p620, %p621
      %p623 = scmp.ne.s32.totalorder %s612, %s613
      %p624 = scmp.eq.s32.totalorder %s83, 0
      %p625 = por %p623, %p624
      %p626 = scmp.ne.s32.totalorder %s612, %s613
      %p627 = scmp.eq.s32.totalorder %s84, 3
      %p628 = por %p626, %p627
      %p630 = scmp.ne.s32.totalorder %s613, %s629
      %p631 = scmp.eq.s32.totalorder %s84, 0
      %p632 = por %p630, %p631
      %s633 = ssub.s32 %s78, %s85
      %p634 = scmp.eq.s32.totalorder %s633, 0
      %s636 = sadd.s32 %s635, 1
      %s637 = scalar_select %p634, %s635, %s636
      %p640 = pneg %p634
      %p641 = scmp.eq.s32.totalorder %s78, 3
      %p642 = por %p640, %p641
      %p643 = scmp.ne.s32.totalorder %s635, %s638
      %p644 = scmp.eq.s32.totalorder %s78, 0
      %p645 = por %p643, %p644
      %p646 = scmp.ne.s32.totalorder %s635, %s638
      %p647 = scmp.eq.s32.totalorder %s83, 3
      %p648 = por %p646, %p647
      %p649 = scmp.ne.s32.totalorder %s638, %s639
      %p650 = scmp.eq.s32.totalorder %s83, 0
      %p651 = por %p649, %p650
      %p652 = scmp.ne.s32.totalorder %s638, %s639
      %p653 = scmp.eq.s32.totalorder %s84, 3
      %p654 = por %p652, %p653
      %p656 = scmp.ne.s32.totalorder %s639, %s655
      %p657 = scmp.eq.s32.totalorder %s84, 0
      %p658 = por %p656, %p657
      %s659 = ssub.s32 %s78, %s85
      %p660 = scmp.eq.s32.totalorder %s659, 0
      %s662 = sadd.s32 %s661, 1
      %s663 = scalar_select %p660, %s661, %s662
      %p666 = pneg %p660
      %p667 = scmp.eq.s32.totalorder %s78, 3
      %p668 = por %p666, %p667
      %p669 = scmp.ne.s32.totalorder %s661, %s664
      %p670 = scmp.eq.s32.totalorder %s78, 0
      %p671 = por %p669, %p670
      %p672 = scmp.ne.s32.totalorder %s661, %s664
      %p673 = scmp.eq.s32.totalorder %s83, 3
      %p674 = por %p672, %p673
      %p675 = scmp.ne.s32.totalorder %s664, %s665
      %p676 = scmp.eq.s32.totalorder %s83, 0
      %p677 = por %p675, %p676
      %p678 = scmp.ne.s32.totalorder %s664, %s665
      %p679 = scmp.eq.s32.totalorder %s84, 3
      %p680 = por %p678, %p679
      %p682 = scmp.ne.s32.totalorder %s665, %s681
      %p683 = scmp.eq.s32.totalorder %s84, 0
      %p684 = por %p682, %p683
      %s685 = ssub.s32 %s78, %s85
      %p686 = scmp.eq.s32.totalorder %s685, 0
      %s688 = sadd.s32 %s687, 1
      %s689 = scalar_select %p686, %s687, %s688
      %p692 = pneg %p686
      %p693 = scmp.eq.s32.totalorder %s78, 3
      %p694 = por %p692, %p693
      %p695 = scmp.ne.s32.totalorder %s687, %s690
      %p696 = scmp.eq.s32.totalorder %s78, 0
      %p697 = por %p695, %p696
      %p698 = scmp.ne.s32.totalorder %s687, %s690
      %p699 = scmp.eq.s32.totalorder %s83, 3
      %p700 = por %p698, %p699
      %p701 = scmp.ne.s32.totalorder %s690, %s691
      %p702 = scmp.eq.s32.totalorder %s83, 0
      %p703 = por %p701, %p702
      %p704 = scmp.ne.s32.totalorder %s690, %s691
      %p705 = scmp.eq.s32.totalorder %s84, 3
      %p706 = por %p704, %p705
      %p708 = scmp.ne.s32.totalorder %s691, %s707
      %p709 = scmp.eq.s32.totalorder %s84, 0
      %p710 = por %p708, %p709
      %s712 = sadd.s32 %s711, 1
      %p715 = scmp.eq.s32.totalorder %s78, 3
      %p716 = scmp.ne.s32.totalorder %s711, %s713
      %p717 = scmp.eq.s32.totalorder %s78, 0
      %p718 = por %p716, %p717
      %p719 = scmp.ne.s32.totalorder %s711, %s713
      %p720 = scmp.eq.s32.totalorder %s83, 3
      %p721 = por %p719, %p720
      %p722 = scmp.ne.s32.totalorder %s713, %s714
      %p723 = scmp.eq.s32.totalorder %s83, 0
      %p724 = por %p722, %p723
      %p725 = scmp.ne.s32.totalorder %s713, %s714
      %p726 = scmp.eq.s32.totalorder %s84, 3
      %p727 = por %p725, %p726
      %p729 = scmp.ne.s32.totalorder %s714, %s728
      %p730 = scmp.eq.s32.totalorder %s84, 0
      %p731 = por %p729, %p730
      %s733 = sadd.s32 %s732, 1
      %p736 = scmp.eq.s32.totalorder %s78, 3
      %p737 = scmp.ne.s32.totalorder %s732, %s734
      %p738 = scmp.eq.s32.totalorder %s78, 0
      %p739 = por %p737, %p738
      %p740 = scmp.ne.s32.totalorder %s732, %s734
      %p741 = scmp.eq.s32.totalorder %s83, 3
      %p742 = por %p740, %p741
      %p743 = scmp.ne.s32.totalorder %s734, %s735
      %p744 = scmp.eq.s32.totalorder %s83, 0
      %p745 = por %p743, %p744
      %p746 = scmp.ne.s32.totalorder %s734, %s735
      %p747 = scmp.eq.s32.totalorder %s84, 3
      %p748 = por %p746, %p747
      %p750 = scmp.ne.s32.totalorder %s735, %s749
      %p751 = scmp.eq.s32.totalorder %s84, 0
      %p752 = por %p750, %p751
      %s754 = sadd.s32 %s753, 1
      %p757 = scmp.eq.s32.totalorder %s78, 3
      %p758 = scmp.ne.s32.totalorder %s753, %s755
      %p759 = scmp.eq.s32.totalorder %s78, 0
      %p760 = por %p758, %p759
      %p761 = scmp.ne.s32.totalorder %s753, %s755
      %p762 = scmp.eq.s32.totalorder %s83, 3
      %p763 = por %p761, %p762
      %p764 = scmp.ne.s32.totalorder %s755, %s756
      %p765 = scmp.eq.s32.totalorder %s83, 0
      %p766 = por %p764, %p765
      %p767 = scmp.ne.s32.totalorder %s755, %s756
      %p768 = scmp.eq.s32.totalorder %s84, 3
      %p769 = por %p767, %p768
      %p771 = scmp.ne.s32.totalorder %s756, %s770
      %p772 = scmp.eq.s32.totalorder %s84, 0
      %p773 = por %p771, %p772
      %s775 = sadd.s32 %s774, 1
      %p778 = scmp.eq.s32.totalorder %s78, 3
      %p779 = scmp.ne.s32.totalorder %s774, %s776
      %p780 = scmp.eq.s32.totalorder %s78, 0
      %p781 = por %p779, %p780
      %p782 = scmp.ne.s32.totalorder %s774, %s776
      %p783 = scmp.eq.s32.totalorder %s83, 3
      %p784 = por %p782, %p783
      %p785 = scmp.ne.s32.totalorder %s776, %s777
      %p786 = scmp.eq.s32.totalorder %s83, 0
      %p787 = por %p785, %p786
      %p788 = scmp.ne.s32.totalorder %s776, %s777
      %p789 = scmp.eq.s32.totalorder %s84, 3
      %p790 = por %p788, %p789
      %p792 = scmp.ne.s32.totalorder %s777, %s791
      %p793 = scmp.eq.s32.totalorder %s84, 0
      %p794 = por %p792, %p793
      %s796 = sadd.s32 %s795, 1
      %p799 = scmp.eq.s32.totalorder %s78, 3
      %p800 = scmp.ne.s32.totalorder %s795, %s797
      %p801 = scmp.eq.s32.totalorder %s78, 0
      %p802 = por %p800, %p801
      %p803 = scmp.ne.s32.totalorder %s795, %s797
      %p804 = scmp.eq.s32.totalorder %s83, 3
      %p805 = por %p803, %p804
      %p806 = scmp.ne.s32.totalorder %s797, %s798
      %p807 = scmp.eq.s32.totalorder %s83, 0
      %p808 = por %p806, %p807
      %p809 = scmp.ne.s32.totalorder %s797, %s798
      %p810 = scmp.eq.s32.totalorder %s84, 3
      %p811 = por %p809, %p810
      %p813 = scmp.ne.s32.totalorder %s798, %s812
      %p814 = scmp.eq.s32.totalorder %s84, 0
      %p815 = por %p813, %p814
      %p816 = scmp.le.s32.totalorder 1, %s78
      %p817 = scmp.lt.s32.totalorder %s78, 5
      %p818 = pnand %p816, %p817
      %p819 = pneg %p818
      // Predicated region
      $region9: #{transformer_forward.3} parent=5 // pred_check
        _
      $region10: #{transformer_forward.3} parent=5 // pred_check_branch
        %821 = sbr.rel (%p818) target = $region12
      $region11: #{transformer_forward.3} parent=5 // pred_region
        %s822 = ssub.s32 %s78, 1
        // Predicated region
        $region13: #{transformer_forward.3} parent=11 // pred_check
          %p823 = pneg %p99
        $region14: #{transformer_forward.3} parent=11 // pred_check_branch
          %825 = sbr.rel (%p823) target = $region16
        $region15: #{transformer_forward.3} parent=11 // pred_region
          _
        $region16: #{transformer_forward.3} parent=11 // pred_fallthru
          _
        // Predicated region
        $region17: #{transformer_forward.3} parent=11 // pred_check
          %p826 = pneg %p120
        $region18: #{transformer_forward.3} parent=11 // pred_check_branch
          %828 = sbr.rel (%p826) target = $region20
        $region19: #{transformer_forward.3} parent=11 // pred_region
          _
        $region20: #{transformer_forward.3} parent=11 // pred_fallthru
          _
        // Predicated region
        $region21: #{transformer_forward.3} parent=11 // pred_check
          %p829 = pneg %p141
        $region22: #{transformer_forward.3} parent=11 // pred_check_branch
          %831 = sbr.rel (%p829) target = $region24
        $region23: #{transformer_forward.3} parent=11 // pred_region
          _
        $region24: #{transformer_forward.3} parent=11 // pred_fallthru
          _
        // Predicated region
        $region25: #{transformer_forward.3} parent=11 // pred_check
          %p832 = pneg %p162
        $region26: #{transformer_forward.3} parent=11 // pred_check_branch
          %834 = sbr.rel (%p832) target = $region28
        $region27: #{transformer_forward.3} parent=11 // pred_region
          _
        $region28: #{transformer_forward.3} parent=11 // pred_fallthru
          _
        // Predicated region
        $region29: #{transformer_forward.3} parent=11 // pred_check
          %p835 = pneg %p183
        $region30: #{transformer_forward.3} parent=11 // pred_check_branch
          %837 = sbr.rel (%p835) target = $region32
        $region31: #{transformer_forward.3} parent=11 // pred_region
          _
        $region32: #{transformer_forward.3} parent=11 // pred_fallthru
          _
        // Predicated region
        $region33: #{transformer_forward.3} parent=11 // pred_check
          %p838 = pneg %p724
        $region34: #{transformer_forward.3} parent=11 // pred_check_branch
          %840 = sbr.rel (%p838) target = $region36
        $region35: #{transformer_forward.3} parent=11 // pred_region
          _
        $region36: #{transformer_forward.3} parent=11 // pred_fallthru
          _
        // Predicated region
        $region37: #{transformer_forward.3} parent=11 // pred_check
          %p841 = pneg %p745
        $region38: #{transformer_forward.3} parent=11 // pred_check_branch
          %843 = sbr.rel (%p841) target = $region40
        $region39: #{transformer_forward.3} parent=11 // pred_region
          _
        $region40: #{transformer_forward.3} parent=11 // pred_fallthru
          _
        // Predicated region
        $region41: #{transformer_forward.3} parent=11 // pred_check
          %p844 = pneg %p766
        $region42: #{transformer_forward.3} parent=11 // pred_check_branch
          %846 = sbr.rel (%p844) target = $region44
        $region43: #{transformer_forward.3} parent=11 // pred_region
          _
        $region44: #{transformer_forward.3} parent=11 // pred_fallthru
          _
        // Predicated region
        $region45: #{transformer_forward.3} parent=11 // pred_check
          %p847 = pneg %p787
        $region46: #{transformer_forward.3} parent=11 // pred_check_branch
          %849 = sbr.rel (%p847) target = $region48
        $region47: #{transformer_forward.3} parent=11 // pred_region
          _
        $region48: #{transformer_forward.3} parent=11 // pred_fallthru
          _
      $region12: #{transformer_forward.3} parent=5 // pred_fallthru
        _
      %p850 = scmp.lt.s32.totalorder %s78, 4
      // Predicated region
      $region49: #{transformer_forward.3} parent=5 // pred_check
        %p851 = pneg %p850
      $region50: #{transformer_forward.3} parent=5 // pred_check_branch
        %853 = sbr.rel (%p851) target = $region52
      $region51: #{transformer_forward.3} parent=5 // pred_region
        // Predicated region
        $region53: #{transformer_forward.3} parent=51 // pred_check
          %p854 = pneg %p203
        $region54: #{transformer_forward.3} parent=51 // pred_check_branch
          %856 = sbr.rel (%p854) target = $region56
        $region55: #{transformer_forward.3} parent=51 // pred_region
          %s857 = sand.u32 %s193, 1
          %s858 = scalar_lea.sflag [#allocation7], %s857
          %s859 = sand.u32 %s193, 1
          %s860 = smul.addr %s859, 192
          %s861 = scalar_lea.vmem [#allocation6], %s860
          %s863 = ssub.s32 3072, 3072
          %864 = vsyncadd %s858, %s863
          %s865 = smul.addr %s78, 48
          %s866 = smul.addr %s865, 64
          %s867 = scalar_lea.hbm %s11, %s866
          %s868 = sshll.u32 %s861, 4
          %s869 = int_to_ptr.vmem [resolvable:$true] %s868
          %874 = dma.hbm_to_vmem [thread:$0]  %s867, 3072, %s869, %s858, 192, 192, 12
        $region56: #{transformer_forward.3} parent=51 // pred_fallthru
          _
        // Predicated region
        $region57: #{transformer_forward.3} parent=51 // pred_check
          %p875 = pneg %p229
        $region58: #{transformer_forward.3} parent=51 // pred_check_branch
          %877 = sbr.rel (%p875) target = $region60
        $region59: #{transformer_forward.3} parent=51 // pred_region
          %p878 = scmp.lt.s32.totalorder %s78, 3
          %s879 = scalar_select %p878, %s78, 3
          %s880 = smul.addr %s879, 3
          %s881 = scalar_lea.vmem %s13, %s880
        $region60: #{transformer_forward.3} parent=51 // pred_fallthru
          _
        // Predicated region
        $region61: #{transformer_forward.3} parent=51 // pred_check
          %p882 = pneg %p255
        $region62: #{transformer_forward.3} parent=51 // pred_check_branch
          %884 = sbr.rel (%p882) target = $region64
        $region63: #{transformer_forward.3} parent=51 // pred_region
          %s885 = sand.u32 %s78, 1
          %s886 = scalar_lea.sflag [#allocation9], %s885
          %s887 = sand.u32 %s245, 1
          %s888 = smul.addr %s887, 64
          %s889 = scalar_lea.vmem [#allocation8], %s888
          %s891 = ssub.s32 1024, 1024
          %892 = vsyncadd %s886, %s891
          %s893 = smul.addr %s78, 16
          %s894 = smul.addr %s893, 64
          %s895 = scalar_lea.hbm %s15, %s894
          %s896 = sshll.u32 %s889, 4
          %s897 = int_to_ptr.vmem [resolvable:$true] %s896
          %902 = dma.hbm_to_vmem [thread:$0]  %s895, 1024, %s897, %s886, 64, 64, 4
        $region64: #{transformer_forward.3} parent=51 // pred_fallthru
          _
        // Predicated region
        $region65: #{transformer_forward.3} parent=51 // pred_check
          %p903 = pneg %p281
        $region66: #{transformer_forward.3} parent=51 // pred_check_branch
          %905 = sbr.rel (%p903) target = $region68
        $region67: #{transformer_forward.3} parent=51 // pred_region
          %p906 = scmp.lt.s32.totalorder %s78, 3
          %s907 = scalar_select %p906, %s78, 3
          %s908 = scalar_lea.vmem %s17, %s907
        $region68: #{transformer_forward.3} parent=51 // pred_fallthru
          _
        // Predicated region
        $region69: #{transformer_forward.3} parent=51 // pred_check
          %p909 = pneg %p307
        $region70: #{transformer_forward.3} parent=51 // pred_check_branch
          %911 = sbr.rel (%p909) target = $region72
        $region71: #{transformer_forward.3} parent=51 // pred_region
          %p912 = scmp.lt.s32.totalorder %s78, 3
          %s913 = scalar_select %p912, %s78, 3
          %s914 = scalar_lea.vmem %s19, %s913
        $region72: #{transformer_forward.3} parent=51 // pred_fallthru
          _
        // Predicated region
        $region73: #{transformer_forward.3} parent=51 // pred_check
          %p915 = pneg %p333
        $region74: #{transformer_forward.3} parent=51 // pred_check_branch
          %917 = sbr.rel (%p915) target = $region76
        $region75: #{transformer_forward.3} parent=51 // pred_region
          %p918 = scmp.lt.s32.totalorder %s78, 3
          %s919 = scalar_select %p918, %s78, 3
          %s920 = scalar_lea.vmem %s21, %s919
        $region76: #{transformer_forward.3} parent=51 // pred_fallthru
          _
        // Predicated region
        $region77: #{transformer_forward.3} parent=51 // pred_check
          %p921 = pneg %p359
        $region78: #{transformer_forward.3} parent=51 // pred_check_branch
          %923 = sbr.rel (%p921) target = $region80
        $region79: #{transformer_forward.3} parent=51 // pred_region
          %s924 = sand.u32 %s78, 1
          %s925 = scalar_lea.sflag [#allocation9], %s924
          %s926 = sand.u32 %s349, 1
          %s927 = smul.addr %s926, 64
          %s928 = scalar_lea.vmem [#allocation10], %s927
          %s930 = ssub.s32 1024, 1024
          %931 = vsyncadd %s925, %s930
          %s932 = smul.addr %s78, 16
          %s933 = smul.addr %s932, 64
          %s934 = scalar_lea.hbm %s23, %s933
          %s935 = sshll.u32 %s928, 4
          %s936 = int_to_ptr.vmem [resolvable:$true] %s935
          %941 = dma.hbm_to_vmem [thread:$0]  %s934, 1024, %s936, %s925, 64, 64, 4
        $region80: #{transformer_forward.3} parent=51 // pred_fallthru
          _
        // Predicated region
        $region81: #{transformer_forward.3} parent=51 // pred_check
          %p942 = pneg %p385
        $region82: #{transformer_forward.3} parent=51 // pred_check_branch
          %944 = sbr.rel (%p942) target = $region84
        $region83: #{transformer_forward.3} parent=51 // pred_region
          %p945 = scmp.lt.s32.totalorder %s78, 3
          %s946 = scalar_select %p945, %s78, 3
          %s947 = scalar_lea.vmem %s25, %s946
        $region84: #{transformer_forward.3} parent=51 // pred_fallthru
          _
        // Predicated region
        $region85: #{transformer_forward.3} parent=51 // pred_check
          %p948 = pneg %p411
        $region86: #{transformer_forward.3} parent=51 // pred_check_branch
          %950 = sbr.rel (%p948) target = $region88
        $region87: #{transformer_forward.3} parent=51 // pred_region
          %p951 = scmp.lt.s32.totalorder %s78, 3
          %s952 = scalar_select %p951, %s78, 3
          %s953 = smul.addr %s952, 32
          %s954 = smul.addr %s953, 4
          %s955 = scalar_lea.vmem %s27, %s954
        $region88: #{transformer_forward.3} parent=51 // pred_fallthru
          _
        // Predicated region
        $region89: #{transformer_forward.3} parent=51 // pred_check
          %p956 = pneg %p437
        $region90: #{transformer_forward.3} parent=51 // pred_check_branch
          %958 = sbr.rel (%p956) target = $region92
        $region91: #{transformer_forward.3} parent=51 // pred_region
          %p959 = scmp.lt.s32.totalorder %s78, 3
          %s960 = scalar_select %p959, %s78, 3
          %s961 = smul.addr %s960, 2
          %s962 = scalar_lea.vmem %s29, %s961
        $region92: #{transformer_forward.3} parent=51 // pred_fallthru
          _
        // Predicated region
        $region93: #{transformer_forward.3} parent=51 // pred_check
          %p963 = pneg %p463
        $region94: #{transformer_forward.3} parent=51 // pred_check_branch
          %965 = sbr.rel (%p963) target = $region96
        $region95: #{transformer_forward.3} parent=51 // pred_region
          %s966 = sand.u32 %s78, 1
          %s967 = scalar_lea.sflag [#allocation12], %s966
          %s968 = sand.u32 %s453, 1
          %s969 = smul.addr %s968, 64
          %s970 = scalar_lea.vmem [#allocation11], %s969
          %s972 = ssub.s32 1024, 1024
          %973 = vsyncadd %s967, %s972
          %s974 = smul.addr %s78, 16
          %s975 = smul.addr %s974, 64
          %s976 = scalar_lea.hbm %s31, %s975
          %s977 = sshll.u32 %s970, 4
          %s978 = int_to_ptr.vmem [resolvable:$true] %s977
          %983 = dma.hbm_to_vmem [thread:$0]  %s976, 1024, %s978, %s967, 64, 64, 4
        $region96: #{transformer_forward.3} parent=51 // pred_fallthru
          _
        // Predicated region
        $region97: #{transformer_forward.3} parent=51 // pred_check
          %p984 = pneg %p489
        $region98: #{transformer_forward.3} parent=51 // pred_check_branch
          %986 = sbr.rel (%p984) target = $region100
        $region99: #{transformer_forward.3} parent=51 // pred_region
          %p987 = scmp.lt.s32.totalorder %s78, 3
          %s988 = scalar_select %p987, %s78, 3
          %s989 = scalar_lea.vmem %s33, %s988
        $region100: #{transformer_forward.3} parent=51 // pred_fallthru
          _
        // Predicated region
        $region101: #{transformer_forward.3} parent=51 // pred_check
          %p990 = pneg %p515
        $region102: #{transformer_forward.3} parent=51 // pred_check_branch
          %992 = sbr.rel (%p990) target = $region104
        $region103: #{transformer_forward.3} parent=51 // pred_region
          %p993 = scmp.lt.s32.totalorder %s78, 3
          %s994 = scalar_select %p993, %s78, 3
          %s995 = scalar_lea.vmem %s35, %s994
        $region104: #{transformer_forward.3} parent=51 // pred_fallthru
          _
        // Predicated region
        $region105: #{transformer_forward.3} parent=51 // pred_check
          %p996 = pneg %p541
        $region106: #{transformer_forward.3} parent=51 // pred_check_branch
          %998 = sbr.rel (%p996) target = $region108
        $region107: #{transformer_forward.3} parent=51 // pred_region
          %p999 = scmp.lt.s32.totalorder %s78, 3
          %s1000 = scalar_select %p999, %s78, 3
          %s1001 = scalar_lea.vmem %s37, %s1000
        $region108: #{transformer_forward.3} parent=51 // pred_fallthru
          _
        // Predicated region
        $region109: #{transformer_forward.3} parent=51 // pred_check
          %p1002 = pneg %p567
        $region110: #{transformer_forward.3} parent=51 // pred_check_branch
          %1004 = sbr.rel (%p1002) target = $region112
        $region111: #{transformer_forward.3} parent=51 // pred_region
          %s1005 = sand.u32 %s78, 1
          %s1006 = scalar_lea.sflag [#allocation12], %s1005
          %s1007 = sand.u32 %s557, 1
          %s1008 = smul.addr %s1007, 256
          %s1009 = scalar_lea.vmem [#allocation13], %s1008
          %s1011 = ssub.s32 4096, 4096
          %1012 = vsyncadd %s1006, %s1011
          %s1013 = smul.addr %s78, 64
          %s1014 = smul.addr %s1013, 64
          %s1015 = scalar_lea.hbm %s39, %s1014
          %s1016 = sshll.u32 %s1009, 4
          %s1017 = int_to_ptr.vmem [resolvable:$true] %s1016
          %1022 = dma.hbm_to_vmem [thread:$0]  %s1015, 4096, %s1017, %s1006, 256, 256, 16
        $region112: #{transformer_forward.3} parent=51 // pred_fallthru
          _
        // Predicated region
        $region113: #{transformer_forward.3} parent=51 // pred_check
          %p1023 = pneg %p593
        $region114: #{transformer_forward.3} parent=51 // pred_check_branch
          %1025 = sbr.rel (%p1023) target = $region116
        $region115: #{transformer_forward.3} parent=51 // pred_region
          %p1026 = scmp.lt.s32.totalorder %s78, 3
          %s1027 = scalar_select %p1026, %s78, 3
          %s1028 = smul.addr %s1027, 4
          %s1029 = scalar_lea.vmem %s41, %s1028
        $region116: #{transformer_forward.3} parent=51 // pred_fallthru
          _
        // Predicated region
        $region117: #{transformer_forward.3} parent=51 // pred_check
          %p1030 = pneg %p619
        $region118: #{transformer_forward.3} parent=51 // pred_check_branch
          %1032 = sbr.rel (%p1030) target = $region120
        $region119: #{transformer_forward.3} parent=51 // pred_region
          %p1033 = scmp.lt.s32.totalorder %s78, 3
          %s1034 = scalar_select %p1033, %s78, 3
          %s1035 = smul.addr %s1034, 64
          %s1036 = smul.addr %s1035, 4
          %s1037 = scalar_lea.vmem %s43, %s1036
        $region120: #{transformer_forward.3} parent=51 // pred_fallthru
          _
        // Predicated region
        $region121: #{transformer_forward.3} parent=51 // pred_check
          %p1038 = pneg %p645
        $region122: #{transformer_forward.3} parent=51 // pred_check_branch
          %1040 = sbr.rel (%p1038) target = $region124
        $region123: #{transformer_forward.3} parent=51 // pred_region
          %p1041 = scmp.lt.s32.totalorder %s78, 3
          %s1042 = scalar_select %p1041, %s78, 3
          %s1043 = scalar_lea.vmem %s45, %s1042
        $region124: #{transformer_forward.3} parent=51 // pred_fallthru
          _
        // Predicated region
        $region125: #{transformer_forward.3} parent=51 // pred_check
          %p1044 = pneg %p671
        $region126: #{transformer_forward.3} parent=51 // pred_check_branch
          %1046 = sbr.rel (%p1044) target = $region128
        $region127: #{transformer_forward.3} parent=51 // pred_region
          %p1047 = scmp.lt.s32.totalorder %s78, 3
          %s1048 = scalar_select %p1047, %s78, 3
          %s1049 = scalar_lea.vmem %s47, %s1048
        $region128: #{transformer_forward.3} parent=51 // pred_fallthru
          _
        // Predicated region
        $region129: #{transformer_forward.3} parent=51 // pred_check
          %p1050 = pneg %p697
        $region130: #{transformer_forward.3} parent=51 // pred_check_branch
          %1052 = sbr.rel (%p1050) target = $region132
        $region131: #{transformer_forward.3} parent=51 // pred_region
          %p1053 = scmp.lt.s32.totalorder %s78, 3
          %s1054 = scalar_select %p1053, %s78, 3
          %s1055 = scalar_lea.vmem %s49, %s1054
        $region132: #{transformer_forward.3} parent=51 // pred_fallthru
          _
      $region52: #{transformer_forward.3} parent=5 // pred_fallthru
        _
      %p1056 = scmp.le.s32.totalorder 1, %s78
      %p1057 = scmp.lt.s32.totalorder %s78, 5
      %p1058 = pnand %p1056, %p1057
      %p1059 = pneg %p1058
      // Predicated region
      $region133: #{transformer_forward.3} parent=5 // pred_check
        _
      $region134: #{transformer_forward.3} parent=5 // pred_check_branch
        %1061 = sbr.rel (%p1058) target = $region136
      $region135: #{transformer_forward.3} parent=5 // pred_region
        %s1062 = ssub.s32 %s78, 1
        %s1063 = sand.u32 %s196, 1
        %s1064 = scalar_lea.sflag [#allocation7], %s1063
        %s1065 = sand.u32 %s196, 1
        %s1066 = smul.addr %s1065, 192
        %s1067 = scalar_lea.vmem [#allocation6], %s1066
        // Predicated region
        $region137: #{transformer_forward.3} parent=135 // pred_check
          %p1068 = pneg %p209
        $region138: #{transformer_forward.3} parent=135 // pred_check_branch
          %1070 = sbr.rel (%p1068) target = $region140
        $region139: #{transformer_forward.3} parent=135 // pred_region
          %1071 = dma.done %s1064, 3072
        $region140: #{transformer_forward.3} parent=135 // pred_fallthru
          _
        %s1072 = sand.u32 %s83, 1
        %s1073 = scalar_lea.sflag [#allocation9], %s1072
        %s1074 = sand.u32 %s248, 1
        %s1075 = smul.addr %s1074, 64
        %s1076 = scalar_lea.vmem [#allocation8], %s1075
        // Predicated region
        $region141: #{transformer_forward.3} parent=135 // pred_check
          %p1077 = pneg %p261
        $region142: #{transformer_forward.3} parent=135 // pred_check_branch
          %1079 = sbr.rel (%p1077) target = $region144
        $region143: #{transformer_forward.3} parent=135 // pred_region
          %1080 = dma.done %s1073, 1024
        $region144: #{transformer_forward.3} parent=135 // pred_fallthru
          _
        %s1081 = sand.u32 %s83, 1
        %s1082 = scalar_lea.sflag [#allocation9], %s1081
        %s1083 = sand.u32 %s352, 1
        %s1084 = smul.addr %s1083, 64
        %s1085 = scalar_lea.vmem [#allocation10], %s1084
        // Predicated region
        $region145: #{transformer_forward.3} parent=135 // pred_check
          %p1086 = pneg %p365
        $region146: #{transformer_forward.3} parent=135 // pred_check_branch
          %1088 = sbr.rel (%p1086) target = $region148
        $region147: #{transformer_forward.3} parent=135 // pred_region
          %1089 = dma.done %s1082, 1024
        $region148: #{transformer_forward.3} parent=135 // pred_fallthru
          _
        %s1090 = sand.u32 %s83, 1
        %s1091 = scalar_lea.sflag [#allocation12], %s1090
        %s1092 = sand.u32 %s456, 1
        %s1093 = smul.addr %s1092, 64
        %s1094 = scalar_lea.vmem [#allocation11], %s1093
        // Predicated region
        $region149: #{transformer_forward.3} parent=135 // pred_check
          %p1095 = pneg %p469
        $region150: #{transformer_forward.3} parent=135 // pred_check_branch
          %1097 = sbr.rel (%p1095) target = $region152
        $region151: #{transformer_forward.3} parent=135 // pred_region
          %1098 = dma.done %s1091, 1024
        $region152: #{transformer_forward.3} parent=135 // pred_fallthru
          _
        %s1099 = sand.u32 %s83, 1
        %s1100 = scalar_lea.sflag [#allocation12], %s1099
        %s1101 = sand.u32 %s560, 1
        %s1102 = smul.addr %s1101, 256
        %s1103 = scalar_lea.vmem [#allocation13], %s1102
        // Predicated region
        $region153: #{transformer_forward.3} parent=135 // pred_check
          %p1104 = pneg %p573
        $region154: #{transformer_forward.3} parent=135 // pred_check_branch
          %1106 = sbr.rel (%p1104) target = $region156
        $region155: #{transformer_forward.3} parent=135 // pred_region
          %1107 = dma.done %s1100, 4096
        $region156: #{transformer_forward.3} parent=135 // pred_fallthru
          _
        %p1108 = pneg %p99
        %p1109 = pneg %p96
        %p1110 = pneg %p120
        %p1111 = pneg %p117
        %p1112 = pneg %p141
        %p1113 = pneg %p138
        %p1114 = pneg %p162
        %p1115 = pneg %p159
        %p1116 = pneg %p183
        %p1117 = pneg %p180
        %s1118 = sand.u32 %s196, 1
        %s1119 = scalar_lea.sflag [#allocation7], %s1118
        %s1120 = sand.u32 %s196, 1
        %s1121 = smul.addr %s1120, 192
        %s1122 = scalar_lea.vmem [#allocation6], %s1121
        %p1123 = pneg %p209
        %p1124 = pneg %p206
        %p1125 = scmp.lt.s32.totalorder %s83, 3
        %s1126 = scalar_select %p1125, %s83, 3
        %s1127 = smul.addr %s1126, 3
        %s1128 = scalar_lea.vmem %s13, %s1127
        %p1129 = pneg %p235
        %p1130 = pneg %p232
        %s1131 = sand.u32 %s83, 1
        %s1132 = scalar_lea.sflag [#allocation9], %s1131
        %s1133 = sand.u32 %s248, 1
        %s1134 = smul.addr %s1133, 64
        %s1135 = scalar_lea.vmem [#allocation8], %s1134
        %p1136 = pneg %p261
        %p1137 = pneg %p258
        %p1138 = scmp.lt.s32.totalorder %s83, 3
        %s1139 = scalar_select %p1138, %s83, 3
        %s1140 = scalar_lea.vmem %s17, %s1139
        %p1141 = pneg %p287
        %p1142 = pneg %p284
        %p1143 = scmp.lt.s32.totalorder %s83, 3
        %s1144 = scalar_select %p1143, %s83, 3
        %s1145 = scalar_lea.vmem %s19, %s1144
        %p1146 = pneg %p313
        %p1147 = pneg %p310
        %p1148 = scmp.lt.s32.totalorder %s83, 3
        %s1149 = scalar_select %p1148, %s83, 3
        %s1150 = scalar_lea.vmem %s21, %s1149
        %p1151 = pneg %p339
        %p1152 = pneg %p336
        %s1153 = sand.u32 %s83, 1
        %s1154 = scalar_lea.sflag [#allocation9], %s1153
        %s1155 = sand.u32 %s352, 1
        %s1156 = smul.addr %s1155, 64
        %s1157 = scalar_lea.vmem [#allocation10], %s1156
        %p1158 = pneg %p365
        %p1159 = pneg %p362
        %p1160 = scmp.lt.s32.totalorder %s83, 3
        %s1161 = scalar_select %p1160, %s83, 3
        %s1162 = scalar_lea.vmem %s25, %s1161
        %p1163 = pneg %p391
        %p1164 = pneg %p388
        %p1165 = scmp.lt.s32.totalorder %s83, 3
        %s1166 = scalar_select %p1165, %s83, 3
        %s1167 = smul.addr %s1166, 32
        %s1168 = smul.addr %s1167, 4
        %s1169 = scalar_lea.vmem %s27, %s1168
        %p1170 = pneg %p417
        %p1171 = pneg %p414
        %p1172 = scmp.lt.s32.totalorder %s83, 3
        %s1173 = scalar_select %p1172, %s83, 3
        %s1174 = smul.addr %s1173, 2
        %s1175 = scalar_lea.vmem %s29, %s1174
        %p1176 = pneg %p443
        %p1177 = pneg %p440
        %s1178 = sand.u32 %s83, 1
        %s1179 = scalar_lea.sflag [#allocation12], %s1178
        %s1180 = sand.u32 %s456, 1
        %s1181 = smul.addr %s1180, 64
        %s1182 = scalar_lea.vmem [#allocation11], %s1181
        %p1183 = pneg %p469
        %p1184 = pneg %p466
        %p1185 = scmp.lt.s32.totalorder %s83, 3
        %s1186 = scalar_select %p1185, %s83, 3
        %s1187 = scalar_lea.vmem %s33, %s1186
        %p1188 = pneg %p495
        %p1189 = pneg %p492
        %p1190 = scmp.lt.s32.totalorder %s83, 3
        %s1191 = scalar_select %p1190, %s83, 3
        %s1192 = scalar_lea.vmem %s35, %s1191
        %p1193 = pneg %p521
        %p1194 = pneg %p518
        %p1195 = scmp.lt.s32.totalorder %s83, 3
        %s1196 = scalar_select %p1195, %s83, 3
        %s1197 = scalar_lea.vmem %s37, %s1196
        %p1198 = pneg %p547
        %p1199 = pneg %p544
        %s1200 = sand.u32 %s83, 1
        %s1201 = scalar_lea.sflag [#allocation12], %s1200
        %s1202 = sand.u32 %s560, 1
        %s1203 = smul.addr %s1202, 256
        %s1204 = scalar_lea.vmem [#allocation13], %s1203
        %p1205 = pneg %p573
        %p1206 = pneg %p570
        %p1207 = scmp.lt.s32.totalorder %s83, 3
        %s1208 = scalar_select %p1207, %s83, 3
        %s1209 = smul.addr %s1208, 4
        %s1210 = scalar_lea.vmem %s41, %s1209
        %p1211 = pneg %p599
        %p1212 = pneg %p596
        %p1213 = scmp.lt.s32.totalorder %s83, 3
        %s1214 = scalar_select %p1213, %s83, 3
        %s1215 = smul.addr %s1214, 64
        %s1216 = smul.addr %s1215, 4
        %s1217 = scalar_lea.vmem %s43, %s1216
        %p1218 = pneg %p625
        %p1219 = pneg %p622
        %p1220 = scmp.lt.s32.totalorder %s83, 3
        %s1221 = scalar_select %p1220, %s83, 3
        %s1222 = scalar_lea.vmem %s45, %s1221
        %p1223 = pneg %p651
        %p1224 = pneg %p648
        %p1225 = scmp.lt.s32.totalorder %s83, 3
        %s1226 = scalar_select %p1225, %s83, 3
        %s1227 = scalar_lea.vmem %s47, %s1226
        %p1228 = pneg %p677
        %p1229 = pneg %p674
        %p1230 = scmp.lt.s32.totalorder %s83, 3
        %s1231 = scalar_select %p1230, %s83, 3
        %s1232 = scalar_lea.vmem %s49, %s1231
        %p1233 = pneg %p703
        %p1234 = pneg %p700
        %p1235 = pneg %p724
        %p1236 = pneg %p721
        %p1237 = pneg %p745
        %p1238 = pneg %p742
        %p1239 = pneg %p766
        %p1240 = pneg %p763
        %p1241 = pneg %p787
        %p1242 = pneg %p784
        %p1243 = pneg %p808
        %p1244 = pneg %p805
        %p1245 = scmp.lt.s32.totalorder %s83, 3
        %s1246 = scalar_select %p1245, %s83, 3
        %s1247 = smul.addr %s1246, 3
        %s1248 = scalar_lea.vmem %s13, %s1247
        %p1249 = scmp.lt.s32.totalorder %s83, 3
        %s1250 = scalar_select %p1249, %s83, 3
        %s1251 = scalar_lea.vmem %s17, %s1250
        %p1252 = scmp.lt.s32.totalorder %s83, 3
        %s1253 = scalar_select %p1252, %s83, 3
        %s1254 = scalar_lea.vmem %s19, %s1253
        %p1255 = scmp.lt.s32.totalorder %s83, 3
        %s1256 = scalar_select %p1255, %s83, 3
        %s1257 = scalar_lea.vmem %s21, %s1256
        %p1258 = scmp.lt.s32.totalorder %s83, 3
        %s1259 = scalar_select %p1258, %s83, 3
        %s1260 = scalar_lea.vmem %s25, %s1259
        %p1261 = scmp.lt.s32.totalorder %s83, 3
        %s1262 = scalar_select %p1261, %s83, 3
        %s1263 = smul.addr %s1262, 32
        %s1264 = smul.addr %s1263, 4
        %s1265 = scalar_lea.vmem %s27, %s1264
        %p1266 = scmp.lt.s32.totalorder %s83, 3
        %s1267 = scalar_select %p1266, %s83, 3
        %s1268 = smul.addr %s1267, 2
        %s1269 = scalar_lea.vmem %s29, %s1268
        %p1270 = scmp.lt.s32.totalorder %s83, 3
        %s1271 = scalar_select %p1270, %s83, 3
        %s1272 = scalar_lea.vmem %s33, %s1271
        %p1273 = scmp.lt.s32.totalorder %s83, 3
        %s1274 = scalar_select %p1273, %s83, 3
        %s1275 = scalar_lea.vmem %s35, %s1274
        %p1276 = scmp.lt.s32.totalorder %s83, 3
        %s1277 = scalar_select %p1276, %s83, 3
        %s1278 = scalar_lea.vmem %s37, %s1277
        %p1279 = scmp.lt.s32.totalorder %s83, 3
        %s1280 = scalar_select %p1279, %s83, 3
        %s1281 = smul.addr %s1280, 4
        %s1282 = scalar_lea.vmem %s41, %s1281
        %p1283 = scmp.lt.s32.totalorder %s83, 3
        %s1284 = scalar_select %p1283, %s83, 3
        %s1285 = smul.addr %s1284, 64
        %s1286 = smul.addr %s1285, 4
        %s1287 = scalar_lea.vmem %s43, %s1286
        %p1288 = scmp.lt.s32.totalorder %s83, 3
        %s1289 = scalar_select %p1288, %s83, 3
        %s1290 = scalar_lea.vmem %s45, %s1289
        %p1291 = scmp.lt.s32.totalorder %s83, 3
        %s1292 = scalar_select %p1291, %s83, 3
        %s1293 = scalar_lea.vmem %s47, %s1292
        %p1294 = scmp.lt.s32.totalorder %s83, 3
        %s1295 = scalar_select %p1294, %s83, 3
        %s1296 = scalar_lea.vmem %s49, %s1295
        %p1298 = scmp.eq.s32.totalorder %s83, 0
        // Predicated region
        $region157: #{transformer_forward.3} parent=135 // pred_check
          %p1299 = pneg %p1298
        $region158: #{transformer_forward.3} parent=135 // pred_check_branch
          %1301 = sbr.rel (%p1299) target = $region160
        $region159: #{transformer_forward.3} parent=135 // pred_region
          %v1302 = vld [vmem:[%s1] sm:$0xff]
          %v1303 = vld [vmem:[%s1 + $0x8] sm:$0xff]
          %v1304 = vld [vmem:[%s5] sm:$0xf]
          %v1305 = vld [vmem:[%s7] sm:$0x1]
          %v1307 = vlaneseq
          %v1308 = vshrl.u32 %v1307, 7
          %v1309 = vsub.s32 0, %v1308
          %v1310 = vrot.slane %v1305, %v1309
          %vm1312 = vcmask 31744
          %v1314 = vsel %vm1312, %v1302, 0
          %v1317 = vsel %vm1312, %v1303, 0
          %vm1319 = vcmask 1043456
          %v1321 = vsel %vm1319, %v1304, 0
          %1323 = vmatprep.subr.mxu0 0.0
          %1324 = vmatpush1.msra.mxu0 0.0
          %1325 = vmatprep.subr.mxu0 0.0
          %1326 = vmatpush1.msra.mxu0 0.0
          %1327 = vmatprep.subr.mxu0 0.0
          %1328 = vmatpush1.msra.mxu0 0.0
          %1329 = vmatprep.subr.mxu0 0.0
          %1330 = vmatpush1.msra.mxu0 0.0
          %1331 = vmatprep.subr.mxu0 0.0
          %1332 = vmatpush1.msra.mxu0 0.0
          %1333 = vmatprep.subr.mxu0 0.0
          %1334 = vmatpush1.msra.mxu0 0.0
          %1335 = vmatprep.subr.mxu0 0.0
          %1336 = vmatpush1.msra.mxu0 0.0
          %1337 = vmatprep.subr.mxu0 0.0
          %1338 = vmatpush1.msra.mxu0 0.0
          %1339 = vmatprep.subr.mxu0 0.0
          %1340 = vmatpush1.msra.mxu0 0.0
          %1341 = vmatprep.subr.mxu0 0.0
          %1342 = vmatpush1.msra.mxu0 0.0
          %1343 = vmatprep.subr.mxu0 0.0
          %1344 = vmatpush1.msra.mxu0 0.0
          %1345 = vmatprep.subr.mxu0 0.0
          %1346 = vmatpush1.msra.mxu0 0.0
          %1347 = vmatprep.subr.mxu0 0.0
          %1348 = vmatpush1.msra.mxu0 0.0
          %1349 = vmatprep.subr.mxu0 0.0
          %1350 = vmatpush1.msra.mxu0 0.0
          %1351 = vmatprep.subr.mxu0 0.0
          %1352 = vmatpush1.msra.mxu0 0.0
          %1353 = vmatprep.subr.mxu0 0.0
          %1354 = vmatpush1.msra.mxu0 %v1321
          %1355 = vmatprep.subr.mxu0 0.0
          %1356 = vmatpush2.msra.mxu0 0.0
          %1357 = vmatprep.subr.mxu0 0.0
          %1358 = vmatpush2.msra.mxu0 0.0
          %1359 = vmatprep.subr.mxu0 0.0
          %1360 = vmatpush2.msra.mxu0 0.0
          %1361 = vmatprep.subr.mxu0 0.0
          %1362 = vmatpush2.msra.mxu0 0.0
          %1363 = vmatprep.subr.mxu0 0.0
          %1364 = vmatpush2.msra.mxu0 0.0
          %1365 = vmatprep.subr.mxu0 0.0
          %1366 = vmatpush2.msra.mxu0 0.0
          %1367 = vmatprep.subr.mxu0 0.0
          %1368 = vmatpush2.msra.mxu0 0.0
          %1369 = vmatprep.subr.mxu0 0.0
          %1370 = vmatpush2.msra.mxu0 0.0
          %1371 = vmatprep.subr.mxu0 0.0
          %1372 = vmatpush2.msra.mxu0 0.0
          %1373 = vmatprep.subr.mxu0 0.0
          %1374 = vmatpush2.msra.mxu0 0.0
          %1375 = vmatprep.subr.mxu0 0.0
          %1376 = vmatpush2.msra.mxu0 0.0
          %1377 = vmatprep.subr.mxu0 0.0
          %1378 = vmatpush2.msra.mxu0 0.0
          %1379 = vmatprep.subr.mxu0 0.0
          %1380 = vmatpush2.msra.mxu0 0.0
          %1381 = vmatprep.subr.mxu0 0.0
          %1382 = vmatpush2.msra.mxu0 0.0
          %1383 = vmatprep.subr.mxu0 0.0
          %1384 = vmatpush2.msra.mxu0 0.0
          %1385 = vmatprep.subr.mxu0 0.0
          %1386 = vmatpush2.msra.mxu0 0.0
          %1387 = vmatprep.mubr.f32.mxu0 0.0
          %1388 = vmatmul.mubr.f32.gmra.mxu0 %v1314
          %v1389 = vpop.f32.mrf.mxu0
          %v1390 = vadd.f32 %v1310, %v1389
          %v1391 = vpop.f32.mrf.mxu0
          %1392 = vmatprep.mubr.f32.mxu0 0.0
          %1393 = vmatmul.mubr.f32.gmra.mxu0 %v1317
          %v1394 = vpop.f32.mrf.mxu0
          %v1395 = vadd.f32 %v1310, %v1394
          %v1396 = vpop.f32.mrf.mxu0
          %1397 = vdwg.mxu0
          %1398 = vst [vmem:[#allocation3] sm:$0xff] %v1390
          %1399 = vst [vmem:[#allocation3 + $0x8] sm:$0xff] %v1395
          %v1400 = vld [vmem:[%s3] sm:$0xff]
          %v1401 = vadd.f32 %v1390, %v1400
          %v1402 = vadd.f32 %v1395, %v1400
          %1403 = vst [vmem:[#allocation2] sm:$0xff] %v1401
          %1404 = vst [vmem:[#allocation2 + $0x8] sm:$0xff] %v1402
        $region160: #{transformer_forward.3} parent=135 // pred_fallthru
          _
        %v1405 = vld [vmem:[#allocation2] sm:$0xff]
        %v1406 = vld [vmem:[#allocation2 + $0x8] sm:$0xff]
        %v1407 = vpack.c.bf16 %v1406, %v1405
        %v1408 = vld [vmem:[%s1067] sm:$0xff]
        %v1409 = vld [vmem:[%s1067 + $0x8] sm:$0xf]
        %v1410 = vld [vmem:[%s1067 + $0xc] sm:$0xff]
        %v1411 = vld [vmem:[%s1067 + $0x14] sm:$0xf]
        %v1412 = vld [vmem:[%s1067 + $0x18] sm:$0xff]
        %v1413 = vld [vmem:[%s1067 + $0x20] sm:$0xf]
        %v1414 = vld [vmem:[%s1067 + $0x24] sm:$0xff]
        %v1415 = vld [vmem:[%s1067 + $0x2c] sm:$0xf]
        %v1416 = vld [vmem:[%s1067 + $0x30] sm:$0xff]
        %v1417 = vld [vmem:[%s1067 + $0x38] sm:$0xf]
        %v1418 = vld [vmem:[%s1067 + $0x3c] sm:$0xff]
        %v1419 = vld [vmem:[%s1067 + $0x44] sm:$0xf]
        %v1420 = vld [vmem:[%s1067 + $0x48] sm:$0xff]
        %v1421 = vld [vmem:[%s1067 + $0x50] sm:$0xf]
        %v1422 = vld [vmem:[%s1067 + $0x54] sm:$0xff]
        %v1423 = vld [vmem:[%s1067 + $0x5c] sm:$0xf]
        %v1424 = vld [vmem:[%s1067 + $0x60] sm:$0xff]
        %v1425 = vld [vmem:[%s1067 + $0x68] sm:$0xf]
        %v1426 = vld [vmem:[%s1067 + $0x6c] sm:$0xff]
        %v1427 = vld [vmem:[%s1067 + $0x74] sm:$0xf]
        %v1428 = vld [vmem:[%s1067 + $0x78] sm:$0xff]
        %v1429 = vld [vmem:[%s1067 + $0x80] sm:$0xf]
        %v1430 = vld [vmem:[%s1067 + $0x84] sm:$0xff]
        %v1431 = vld [vmem:[%s1067 + $0x8c] sm:$0xf]
        %v1432 = vld [vmem:[%s1067 + $0x90] sm:$0xff]
        %v1433 = vld [vmem:[%s1067 + $0x98] sm:$0xf]
        %v1434 = vld [vmem:[%s1067 + $0x9c] sm:$0xff]
        %v1435 = vld [vmem:[%s1067 + $0xa4] sm:$0xf]
        %v1436 = vld [vmem:[%s1067 + $0xa8] sm:$0xff]
        %v1437 = vld [vmem:[%s1067 + $0xb0] sm:$0xf]
        %v1438 = vld [vmem:[%s1067 + $0xb4] sm:$0xff]
        %v1439 = vld [vmem:[%s1067 + $0xbc] sm:$0xf]
        %v1440 = vld [vmem:[%s1248] sm:$0x7]
        %v1442 = vlaneseq
        %v1443 = vshrl.u32 %v1442, 7
        %v1444 = vsub.s32 0, %v1443
        %v1445 = vrot.slane %v1440, %v1444
        %v1446 = vlaneseq
        %v1447 = vshrl.u32 %v1446, 7
        %v1448 = vsub.s32 1, %v1447
        %v1449 = vrot.slane %v1440, %v1448
        %v1450 = vlaneseq
        %v1451 = vshrl.u32 %v1450, 7
        %v1452 = vsub.s32 2, %v1451
        %v1453 = vrot.slane %v1440, %v1452
        %v1489 = vunpack.c.l.b16 %v1408
        %v1490 = vunpack.c.h.b16 %v1408
        %v1491 = vunpack.c.l.b16 %v1409
        %v1492 = vunpack.c.l.b16 %v1410
        %v1493 = vunpack.c.h.b16 %v1410
        %v1494 = vunpack.c.l.b16 %v1411
        %v1495 = vunpack.c.l.b16 %v1412
        %v1496 = vunpack.c.h.b16 %v1412
        %v1497 = vunpack.c.l.b16 %v1413
        %v1498 = vunpack.c.l.b16 %v1414
        %v1499 = vunpack.c.h.b16 %v1414
        %v1500 = vunpack.c.l.b16 %v1415
        %v1501 = vunpack.c.l.b16 %v1416
        %v1502 = vunpack.c.h.b16 %v1416
        %v1503 = vunpack.c.l.b16 %v1417
        %v1504 = vunpack.c.l.b16 %v1418
        %v1505 = vunpack.c.h.b16 %v1418
        %v1506 = vunpack.c.l.b16 %v1419
        %v1507 = vunpack.c.l.b16 %v1420
        %v1508 = vunpack.c.h.b16 %v1420
        %v1509 = vunpack.c.l.b16 %v1421
        %v1510 = vunpack.c.l.b16 %v1422
        %v1511 = vunpack.c.h.b16 %v1422
        %v1512 = vunpack.c.l.b16 %v1423
        %v1513 = vunpack.c.l.b16 %v1424
        %v1514 = vunpack.c.h.b16 %v1424
        %v1515 = vunpack.c.l.b16 %v1425
        %v1516 = vunpack.c.l.b16 %v1426
        %v1517 = vunpack.c.h.b16 %v1426
        %v1518 = vunpack.c.l.b16 %v1427
        %v1519 = vunpack.c.l.b16 %v1428
        %v1520 = vunpack.c.h.b16 %v1428
        %v1521 = vunpack.c.l.b16 %v1429
        %v1522 = vunpack.c.l.b16 %v1430
        %v1523 = vunpack.c.h.b16 %v1430
        %v1524 = vunpack.c.l.b16 %v1431
        %v1525 = vunpack.c.l.b16 %v1432
        %v1526 = vunpack.c.h.b16 %v1432
        %v1527 = vunpack.c.l.b16 %v1433
        %v1528 = vunpack.c.l.b16 %v1434
        %v1529 = vunpack.c.h.b16 %v1434
        %v1530 = vunpack.c.l.b16 %v1435
        %v1531 = vunpack.c.l.b16 %v1436
        %v1532 = vunpack.c.h.b16 %v1436
        %v1533 = vunpack.c.l.b16 %v1437
        %v1534 = vunpack.c.l.b16 %v1438
        %v1535 = vunpack.c.h.b16 %v1438
        %v1536 = vunpack.c.l.b16 %v1439
        %v1537 = vpack.c.b16 %v1492, %v1489
        %v1538 = vpack.c.b16 %v1493, %v1490
        %v1539 = vpack.c.b16 %v1494, %v1491
        %v1540 = vpack.c.b16 %v1498, %v1495
        %v1541 = vpack.c.b16 %v1499, %v1496
        %v1542 = vpack.c.b16 %v1500, %v1497
        %v1543 = vpack.c.b16 %v1504, %v1501
        %v1544 = vpack.c.b16 %v1505, %v1502
        %v1545 = vpack.c.b16 %v1506, %v1503
        %v1546 = vpack.c.b16 %v1510, %v1507
        %v1547 = vpack.c.b16 %v1511, %v1508
        %v1548 = vpack.c.b16 %v1512, %v1509
        %v1549 = vpack.c.b16 %v1516, %v1513
        %v1550 = vpack.c.b16 %v1517, %v1514
        %v1551 = vpack.c.b16 %v1518, %v1515
        %v1552 = vpack.c.b16 %v1522, %v1519
        %v1553 = vpack.c.b16 %v1523, %v1520
        %v1554 = vpack.c.b16 %v1524, %v1521
        %v1555 = vpack.c.b16 %v1528, %v1525
        %v1556 = vpack.c.b16 %v1529, %v1526
        %v1557 = vpack.c.b16 %v1530, %v1527
        %v1558 = vpack.c.b16 %v1534, %v1531
        %v1559 = vpack.c.b16 %v1535, %v1532
        %v1560 = vpack.c.b16 %v1536, %v1533
        %1585 = vmatprep.subr.bf16.mxu0 %v1559
        %1586 = vmatpush1.bf16.msra.mxu0 %v1558
        %1587 = vmatprep.subr.bf16.mxu0 %v1556
        %1588 = vmatpush1.bf16.msra.mxu0 %v1555
        %1589 = vmatprep.subr.bf16.mxu0 %v1553
        %1590 = vmatpush1.bf16.msra.mxu0 %v1552
        %1591 = vmatprep.subr.bf16.mxu0 %v1550
        %1592 = vmatpush1.bf16.msra.mxu0 %v1549
        %1593 = vmatprep.subr.bf16.mxu0 %v1547
        %1594 = vmatpush1.bf16.msra.mxu0 %v1546
        %1595 = vmatprep.subr.bf16.mxu0 %v1544
        %1596 = vmatpush1.bf16.msra.mxu0 %v1543
        %1597 = vmatprep.subr.bf16.mxu0 %v1541
        %1598 = vmatpush1.bf16.msra.mxu0 %v1540
        %1599 = vmatprep.subr.bf16.mxu0 %v1538
        %1600 = vmatpush1.bf16.msra.mxu0 %v1537
        %1601 = vmatprep.subr.bf16.mxu0 0
        %1602 = vmatpush2.bf16.msra.mxu0 0
        %1603 = vmatprep.subr.bf16.mxu0 0
        %1604 = vmatpush2.bf16.msra.mxu0 0
        %1605 = vmatprep.subr.bf16.mxu0 0
        %1606 = vmatpush2.bf16.msra.mxu0 0
        %1607 = vmatprep.subr.bf16.mxu0 0
        %1608 = vmatpush2.bf16.msra.mxu0 0
        %1609 = vmatprep.subr.bf16.mxu0 0
        %1610 = vmatpush2.bf16.msra.mxu0 0
        %1611 = vmatprep.subr.bf16.mxu0 0
        %1612 = vmatpush2.bf16.msra.mxu0 0
        %1613 = vmatprep.subr.bf16.mxu0 0
        %1614 = vmatpush2.bf16.msra.mxu0 0
        %1615 = vmatprep.subr.bf16.mxu0 0
        %1616 = vmatpush2.bf16.msra.mxu0 0
        %1617 = vmatprep.mubr.bf16.mxu0 0
        %1618 = vmatmul.mubr.bf16.gmra.mxu0 %v1407
        %v1619 = vpop.f32.mrf.mxu0
        %v1620 = vadd.f32 %v1445, %v1619
        %v1621 = vpop.f32.mrf.mxu0
        %v1622 = vadd.f32 %v1449, %v1621
        %v1623 = vpop.f32.mrf.mxu0
        %v1624 = vadd.f32 %v1445, %v1623
        %v1625 = vpop.f32.mrf.mxu0
        %v1626 = vadd.f32 %v1449, %v1625
        %1627 = vdwg.mxu0
        %1628 = vmatprep.subr.bf16.mxu0 0
        %1629 = vmatpush1.bf16.msra.mxu0 %v1560
        %1630 = vmatprep.subr.bf16.mxu0 0
        %1631 = vmatpush1.bf16.msra.mxu0 %v1557
        %1632 = vmatprep.subr.bf16.mxu0 0
        %1633 = vmatpush1.bf16.msra.mxu0 %v1554
        %1634 = vmatprep.subr.bf16.mxu0 0
        %1635 = vmatpush1.bf16.msra.mxu0 %v1551
        %1636 = vmatprep.subr.bf16.mxu0 0
        %1637 = vmatpush1.bf16.msra.mxu0 %v1548
        %1638 = vmatprep.subr.bf16.mxu0 0
        %1639 = vmatpush1.bf16.msra.mxu0 %v1545
        %1640 = vmatprep.subr.bf16.mxu0 0
        %1641 = vmatpush1.bf16.msra.mxu0 %v1542
        %1642 = vmatprep.subr.bf16.mxu0 0
        %1643 = vmatpush1.bf16.msra.mxu0 %v1539
        %1644 = vmatprep.subr.bf16.mxu0 0
        %1645 = vmatpush2.bf16.msra.mxu0 0
        %1646 = vmatprep.subr.bf16.mxu0 0
        %1647 = vmatpush2.bf16.msra.mxu0 0
        %1648 = vmatprep.subr.bf16.mxu0 0
        %1649 = vmatpush2.bf16.msra.mxu0 0
        %1650 = vmatprep.subr.bf16.mxu0 0
        %1651 = vmatpush2.bf16.msra.mxu0 0
        %1652 = vmatprep.subr.bf16.mxu0 0
        %1653 = vmatpush2.bf16.msra.mxu0 0
        %1654 = vmatprep.subr.bf16.mxu0 0
        %1655 = vmatpush2.bf16.msra.mxu0 0
        %1656 = vmatprep.subr.bf16.mxu0 0
        %1657 = vmatpush2.bf16.msra.mxu0 0
        %1658 = vmatprep.subr.bf16.mxu0 0
        %1659 = vmatpush2.bf16.msra.mxu0 0
        %1660 = vmatprep.mubr.bf16.mxu0 0
        %1661 = vmatmul.mubr.bf16.gmra.mxu0 %v1407
        %v1662 = vpop.f32.mrf.mxu0
        %v1663 = vadd.f32 %v1453, %v1662
        %v1664 = vpop.f32.mrf.mxu0
        %v1665 = vpop.f32.mrf.mxu0
        %v1666 = vadd.f32 %v1453, %v1665
        %v1667 = vpop.f32.mrf.mxu0
        %1668 = vdwg.mxu0
        %v1669 = vpack.c.bf16 %v1620, %v1620
        %v1670 = vpack.c.bf16 %v1624, %v1624
        %v1671 = vpack.c.bf16 %v1622, %v1622
        %v1672 = vpack.c.bf16 %v1626, %v1626
        %1673 = vmatprep.subr.bf16.mxu0 0
        %1674 = vmatpush1.bf16.xpose.msra.mxu0 0
        %1675 = vmatprep.subr.bf16.mxu0 0
        %1676 = vmatpush1.bf16.xpose.msra.mxu0 0
        %1677 = vmatprep.subr.bf16.mxu0 0
        %1678 = vmatpush1.bf16.xpose.msra.mxu0 0
        %1679 = vmatprep.subr.bf16.mxu0 0
        %1680 = vmatpush1.bf16.xpose.msra.mxu0 0
        %1681 = vmatprep.subr.bf16.mxu0 0
        %1682 = vmatpush1.bf16.xpose.msra.mxu0 0
        %1683 = vmatprep.subr.bf16.mxu0 0
        %1684 = vmatpush1.bf16.xpose.msra.mxu0 0
        %1685 = vmatprep.subr.bf16.mxu0 0
        %1686 = vmatpush1.bf16.xpose.msra.mxu0 0
        %1687 = vmatprep.subr.bf16.mxu0 0
        %1688 = vmatpush1.bf16.xpose.msra.mxu0 %v1671
        %1689 = vmatprep.subr.bf16.mxu0 0
        %1690 = vmatpush2.bf16.xpose.msra.mxu0 0
        %1691 = vmatprep.subr.bf16.mxu0 0
        %1692 = vmatpush2.bf16.xpose.msra.mxu0 0
        %1693 = vmatprep.subr.bf16.mxu0 0
        %1694 = vmatpush2.bf16.xpose.msra.mxu0 0
        %1695 = vmatprep.subr.bf16.mxu0 0
        %1696 = vmatpush2.bf16.xpose.msra.mxu0 0
        %1697 = vmatprep.subr.bf16.mxu0 0
        %1698 = vmatpush2.bf16.xpose.msra.mxu0 0
        %1699 = vmatprep.subr.bf16.mxu0 0
        %1700 = vmatpush2.bf16.xpose.msra.mxu0 0
        %1701 = vmatprep.subr.bf16.mxu0 0
        %1702 = vmatpush2.bf16.xpose.msra.mxu0 0
        %1703 = vmatprep.subr.bf16.mxu0 0
        %1704 = vmatpush2.bf16.xpose.msra.mxu0 0
        %1705 = vmatprep.mubr.bf16.mxu0 0
        %1706 = vmatmul.mubr.bf16.gmra.mxu0 %v1669
        %v1707 = vpop.f32.mrf.mxu0
        %v1708 = vadd.f32 0.0, %v1707
        %v1709 = vpop.f32.mrf.mxu0
        %v1710 = vpop.f32.mrf.mxu0
        %v1711 = vpop.f32.mrf.mxu0
        %1712 = vdwg.mxu0
        %1713 = vmatprep.subr.bf16.mxu0 0
        %1714 = vmatpush1.bf16.xpose.msra.mxu0 0
        %1715 = vmatprep.subr.bf16.mxu0 0
        %1716 = vmatpush1.bf16.xpose.msra.mxu0 0
        %1717 = vmatprep.subr.bf16.mxu0 0
        %1718 = vmatpush1.bf16.xpose.msra.mxu0 0
        %1719 = vmatprep.subr.bf16.mxu0 0
        %1720 = vmatpush1.bf16.xpose.msra.mxu0 0
        %1721 = vmatprep.subr.bf16.mxu0 0
        %1722 = vmatpush1.bf16.xpose.msra.mxu0 0
        %1723 = vmatprep.subr.bf16.mxu0 0
        %1724 = vmatpush1.bf16.xpose.msra.mxu0 0
        %1725 = vmatprep.subr.bf16.mxu0 0
        %1726 = vmatpush1.bf16.xpose.msra.mxu0 0
        %1727 = vmatprep.subr.bf16.mxu0 0
        %1728 = vmatpush1.bf16.xpose.msra.mxu0 %v1672
        %1729 = vmatprep.subr.bf16.mxu0 0
        %1730 = vmatpush2.bf16.xpose.msra.mxu0 0
        %1731 = vmatprep.subr.bf16.mxu0 0
        %1732 = vmatpush2.bf16.xpose.msra.mxu0 0
        %1733 = vmatprep.subr.bf16.mxu0 0
        %1734 = vmatpush2.bf16.xpose.msra.mxu0 0
        %1735 = vmatprep.subr.bf16.mxu0 0
        %1736 = vmatpush2.bf16.xpose.msra.mxu0 0
        %1737 = vmatprep.subr.bf16.mxu0 0
        %1738 = vmatpush2.bf16.xpose.msra.mxu0 0
        %1739 = vmatprep.subr.bf16.mxu0 0
        %1740 = vmatpush2.bf16.xpose.msra.mxu0 0
        %1741 = vmatprep.subr.bf16.mxu0 0
        %1742 = vmatpush2.bf16.xpose.msra.mxu0 0
        %1743 = vmatprep.subr.bf16.mxu0 0
        %1744 = vmatpush2.bf16.xpose.msra.mxu0 0
        %1745 = vmatprep.mubr.bf16.mxu0 0
        %1746 = vmatmul.mubr.bf16.gmra.mxu0 %v1670
        %v1747 = vpop.f32.mrf.mxu0
        %v1748 = vadd.f32 0.0, %v1747
        %v1749 = vpop.f32.mrf.mxu0
        %v1750 = vpop.f32.mrf.mxu0
        %v1751 = vpop.f32.mrf.mxu0
        %1752 = vdwg.mxu0
        %v1753 = vmul.f32 %v1708, 0.088388346
        %v1754 = vmul.f32 %v1748, 0.088388346
        %v1755 = vlaneseq
        %v1756 = vshrl.u32 %v1755, 7
        %v1757 = vlaneseq
        %v1758 = vand.u32 %v1757, 127
        %vm1759 = vcmp.ge.s32.totalorder %v1756, %v1758
        %v1760 = vsel %vm1759, %v1753, -inf
        %v1761 = vsel %vm1759, %v1754, -inf
        %vm1762 = vcmask 64512
        %v1763 = vsel %vm1762, %v1760, -inf
        %1764 = vmax.xlane.f32.xlu0 %v1763
        %v1765 = vpop.xlane.xlu0 %1764
        %v1766 = vsel %vm1762, %v1761, -inf
        %1767 = vmax.xlane.f32.xlu0 %v1766
        %v1768 = vpop.xlane.xlu0 %1767
        %v1769 = vsub.f32 %v1760, %v1765
        %v1770 = vsub.f32 %v1761, %v1768
        %v1771 = vmul.f32 %v1769, 1.442695
        %v1772 = vpow.pop %v1771
        %v1773 = vmul.f32 %v1770, 1.442695
        %v1774 = vpow.pop %v1773
        %v1775 = vsel %vm1762, %v1772, 0.0
        %1776 = vadd.xlane.f32.xlu0 %v1775
        %v1777 = vpop.xlane.xlu0 %1776
        %v1778 = vsel %vm1762, %v1774, 0.0
        %1779 = vadd.xlane.f32.xlu0 %v1778
        %v1780 = vpop.xlane.xlu0 %1779
        %v1781 = vrcp.pop %v1777
        %v1782 = vrcp.pop %v1780
        %v1783 = vmul.f32 %v1772, %v1781
        %v1784 = vmul.f32 %v1774, %v1782
        %v1785 = vpack.c.bf16 %v1783, %v1783
        %v1786 = vpack.c.bf16 %v1784, %v1784
        %v1787 = vpack.c.bf16 %v1663, %v1663
        %v1788 = vpack.c.bf16 %v1666, %v1666
        %v1790 = vsel %vm1762, %v1785, 0
        %vm1792 = vcmask 1043456
        %v1794 = vsel %vm1792, %v1787, 0
        %1796 = vmatprep.subr.bf16.mxu0 0
        %1797 = vmatpush1.bf16.msra.mxu0 0
        %1798 = vmatprep.subr.bf16.mxu0 0
        %1799 = vmatpush1.bf16.msra.mxu0 0
        %1800 = vmatprep.subr.bf16.mxu0 0
        %1801 = vmatpush1.bf16.msra.mxu0 0
        %1802 = vmatprep.subr.bf16.mxu0 0
        %1803 = vmatpush1.bf16.msra.mxu0 0
        %1804 = vmatprep.subr.bf16.mxu0 0
        %1805 = vmatpush1.bf16.msra.mxu0 0
        %1806 = vmatprep.subr.bf16.mxu0 0
        %1807 = vmatpush1.bf16.msra.mxu0 0
        %1808 = vmatprep.subr.bf16.mxu0 0
        %1809 = vmatpush1.bf16.msra.mxu0 0
        %1810 = vmatprep.subr.bf16.mxu0 0
        %1811 = vmatpush1.bf16.msra.mxu0 %v1794
        %1812 = vmatprep.subr.bf16.mxu0 0
        %1813 = vmatpush2.bf16.msra.mxu0 0
        %1814 = vmatprep.subr.bf16.mxu0 0
        %1815 = vmatpush2.bf16.msra.mxu0 0
        %1816 = vmatprep.subr.bf16.mxu0 0
        %1817 = vmatpush2.bf16.msra.mxu0 0
        %1818 = vmatprep.subr.bf16.mxu0 0
        %1819 = vmatpush2.bf16.msra.mxu0 0
        %1820 = vmatprep.subr.bf16.mxu0 0
        %1821 = vmatpush2.bf16.msra.mxu0 0
        %1822 = vmatprep.subr.bf16.mxu0 0
        %1823 = vmatpush2.bf16.msra.mxu0 0
        %1824 = vmatprep.subr.bf16.mxu0 0
        %1825 = vmatpush2.bf16.msra.mxu0 0
        %1826 = vmatprep.subr.bf16.mxu0 0
        %1827 = vmatpush2.bf16.msra.mxu0 0
        %1828 = vmatprep.mubr.bf16.mxu0 0
        %1829 = vmatmul.mubr.bf16.gmra.mxu0 %v1790
        %v1830 = vpop.f32.mrf.mxu0
        %v1831 = vadd.f32 0.0, %v1830
        %v1832 = vpop.f32.mrf.mxu0
        %v1833 = vpop.f32.mrf.mxu0
        %v1834 = vpop.f32.mrf.mxu0
        %1835 = vdwg.mxu0
        %v1837 = vsel %vm1762, %v1786, 0
        %v1840 = vsel %vm1792, %v1788, 0
        %1842 = vmatprep.subr.bf16.mxu0 0
        %1843 = vmatpush1.bf16.msra.mxu0 0
        %1844 = vmatprep.subr.bf16.mxu0 0
        %1845 = vmatpush1.bf16.msra.mxu0 0
        %1846 = vmatprep.subr.bf16.mxu0 0
        %1847 = vmatpush1.bf16.msra.mxu0 0
        %1848 = vmatprep.subr.bf16.mxu0 0
        %1849 = vmatpush1.bf16.msra.mxu0 0
        %1850 = vmatprep.subr.bf16.mxu0 0
        %1851 = vmatpush1.bf16.msra.mxu0 0
        %1852 = vmatprep.subr.bf16.mxu0 0
        %1853 = vmatpush1.bf16.msra.mxu0 0
        %1854 = vmatprep.subr.bf16.mxu0 0
        %1855 = vmatpush1.bf16.msra.mxu0 0
        %1856 = vmatprep.subr.bf16.mxu0 0
        %1857 = vmatpush1.bf16.msra.mxu0 %v1840
        %1858 = vmatprep.subr.bf16.mxu0 0
        %1859 = vmatpush2.bf16.msra.mxu0 0
        %1860 = vmatprep.subr.bf16.mxu0 0
        %1861 = vmatpush2.bf16.msra.mxu0 0
        %1862 = vmatprep.subr.bf16.mxu0 0
        %1863 = vmatpush2.bf16.msra.mxu0 0
        %1864 = vmatprep.subr.bf16.mxu0 0
        %1865 = vmatpush2.bf16.msra.mxu0 0
        %1866 = vmatprep.subr.bf16.mxu0 0
        %1867 = vmatpush2.bf16.msra.mxu0 0
        %1868 = vmatprep.subr.bf16.mxu0 0
        %1869 = vmatpush2.bf16.msra.mxu0 0
        %1870 = vmatprep.subr.bf16.mxu0 0
        %1871 = vmatpush2.bf16.msra.mxu0 0
        %1872 = vmatprep.subr.bf16.mxu0 0
        %1873 = vmatpush2.bf16.msra.mxu0 0
        %1874 = vmatprep.mubr.bf16.mxu0 0
        %1875 = vmatmul.mubr.bf16.gmra.mxu0 %v1837
        %v1876 = vpop.f32.mrf.mxu0
        %v1877 = vadd.f32 0.0, %v1876
        %v1878 = vpop.f32.mrf.mxu0
        %v1879 = vpop.f32.mrf.mxu0
        %v1880 = vpop.f32.mrf.mxu0
        %1881 = vdwg.mxu0
        %v1882 = vpack.c.bf16 %v1877, %v1831
        %v1883 = vld [vmem:[%s1076] sm:$0xf]
        %v1884 = vld [vmem:[%s1076 + $0x4] sm:$0xf]
        %v1885 = vld [vmem:[%s1076 + $0x8] sm:$0xf]
        %v1886 = vld [vmem:[%s1076 + $0xc] sm:$0xf]
        %v1887 = vld [vmem:[%s1076 + $0x10] sm:$0xf]
        %v1888 = vld [vmem:[%s1076 + $0x14] sm:$0xf]
        %v1889 = vld [vmem:[%s1076 + $0x18] sm:$0xf]
        %v1890 = vld [vmem:[%s1076 + $0x1c] sm:$0xf]
        %v1891 = vld [vmem:[%s1076 + $0x20] sm:$0xf]
        %v1892 = vld [vmem:[%s1076 + $0x24] sm:$0xf]
        %v1893 = vld [vmem:[%s1076 + $0x28] sm:$0xf]
        %v1894 = vld [vmem:[%s1076 + $0x2c] sm:$0xf]
        %v1895 = vld [vmem:[%s1076 + $0x30] sm:$0xf]
        %v1896 = vld [vmem:[%s1076 + $0x34] sm:$0xf]
        %v1897 = vld [vmem:[%s1076 + $0x38] sm:$0xf]
        %v1898 = vld [vmem:[%s1076 + $0x3c] sm:$0xf]
        %v1899 = vld [vmem:[%s1251] sm:$0x1]
        %v1901 = vlaneseq
        %v1902 = vshrl.u32 %v1901, 7
        %v1903 = vsub.s32 0, %v1902
        %v1904 = vrot.slane %v1899, %v1903
        %v1922 = vunpack.c.l.b16 %v1883
        %v1923 = vunpack.c.l.b16 %v1884
        %v1924 = vunpack.c.l.b16 %v1885
        %v1925 = vunpack.c.l.b16 %v1886
        %v1926 = vunpack.c.l.b16 %v1887
        %v1927 = vunpack.c.l.b16 %v1888
        %v1928 = vunpack.c.l.b16 %v1889
        %v1929 = vunpack.c.l.b16 %v1890
        %v1930 = vunpack.c.l.b16 %v1891
        %v1931 = vunpack.c.l.b16 %v1892
        %v1932 = vunpack.c.l.b16 %v1893
        %v1933 = vunpack.c.l.b16 %v1894
        %v1934 = vunpack.c.l.b16 %v1895
        %v1935 = vunpack.c.l.b16 %v1896
        %v1936 = vunpack.c.l.b16 %v1897
        %v1937 = vunpack.c.l.b16 %v1898
        %v1938 = vpack.c.b16 %v1923, %v1922
        %v1939 = vpack.c.b16 %v1925, %v1924
        %v1940 = vpack.c.b16 %v1927, %v1926
        %v1941 = vpack.c.b16 %v1929, %v1928
        %v1942 = vpack.c.b16 %v1931, %v1930
        %v1943 = vpack.c.b16 %v1933, %v1932
        %v1944 = vpack.c.b16 %v1935, %v1934
        %v1945 = vpack.c.b16 %v1937, %v1936
        %1954 = vmatprep.subr.bf16.mxu0 0
        %1955 = vmatpush1.bf16.msra.mxu0 %v1945
        %1956 = vmatprep.subr.bf16.mxu0 0
        %1957 = vmatpush1.bf16.msra.mxu0 %v1944
        %1958 = vmatprep.subr.bf16.mxu0 0
        %1959 = vmatpush1.bf16.msra.mxu0 %v1943
        %1960 = vmatprep.subr.bf16.mxu0 0
        %1961 = vmatpush1.bf16.msra.mxu0 %v1942
        %1962 = vmatprep.subr.bf16.mxu0 0
        %1963 = vmatpush1.bf16.msra.mxu0 %v1941
        %1964 = vmatprep.subr.bf16.mxu0 0
        %1965 = vmatpush1.bf16.msra.mxu0 %v1940
        %1966 = vmatprep.subr.bf16.mxu0 0
        %1967 = vmatpush1.bf16.msra.mxu0 %v1939
        %1968 = vmatprep.subr.bf16.mxu0 0
        %1969 = vmatpush1.bf16.msra.mxu0 %v1938
        %1970 = vmatprep.subr.bf16.mxu0 0
        %1971 = vmatpush2.bf16.msra.mxu0 0
        %1972 = vmatprep.subr.bf16.mxu0 0
        %1973 = vmatpush2.bf16.msra.mxu0 0
        %1974 = vmatprep.subr.bf16.mxu0 0
        %1975 = vmatpush2.bf16.msra.mxu0 0
        %1976 = vmatprep.subr.bf16.mxu0 0
        %1977 = vmatpush2.bf16.msra.mxu0 0
        %1978 = vmatprep.subr.bf16.mxu0 0
        %1979 = vmatpush2.bf16.msra.mxu0 0
        %1980 = vmatprep.subr.bf16.mxu0 0
        %1981 = vmatpush2.bf16.msra.mxu0 0
        %1982 = vmatprep.subr.bf16.mxu0 0
        %1983 = vmatpush2.bf16.msra.mxu0 0
        %1984 = vmatprep.subr.bf16.mxu0 0
        %1985 = vmatpush2.bf16.msra.mxu0 0
        %1986 = vmatprep.mubr.bf16.mxu0 0
        %1987 = vmatmul.mubr.bf16.gmra.mxu0 %v1882
        %v1988 = vpop.f32.mrf.mxu0
        %v1989 = vadd.f32 %v1904, %v1988
        %v1990 = vpop.f32.mrf.mxu0
        %v1991 = vpop.f32.mrf.mxu0
        %v1992 = vadd.f32 %v1904, %v1991
        %v1993 = vpop.f32.mrf.mxu0
        %1994 = vdwg.mxu0
        %v1995 = vadd.f32 %v1405, %v1989
        %v1996 = vadd.f32 %v1406, %v1992
        %v1997 = vld [vmem:[%s1254] sm:$0x1]
        %v1998 = vld [vmem:[%s1257] sm:$0x1]
        %1999 = vadd.xlane.f32.xlu0 %v1995
        %v2000 = vpop.xlane.xlu0 %1999
        %2001 = vadd.xlane.f32.xlu0 %v1996
        %v2002 = vpop.xlane.xlu0 %2001
        %v2003 = vrcp.pop 128.0
        %v2004 = vmul.f32 %v2000, %v2003
        %v2005 = vmul.f32 %v2002, %v2003
        %v2006 = vsub.f32 %v1995, %v2004
        %v2007 = vsub.f32 %v1996, %v2005
        %v2008 = vmul.f32 %v2006, %v2006
        %v2009 = vmul.f32 %v2007, %v2007
        %2010 = vadd.xlane.f32.xlu0 %v2008
        %v2011 = vpop.xlane.xlu0 %2010
        %2012 = vadd.xlane.f32.xlu0 %v2009
        %v2013 = vpop.xlane.xlu0 %2012
        %v2014 = vmul.f32 %v2011, %v2003
        %v2015 = vmul.f32 %v2013, %v2003
        %v2016 = vadd.f32 %v2014, 1e-05
        %v2017 = vadd.f32 %v2015, 1e-05
        %v2018 = vrsqrt.pop %v2016
        %v2019 = vrsqrt.pop %v2017
        %v2020 = vmul.f32 %v2006, %v2018
        %v2021 = vmul.f32 %v2007, %v2019
        %v2023 = vlaneseq
        %v2024 = vshrl.u32 %v2023, 7
        %v2025 = vsub.s32 0, %v2024
        %v2026 = vrot.slane %v1997, %v2025
        %v2028 = vmul.f32 %v2020, %v2026
        %v2029 = vmul.f32 %v2021, %v2026
        %v2031 = vlaneseq
        %v2032 = vshrl.u32 %v2031, 7
        %v2033 = vsub.s32 0, %v2032
        %v2034 = vrot.slane %v1998, %v2033
        %v2036 = vadd.f32 %v2028, %v2034
        %v2037 = vadd.f32 %v2029, %v2034
        %v2038 = vpack.c.bf16 %v2037, %v2036
        %v2039 = vld [vmem:[%s1085] sm:$0xf]
        %v2040 = vld [vmem:[%s1085 + $0x4] sm:$0xf]
        %v2041 = vld [vmem:[%s1085 + $0x8] sm:$0xf]
        %v2042 = vld [vmem:[%s1085 + $0xc] sm:$0xf]
        %v2043 = vld [vmem:[%s1085 + $0x10] sm:$0xf]
        %v2044 = vld [vmem:[%s1085 + $0x14] sm:$0xf]
        %v2045 = vld [vmem:[%s1085 + $0x18] sm:$0xf]
        %v2046 = vld [vmem:[%s1085 + $0x1c] sm:$0xf]
        %v2047 = vld [vmem:[%s1085 + $0x20] sm:$0xf]
        %v2048 = vld [vmem:[%s1085 + $0x24] sm:$0xf]
        %v2049 = vld [vmem:[%s1085 + $0x28] sm:$0xf]
        %v2050 = vld [vmem:[%s1085 + $0x2c] sm:$0xf]
        %v2051 = vld [vmem:[%s1085 + $0x30] sm:$0xf]
        %v2052 = vld [vmem:[%s1085 + $0x34] sm:$0xf]
        %v2053 = vld [vmem:[%s1085 + $0x38] sm:$0xf]
        %v2054 = vld [vmem:[%s1085 + $0x3c] sm:$0xf]
        %v2055 = vld [vmem:[%s1260] sm:$0x1]
        %v2057 = vlaneseq
        %v2058 = vshrl.u32 %v2057, 7
        %v2059 = vsub.s32 0, %v2058
        %v2060 = vrot.slane %v2055, %v2059
        %v2078 = vunpack.c.l.b16 %v2039
        %v2079 = vunpack.c.l.b16 %v2040
        %v2080 = vunpack.c.l.b16 %v2041
        %v2081 = vunpack.c.l.b16 %v2042
        %v2082 = vunpack.c.l.b16 %v2043
        %v2083 = vunpack.c.l.b16 %v2044
        %v2084 = vunpack.c.l.b16 %v2045
        %v2085 = vunpack.c.l.b16 %v2046
        %v2086 = vunpack.c.l.b16 %v2047
        %v2087 = vunpack.c.l.b16 %v2048
        %v2088 = vunpack.c.l.b16 %v2049
        %v2089 = vunpack.c.l.b16 %v2050
        %v2090 = vunpack.c.l.b16 %v2051
        %v2091 = vunpack.c.l.b16 %v2052
        %v2092 = vunpack.c.l.b16 %v2053
        %v2093 = vunpack.c.l.b16 %v2054
        %v2094 = vpack.c.b16 %v2079, %v2078
        %v2095 = vpack.c.b16 %v2081, %v2080
        %v2096 = vpack.c.b16 %v2083, %v2082
        %v2097 = vpack.c.b16 %v2085, %v2084
        %v2098 = vpack.c.b16 %v2087, %v2086
        %v2099 = vpack.c.b16 %v2089, %v2088
        %v2100 = vpack.c.b16 %v2091, %v2090
        %v2101 = vpack.c.b16 %v2093, %v2092
        %2110 = vmatprep.subr.bf16.mxu0 0
        %2111 = vmatpush1.bf16.msra.mxu0 %v2101
        %2112 = vmatprep.subr.bf16.mxu0 0
        %2113 = vmatpush1.bf16.msra.mxu0 %v2100
        %2114 = vmatprep.subr.bf16.mxu0 0
        %2115 = vmatpush1.bf16.msra.mxu0 %v2099
        %2116 = vmatprep.subr.bf16.mxu0 0
        %2117 = vmatpush1.bf16.msra.mxu0 %v2098
        %2118 = vmatprep.subr.bf16.mxu0 0
        %2119 = vmatpush1.bf16.msra.mxu0 %v2097
        %2120 = vmatprep.subr.bf16.mxu0 0
        %2121 = vmatpush1.bf16.msra.mxu0 %v2096
        %2122 = vmatprep.subr.bf16.mxu0 0
        %2123 = vmatpush1.bf16.msra.mxu0 %v2095
        %2124 = vmatprep.subr.bf16.mxu0 0
        %2125 = vmatpush1.bf16.msra.mxu0 %v2094
        %2126 = vmatprep.subr.bf16.mxu0 0
        %2127 = vmatpush2.bf16.msra.mxu0 0
        %2128 = vmatprep.subr.bf16.mxu0 0
        %2129 = vmatpush2.bf16.msra.mxu0 0
        %2130 = vmatprep.subr.bf16.mxu0 0
        %2131 = vmatpush2.bf16.msra.mxu0 0
        %2132 = vmatprep.subr.bf16.mxu0 0
        %2133 = vmatpush2.bf16.msra.mxu0 0
        %2134 = vmatprep.subr.bf16.mxu0 0
        %2135 = vmatpush2.bf16.msra.mxu0 0
        %2136 = vmatprep.subr.bf16.mxu0 0
        %2137 = vmatpush2.bf16.msra.mxu0 0
        %2138 = vmatprep.subr.bf16.mxu0 0
        %2139 = vmatpush2.bf16.msra.mxu0 0
        %2140 = vmatprep.subr.bf16.mxu0 0
        %2141 = vmatpush2.bf16.msra.mxu0 0
        %2142 = vmatprep.mubr.bf16.mxu0 0
        %2143 = vmatmul.mubr.bf16.gmra.mxu0 %v2038
        %v2144 = vpop.f32.mrf.mxu0
        %v2145 = vadd.f32 %v2060, %v2144
        %v2146 = vpop.f32.mrf.mxu0
        %v2147 = vpop.f32.mrf.mxu0
        %v2148 = vadd.f32 %v2060, %v2147
        %v2149 = vpop.f32.mrf.mxu0
        %2150 = vdwg.mxu0
        %v2151 = vld [vmem:[%s9] sm:$0xff]
        %v2152 = vld [vmem:[%s9 + $0x8] sm:$0xff]
        %v2153 = vpack.c.bf16 %v2152, %v2151
        %v2154 = vld [vmem:[%s1265] sm:$0xff]
        %v2155 = vld [vmem:[%s1265 + $0x8] sm:$0xff]
        %v2156 = vld [vmem:[%s1265 + $0x10] sm:$0xff]
        %v2157 = vld [vmem:[%s1265 + $0x18] sm:$0xff]
        %v2158 = vld [vmem:[%s1265 + $0x20] sm:$0xff]
        %v2159 = vld [vmem:[%s1265 + $0x28] sm:$0xff]
        %v2160 = vld [vmem:[%s1265 + $0x30] sm:$0xff]
        %v2161 = vld [vmem:[%s1265 + $0x38] sm:$0xff]
        %v2162 = vld [vmem:[%s1265 + $0x40] sm:$0xff]
        %v2163 = vld [vmem:[%s1265 + $0x48] sm:$0xff]
        %v2164 = vld [vmem:[%s1265 + $0x50] sm:$0xff]
        %v2165 = vld [vmem:[%s1265 + $0x58] sm:$0xff]
        %v2166 = vld [vmem:[%s1265 + $0x60] sm:$0xff]
        %v2167 = vld [vmem:[%s1265 + $0x68] sm:$0xff]
        %v2168 = vld [vmem:[%s1265 + $0x70] sm:$0xff]
        %v2169 = vld [vmem:[%s1265 + $0x78] sm:$0xff]
        %v2170 = vld [vmem:[%s1269] sm:$0x3]
        %v2172 = vlaneseq
        %v2173 = vshrl.u32 %v2172, 7
        %v2174 = vsub.s32 0, %v2173
        %v2175 = vrot.slane %v2170, %v2174
        %v2176 = vlaneseq
        %v2177 = vshrl.u32 %v2176, 7
        %v2178 = vsub.s32 1, %v2177
        %v2179 = vrot.slane %v2170, %v2178
        %v2198 = vunpack.c.l.b16 %v2154
        %v2199 = vunpack.c.h.b16 %v2154
        %v2200 = vunpack.c.l.b16 %v2155
        %v2201 = vunpack.c.h.b16 %v2155
        %v2202 = vunpack.c.l.b16 %v2156
        %v2203 = vunpack.c.h.b16 %v2156
        %v2204 = vunpack.c.l.b16 %v2157
        %v2205 = vunpack.c.h.b16 %v2157
        %v2206 = vunpack.c.l.b16 %v2158
        %v2207 = vunpack.c.h.b16 %v2158
        %v2208 = vunpack.c.l.b16 %v2159
        %v2209 = vunpack.c.h.b16 %v2159
        %v2210 = vunpack.c.l.b16 %v2160
        %v2211 = vunpack.c.h.b16 %v2160
        %v2212 = vunpack.c.l.b16 %v2161
        %v2213 = vunpack.c.h.b16 %v2161
        %v2214 = vunpack.c.l.b16 %v2162
        %v2215 = vunpack.c.h.b16 %v2162
        %v2216 = vunpack.c.l.b16 %v2163
        %v2217 = vunpack.c.h.b16 %v2163
        %v2218 = vunpack.c.l.b16 %v2164
        %v2219 = vunpack.c.h.b16 %v2164
        %v2220 = vunpack.c.l.b16 %v2165
        %v2221 = vunpack.c.h.b16 %v2165
        %v2222 = vunpack.c.l.b16 %v2166
        %v2223 = vunpack.c.h.b16 %v2166
        %v2224 = vunpack.c.l.b16 %v2167
        %v2225 = vunpack.c.h.b16 %v2167
        %v2226 = vunpack.c.l.b16 %v2168
        %v2227 = vunpack.c.h.b16 %v2168
        %v2228 = vunpack.c.l.b16 %v2169
        %v2229 = vunpack.c.h.b16 %v2169
        %v2230 = vpack.c.b16 %v2200, %v2198
        %v2231 = vpack.c.b16 %v2201, %v2199
        %v2232 = vpack.c.b16 %v2204, %v2202
        %v2233 = vpack.c.b16 %v2205, %v2203
        %v2234 = vpack.c.b16 %v2208, %v2206
        %v2235 = vpack.c.b16 %v2209, %v2207
        %v2236 = vpack.c.b16 %v2212, %v2210
        %v2237 = vpack.c.b16 %v2213, %v2211
        %v2238 = vpack.c.b16 %v2216, %v2214
        %v2239 = vpack.c.b16 %v2217, %v2215
        %v2240 = vpack.c.b16 %v2220, %v2218
        %v2241 = vpack.c.b16 %v2221, %v2219
        %v2242 = vpack.c.b16 %v2224, %v2222
        %v2243 = vpack.c.b16 %v2225, %v2223
        %v2244 = vpack.c.b16 %v2228, %v2226
        %v2245 = vpack.c.b16 %v2229, %v2227
        %2262 = vmatprep.subr.bf16.mxu0 %v2245
        %2263 = vmatpush1.bf16.msra.mxu0 %v2244
        %2264 = vmatprep.subr.bf16.mxu0 %v2243
        %2265 = vmatpush1.bf16.msra.mxu0 %v2242
        %2266 = vmatprep.subr.bf16.mxu0 %v2241
        %2267 = vmatpush1.bf16.msra.mxu0 %v2240
        %2268 = vmatprep.subr.bf16.mxu0 %v2239
        %2269 = vmatpush1.bf16.msra.mxu0 %v2238
        %2270 = vmatprep.subr.bf16.mxu0 %v2237
        %2271 = vmatpush1.bf16.msra.mxu0 %v2236
        %2272 = vmatprep.subr.bf16.mxu0 %v2235
        %2273 = vmatpush1.bf16.msra.mxu0 %v2234
        %2274 = vmatprep.subr.bf16.mxu0 %v2233
        %2275 = vmatpush1.bf16.msra.mxu0 %v2232
        %2276 = vmatprep.subr.bf16.mxu0 %v2231
        %2277 = vmatpush1.bf16.msra.mxu0 %v2230
        %2278 = vmatprep.subr.bf16.mxu0 0
        %2279 = vmatpush2.bf16.msra.mxu0 0
        %2280 = vmatprep.subr.bf16.mxu0 0
        %2281 = vmatpush2.bf16.msra.mxu0 0
        %2282 = vmatprep.subr.bf16.mxu0 0
        %2283 = vmatpush2.bf16.msra.mxu0 0
        %2284 = vmatprep.subr.bf16.mxu0 0
        %2285 = vmatpush2.bf16.msra.mxu0 0
        %2286 = vmatprep.subr.bf16.mxu0 0
        %2287 = vmatpush2.bf16.msra.mxu0 0
        %2288 = vmatprep.subr.bf16.mxu0 0
        %2289 = vmatpush2.bf16.msra.mxu0 0
        %2290 = vmatprep.subr.bf16.mxu0 0
        %2291 = vmatpush2.bf16.msra.mxu0 0
        %2292 = vmatprep.subr.bf16.mxu0 0
        %2293 = vmatpush2.bf16.msra.mxu0 0
        %2294 = vmatprep.mubr.bf16.mxu0 0
        %2295 = vmatmul.mubr.bf16.gmra.mxu0 %v2153
        %v2296 = vpop.f32.mrf.mxu0
        %v2297 = vadd.f32 %v2175, %v2296
        %v2298 = vpop.f32.mrf.mxu0
        %v2299 = vadd.f32 %v2179, %v2298
        %v2300 = vpop.f32.mrf.mxu0
        %v2301 = vadd.f32 %v2175, %v2300
        %v2302 = vpop.f32.mrf.mxu0
        %v2303 = vadd.f32 %v2179, %v2302
        %2304 = vdwg.mxu0
        %v2305 = vpack.c.bf16 %v2145, %v2145
        %v2306 = vpack.c.bf16 %v2148, %v2148
        %v2307 = vpack.c.bf16 %v2297, %v2297
        %v2308 = vpack.c.bf16 %v2301, %v2301
        %2309 = vmatprep.subr.bf16.mxu0 0
        %2310 = vmatpush1.bf16.xpose.msra.mxu0 0
        %2311 = vmatprep.subr.bf16.mxu0 0
        %2312 = vmatpush1.bf16.xpose.msra.mxu0 0
        %2313 = vmatprep.subr.bf16.mxu0 0
        %2314 = vmatpush1.bf16.xpose.msra.mxu0 0
        %2315 = vmatprep.subr.bf16.mxu0 0
        %2316 = vmatpush1.bf16.xpose.msra.mxu0 0
        %2317 = vmatprep.subr.bf16.mxu0 0
        %2318 = vmatpush1.bf16.xpose.msra.mxu0 0
        %2319 = vmatprep.subr.bf16.mxu0 0
        %2320 = vmatpush1.bf16.xpose.msra.mxu0 0
        %2321 = vmatprep.subr.bf16.mxu0 0
        %2322 = vmatpush1.bf16.xpose.msra.mxu0 0
        %2323 = vmatprep.subr.bf16.mxu0 0
        %2324 = vmatpush1.bf16.xpose.msra.mxu0 %v2307
        %2325 = vmatprep.subr.bf16.mxu0 0
        %2326 = vmatpush2.bf16.xpose.msra.mxu0 0
        %2327 = vmatprep.subr.bf16.mxu0 0
        %2328 = vmatpush2.bf16.xpose.msra.mxu0 0
        %2329 = vmatprep.subr.bf16.mxu0 0
        %2330 = vmatpush2.bf16.xpose.msra.mxu0 0
        %2331 = vmatprep.subr.bf16.mxu0 0
        %2332 = vmatpush2.bf16.xpose.msra.mxu0 0
        %2333 = vmatprep.subr.bf16.mxu0 0
        %2334 = vmatpush2.bf16.xpose.msra.mxu0 0
        %2335 = vmatprep.subr.bf16.mxu0 0
        %2336 = vmatpush2.bf16.xpose.msra.mxu0 0
        %2337 = vmatprep.subr.bf16.mxu0 0
        %2338 = vmatpush2.bf16.xpose.msra.mxu0 0
        %2339 = vmatprep.subr.bf16.mxu0 0
        %2340 = vmatpush2.bf16.xpose.msra.mxu0 0
        %2341 = vmatprep.mubr.bf16.mxu0 0
        %2342 = vmatmul.mubr.bf16.gmra.mxu0 %v2305
        %v2343 = vpop.f32.mrf.mxu0
        %v2344 = vadd.f32 0.0, %v2343
        %v2345 = vpop.f32.mrf.mxu0
        %v2346 = vpop.f32.mrf.mxu0
        %v2347 = vpop.f32.mrf.mxu0
        %2348 = vdwg.mxu0
        %2349 = vmatprep.subr.bf16.mxu0 0
        %2350 = vmatpush1.bf16.xpose.msra.mxu0 0
        %2351 = vmatprep.subr.bf16.mxu0 0
        %2352 = vmatpush1.bf16.xpose.msra.mxu0 0
        %2353 = vmatprep.subr.bf16.mxu0 0
        %2354 = vmatpush1.bf16.xpose.msra.mxu0 0
        %2355 = vmatprep.subr.bf16.mxu0 0
        %2356 = vmatpush1.bf16.xpose.msra.mxu0 0
        %2357 = vmatprep.subr.bf16.mxu0 0
        %2358 = vmatpush1.bf16.xpose.msra.mxu0 0
        %2359 = vmatprep.subr.bf16.mxu0 0
        %2360 = vmatpush1.bf16.xpose.msra.mxu0 0
        %2361 = vmatprep.subr.bf16.mxu0 0
        %2362 = vmatpush1.bf16.xpose.msra.mxu0 0
        %2363 = vmatprep.subr.bf16.mxu0 0
        %2364 = vmatpush1.bf16.xpose.msra.mxu0 %v2308
        %2365 = vmatprep.subr.bf16.mxu0 0
        %2366 = vmatpush2.bf16.xpose.msra.mxu0 0
        %2367 = vmatprep.subr.bf16.mxu0 0
        %2368 = vmatpush2.bf16.xpose.msra.mxu0 0
        %2369 = vmatprep.subr.bf16.mxu0 0
        %2370 = vmatpush2.bf16.xpose.msra.mxu0 0
        %2371 = vmatprep.subr.bf16.mxu0 0
        %2372 = vmatpush2.bf16.xpose.msra.mxu0 0
        %2373 = vmatprep.subr.bf16.mxu0 0
        %2374 = vmatpush2.bf16.xpose.msra.mxu0 0
        %2375 = vmatprep.subr.bf16.mxu0 0
        %2376 = vmatpush2.bf16.xpose.msra.mxu0 0
        %2377 = vmatprep.subr.bf16.mxu0 0
        %2378 = vmatpush2.bf16.xpose.msra.mxu0 0
        %2379 = vmatprep.subr.bf16.mxu0 0
        %2380 = vmatpush2.bf16.xpose.msra.mxu0 0
        %2381 = vmatprep.mubr.bf16.mxu0 0
        %2382 = vmatmul.mubr.bf16.gmra.mxu0 %v2306
        %v2383 = vpop.f32.mrf.mxu0
        %v2384 = vadd.f32 0.0, %v2383
        %v2385 = vpop.f32.mrf.mxu0
        %v2386 = vpop.f32.mrf.mxu0
        %v2387 = vpop.f32.mrf.mxu0
        %2388 = vdwg.mxu0
        %v2389 = vmul.f32 %v2344, 0.088388346
        %v2390 = vmul.f32 %v2384, 0.088388346
        %v2391 = vsel %vm1762, %v2389, -inf
        %2392 = vmax.xlane.f32.xlu0 %v2391
        %v2393 = vpop.xlane.xlu0 %2392
        %v2394 = vsel %vm1762, %v2390, -inf
        %2395 = vmax.xlane.f32.xlu0 %v2394
        %v2396 = vpop.xlane.xlu0 %2395
        %v2397 = vsub.f32 %v2389, %v2393
        %v2398 = vsub.f32 %v2390, %v2396
        %v2399 = vmul.f32 %v2397, 1.442695
        %v2400 = vpow.pop %v2399
        %v2401 = vmul.f32 %v2398, 1.442695
        %v2402 = vpow.pop %v2401
        %v2403 = vsel %vm1762, %v2400, 0.0
        %2404 = vadd.xlane.f32.xlu0 %v2403
        %v2405 = vpop.xlane.xlu0 %2404
        %v2406 = vsel %vm1762, %v2402, 0.0
        %2407 = vadd.xlane.f32.xlu0 %v2406
        %v2408 = vpop.xlane.xlu0 %2407
        %v2409 = vrcp.pop %v2405
        %v2410 = vrcp.pop %v2408
        %v2411 = vmul.f32 %v2400, %v2409
        %v2412 = vmul.f32 %v2402, %v2410
        %v2413 = vpack.c.bf16 %v2411, %v2411
        %v2414 = vpack.c.bf16 %v2412, %v2412
        %v2415 = vpack.c.bf16 %v2299, %v2299
        %v2416 = vpack.c.bf16 %v2303, %v2303
        %v2418 = vsel %vm1762, %v2413, 0
        %v2421 = vsel %vm1792, %v2415, 0
        %2423 = vmatprep.subr.bf16.mxu0 0
        %2424 = vmatpush1.bf16.msra.mxu0 0
        %2425 = vmatprep.subr.bf16.mxu0 0
        %2426 = vmatpush1.bf16.msra.mxu0 0
        %2427 = vmatprep.subr.bf16.mxu0 0
        %2428 = vmatpush1.bf16.msra.mxu0 0
        %2429 = vmatprep.subr.bf16.mxu0 0
        %2430 = vmatpush1.bf16.msra.mxu0 0
        %2431 = vmatprep.subr.bf16.mxu0 0
        %2432 = vmatpush1.bf16.msra.mxu0 0
        %2433 = vmatprep.subr.bf16.mxu0 0
        %2434 = vmatpush1.bf16.msra.mxu0 0
        %2435 = vmatprep.subr.bf16.mxu0 0
        %2436 = vmatpush1.bf16.msra.mxu0 0
        %2437 = vmatprep.subr.bf16.mxu0 0
        %2438 = vmatpush1.bf16.msra.mxu0 %v2421
        %2439 = vmatprep.subr.bf16.mxu0 0
        %2440 = vmatpush2.bf16.msra.mxu0 0
        %2441 = vmatprep.subr.bf16.mxu0 0
        %2442 = vmatpush2.bf16.msra.mxu0 0
        %2443 = vmatprep.subr.bf16.mxu0 0
        %2444 = vmatpush2.bf16.msra.mxu0 0
        %2445 = vmatprep.subr.bf16.mxu0 0
        %2446 = vmatpush2.bf16.msra.mxu0 0
        %2447 = vmatprep.subr.bf16.mxu0 0
        %2448 = vmatpush2.bf16.msra.mxu0 0
        %2449 = vmatprep.subr.bf16.mxu0 0
        %2450 = vmatpush2.bf16.msra.mxu0 0
        %2451 = vmatprep.subr.bf16.mxu0 0
        %2452 = vmatpush2.bf16.msra.mxu0 0
        %2453 = vmatprep.subr.bf16.mxu0 0
        %2454 = vmatpush2.bf16.msra.mxu0 0
        %2455 = vmatprep.mubr.bf16.mxu0 0
        %2456 = vmatmul.mubr.bf16.gmra.mxu0 %v2418
        %v2457 = vpop.f32.mrf.mxu0
        %v2458 = vadd.f32 0.0, %v2457
        %v2459 = vpop.f32.mrf.mxu0
        %v2460 = vpop.f32.mrf.mxu0
        %v2461 = vpop.f32.mrf.mxu0
        %2462 = vdwg.mxu0
        %v2464 = vsel %vm1762, %v2414, 0
        %v2467 = vsel %vm1792, %v2416, 0
        %2469 = vmatprep.subr.bf16.mxu0 0
        %2470 = vmatpush1.bf16.msra.mxu0 0
        %2471 = vmatprep.subr.bf16.mxu0 0
        %2472 = vmatpush1.bf16.msra.mxu0 0
        %2473 = vmatprep.subr.bf16.mxu0 0
        %2474 = vmatpush1.bf16.msra.mxu0 0
        %2475 = vmatprep.subr.bf16.mxu0 0
        %2476 = vmatpush1.bf16.msra.mxu0 0
        %2477 = vmatprep.subr.bf16.mxu0 0
        %2478 = vmatpush1.bf16.msra.mxu0 0
        %2479 = vmatprep.subr.bf16.mxu0 0
        %2480 = vmatpush1.bf16.msra.mxu0 0
        %2481 = vmatprep.subr.bf16.mxu0 0
        %2482 = vmatpush1.bf16.msra.mxu0 0
        %2483 = vmatprep.subr.bf16.mxu0 0
        %2484 = vmatpush1.bf16.msra.mxu0 %v2467
        %2485 = vmatprep.subr.bf16.mxu0 0
        %2486 = vmatpush2.bf16.msra.mxu0 0
        %2487 = vmatprep.subr.bf16.mxu0 0
        %2488 = vmatpush2.bf16.msra.mxu0 0
        %2489 = vmatprep.subr.bf16.mxu0 0
        %2490 = vmatpush2.bf16.msra.mxu0 0
        %2491 = vmatprep.subr.bf16.mxu0 0
        %2492 = vmatpush2.bf16.msra.mxu0 0
        %2493 = vmatprep.subr.bf16.mxu0 0
        %2494 = vmatpush2.bf16.msra.mxu0 0
        %2495 = vmatprep.subr.bf16.mxu0 0
        %2496 = vmatpush2.bf16.msra.mxu0 0
        %2497 = vmatprep.subr.bf16.mxu0 0
        %2498 = vmatpush2.bf16.msra.mxu0 0
        %2499 = vmatprep.subr.bf16.mxu0 0
        %2500 = vmatpush2.bf16.msra.mxu0 0
        %2501 = vmatprep.mubr.bf16.mxu0 0
        %2502 = vmatmul.mubr.bf16.gmra.mxu0 %v2464
        %v2503 = vpop.f32.mrf.mxu0
        %v2504 = vadd.f32 0.0, %v2503
        %v2505 = vpop.f32.mrf.mxu0
        %v2506 = vpop.f32.mrf.mxu0
        %v2507 = vpop.f32.mrf.mxu0
        %2508 = vdwg.mxu0
        %v2509 = vpack.c.bf16 %v2504, %v2458
        %v2510 = vld [vmem:[%s1094] sm:$0xf]
        %v2511 = vld [vmem:[%s1094 + $0x4] sm:$0xf]
        %v2512 = vld [vmem:[%s1094 + $0x8] sm:$0xf]
        %v2513 = vld [vmem:[%s1094 + $0xc] sm:$0xf]
        %v2514 = vld [vmem:[%s1094 + $0x10] sm:$0xf]
        %v2515 = vld [vmem:[%s1094 + $0x14] sm:$0xf]
        %v2516 = vld [vmem:[%s1094 + $0x18] sm:$0xf]
        %v2517 = vld [vmem:[%s1094 + $0x1c] sm:$0xf]
        %v2518 = vld [vmem:[%s1094 + $0x20] sm:$0xf]
        %v2519 = vld [vmem:[%s1094 + $0x24] sm:$0xf]
        %v2520 = vld [vmem:[%s1094 + $0x28] sm:$0xf]
        %v2521 = vld [vmem:[%s1094 + $0x2c] sm:$0xf]
        %v2522 = vld [vmem:[%s1094 + $0x30] sm:$0xf]
        %v2523 = vld [vmem:[%s1094 + $0x34] sm:$0xf]
        %v2524 = vld [vmem:[%s1094 + $0x38] sm:$0xf]
        %v2525 = vld [vmem:[%s1094 + $0x3c] sm:$0xf]
        %v2526 = vld [vmem:[%s1272] sm:$0x1]
        %v2528 = vlaneseq
        %v2529 = vshrl.u32 %v2528, 7
        %v2530 = vsub.s32 0, %v2529
        %v2531 = vrot.slane %v2526, %v2530
        %v2549 = vunpack.c.l.b16 %v2510
        %v2550 = vunpack.c.l.b16 %v2511
        %v2551 = vunpack.c.l.b16 %v2512
        %v2552 = vunpack.c.l.b16 %v2513
        %v2553 = vunpack.c.l.b16 %v2514
        %v2554 = vunpack.c.l.b16 %v2515
        %v2555 = vunpack.c.l.b16 %v2516
        %v2556 = vunpack.c.l.b16 %v2517
        %v2557 = vunpack.c.l.b16 %v2518
        %v2558 = vunpack.c.l.b16 %v2519
        %v2559 = vunpack.c.l.b16 %v2520
        %v2560 = vunpack.c.l.b16 %v2521
        %v2561 = vunpack.c.l.b16 %v2522
        %v2562 = vunpack.c.l.b16 %v2523
        %v2563 = vunpack.c.l.b16 %v2524
        %v2564 = vunpack.c.l.b16 %v2525
        %v2565 = vpack.c.b16 %v2550, %v2549
        %v2566 = vpack.c.b16 %v2552, %v2551
        %v2567 = vpack.c.b16 %v2554, %v2553
        %v2568 = vpack.c.b16 %v2556, %v2555
        %v2569 = vpack.c.b16 %v2558, %v2557
        %v2570 = vpack.c.b16 %v2560, %v2559
        %v2571 = vpack.c.b16 %v2562, %v2561
        %v2572 = vpack.c.b16 %v2564, %v2563
        %2581 = vmatprep.subr.bf16.mxu0 0
        %2582 = vmatpush1.bf16.msra.mxu0 %v2572
        %2583 = vmatprep.subr.bf16.mxu0 0
        %2584 = vmatpush1.bf16.msra.mxu0 %v2571
        %2585 = vmatprep.subr.bf16.mxu0 0
        %2586 = vmatpush1.bf16.msra.mxu0 %v2570
        %2587 = vmatprep.subr.bf16.mxu0 0
        %2588 = vmatpush1.bf16.msra.mxu0 %v2569
        %2589 = vmatprep.subr.bf16.mxu0 0
        %2590 = vmatpush1.bf16.msra.mxu0 %v2568
        %2591 = vmatprep.subr.bf16.mxu0 0
        %2592 = vmatpush1.bf16.msra.mxu0 %v2567
        %2593 = vmatprep.subr.bf16.mxu0 0
        %2594 = vmatpush1.bf16.msra.mxu0 %v2566
        %2595 = vmatprep.subr.bf16.mxu0 0
        %2596 = vmatpush1.bf16.msra.mxu0 %v2565
        %2597 = vmatprep.subr.bf16.mxu0 0
        %2598 = vmatpush2.bf16.msra.mxu0 0
        %2599 = vmatprep.subr.bf16.mxu0 0
        %2600 = vmatpush2.bf16.msra.mxu0 0
        %2601 = vmatprep.subr.bf16.mxu0 0
        %2602 = vmatpush2.bf16.msra.mxu0 0
        %2603 = vmatprep.subr.bf16.mxu0 0
        %2604 = vmatpush2.bf16.msra.mxu0 0
        %2605 = vmatprep.subr.bf16.mxu0 0
        %2606 = vmatpush2.bf16.msra.mxu0 0
        %2607 = vmatprep.subr.bf16.mxu0 0
        %2608 = vmatpush2.bf16.msra.mxu0 0
        %2609 = vmatprep.subr.bf16.mxu0 0
        %2610 = vmatpush2.bf16.msra.mxu0 0
        %2611 = vmatprep.subr.bf16.mxu0 0
        %2612 = vmatpush2.bf16.msra.mxu0 0
        %2613 = vmatprep.mubr.bf16.mxu0 0
        %2614 = vmatmul.mubr.bf16.gmra.mxu0 %v2509
        %v2615 = vpop.f32.mrf.mxu0
        %v2616 = vadd.f32 %v2531, %v2615
        %v2617 = vpop.f32.mrf.mxu0
        %v2618 = vpop.f32.mrf.mxu0
        %v2619 = vadd.f32 %v2531, %v2618
        %v2620 = vpop.f32.mrf.mxu0
        %2621 = vdwg.mxu0
        %v2622 = vadd.f32 %v2036, %v2616
        %v2623 = vadd.f32 %v2037, %v2619
        %v2624 = vld [vmem:[%s1275] sm:$0x1]
        %v2625 = vld [vmem:[%s1278] sm:$0x1]
        %2626 = vadd.xlane.f32.xlu0 %v2622
        %v2627 = vpop.xlane.xlu0 %2626
        %2628 = vadd.xlane.f32.xlu0 %v2623
        %v2629 = vpop.xlane.xlu0 %2628
        %v2630 = vmul.f32 %v2627, %v2003
        %v2631 = vmul.f32 %v2629, %v2003
        %v2632 = vsub.f32 %v2622, %v2630
        %v2633 = vsub.f32 %v2623, %v2631
        %v2634 = vmul.f32 %v2632, %v2632
        %v2635 = vmul.f32 %v2633, %v2633
        %2636 = vadd.xlane.f32.xlu0 %v2634
        %v2637 = vpop.xlane.xlu0 %2636
        %2638 = vadd.xlane.f32.xlu0 %v2635
        %v2639 = vpop.xlane.xlu0 %2638
        %v2640 = vmul.f32 %v2637, %v2003
        %v2641 = vmul.f32 %v2639, %v2003
        %v2642 = vadd.f32 %v2640, 1e-05
        %v2643 = vadd.f32 %v2641, 1e-05
        %v2644 = vrsqrt.pop %v2642
        %v2645 = vrsqrt.pop %v2643
        %v2646 = vmul.f32 %v2632, %v2644
        %v2647 = vmul.f32 %v2633, %v2645
        %v2649 = vlaneseq
        %v2650 = vshrl.u32 %v2649, 7
        %v2651 = vsub.s32 0, %v2650
        %v2652 = vrot.slane %v2624, %v2651
        %v2654 = vmul.f32 %v2646, %v2652
        %v2655 = vmul.f32 %v2647, %v2652
        %v2657 = vlaneseq
        %v2658 = vshrl.u32 %v2657, 7
        %v2659 = vsub.s32 0, %v2658
        %v2660 = vrot.slane %v2625, %v2659
        %v2662 = vadd.f32 %v2654, %v2660
        %v2663 = vadd.f32 %v2655, %v2660
        %v2664 = vpack.c.bf16 %v2663, %v2662
        %v2665 = vld [vmem:[%s1103] sm:$0xff]
        %v2666 = vld [vmem:[%s1103 + $0x8] sm:$0xff]
        %v2667 = vld [vmem:[%s1103 + $0x10] sm:$0xff]
        %v2668 = vld [vmem:[%s1103 + $0x18] sm:$0xff]
        %v2669 = vld [vmem:[%s1103 + $0x20] sm:$0xff]
        %v2670 = vld [vmem:[%s1103 + $0x28] sm:$0xff]
        %v2671 = vld [vmem:[%s1103 + $0x30] sm:$0xff]
        %v2672 = vld [vmem:[%s1103 + $0x38] sm:$0xff]
        %v2673 = vld [vmem:[%s1103 + $0x40] sm:$0xff]
        %v2674 = vld [vmem:[%s1103 + $0x48] sm:$0xff]
        %v2675 = vld [vmem:[%s1103 + $0x50] sm:$0xff]
        %v2676 = vld [vmem:[%s1103 + $0x58] sm:$0xff]
        %v2677 = vld [vmem:[%s1103 + $0x60] sm:$0xff]
        %v2678 = vld [vmem:[%s1103 + $0x68] sm:$0xff]
        %v2679 = vld [vmem:[%s1103 + $0x70] sm:$0xff]
        %v2680 = vld [vmem:[%s1103 + $0x78] sm:$0xff]
        %v2681 = vld [vmem:[%s1103 + $0x80] sm:$0xff]
        %v2682 = vld [vmem:[%s1103 + $0x88] sm:$0xff]
        %v2683 = vld [vmem:[%s1103 + $0x90] sm:$0xff]
        %v2684 = vld [vmem:[%s1103 + $0x98] sm:$0xff]
        %v2685 = vld [vmem:[%s1103 + $0xa0] sm:$0xff]
        %v2686 = vld [vmem:[%s1103 + $0xa8] sm:$0xff]
        %v2687 = vld [vmem:[%s1103 + $0xb0] sm:$0xff]
        %v2688 = vld [vmem:[%s1103 + $0xb8] sm:$0xff]
        %v2689 = vld [vmem:[%s1103 + $0xc0] sm:$0xff]
        %v2690 = vld [vmem:[%s1103 + $0xc8] sm:$0xff]
        %v2691 = vld [vmem:[%s1103 + $0xd0] sm:$0xff]
        %v2692 = vld [vmem:[%s1103 + $0xd8] sm:$0xff]
        %v2693 = vld [vmem:[%s1103 + $0xe0] sm:$0xff]
        %v2694 = vld [vmem:[%s1103 + $0xe8] sm:$0xff]
        %v2695 = vld [vmem:[%s1103 + $0xf0] sm:$0xff]
        %v2696 = vld [vmem:[%s1103 + $0xf8] sm:$0xff]
        %v2697 = vld [vmem:[%s1282] sm:$0xf]
        %v2699 = vlaneseq
        %v2700 = vshrl.u32 %v2699, 7
        %v2701 = vsub.s32 0, %v2700
        %v2702 = vrot.slane %v2697, %v2701
        %v2703 = vlaneseq
        %v2704 = vshrl.u32 %v2703, 7
        %v2705 = vsub.s32 1, %v2704
        %v2706 = vrot.slane %v2697, %v2705
        %v2707 = vlaneseq
        %v2708 = vshrl.u32 %v2707, 7
        %v2709 = vsub.s32 2, %v2708
        %v2710 = vrot.slane %v2697, %v2709
        %v2711 = vlaneseq
        %v2712 = vshrl.u32 %v2711, 7
        %v2713 = vsub.s32 3, %v2712
        %v2714 = vrot.slane %v2697, %v2713
        %v2751 = vunpack.c.l.b16 %v2665
        %v2752 = vunpack.c.h.b16 %v2665
        %v2753 = vunpack.c.l.b16 %v2666
        %v2754 = vunpack.c.h.b16 %v2666
        %v2755 = vunpack.c.l.b16 %v2667
        %v2756 = vunpack.c.h.b16 %v2667
        %v2757 = vunpack.c.l.b16 %v2668
        %v2758 = vunpack.c.h.b16 %v2668
        %v2759 = vunpack.c.l.b16 %v2669
        %v2760 = vunpack.c.h.b16 %v2669
        %v2761 = vunpack.c.l.b16 %v2670
        %v2762 = vunpack.c.h.b16 %v2670
        %v2763 = vunpack.c.l.b16 %v2671
        %v2764 = vunpack.c.h.b16 %v2671
        %v2765 = vunpack.c.l.b16 %v2672
        %v2766 = vunpack.c.h.b16 %v2672
        %v2767 = vunpack.c.l.b16 %v2673
        %v2768 = vunpack.c.h.b16 %v2673
        %v2769 = vunpack.c.l.b16 %v2674
        %v2770 = vunpack.c.h.b16 %v2674
        %v2771 = vunpack.c.l.b16 %v2675
        %v2772 = vunpack.c.h.b16 %v2675
        %v2773 = vunpack.c.l.b16 %v2676
        %v2774 = vunpack.c.h.b16 %v2676
        %v2775 = vunpack.c.l.b16 %v2677
        %v2776 = vunpack.c.h.b16 %v2677
        %v2777 = vunpack.c.l.b16 %v2678
        %v2778 = vunpack.c.h.b16 %v2678
        %v2779 = vunpack.c.l.b16 %v2679
        %v2780 = vunpack.c.h.b16 %v2679
        %v2781 = vunpack.c.l.b16 %v2680
        %v2782 = vunpack.c.h.b16 %v2680
        %v2783 = vunpack.c.l.b16 %v2681
        %v2784 = vunpack.c.h.b16 %v2681
        %v2785 = vunpack.c.l.b16 %v2682
        %v2786 = vunpack.c.h.b16 %v2682
        %v2787 = vunpack.c.l.b16 %v2683
        %v2788 = vunpack.c.h.b16 %v2683
        %v2789 = vunpack.c.l.b16 %v2684
        %v2790 = vunpack.c.h.b16 %v2684
        %v2791 = vunpack.c.l.b16 %v2685
        %v2792 = vunpack.c.h.b16 %v2685
        %v2793 = vunpack.c.l.b16 %v2686
        %v2794 = vunpack.c.h.b16 %v2686
        %v2795 = vunpack.c.l.b16 %v2687
        %v2796 = vunpack.c.h.b16 %v2687
        %v2797 = vunpack.c.l.b16 %v2688
        %v2798 = vunpack.c.h.b16 %v2688
        %v2799 = vunpack.c.l.b16 %v2689
        %v2800 = vunpack.c.h.b16 %v2689
        %v2801 = vunpack.c.l.b16 %v2690
        %v2802 = vunpack.c.h.b16 %v2690
        %v2803 = vunpack.c.l.b16 %v2691
        %v2804 = vunpack.c.h.b16 %v2691
        %v2805 = vunpack.c.l.b16 %v2692
        %v2806 = vunpack.c.h.b16 %v2692
        %v2807 = vunpack.c.l.b16 %v2693
        %v2808 = vunpack.c.h.b16 %v2693
        %v2809 = vunpack.c.l.b16 %v2694
        %v2810 = vunpack.c.h.b16 %v2694
        %v2811 = vunpack.c.l.b16 %v2695
        %v2812 = vunpack.c.h.b16 %v2695
        %v2813 = vunpack.c.l.b16 %v2696
        %v2814 = vunpack.c.h.b16 %v2696
        %v2815 = vpack.c.b16 %v2755, %v2751
        %v2816 = vpack.c.b16 %v2756, %v2752
        %v2817 = vpack.c.b16 %v2757, %v2753
        %v2818 = vpack.c.b16 %v2758, %v2754
        %v2819 = vpack.c.b16 %v2763, %v2759
        %v2820 = vpack.c.b16 %v2764, %v2760
        %v2821 = vpack.c.b16 %v2765, %v2761
        %v2822 = vpack.c.b16 %v2766, %v2762
        %v2823 = vpack.c.b16 %v2771, %v2767
        %v2824 = vpack.c.b16 %v2772, %v2768
        %v2825 = vpack.c.b16 %v2773, %v2769
        %v2826 = vpack.c.b16 %v2774, %v2770
        %v2827 = vpack.c.b16 %v2779, %v2775
        %v2828 = vpack.c.b16 %v2780, %v2776
        %v2829 = vpack.c.b16 %v2781, %v2777
        %v2830 = vpack.c.b16 %v2782, %v2778
        %v2831 = vpack.c.b16 %v2787, %v2783
        %v2832 = vpack.c.b16 %v2788, %v2784
        %v2833 = vpack.c.b16 %v2789, %v2785
        %v2834 = vpack.c.b16 %v2790, %v2786
        %v2835 = vpack.c.b16 %v2795, %v2791
        %v2836 = vpack.c.b16 %v2796, %v2792
        %v2837 = vpack.c.b16 %v2797, %v2793
        %v2838 = vpack.c.b16 %v2798, %v2794
        %v2839 = vpack.c.b16 %v2803, %v2799
        %v2840 = vpack.c.b16 %v2804, %v2800
        %v2841 = vpack.c.b16 %v2805, %v2801
        %v2842 = vpack.c.b16 %v2806, %v2802
        %v2843 = vpack.c.b16 %v2811, %v2807
        %v2844 = vpack.c.b16 %v2812, %v2808
        %v2845 = vpack.c.b16 %v2813, %v2809
        %v2846 = vpack.c.b16 %v2814, %v2810
        %2879 = vmatprep.subr.bf16.mxu0 %v2844
        %2880 = vmatpush1.bf16.msra.mxu0 %v2843
        %2881 = vmatprep.subr.bf16.mxu0 %v2840
        %2882 = vmatpush1.bf16.msra.mxu0 %v2839
        %2883 = vmatprep.subr.bf16.mxu0 %v2836
        %2884 = vmatpush1.bf16.msra.mxu0 %v2835
        %2885 = vmatprep.subr.bf16.mxu0 %v2832
        %2886 = vmatpush1.bf16.msra.mxu0 %v2831
        %2887 = vmatprep.subr.bf16.mxu0 %v2828
        %2888 = vmatpush1.bf16.msra.mxu0 %v2827
        %2889 = vmatprep.subr.bf16.mxu0 %v2824
        %2890 = vmatpush1.bf16.msra.mxu0 %v2823
        %2891 = vmatprep.subr.bf16.mxu0 %v2820
        %2892 = vmatpush1.bf16.msra.mxu0 %v2819
        %2893 = vmatprep.subr.bf16.mxu0 %v2816
        %2894 = vmatpush1.bf16.msra.mxu0 %v2815
        %2895 = vmatprep.subr.bf16.mxu0 0
        %2896 = vmatpush2.bf16.msra.mxu0 0
        %2897 = vmatprep.subr.bf16.mxu0 0
        %2898 = vmatpush2.bf16.msra.mxu0 0
        %2899 = vmatprep.subr.bf16.mxu0 0
        %2900 = vmatpush2.bf16.msra.mxu0 0
        %2901 = vmatprep.subr.bf16.mxu0 0
        %2902 = vmatpush2.bf16.msra.mxu0 0
        %2903 = vmatprep.subr.bf16.mxu0 0
        %2904 = vmatpush2.bf16.msra.mxu0 0
        %2905 = vmatprep.subr.bf16.mxu0 0
        %2906 = vmatpush2.bf16.msra.mxu0 0
        %2907 = vmatprep.subr.bf16.mxu0 0
        %2908 = vmatpush2.bf16.msra.mxu0 0
        %2909 = vmatprep.subr.bf16.mxu0 0
        %2910 = vmatpush2.bf16.msra.mxu0 0
        %2911 = vmatprep.mubr.bf16.mxu0 0
        %2912 = vmatmul.mubr.bf16.gmra.mxu0 %v2664
        %v2913 = vpop.f32.mrf.mxu0
        %v2914 = vadd.f32 %v2702, %v2913
        %v2915 = vpop.f32.mrf.mxu0
        %v2916 = vadd.f32 %v2706, %v2915
        %v2917 = vpop.f32.mrf.mxu0
        %v2918 = vadd.f32 %v2702, %v2917
        %v2919 = vpop.f32.mrf.mxu0
        %v2920 = vadd.f32 %v2706, %v2919
        %2921 = vdwg.mxu0
        %2922 = vmatprep.subr.bf16.mxu0 %v2846
        %2923 = vmatpush1.bf16.msra.mxu0 %v2845
        %2924 = vmatprep.subr.bf16.mxu0 %v2842
        %2925 = vmatpush1.bf16.msra.mxu0 %v2841
        %2926 = vmatprep.subr.bf16.mxu0 %v2838
        %2927 = vmatpush1.bf16.msra.mxu0 %v2837
        %2928 = vmatprep.subr.bf16.mxu0 %v2834
        %2929 = vmatpush1.bf16.msra.mxu0 %v2833
        %2930 = vmatprep.subr.bf16.mxu0 %v2830
        %2931 = vmatpush1.bf16.msra.mxu0 %v2829
        %2932 = vmatprep.subr.bf16.mxu0 %v2826
        %2933 = vmatpush1.bf16.msra.mxu0 %v2825
        %2934 = vmatprep.subr.bf16.mxu0 %v2822
        %2935 = vmatpush1.bf16.msra.mxu0 %v2821
        %2936 = vmatprep.subr.bf16.mxu0 %v2818
        %2937 = vmatpush1.bf16.msra.mxu0 %v2817
        %2938 = vmatprep.subr.bf16.mxu0 0
        %2939 = vmatpush2.bf16.msra.mxu0 0
        %2940 = vmatprep.subr.bf16.mxu0 0
        %2941 = vmatpush2.bf16.msra.mxu0 0
        %2942 = vmatprep.subr.bf16.mxu0 0
        %2943 = vmatpush2.bf16.msra.mxu0 0
        %2944 = vmatprep.subr.bf16.mxu0 0
        %2945 = vmatpush2.bf16.msra.mxu0 0
        %2946 = vmatprep.subr.bf16.mxu0 0
        %2947 = vmatpush2.bf16.msra.mxu0 0
        %2948 = vmatprep.subr.bf16.mxu0 0
        %2949 = vmatpush2.bf16.msra.mxu0 0
        %2950 = vmatprep.subr.bf16.mxu0 0
        %2951 = vmatpush2.bf16.msra.mxu0 0
        %2952 = vmatprep.subr.bf16.mxu0 0
        %2953 = vmatpush2.bf16.msra.mxu0 0
        %2954 = vmatprep.mubr.bf16.mxu0 0
        %2955 = vmatmul.mubr.bf16.gmra.mxu0 %v2664
        %v2956 = vpop.f32.mrf.mxu0
        %v2957 = vadd.f32 %v2710, %v2956
        %v2958 = vpop.f32.mrf.mxu0
        %v2959 = vadd.f32 %v2714, %v2958
        %v2960 = vpop.f32.mrf.mxu0
        %v2961 = vadd.f32 %v2710, %v2960
        %v2962 = vpop.f32.mrf.mxu0
        %v2963 = vadd.f32 %v2714, %v2962
        %2964 = vdwg.mxu0
        %v2965 = vmax.f32 %v2914, 0.0
        %v2966 = vmax.f32 %v2916, 0.0
        %v2967 = vmax.f32 %v2957, 0.0
        %v2968 = vmax.f32 %v2959, 0.0
        %v2969 = vmax.f32 %v2918, 0.0
        %v2970 = vmax.f32 %v2920, 0.0
        %v2971 = vmax.f32 %v2961, 0.0
        %v2972 = vmax.f32 %v2963, 0.0
        %v2973 = vpack.c.bf16 %v2969, %v2965
        %v2974 = vpack.c.bf16 %v2970, %v2966
        %v2975 = vpack.c.bf16 %v2971, %v2967
        %v2976 = vpack.c.bf16 %v2972, %v2968
        %v2977 = vld [vmem:[%s1287] sm:$0xf]
        %v2978 = vld [vmem:[%s1287 + $0x4] sm:$0xf]
        %v2979 = vld [vmem:[%s1287 + $0x8] sm:$0xf]
        %v2980 = vld [vmem:[%s1287 + $0xc] sm:$0xf]
        %v2981 = vld [vmem:[%s1287 + $0x10] sm:$0xf]
        %v2982 = vld [vmem:[%s1287 + $0x14] sm:$0xf]
        %v2983 = vld [vmem:[%s1287 + $0x18] sm:$0xf]
        %v2984 = vld [vmem:[%s1287 + $0x1c] sm:$0xf]
        %v2985 = vld [vmem:[%s1287 + $0x20] sm:$0xf]
        %v2986 = vld [vmem:[%s1287 + $0x24] sm:$0xf]
        %v2987 = vld [vmem:[%s1287 + $0x28] sm:$0xf]
        %v2988 = vld [vmem:[%s1287 + $0x2c] sm:$0xf]
        %v2989 = vld [vmem:[%s1287 + $0x30] sm:$0xf]
        %v2990 = vld [vmem:[%s1287 + $0x34] sm:$0xf]
        %v2991 = vld [vmem:[%s1287 + $0x38] sm:$0xf]
        %v2992 = vld [vmem:[%s1287 + $0x3c] sm:$0xf]
        %v2993 = vld [vmem:[%s1287 + $0x40] sm:$0xf]
        %v2994 = vld [vmem:[%s1287 + $0x44] sm:$0xf]
        %v2995 = vld [vmem:[%s1287 + $0x48] sm:$0xf]
        %v2996 = vld [vmem:[%s1287 + $0x4c] sm:$0xf]
        %v2997 = vld [vmem:[%s1287 + $0x50] sm:$0xf]
        %v2998 = vld [vmem:[%s1287 + $0x54] sm:$0xf]
        %v2999 = vld [vmem:[%s1287 + $0x58] sm:$0xf]
        %v3000 = vld [vmem:[%s1287 + $0x5c] sm:$0xf]
        %v3001 = vld [vmem:[%s1287 + $0x60] sm:$0xf]
        %v3002 = vld [vmem:[%s1287 + $0x64] sm:$0xf]
        %v3003 = vld [vmem:[%s1287 + $0x68] sm:$0xf]
        %v3004 = vld [vmem:[%s1287 + $0x6c] sm:$0xf]
        %v3005 = vld [vmem:[%s1287 + $0x70] sm:$0xf]
        %v3006 = vld [vmem:[%s1287 + $0x74] sm:$0xf]
        %v3007 = vld [vmem:[%s1287 + $0x78] sm:$0xf]
        %v3008 = vld [vmem:[%s1287 + $0x7c] sm:$0xf]
        %v3009 = vld [vmem:[%s1287 + $0x80] sm:$0xf]
        %v3010 = vld [vmem:[%s1287 + $0x84] sm:$0xf]
        %v3011 = vld [vmem:[%s1287 + $0x88] sm:$0xf]
        %v3012 = vld [vmem:[%s1287 + $0x8c] sm:$0xf]
        %v3013 = vld [vmem:[%s1287 + $0x90] sm:$0xf]
        %v3014 = vld [vmem:[%s1287 + $0x94] sm:$0xf]
        %v3015 = vld [vmem:[%s1287 + $0x98] sm:$0xf]
        %v3016 = vld [vmem:[%s1287 + $0x9c] sm:$0xf]
        %v3017 = vld [vmem:[%s1287 + $0xa0] sm:$0xf]
        %v3018 = vld [vmem:[%s1287 + $0xa4] sm:$0xf]
        %v3019 = vld [vmem:[%s1287 + $0xa8] sm:$0xf]
        %v3020 = vld [vmem:[%s1287 + $0xac] sm:$0xf]
        %v3021 = vld [vmem:[%s1287 + $0xb0] sm:$0xf]
        %v3022 = vld [vmem:[%s1287 + $0xb4] sm:$0xf]
        %v3023 = vld [vmem:[%s1287 + $0xb8] sm:$0xf]
        %v3024 = vld [vmem:[%s1287 + $0xbc] sm:$0xf]
        %v3025 = vld [vmem:[%s1287 + $0xc0] sm:$0xf]
        %v3026 = vld [vmem:[%s1287 + $0xc4] sm:$0xf]
        %v3027 = vld [vmem:[%s1287 + $0xc8] sm:$0xf]
        %v3028 = vld [vmem:[%s1287 + $0xcc] sm:$0xf]
        %v3029 = vld [vmem:[%s1287 + $0xd0] sm:$0xf]
        %v3030 = vld [vmem:[%s1287 + $0xd4] sm:$0xf]
        %v3031 = vld [vmem:[%s1287 + $0xd8] sm:$0xf]
        %v3032 = vld [vmem:[%s1287 + $0xdc] sm:$0xf]
        %v3033 = vld [vmem:[%s1287 + $0xe0] sm:$0xf]
        %v3034 = vld [vmem:[%s1287 + $0xe4] sm:$0xf]
        %v3035 = vld [vmem:[%s1287 + $0xe8] sm:$0xf]
        %v3036 = vld [vmem:[%s1287 + $0xec] sm:$0xf]
        %v3037 = vld [vmem:[%s1287 + $0xf0] sm:$0xf]
        %v3038 = vld [vmem:[%s1287 + $0xf4] sm:$0xf]
        %v3039 = vld [vmem:[%s1287 + $0xf8] sm:$0xf]
        %v3040 = vld [vmem:[%s1287 + $0xfc] sm:$0xf]
        %v3041 = vld [vmem:[%s1290] sm:$0x1]
        %v3043 = vlaneseq
        %v3044 = vshrl.u32 %v3043, 7
        %v3045 = vsub.s32 0, %v3044
        %v3046 = vrot.slane %v3041, %v3045
        %v3112 = vunpack.c.l.b16 %v2977
        %v3113 = vunpack.c.l.b16 %v2978
        %v3114 = vunpack.c.l.b16 %v2979
        %v3115 = vunpack.c.l.b16 %v2980
        %v3116 = vunpack.c.l.b16 %v2981
        %v3117 = vunpack.c.l.b16 %v2982
        %v3118 = vunpack.c.l.b16 %v2983
        %v3119 = vunpack.c.l.b16 %v2984
        %v3120 = vunpack.c.l.b16 %v2985
        %v3121 = vunpack.c.l.b16 %v2986
        %v3122 = vunpack.c.l.b16 %v2987
        %v3123 = vunpack.c.l.b16 %v2988
        %v3124 = vunpack.c.l.b16 %v2989
        %v3125 = vunpack.c.l.b16 %v2990
        %v3126 = vunpack.c.l.b16 %v2991
        %v3127 = vunpack.c.l.b16 %v2992
        %v3128 = vunpack.c.l.b16 %v2993
        %v3129 = vunpack.c.l.b16 %v2994
        %v3130 = vunpack.c.l.b16 %v2995
        %v3131 = vunpack.c.l.b16 %v2996
        %v3132 = vunpack.c.l.b16 %v2997
        %v3133 = vunpack.c.l.b16 %v2998
        %v3134 = vunpack.c.l.b16 %v2999
        %v3135 = vunpack.c.l.b16 %v3000
        %v3136 = vunpack.c.l.b16 %v3001
        %v3137 = vunpack.c.l.b16 %v3002
        %v3138 = vunpack.c.l.b16 %v3003
        %v3139 = vunpack.c.l.b16 %v3004
        %v3140 = vunpack.c.l.b16 %v3005
        %v3141 = vunpack.c.l.b16 %v3006
        %v3142 = vunpack.c.l.b16 %v3007
        %v3143 = vunpack.c.l.b16 %v3008
        %v3144 = vunpack.c.l.b16 %v3009
        %v3145 = vunpack.c.l.b16 %v3010
        %v3146 = vunpack.c.l.b16 %v3011
        %v3147 = vunpack.c.l.b16 %v3012
        %v3148 = vunpack.c.l.b16 %v3013
        %v3149 = vunpack.c.l.b16 %v3014
        %v3150 = vunpack.c.l.b16 %v3015
        %v3151 = vunpack.c.l.b16 %v3016
        %v3152 = vunpack.c.l.b16 %v3017
        %v3153 = vunpack.c.l.b16 %v3018
        %v3154 = vunpack.c.l.b16 %v3019
        %v3155 = vunpack.c.l.b16 %v3020
        %v3156 = vunpack.c.l.b16 %v3021
        %v3157 = vunpack.c.l.b16 %v3022
        %v3158 = vunpack.c.l.b16 %v3023
        %v3159 = vunpack.c.l.b16 %v3024
        %v3160 = vunpack.c.l.b16 %v3025
        %v3161 = vunpack.c.l.b16 %v3026
        %v3162 = vunpack.c.l.b16 %v3027
        %v3163 = vunpack.c.l.b16 %v3028
        %v3164 = vunpack.c.l.b16 %v3029
        %v3165 = vunpack.c.l.b16 %v3030
        %v3166 = vunpack.c.l.b16 %v3031
        %v3167 = vunpack.c.l.b16 %v3032
        %v3168 = vunpack.c.l.b16 %v3033
        %v3169 = vunpack.c.l.b16 %v3034
        %v3170 = vunpack.c.l.b16 %v3035
        %v3171 = vunpack.c.l.b16 %v3036
        %v3172 = vunpack.c.l.b16 %v3037
        %v3173 = vunpack.c.l.b16 %v3038
        %v3174 = vunpack.c.l.b16 %v3039
        %v3175 = vunpack.c.l.b16 %v3040
        %v3176 = vpack.c.b16 %v3113, %v3112
        %v3177 = vpack.c.b16 %v3115, %v3114
        %v3178 = vpack.c.b16 %v3117, %v3116
        %v3179 = vpack.c.b16 %v3119, %v3118
        %v3180 = vpack.c.b16 %v3121, %v3120
        %v3181 = vpack.c.b16 %v3123, %v3122
        %v3182 = vpack.c.b16 %v3125, %v3124
        %v3183 = vpack.c.b16 %v3127, %v3126
        %v3184 = vpack.c.b16 %v3129, %v3128
        %v3185 = vpack.c.b16 %v3131, %v3130
        %v3186 = vpack.c.b16 %v3133, %v3132
        %v3187 = vpack.c.b16 %v3135, %v3134
        %v3188 = vpack.c.b16 %v3137, %v3136
        %v3189 = vpack.c.b16 %v3139, %v3138
        %v3190 = vpack.c.b16 %v3141, %v3140
        %v3191 = vpack.c.b16 %v3143, %v3142
        %v3192 = vpack.c.b16 %v3145, %v3144
        %v3193 = vpack.c.b16 %v3147, %v3146
        %v3194 = vpack.c.b16 %v3149, %v3148
        %v3195 = vpack.c.b16 %v3151, %v3150
        %v3196 = vpack.c.b16 %v3153, %v3152
        %v3197 = vpack.c.b16 %v3155, %v3154
        %v3198 = vpack.c.b16 %v3157, %v3156
        %v3199 = vpack.c.b16 %v3159, %v3158
        %v3200 = vpack.c.b16 %v3161, %v3160
        %v3201 = vpack.c.b16 %v3163, %v3162
        %v3202 = vpack.c.b16 %v3165, %v3164
        %v3203 = vpack.c.b16 %v3167, %v3166
        %v3204 = vpack.c.b16 %v3169, %v3168
        %v3205 = vpack.c.b16 %v3171, %v3170
        %v3206 = vpack.c.b16 %v3173, %v3172
        %v3207 = vpack.c.b16 %v3175, %v3174
        %3240 = vmatprep.subr.bf16.mxu0 0
        %3241 = vmatpush1.bf16.msra.mxu0 %v3183
        %3242 = vmatprep.subr.bf16.mxu0 0
        %3243 = vmatpush1.bf16.msra.mxu0 %v3182
        %3244 = vmatprep.subr.bf16.mxu0 0
        %3245 = vmatpush1.bf16.msra.mxu0 %v3181
        %3246 = vmatprep.subr.bf16.mxu0 0
        %3247 = vmatpush1.bf16.msra.mxu0 %v3180
        %3248 = vmatprep.subr.bf16.mxu0 0
        %3249 = vmatpush1.bf16.msra.mxu0 %v3179
        %3250 = vmatprep.subr.bf16.mxu0 0
        %3251 = vmatpush1.bf16.msra.mxu0 %v3178
        %3252 = vmatprep.subr.bf16.mxu0 0
        %3253 = vmatpush1.bf16.msra.mxu0 %v3177
        %3254 = vmatprep.subr.bf16.mxu0 0
        %3255 = vmatpush1.bf16.msra.mxu0 %v3176
        %3256 = vmatprep.subr.bf16.mxu0 0
        %3257 = vmatpush2.bf16.msra.mxu0 %v3191
        %3258 = vmatprep.subr.bf16.mxu0 0
        %3259 = vmatpush2.bf16.msra.mxu0 %v3190
        %3260 = vmatprep.subr.bf16.mxu0 0
        %3261 = vmatpush2.bf16.msra.mxu0 %v3189
        %3262 = vmatprep.subr.bf16.mxu0 0
        %3263 = vmatpush2.bf16.msra.mxu0 %v3188
        %3264 = vmatprep.subr.bf16.mxu0 0
        %3265 = vmatpush2.bf16.msra.mxu0 %v3187
        %3266 = vmatprep.subr.bf16.mxu0 0
        %3267 = vmatpush2.bf16.msra.mxu0 %v3186
        %3268 = vmatprep.subr.bf16.mxu0 0
        %3269 = vmatpush2.bf16.msra.mxu0 %v3185
        %3270 = vmatprep.subr.bf16.mxu0 0
        %3271 = vmatpush2.bf16.msra.mxu0 %v3184
        %3272 = vmatprep.mubr.bf16.mxu0 %v2974
        %3273 = vmatmul.mubr.bf16.gmra.mxu0 %v2973
        %v3274 = vpop.f32.mrf.mxu0
        %v3275 = vadd.f32 %v3046, %v3274
        %v3276 = vpop.f32.mrf.mxu0
        %v3277 = vpop.f32.mrf.mxu0
        %v3278 = vadd.f32 %v3046, %v3277
        %v3279 = vpop.f32.mrf.mxu0
        %3280 = vdwg.mxu0
        %3281 = vmatprep.subr.bf16.mxu0 0
        %3282 = vmatpush1.bf16.msra.mxu0 %v3199
        %3283 = vmatprep.subr.bf16.mxu0 0
        %3284 = vmatpush1.bf16.msra.mxu0 %v3198
        %3285 = vmatprep.subr.bf16.mxu0 0
        %3286 = vmatpush1.bf16.msra.mxu0 %v3197
        %3287 = vmatprep.subr.bf16.mxu0 0
        %3288 = vmatpush1.bf16.msra.mxu0 %v3196
        %3289 = vmatprep.subr.bf16.mxu0 0
        %3290 = vmatpush1.bf16.msra.mxu0 %v3195
        %3291 = vmatprep.subr.bf16.mxu0 0
        %3292 = vmatpush1.bf16.msra.mxu0 %v3194
        %3293 = vmatprep.subr.bf16.mxu0 0
        %3294 = vmatpush1.bf16.msra.mxu0 %v3193
        %3295 = vmatprep.subr.bf16.mxu0 0
        %3296 = vmatpush1.bf16.msra.mxu0 %v3192
        %3297 = vmatprep.subr.bf16.mxu0 0
        %3298 = vmatpush2.bf16.msra.mxu0 %v3207
        %3299 = vmatprep.subr.bf16.mxu0 0
        %3300 = vmatpush2.bf16.msra.mxu0 %v3206
        %3301 = vmatprep.subr.bf16.mxu0 0
        %3302 = vmatpush2.bf16.msra.mxu0 %v3205
        %3303 = vmatprep.subr.bf16.mxu0 0
        %3304 = vmatpush2.bf16.msra.mxu0 %v3204
        %3305 = vmatprep.subr.bf16.mxu0 0
        %3306 = vmatpush2.bf16.msra.mxu0 %v3203
        %3307 = vmatprep.subr.bf16.mxu0 0
        %3308 = vmatpush2.bf16.msra.mxu0 %v3202
        %3309 = vmatprep.subr.bf16.mxu0 0
        %3310 = vmatpush2.bf16.msra.mxu0 %v3201
        %3311 = vmatprep.subr.bf16.mxu0 0
        %3312 = vmatpush2.bf16.msra.mxu0 %v3200
        %3313 = vmatprep.mubr.bf16.mxu0 %v2976
        %3314 = vmatmul.mubr.bf16.gmra.mxu0 %v2975
        %v3315 = vpop.f32.mrf.mxu0
        %v3316 = vadd.f32 %v3275, %v3315
        %v3317 = vpop.f32.mrf.mxu0
        %v3318 = vpop.f32.mrf.mxu0
        %v3319 = vadd.f32 %v3278, %v3318
        %v3320 = vpop.f32.mrf.mxu0
        %3321 = vdwg.mxu0
        %v3322 = vadd.f32 %v2662, %v3316
        %v3323 = vadd.f32 %v2663, %v3319
        %v3324 = vld [vmem:[%s1293] sm:$0x1]
        %v3325 = vld [vmem:[%s1296] sm:$0x1]
        %3326 = vadd.xlane.f32.xlu0 %v3322
        %v3327 = vpop.xlane.xlu0 %3326
        %3328 = vadd.xlane.f32.xlu0 %v3323
        %v3329 = vpop.xlane.xlu0 %3328
        %v3330 = vmul.f32 %v3327, %v2003
        %v3331 = vmul.f32 %v3329, %v2003
        %v3332 = vsub.f32 %v3322, %v3330
        %v3333 = vsub.f32 %v3323, %v3331
        %v3334 = vmul.f32 %v3332, %v3332
        %v3335 = vmul.f32 %v3333, %v3333
        %3336 = vadd.xlane.f32.xlu0 %v3334
        %v3337 = vpop.xlane.xlu0 %3336
        %3338 = vadd.xlane.f32.xlu0 %v3335
        %v3339 = vpop.xlane.xlu0 %3338
        %v3340 = vmul.f32 %v3337, %v2003
        %v3341 = vmul.f32 %v3339, %v2003
        %v3342 = vadd.f32 %v3340, 1e-05
        %v3343 = vadd.f32 %v3341, 1e-05
        %v3344 = vrsqrt.pop %v3342
        %v3345 = vrsqrt.pop %v3343
        %v3346 = vmul.f32 %v3332, %v3344
        %v3347 = vmul.f32 %v3333, %v3345
        %v3349 = vlaneseq
        %v3350 = vshrl.u32 %v3349, 7
        %v3351 = vsub.s32 0, %v3350
        %v3352 = vrot.slane %v3324, %v3351
        %v3354 = vmul.f32 %v3346, %v3352
        %v3355 = vmul.f32 %v3347, %v3352
        %v3357 = vlaneseq
        %v3358 = vshrl.u32 %v3357, 7
        %v3359 = vsub.s32 0, %v3358
        %v3360 = vrot.slane %v3325, %v3359
        %v3362 = vadd.f32 %v3354, %v3360
        %v3363 = vadd.f32 %v3355, %v3360
        %3364 = vst [vmem:[#allocation2] sm:$0xff] %v3362
        %3365 = vst [vmem:[#allocation2 + $0x8] sm:$0xff] %v3363
        %p3366 = scmp.eq.s32.totalorder %s83, 3
        // Predicated region
        $region161: #{transformer_forward.3} parent=135 // pred_check
          %p3367 = pneg %p3366
        $region162: #{transformer_forward.3} parent=135 // pred_check_branch
          %3369 = sbr.rel (%p3367) target = $region164
        $region163: #{transformer_forward.3} parent=135 // pred_region
          %v3370 = vld [vmem:[#allocation3] sm:$0xff]
          %v3371 = vld [vmem:[#allocation3 + $0x8] sm:$0xff]
          %v3372 = vadd.f32 %v3362, %v3370
          %v3373 = vadd.f32 %v3363, %v3371
          %v3374 = vld [vmem:[%s51] sm:$0x1]
          %v3376 = vlaneseq
          %v3377 = vshrl.u32 %v3376, 7
          %v3378 = vsub.s32 0, %v3377
          %v3379 = vrot.slane %v3374, %v3378
          %v3381 = vmul.f32 %v3372, %v3379
          %v3382 = vmul.f32 %v3373, %v3379
          %3383 = vadd.xlane.f32.xlu0 %v3381
          %v3384 = vpop.xlane.xlu0 %3383
          %3385 = vadd.xlane.f32.xlu0 %v3382
          %v3386 = vpop.xlane.xlu0 %3385
          %v3387 = vld [vmem:[#allocation4] sm:$0x1]
          %v3389 = vlaneseq
          %v3390 = vshrl.u32 %v3389, 7
          %v3391 = vsub.s32 0, %v3390
          %v3392 = vrot.slane %v3387, %v3391
          %3393 = vset.pattern.permute.xlu0 0
          %3394 = vperm.xlu0 %3393, %v3392
          %v3395 = vpop.permute.xlu0 %3394
          %v3397 = vadd.f32 %v3384, %v3395
          %v3398 = vadd.f32 %v3386, %v3395
          %v3399 = vld [vmem:[%s55] sm:$0x1]
          %v3401 = vlaneseq
          %v3402 = vshrl.u32 %v3401, 7
          %v3403 = vsub.s32 0, %v3402
          %v3404 = vrot.slane %v3399, %v3403
          %3406 = vbcast.lane.b32.xlu0 %v3404, 256
          %v3407 = vpop.permute.xlu0 %3406
          %v3409 = vmul.f32 %v3397, %v3407
          %v3410 = vmul.f32 %v3398, %v3407
          %3413 = vset.pattern.permute.xlu0 0
          %3414 = vperm.xlu0 %3413, %v3409
          %v3415 = vpop.permute.xlu0 %3414
          %3416 = vset.pattern.permute.xlu0 0
          %3417 = vperm.xlu0 %3416, %v3410
          %v3418 = vpop.permute.xlu0 %3417
          %v3419 = vlaneseq
          %v3420 = vshrl.u32 %v3419, 7
          %v3421 = vsub.s32 %v1758, %v3420
          %v3422 = vrot.slane %v3415, %v3421
          %v3423 = vlaneseq
          %v3424 = vshrl.u32 %v3423, 7
          %v3425 = vsub.s32 %v1758, %v3424
          %v3426 = vrot.slane %v3418, %v3425
          %vm3427 = vcmask 1041409
          %v3428 = vsel %vm3427, %v3426, %v3422
          %vm3430 = vcmask 58368
          %v3431 = vsel %vm3430, %v3428, 0.0
          %3432 = vadd.xlane.f32.xlu0 %v3431
          %v3433 = vpop.xlane.xlu0 %3432
          %v3434 = vld [vmem:[#allocation5] sm:$0x1]
          %v3436 = vlaneseq
          %v3437 = vshrl.u32 %v3436, 7
          %v3438 = vsub.s32 0, %v3437
          %v3439 = vrot.slane %v3434, %v3438
          %v3441 = vadd.f32 %v3433, %v3439
          %vm3442 = vcmask 1024
          %3443 = vst.msk [vmem:[%s59] sm:$0x3] %vm3442, %v3441
        $region164: #{transformer_forward.3} parent=135 // pred_fallthru
          _
        // Predicated region
        $region165: #{transformer_forward.3} parent=135 // pred_check
          %p3444 = pneg %p805
        $region166: #{transformer_forward.3} parent=135 // pred_check_branch
          %3446 = sbr.rel (%p3444) target = $region168
        $region167: #{transformer_forward.3} parent=135 // pred_region
          _
        $region168: #{transformer_forward.3} parent=135 // pred_fallthru
          _
        // Predicated region
        $region169: #{transformer_forward.3} parent=135 // pred_check
          %p3447 = pneg %p805
        $region170: #{transformer_forward.3} parent=135 // pred_check_branch
          %3449 = sbr.rel (%p3447) target = $region172
        $region171: #{transformer_forward.3} parent=135 // pred_region
          _
        $region172: #{transformer_forward.3} parent=135 // pred_fallthru
          _
      $region136: #{transformer_forward.3} parent=5 // pred_fallthru
        _
      %p3450 = scmp.le.s32.totalorder 2, %s78
      // Predicated region
      $region173: #{transformer_forward.3} parent=5 // pred_check
        %p3451 = pneg %p3450
      $region174: #{transformer_forward.3} parent=5 // pred_check_branch
        %3453 = sbr.rel (%p3451) target = $region176
      $region175: #{transformer_forward.3} parent=5 // pred_region
        %s3454 = ssub.s32 %s78, 2
      $region176: #{transformer_forward.3} parent=5 // pred_fallthru
        _
    $region6: #{transformer_forward.3} parent=1 // loop_footer
      %s82 = sadd.s32 1, %s78
    $region7: #{transformer_forward.3} parent=1 // loop_footer_branch
      %77 = sbr.rel target = $region3
    $region8: #{transformer_forward.3} parent=1 // loop_exit
      _
    %3455 = vsyncpa [#allocation7], 1
    %s3456 = scalar_lea.sflag [#allocation7], 1
    %3457 = vsyncpa %s3456, 1
    %3458 = vsyncpa [#allocation9], 1
    %s3459 = scalar_lea.sflag [#allocation9], 1
    %3460 = vsyncpa %s3459, 1
    %3461 = vsyncpa [#allocation12], 1
    %s3462 = scalar_lea.sflag [#allocation12], 1
    %3463 = vsyncpa %s3462, 1

</llo_original>
